<compile_context>
chip_gen: v6e
topology: v6e:2x2x1
jax: 0.10.0
libtpu: 0.0.40
codegen_flags: <defaults>
</compile_context>

<pallas_src>
import numpy as np
import jax
import jax.numpy as jnp
from jax.experimental import pallas as pl
from jax.experimental.pallas import tpu as pltpu


# ---------------------------------------------------------------------------
# Fused kernel: one grid step == one image.
# ---------------------------------------------------------------------------
def _simple_net_kernel(x_ref, a1_ref, r1_ref, b1_ref, a2_ref, r2_ref, b2_ref,
                       w1h_ref, bfc1_ref, w2_ref, bfc2_ref, out_ref):
    x = x_ref[0]                                            # (64, 64) f32

    # conv1 with the pool1 *column* subsample folded into the banded weights.
    # y1d[k][h, q*10+c] = conv1 (pre-bias) at spatial (h, 3q+k)
    y1d = []
    for k in range(3):
        acc = jnp.dot(x[0:60, :], a1_ref[k, 0], preferred_element_type=jnp.float32)
        for kh in range(1, 5):
            acc = acc + jnp.dot(x[kh:kh + 60, :], a1_ref[k, kh],
                                preferred_element_type=jnp.float32)
        y1d.append(acc)                                     # (60, 200)

    # pool1 row part: 0/1 row-selection matmuls; then bias + ReLU
    # (max commutes with the constant bias add and with the monotone ReLU).
    pool1 = None
    for j in range(3):
        rsel = r1_ref[j]                                    # (20, 60)
        for k in range(3):
            cand = jnp.dot(rsel, y1d[k], preferred_element_type=jnp.float32)
            pool1 = cand if pool1 is None else jnp.maximum(pool1, cand)
    p1 = jnp.maximum(pool1 + b1_ref[...], 0.0)              # (20, 200) = (h, w*10+c)

    # conv2, pool2 column subsample folded in (floor mode: only cols 0..14 used).
    y2d = []
    for k in range(3):
        acc = jnp.dot(p1[0:16, :], a2_ref[k, 0], preferred_element_type=jnp.float32)
        for kh in range(1, 5):
            acc = acc + jnp.dot(p1[kh:kh + 16, :], a2_ref[k, kh],
                                preferred_element_type=jnp.float32)
        y2d.append(acc)                                     # (16, 100)

    pool2 = None
    for j in range(3):
        rsel = r2_ref[j]                                    # (5, 16), rows 0..14 only
        for k in range(3):
            cand = jnp.dot(rsel, y2d[k], preferred_element_type=jnp.float32)
            pool2 = cand if pool2 is None else jnp.maximum(pool2, cand)
    p2 = jnp.maximum(pool2 + b2_ref[...], 0.0)              # (5, 100) = (h, w*20+c)

    # fc1 (flatten order folded into the host-permuted weights) + fc2.
    h = jnp.dot(p2[0:1, :], w1h_ref[0], preferred_element_type=jnp.float32)
    for r in range(1, 5):
        h = h + jnp.dot(p2[r:r + 1, :], w1h_ref[r], preferred_element_type=jnp.float32)
    h = h + bfc1_ref[...]                                   # (1, 100)
    out = jnp.dot(h, w2_ref[...], preferred_element_type=jnp.float32) + bfc2_ref[...]
    out_ref[0] = out                                        # (1, 15)


# ---------------------------------------------------------------------------
# Wrapper
# ---------------------------------------------------------------------------
def simple_net_forward(x_nchw, consts):
    n = x_nchw.shape[0]
    x = x_nchw.astype(jnp.float32).reshape(n, 64, 64)       # squeeze C=1

    out = pl.pallas_call(
        _simple_net_kernel,
        grid=(n,),
        in_specs=[
            pl.BlockSpec((1, 64, 64), lambda i: (i, 0, 0)),          # x (per image)
            pl.BlockSpec((3, 5, 64, 200), lambda i: (0, 0, 0, 0)),   # conv1 banded W
            pl.BlockSpec((3, 20, 60), lambda i: (0, 0, 0)),          # pool1 row select
            pl.BlockSpec((1, 200), lambda i: (0, 0)),                # conv1 bias (tiled)
            pl.BlockSpec((3, 5, 200, 100), lambda i: (0, 0, 0, 0)),  # conv2 banded W
            pl.BlockSpec((3, 5, 16), lambda i: (0, 0, 0)),           # pool2 row select
            pl.BlockSpec((1, 100), lambda i: (0, 0)),                # conv2 bias (tiled)
            pl.BlockSpec((5, 100, 100), lambda i: (0, 0, 0)),        # fc1 W (permuted)
            pl.BlockSpec((1, 100), lambda i: (0, 0)),                # fc1 bias
            pl.BlockSpec((100, 15), lambda i: (0, 0)),               # fc2 W
            pl.BlockSpec((1, 15), lambda i: (0, 0)),                 # fc2 bias
        ],
        out_specs=pl.BlockSpec((1, 1, 15), lambda i: (i, 0, 0)),
        out_shape=jax.ShapeDtypeStruct((n, 1, 15), jnp.float32),
        compiler_params=pltpu.CompilerParams(dimension_semantics=("parallel",)),
    )(x, consts["a1"], consts["r1"], consts["b1"], consts["a2"], consts["r2"],
      consts["b2"], consts["w1h"], consts["bfc1"], consts["w2"], consts["bfc2"])
    return out.reshape(n, 15)


# ---------------------------------------------------------------------------
# Host-side (one-time) weight repacking into MXU-friendly banded / selection mats
# ---------------------------------------------------------------------------
def _build_conv1(w1, b1):
    # w1: (10, 1, 5, 5) torch [co, ci, kh, kw]; b1: (10,)
    co_n = 10
    a = np.zeros((3, 5, 64, 20 * co_n), np.float32)   # [k, kh, in_col, q*10+co]
    for k in range(3):
        for kh in range(5):
            for q in range(20):
                w0 = 3 * q + k                          # conv1 output column
                for kw in range(5):
                    a[k, kh, w0 + kw, q * co_n:(q + 1) * co_n] = w1[:, 0, kh, kw]
    bt = np.tile(np.asarray(b1, np.float32), 20).reshape(1, 20 * co_n)
    return a, bt


def _build_conv2(w2, b2):
    # w2: (20, 10, 5, 5) torch [co, ci, kh, kw]; b2: (20,)
    co_n, ci_n = 20, 10
    a = np.zeros((3, 5, 20 * ci_n, 5 * co_n), np.float32)  # [k, kh, wj*10+ci, q*20+co]
    for k in range(3):
        for kh in range(5):
            for q in range(5):
                w0 = 3 * q + k                          # conv2 output column (0..14)
                for kw in range(5):
                    wj = w0 + kw                        # p1 column (<= 18)
                    for ci in range(ci_n):
                        a[k, kh, wj * ci_n + ci, q * co_n:(q + 1) * co_n] = w2[:, ci, kh, kw]
    bt = np.tile(np.asarray(b2, np.float32), 5).reshape(1, 5 * co_n)
    return a, bt


def _build_rowsel(n_out, n_in):
    r = np.zeros((3, n_out, n_in), np.float32)          # r[j, p, 3p+j] = 1
    for j in range(3):
        for p in range(n_out):
            r[j, p, 3 * p + j] = 1.0
    return r


def _build_fc(fc1_w, fc1_b, fc2_w, fc2_b):
    # fc1_w: (100, 500) torch [out, in], in-index = co*25 + h*5 + w (NCHW flatten)
    w1t = np.asarray(fc1_w, np.float32).T.reshape(20, 5, 5, 100)   # [co, h, w, o]
    w1h = np.ascontiguousarray(
        np.transpose(w1t, (1, 2, 0, 3)).reshape(5, 100, 100))      # [h, w*20+co, o]
    w2t = np.ascontiguousarray(np.asarray(fc2_w, np.float32).T)    # (100, 15)
    return (w1h, np.asarray(fc1_b, np.float32).reshape(1, 100),
            w2t, np.asarray(fc2_b, np.float32).reshape(1, 15))


def prepare_constants(params):
    a1, b1t = _build_conv1(np.asarray(params["conv1_w"]), np.asarray(params["conv1_b"]))
    a2, b2t = _build_conv2(np.asarray(params["conv2_w"]), np.asarray(params["conv2_b"]))
    w1h, bfc1, w2t, bfc2 = _build_fc(params["fc1_w"], params["fc1_b"],
                                     params["fc2_w"], params["fc2_b"])
    return {
        "a1": jnp.asarray(a1), "r1": jnp.asarray(_build_rowsel(20, 60)), "b1": jnp.asarray(b1t),
        "a2": jnp.asarray(a2), "r2": jnp.asarray(_build_rowsel(5, 16)), "b2": jnp.asarray(b2t),
        "w1h": jnp.asarray(w1h), "bfc1": jnp.asarray(bfc1),
        "w2": jnp.asarray(w2t), "bfc2": jnp.asarray(bfc2),
    }


# ---------------------------------------------------------------------------
# Deterministic synthetic params in PyTorch layouts (U(-1/sqrt(fan_in), ...))
# ---------------------------------------------------------------------------
def init_params(key):
    def u(k, shape, fan_in):
        b = 1.0 / np.sqrt(float(fan_in))
        return jax.random.uniform(k, shape, jnp.float32, -b, b)

    ks = jax.random.split(key, 8)
    return {
        "conv1_w": u(ks[0], (10, 1, 5, 5), 25),   "conv1_b": u(ks[1], (10,), 25),
        "conv2_w": u(ks[2], (20, 10, 5, 5), 250), "conv2_b": u(ks[3], (20,), 250),
        "fc1_w":   u(ks[4], (100, 500), 500),     "fc1_b":   u(ks[5], (100,), 500),
        "fc2_w":   u(ks[6], (15, 100), 100),      "fc2_b":   u(ks[7], (15,), 100),
    }


if __name__ == "__main__":
    key = jax.random.PRNGKey(0)
    k_x, k_p = jax.random.split(key)

    # Input must be (N, 1, 64, 64) so the conv/pool stack yields 20*5*5 = 500 features.
    x = jax.random.normal(k_x, (2, 1, 64, 64), dtype=jnp.float32)
    params = init_params(k_p)
    consts = prepare_constants(params)          # one-time host-side repacking

    fwd = jax.jit(simple_net_forward)
    out = jax.block_until_ready(fwd(x, consts))

    assert out.shape == (2, 15), out.shape
    assert out.dtype == jnp.float32
    print("KERNEL_OK")
</pallas_src>

<mosaic_0001>
module attributes {stable_mosaic.version = 11 : i64} {
  func.func @_simple_net_kernel(%arg0: i32, %arg1: memref<1x64x64xf32, #tpu.memory_space<vmem>>, %arg2: memref<3x5x64x200xf32, #tpu.memory_space<vmem>>, %arg3: memref<3x20x60xf32, #tpu.memory_space<vmem>>, %arg4: memref<1x200xf32, #tpu.memory_space<vmem>>, %arg5: memref<3x5x200x100xf32, #tpu.memory_space<vmem>>, %arg6: memref<3x5x16xf32, #tpu.memory_space<vmem>>, %arg7: memref<1x100xf32, #tpu.memory_space<vmem>>, %arg8: memref<5x100x100xf32, #tpu.memory_space<vmem>>, %arg9: memref<1x100xf32, #tpu.memory_space<vmem>>, %arg10: memref<100x15xf32, #tpu.memory_space<vmem>>, %arg11: memref<1x15xf32, #tpu.memory_space<vmem>>, %arg12: memref<1x1x15xf32, #tpu.memory_space<vmem>>) attributes {dimension_semantics = [#tpu.dimension_semantics<parallel>], iteration_bounds = array<i64: 2>, scalar_prefetch = 0 : i64, scratch_operands = 0 : i64, tpu.core_type = #tpu.core_type<tc>, window_params = [{transform_indices = @transform_0, window_bounds = array<i64: 1, 64, 64>}, {pipeline_mode = #tpu.pipeline_mode<synchronous>, transform_indices = @transform_1, window_bounds = array<i64: 3, 5, 64, 200>}, {pipeline_mode = #tpu.pipeline_mode<synchronous>, transform_indices = @transform_2, window_bounds = array<i64: 3, 20, 60>}, {pipeline_mode = #tpu.pipeline_mode<synchronous>, transform_indices = @transform_3, window_bounds = array<i64: 1, 200>}, {pipeline_mode = #tpu.pipeline_mode<synchronous>, transform_indices = @transform_4, window_bounds = array<i64: 3, 5, 200, 100>}, {pipeline_mode = #tpu.pipeline_mode<synchronous>, transform_indices = @transform_5, window_bounds = array<i64: 3, 5, 16>}, {pipeline_mode = #tpu.pipeline_mode<synchronous>, transform_indices = @transform_6, window_bounds = array<i64: 1, 100>}, {pipeline_mode = #tpu.pipeline_mode<synchronous>, transform_indices = @transform_7, window_bounds = array<i64: 5, 100, 100>}, {pipeline_mode = #tpu.pipeline_mode<synchronous>, transform_indices = @transform_8, window_bounds = array<i64: 1, 100>}, {pipeline_mode = #tpu.pipeline_mode<synchronous>, transform_indices = @transform_9, window_bounds = array<i64: 100, 15>}, {pipeline_mode = #tpu.pipeline_mode<synchronous>, transform_indices = @transform_10, window_bounds = array<i64: 1, 15>}, {transform_indices = @transform_11, window_bounds = array<i64: 1, 1, 15>}]} {
    %c0 = arith.constant 0 : index
    %c0_0 = arith.constant 0 : index
    %c0_1 = arith.constant 0 : index
    %0 = vector.load %arg1[%c0, %c0_0, %c0_1] : memref<1x64x64xf32, #tpu.memory_space<vmem>>, vector<1x64x64xf32>
    %1 = vector.shape_cast %0 : vector<1x64x64xf32> to vector<64x64xf32>
    %2 = vector.extract_strided_slice %1 {offsets = [0, 0], sizes = [60, 64], strides = [1, 1]} : vector<64x64xf32> to vector<60x64xf32>
    %c0_2 = arith.constant 0 : index
    %c0_3 = arith.constant 0 : index
    %c0_4 = arith.constant 0 : index
    %c0_5 = arith.constant 0 : index
    %3 = vector.load %arg2[%c0_2, %c0_3, %c0_4, %c0_5] : memref<3x5x64x200xf32, #tpu.memory_space<vmem>>, vector<1x1x64x200xf32>
    %4 = vector.shape_cast %3 : vector<1x1x64x200xf32> to vector<64x200xf32>
    %cst = arith.constant dense<0.000000e+00> : vector<60x200xf32>
    %5 = tpu.matmul %2, %4, %cst {dimension_numbers = #tpu.dot_dimension_numbers<[1], [0], [0], [1], [0, 0, 1, 1], [], []>} : vector<60x64xf32>, vector<64x200xf32>, vector<60x200xf32> -> vector<60x200xf32>
    %6 = vector.extract_strided_slice %1 {offsets = [1, 0], sizes = [60, 64], strides = [1, 1]} : vector<64x64xf32> to vector<60x64xf32>
    %c0_6 = arith.constant 0 : index
    %c1 = arith.constant 1 : index
    %c0_7 = arith.constant 0 : index
    %c0_8 = arith.constant 0 : index
    %7 = vector.load %arg2[%c0_6, %c1, %c0_7, %c0_8] : memref<3x5x64x200xf32, #tpu.memory_space<vmem>>, vector<1x1x64x200xf32>
    %8 = vector.shape_cast %7 : vector<1x1x64x200xf32> to vector<64x200xf32>
    %cst_9 = arith.constant dense<0.000000e+00> : vector<60x200xf32>
    %9 = tpu.matmul %6, %8, %cst_9 {dimension_numbers = #tpu.dot_dimension_numbers<[1], [0], [0], [1], [0, 0, 1, 1], [], []>} : vector<60x64xf32>, vector<64x200xf32>, vector<60x200xf32> -> vector<60x200xf32>
    %10 = arith.addf %5, %9 : vector<60x200xf32>
    %11 = vector.extract_strided_slice %1 {offsets = [2, 0], sizes = [60, 64], strides = [1, 1]} : vector<64x64xf32> to vector<60x64xf32>
    %c0_10 = arith.constant 0 : index
    %c2 = arith.constant 2 : index
    %c0_11 = arith.constant 0 : index
    %c0_12 = arith.constant 0 : index
    %12 = vector.load %arg2[%c0_10, %c2, %c0_11, %c0_12] : memref<3x5x64x200xf32, #tpu.memory_space<vmem>>, vector<1x1x64x200xf32>
    %13 = vector.shape_cast %12 : vector<1x1x64x200xf32> to vector<64x200xf32>
    %cst_13 = arith.constant dense<0.000000e+00> : vector<60x200xf32>
    %14 = tpu.matmul %11, %13, %cst_13 {dimension_numbers = #tpu.dot_dimension_numbers<[1], [0], [0], [1], [0, 0, 1, 1], [], []>} : vector<60x64xf32>, vector<64x200xf32>, vector<60x200xf32> -> vector<60x200xf32>
    %15 = arith.addf %10, %14 : vector<60x200xf32>
    %16 = vector.extract_strided_slice %1 {offsets = [3, 0], sizes = [60, 64], strides = [1, 1]} : vector<64x64xf32> to vector<60x64xf32>
    %c0_14 = arith.constant 0 : index
    %c3 = arith.constant 3 : index
    %c0_15 = arith.constant 0 : index
    %c0_16 = arith.constant 0 : index
    %17 = vector.load %arg2[%c0_14, %c3, %c0_15, %c0_16] : memref<3x5x64x200xf32, #tpu.memory_space<vmem>>, vector<1x1x64x200xf32>
    %18 = vector.shape_cast %17 : vector<1x1x64x200xf32> to vector<64x200xf32>
    %cst_17 = arith.constant dense<0.000000e+00> : vector<60x200xf32>
    %19 = tpu.matmul %16, %18, %cst_17 {dimension_numbers = #tpu.dot_dimension_numbers<[1], [0], [0], [1], [0, 0, 1, 1], [], []>} : vector<60x64xf32>, vector<64x200xf32>, vector<60x200xf32> -> vector<60x200xf32>
    %20 = arith.addf %15, %19 : vector<60x200xf32>
    %21 = vector.extract_strided_slice %1 {offsets = [4, 0], sizes = [60, 64], strides = [1, 1]} : vector<64x64xf32> to vector<60x64xf32>
    %c0_18 = arith.constant 0 : index
    %c4 = arith.constant 4 : index
    %c0_19 = arith.constant 0 : index
    %c0_20 = arith.constant 0 : index
    %22 = vector.load %arg2[%c0_18, %c4, %c0_19, %c0_20] : memref<3x5x64x200xf32, #tpu.memory_space<vmem>>, vector<1x1x64x200xf32>
    %23 = vector.shape_cast %22 : vector<1x1x64x200xf32> to vector<64x200xf32>
    %cst_21 = arith.constant dense<0.000000e+00> : vector<60x200xf32>
    %24 = tpu.matmul %21, %23, %cst_21 {dimension_numbers = #tpu.dot_dimension_numbers<[1], [0], [0], [1], [0, 0, 1, 1], [], []>} : vector<60x64xf32>, vector<64x200xf32>, vector<60x200xf32> -> vector<60x200xf32>
    %25 = arith.addf %20, %24 : vector<60x200xf32>
    %26 = vector.extract_strided_slice %1 {offsets = [0, 0], sizes = [60, 64], strides = [1, 1]} : vector<64x64xf32> to vector<60x64xf32>
    %c1_22 = arith.constant 1 : index
    %c0_23 = arith.constant 0 : index
    %c0_24 = arith.constant 0 : index
    %c0_25 = arith.constant 0 : index
    %27 = vector.load %arg2[%c1_22, %c0_23, %c0_24, %c0_25] : memref<3x5x64x200xf32, #tpu.memory_space<vmem>>, vector<1x1x64x200xf32>
    %28 = vector.shape_cast %27 : vector<1x1x64x200xf32> to vector<64x200xf32>
    %cst_26 = arith.constant dense<0.000000e+00> : vector<60x200xf32>
    %29 = tpu.matmul %26, %28, %cst_26 {dimension_numbers = #tpu.dot_dimension_numbers<[1], [0], [0], [1], [0, 0, 1, 1], [], []>} : vector<60x64xf32>, vector<64x200xf32>, vector<60x200xf32> -> vector<60x200xf32>
    %30 = vector.extract_strided_slice %1 {offsets = [1, 0], sizes = [60, 64], strides = [1, 1]} : vector<64x64xf32> to vector<60x64xf32>
    %c1_27 = arith.constant 1 : index
    %c1_28 = arith.constant 1 : index
    %c0_29 = arith.constant 0 : index
    %c0_30 = arith.constant 0 : index
    %31 = vector.load %arg2[%c1_27, %c1_28, %c0_29, %c0_30] : memref<3x5x64x200xf32, #tpu.memory_space<vmem>>, vector<1x1x64x200xf32>
    %32 = vector.shape_cast %31 : vector<1x1x64x200xf32> to vector<64x200xf32>
    %cst_31 = arith.constant dense<0.000000e+00> : vector<60x200xf32>
    %33 = tpu.matmul %30, %32, %cst_31 {dimension_numbers = #tpu.dot_dimension_numbers<[1], [0], [0], [1], [0, 0, 1, 1], [], []>} : vector<60x64xf32>, vector<64x200xf32>, vector<60x200xf32> -> vector<60x200xf32>
    %34 = arith.addf %29, %33 : vector<60x200xf32>
    %35 = vector.extract_strided_slice %1 {offsets = [2, 0], sizes = [60, 64], strides = [1, 1]} : vector<64x64xf32> to vector<60x64xf32>
    %c1_32 = arith.constant 1 : index
    %c2_33 = arith.constant 2 : index
    %c0_34 = arith.constant 0 : index
    %c0_35 = arith.constant 0 : index
    %36 = vector.load %arg2[%c1_32, %c2_33, %c0_34, %c0_35] : memref<3x5x64x200xf32, #tpu.memory_space<vmem>>, vector<1x1x64x200xf32>
    %37 = vector.shape_cast %36 : vector<1x1x64x200xf32> to vector<64x200xf32>
    %cst_36 = arith.constant dense<0.000000e+00> : vector<60x200xf32>
    %38 = tpu.matmul %35, %37, %cst_36 {dimension_numbers = #tpu.dot_dimension_numbers<[1], [0], [0], [1], [0, 0, 1, 1], [], []>} : vector<60x64xf32>, vector<64x200xf32>, vector<60x200xf32> -> vector<60x200xf32>
    %39 = arith.addf %34, %38 : vector<60x200xf32>
    %40 = vector.extract_strided_slice %1 {offsets = [3, 0], sizes = [60, 64], strides = [1, 1]} : vector<64x64xf32> to vector<60x64xf32>
    %c1_37 = arith.constant 1 : index
    %c3_38 = arith.constant 3 : index
    %c0_39 = arith.constant 0 : index
    %c0_40 = arith.constant 0 : index
    %41 = vector.load %arg2[%c1_37, %c3_38, %c0_39, %c0_40] : memref<3x5x64x200xf32, #tpu.memory_space<vmem>>, vector<1x1x64x200xf32>
    %42 = vector.shape_cast %41 : vector<1x1x64x200xf32> to vector<64x200xf32>
    %cst_41 = arith.constant dense<0.000000e+00> : vector<60x200xf32>
    %43 = tpu.matmul %40, %42, %cst_41 {dimension_numbers = #tpu.dot_dimension_numbers<[1], [0], [0], [1], [0, 0, 1, 1], [], []>} : vector<60x64xf32>, vector<64x200xf32>, vector<60x200xf32> -> vector<60x200xf32>
    %44 = arith.addf %39, %43 : vector<60x200xf32>
    %45 = vector.extract_strided_slice %1 {offsets = [4, 0], sizes = [60, 64], strides = [1, 1]} : vector<64x64xf32> to vector<60x64xf32>
    %c1_42 = arith.constant 1 : index
    %c4_43 = arith.constant 4 : index
    %c0_44 = arith.constant 0 : index
    %c0_45 = arith.constant 0 : index
    %46 = vector.load %arg2[%c1_42, %c4_43, %c0_44, %c0_45] : memref<3x5x64x200xf32, #tpu.memory_space<vmem>>, vector<1x1x64x200xf32>
    %47 = vector.shape_cast %46 : vector<1x1x64x200xf32> to vector<64x200xf32>
    %cst_46 = arith.constant dense<0.000000e+00> : vector<60x200xf32>
    %48 = tpu.matmul %45, %47, %cst_46 {dimension_numbers = #tpu.dot_dimension_numbers<[1], [0], [0], [1], [0, 0, 1, 1], [], []>} : vector<60x64xf32>, vector<64x200xf32>, vector<60x200xf32> -> vector<60x200xf32>
    %49 = arith.addf %44, %48 : vector<60x200xf32>
    %50 = vector.extract_strided_slice %1 {offsets = [0, 0], sizes = [60, 64], strides = [1, 1]} : vector<64x64xf32> to vector<60x64xf32>
    %c2_47 = arith.constant 2 : index
    %c0_48 = arith.constant 0 : index
    %c0_49 = arith.constant 0 : index
    %c0_50 = arith.constant 0 : index
    %51 = vector.load %arg2[%c2_47, %c0_48, %c0_49, %c0_50] : memref<3x5x64x200xf32, #tpu.memory_space<vmem>>, vector<1x1x64x200xf32>
    %52 = vector.shape_cast %51 : vector<1x1x64x200xf32> to vector<64x200xf32>
    %cst_51 = arith.constant dense<0.000000e+00> : vector<60x200xf32>
    %53 = tpu.matmul %50, %52, %cst_51 {dimension_numbers = #tpu.dot_dimension_numbers<[1], [0], [0], [1], [0, 0, 1, 1], [], []>} : vector<60x64xf32>, vector<64x200xf32>, vector<60x200xf32> -> vector<60x200xf32>
    %54 = vector.extract_strided_slice %1 {offsets = [1, 0], sizes = [60, 64], strides = [1, 1]} : vector<64x64xf32> to vector<60x64xf32>
    %c2_52 = arith.constant 2 : index
    %c1_53 = arith.constant 1 : index
    %c0_54 = arith.constant 0 : index
    %c0_55 = arith.constant 0 : index
    %55 = vector.load %arg2[%c2_52, %c1_53, %c0_54, %c0_55] : memref<3x5x64x200xf32, #tpu.memory_space<vmem>>, vector<1x1x64x200xf32>
    %56 = vector.shape_cast %55 : vector<1x1x64x200xf32> to vector<64x200xf32>
    %cst_56 = arith.constant dense<0.000000e+00> : vector<60x200xf32>
    %57 = tpu.matmul %54, %56, %cst_56 {dimension_numbers = #tpu.dot_dimension_numbers<[1], [0], [0], [1], [0, 0, 1, 1], [], []>} : vector<60x64xf32>, vector<64x200xf32>, vector<60x200xf32> -> vector<60x200xf32>
    %58 = arith.addf %53, %57 : vector<60x200xf32>
    %59 = vector.extract_strided_slice %1 {offsets = [2, 0], sizes = [60, 64], strides = [1, 1]} : vector<64x64xf32> to vector<60x64xf32>
    %c2_57 = arith.constant 2 : index
    %c2_58 = arith.constant 2 : index
    %c0_59 = arith.constant 0 : index
    %c0_60 = arith.constant 0 : index
    %60 = vector.load %arg2[%c2_57, %c2_58, %c0_59, %c0_60] : memref<3x5x64x200xf32, #tpu.memory_space<vmem>>, vector<1x1x64x200xf32>
    %61 = vector.shape_cast %60 : vector<1x1x64x200xf32> to vector<64x200xf32>
    %cst_61 = arith.constant dense<0.000000e+00> : vector<60x200xf32>
    %62 = tpu.matmul %59, %61, %cst_61 {dimension_numbers = #tpu.dot_dimension_numbers<[1], [0], [0], [1], [0, 0, 1, 1], [], []>} : vector<60x64xf32>, vector<64x200xf32>, vector<60x200xf32> -> vector<60x200xf32>
    %63 = arith.addf %58, %62 : vector<60x200xf32>
    %64 = vector.extract_strided_slice %1 {offsets = [3, 0], sizes = [60, 64], strides = [1, 1]} : vector<64x64xf32> to vector<60x64xf32>
    %c2_62 = arith.constant 2 : index
    %c3_63 = arith.constant 3 : index
    %c0_64 = arith.constant 0 : index
    %c0_65 = arith.constant 0 : index
    %65 = vector.load %arg2[%c2_62, %c3_63, %c0_64, %c0_65] : memref<3x5x64x200xf32, #tpu.memory_space<vmem>>, vector<1x1x64x200xf32>
    %66 = vector.shape_cast %65 : vector<1x1x64x200xf32> to vector<64x200xf32>
    %cst_66 = arith.constant dense<0.000000e+00> : vector<60x200xf32>
    %67 = tpu.matmul %64, %66, %cst_66 {dimension_numbers = #tpu.dot_dimension_numbers<[1], [0], [0], [1], [0, 0, 1, 1], [], []>} : vector<60x64xf32>, vector<64x200xf32>, vector<60x200xf32> -> vector<60x200xf32>
    %68 = arith.addf %63, %67 : vector<60x200xf32>
    %69 = vector.extract_strided_slice %1 {offsets = [4, 0], sizes = [60, 64], strides = [1, 1]} : vector<64x64xf32> to vector<60x64xf32>
    %c2_67 = arith.constant 2 : index
    %c4_68 = arith.constant 4 : index
    %c0_69 = arith.constant 0 : index
    %c0_70 = arith.constant 0 : index
    %70 = vector.load %arg2[%c2_67, %c4_68, %c0_69, %c0_70] : memref<3x5x64x200xf32, #tpu.memory_space<vmem>>, vector<1x1x64x200xf32>
    %71 = vector.shape_cast %70 : vector<1x1x64x200xf32> to vector<64x200xf32>
    %cst_71 = arith.constant dense<0.000000e+00> : vector<60x200xf32>
    %72 = tpu.matmul %69, %71, %cst_71 {dimension_numbers = #tpu.dot_dimension_numbers<[1], [0], [0], [1], [0, 0, 1, 1], [], []>} : vector<60x64xf32>, vector<64x200xf32>, vector<60x200xf32> -> vector<60x200xf32>
    %73 = arith.addf %68, %72 : vector<60x200xf32>
    %c0_72 = arith.constant 0 : index
    %c0_73 = arith.constant 0 : index
    %c0_74 = arith.constant 0 : index
    %74 = vector.load %arg3[%c0_72, %c0_73, %c0_74] : memref<3x20x60xf32, #tpu.memory_space<vmem>>, vector<1x20x60xf32>
    %75 = vector.shape_cast %74 : vector<1x20x60xf32> to vector<20x60xf32>
    %cst_75 = arith.constant dense<0.000000e+00> : vector<20x200xf32>
    %76 = tpu.matmul %75, %25, %cst_75 {dimension_numbers = #tpu.dot_dimension_numbers<[1], [0], [0], [1], [0, 0, 1, 1], [], []>} : vector<20x60xf32>, vector<60x200xf32>, vector<20x200xf32> -> vector<20x200xf32>
    %cst_76 = arith.constant dense<0.000000e+00> : vector<20x200xf32>
    %77 = tpu.matmul %75, %49, %cst_76 {dimension_numbers = #tpu.dot_dimension_numbers<[1], [0], [0], [1], [0, 0, 1, 1], [], []>} : vector<20x60xf32>, vector<60x200xf32>, vector<20x200xf32> -> vector<20x200xf32>
    %78 = arith.maximumf %76, %77 : vector<20x200xf32>
    %cst_77 = arith.constant dense<0.000000e+00> : vector<20x200xf32>
    %79 = tpu.matmul %75, %73, %cst_77 {dimension_numbers = #tpu.dot_dimension_numbers<[1], [0], [0], [1], [0, 0, 1, 1], [], []>} : vector<20x60xf32>, vector<60x200xf32>, vector<20x200xf32> -> vector<20x200xf32>
    %80 = arith.maximumf %78, %79 : vector<20x200xf32>
    %c1_78 = arith.constant 1 : index
    %c0_79 = arith.constant 0 : index
    %c0_80 = arith.constant 0 : index
    %81 = vector.load %arg3[%c1_78, %c0_79, %c0_80] : memref<3x20x60xf32, #tpu.memory_space<vmem>>, vector<1x20x60xf32>
    %82 = vector.shape_cast %81 : vector<1x20x60xf32> to vector<20x60xf32>
    %cst_81 = arith.constant dense<0.000000e+00> : vector<20x200xf32>
    %83 = tpu.matmul %82, %25, %cst_81 {dimension_numbers = #tpu.dot_dimension_numbers<[1], [0], [0], [1], [0, 0, 1, 1], [], []>} : vector<20x60xf32>, vector<60x200xf32>, vector<20x200xf32> -> vector<20x200xf32>
    %84 = arith.maximumf %80, %83 : vector<20x200xf32>
    %cst_82 = arith.constant dense<0.000000e+00> : vector<20x200xf32>
    %85 = tpu.matmul %82, %49, %cst_82 {dimension_numbers = #tpu.dot_dimension_numbers<[1], [0], [0], [1], [0, 0, 1, 1], [], []>} : vector<20x60xf32>, vector<60x200xf32>, vector<20x200xf32> -> vector<20x200xf32>
    %86 = arith.maximumf %84, %85 : vector<20x200xf32>
    %cst_83 = arith.constant dense<0.000000e+00> : vector<20x200xf32>
    %87 = tpu.matmul %82, %73, %cst_83 {dimension_numbers = #tpu.dot_dimension_numbers<[1], [0], [0], [1], [0, 0, 1, 1], [], []>} : vector<20x60xf32>, vector<60x200xf32>, vector<20x200xf32> -> vector<20x200xf32>
    %88 = arith.maximumf %86, %87 : vector<20x200xf32>
    %c2_84 = arith.constant 2 : index
    %c0_85 = arith.constant 0 : index
    %c0_86 = arith.constant 0 : index
    %89 = vector.load %arg3[%c2_84, %c0_85, %c0_86] : memref<3x20x60xf32, #tpu.memory_space<vmem>>, vector<1x20x60xf32>
    %90 = vector.shape_cast %89 : vector<1x20x60xf32> to vector<20x60xf32>
    %cst_87 = arith.constant dense<0.000000e+00> : vector<20x200xf32>
    %91 = tpu.matmul %90, %25, %cst_87 {dimension_numbers = #tpu.dot_dimension_numbers<[1], [0], [0], [1], [0, 0, 1, 1], [], []>} : vector<20x60xf32>, vector<60x200xf32>, vector<20x200xf32> -> vector<20x200xf32>
    %92 = arith.maximumf %88, %91 : vector<20x200xf32>
    %cst_88 = arith.constant dense<0.000000e+00> : vector<20x200xf32>
    %93 = tpu.matmul %90, %49, %cst_88 {dimension_numbers = #tpu.dot_dimension_numbers<[1], [0], [0], [1], [0, 0, 1, 1], [], []>} : vector<20x60xf32>, vector<60x200xf32>, vector<20x200xf32> -> vector<20x200xf32>
    %94 = arith.maximumf %92, %93 : vector<20x200xf32>
    %cst_89 = arith.constant dense<0.000000e+00> : vector<20x200xf32>
    %95 = tpu.matmul %90, %73, %cst_89 {dimension_numbers = #tpu.dot_dimension_numbers<[1], [0], [0], [1], [0, 0, 1, 1], [], []>} : vector<20x60xf32>, vector<60x200xf32>, vector<20x200xf32> -> vector<20x200xf32>
    %96 = arith.maximumf %94, %95 : vector<20x200xf32>
    %c0_90 = arith.constant 0 : index
    %c0_91 = arith.constant 0 : index
    %97 = vector.load %arg4[%c0_90, %c0_91] : memref<1x200xf32, #tpu.memory_space<vmem>>, vector<1x200xf32>
    %98 = vector.broadcast %97 : vector<1x200xf32> to vector<20x200xf32>
    %99 = arith.addf %96, %98 : vector<20x200xf32>
    %cst_92 = arith.constant 0.000000e+00 : f32
    %100 = vector.broadcast %cst_92 : f32 to vector<20x200xf32>
    %101 = arith.maximumf %99, %100 : vector<20x200xf32>
    %102 = vector.extract_strided_slice %101 {offsets = [0, 0], sizes = [16, 200], strides = [1, 1]} : vector<20x200xf32> to vector<16x200xf32>
    %c0_93 = arith.constant 0 : index
    %c0_94 = arith.constant 0 : index
    %c0_95 = arith.constant 0 : index
    %c0_96 = arith.constant 0 : index
    %103 = vector.load %arg5[%c0_93, %c0_94, %c0_95, %c0_96] : memref<3x5x200x100xf32, #tpu.memory_space<vmem>>, vector<1x1x200x100xf32>
    %104 = vector.shape_cast %103 : vector<1x1x200x100xf32> to vector<200x100xf32>
    %cst_97 = arith.constant dense<0.000000e+00> : vector<16x100xf32>
    %105 = tpu.matmul %102, %104, %cst_97 {dimension_numbers = #tpu.dot_dimension_numbers<[1], [0], [0], [1], [0, 0, 1, 1], [], []>} : vector<16x200xf32>, vector<200x100xf32>, vector<16x100xf32> -> vector<16x100xf32>
    %106 = vector.extract_strided_slice %101 {offsets = [1, 0], sizes = [16, 200], strides = [1, 1]} : vector<20x200xf32> to vector<16x200xf32>
    %c0_98 = arith.constant 0 : index
    %c1_99 = arith.constant 1 : index
    %c0_100 = arith.constant 0 : index
    %c0_101 = arith.constant 0 : index
    %107 = vector.load %arg5[%c0_98, %c1_99, %c0_100, %c0_101] : memref<3x5x200x100xf32, #tpu.memory_space<vmem>>, vector<1x1x200x100xf32>
    %108 = vector.shape_cast %107 : vector<1x1x200x100xf32> to vector<200x100xf32>
    %cst_102 = arith.constant dense<0.000000e+00> : vector<16x100xf32>
    %109 = tpu.matmul %106, %108, %cst_102 {dimension_numbers = #tpu.dot_dimension_numbers<[1], [0], [0], [1], [0, 0, 1, 1], [], []>} : vector<16x200xf32>, vector<200x100xf32>, vector<16x100xf32> -> vector<16x100xf32>
    %110 = arith.addf %105, %109 : vector<16x100xf32>
    %111 = vector.extract_strided_slice %101 {offsets = [2, 0], sizes = [16, 200], strides = [1, 1]} : vector<20x200xf32> to vector<16x200xf32>
    %c0_103 = arith.constant 0 : index
    %c2_104 = arith.constant 2 : index
    %c0_105 = arith.constant 0 : index
    %c0_106 = arith.constant 0 : index
    %112 = vector.load %arg5[%c0_103, %c2_104, %c0_105, %c0_106] : memref<3x5x200x100xf32, #tpu.memory_space<vmem>>, vector<1x1x200x100xf32>
    %113 = vector.shape_cast %112 : vector<1x1x200x100xf32> to vector<200x100xf32>
    %cst_107 = arith.constant dense<0.000000e+00> : vector<16x100xf32>
    %114 = tpu.matmul %111, %113, %cst_107 {dimension_numbers = #tpu.dot_dimension_numbers<[1], [0], [0], [1], [0, 0, 1, 1], [], []>} : vector<16x200xf32>, vector<200x100xf32>, vector<16x100xf32> -> vector<16x100xf32>
    %115 = arith.addf %110, %114 : vector<16x100xf32>
    %116 = vector.extract_strided_slice %101 {offsets = [3, 0], sizes = [16, 200], strides = [1, 1]} : vector<20x200xf32> to vector<16x200xf32>
    %c0_108 = arith.constant 0 : index
    %c3_109 = arith.constant 3 : index
    %c0_110 = arith.constant 0 : index
    %c0_111 = arith.constant 0 : index
    %117 = vector.load %arg5[%c0_108, %c3_109, %c0_110, %c0_111] : memref<3x5x200x100xf32, #tpu.memory_space<vmem>>, vector<1x1x200x100xf32>
    %118 = vector.shape_cast %117 : vector<1x1x200x100xf32> to vector<200x100xf32>
    %cst_112 = arith.constant dense<0.000000e+00> : vector<16x100xf32>
    %119 = tpu.matmul %116, %118, %cst_112 {dimension_numbers = #tpu.dot_dimension_numbers<[1], [0], [0], [1], [0, 0, 1, 1], [], []>} : vector<16x200xf32>, vector<200x100xf32>, vector<16x100xf32> -> vector<16x100xf32>
    %120 = arith.addf %115, %119 : vector<16x100xf32>
    %121 = vector.extract_strided_slice %101 {offsets = [4, 0], sizes = [16, 200], strides = [1, 1]} : vector<20x200xf32> to vector<16x200xf32>
    %c0_113 = arith.constant 0 : index
    %c4_114 = arith.constant 4 : index
    %c0_115 = arith.constant 0 : index
    %c0_116 = arith.constant 0 : index
    %122 = vector.load %arg5[%c0_113, %c4_114, %c0_115, %c0_116] : memref<3x5x200x100xf32, #tpu.memory_space<vmem>>, vector<1x1x200x100xf32>
    %123 = vector.shape_cast %122 : vector<1x1x200x100xf32> to vector<200x100xf32>
    %cst_117 = arith.constant dense<0.000000e+00> : vector<16x100xf32>
    %124 = tpu.matmul %121, %123, %cst_117 {dimension_numbers = #tpu.dot_dimension_numbers<[1], [0], [0], [1], [0, 0, 1, 1], [], []>} : vector<16x200xf32>, vector<200x100xf32>, vector<16x100xf32> -> vector<16x100xf32>
    %125 = arith.addf %120, %124 : vector<16x100xf32>
    %126 = vector.extract_strided_slice %101 {offsets = [0, 0], sizes = [16, 200], strides = [1, 1]} : vector<20x200xf32> to vector<16x200xf32>
    %c1_118 = arith.constant 1 : index
    %c0_119 = arith.constant 0 : index
    %c0_120 = arith.constant 0 : index
    %c0_121 = arith.constant 0 : index
    %127 = vector.load %arg5[%c1_118, %c0_119, %c0_120, %c0_121] : memref<3x5x200x100xf32, #tpu.memory_space<vmem>>, vector<1x1x200x100xf32>
    %128 = vector.shape_cast %127 : vector<1x1x200x100xf32> to vector<200x100xf32>
    %cst_122 = arith.constant dense<0.000000e+00> : vector<16x100xf32>
    %129 = tpu.matmul %126, %128, %cst_122 {dimension_numbers = #tpu.dot_dimension_numbers<[1], [0], [0], [1], [0, 0, 1, 1], [], []>} : vector<16x200xf32>, vector<200x100xf32>, vector<16x100xf32> -> vector<16x100xf32>
    %130 = vector.extract_strided_slice %101 {offsets = [1, 0], sizes = [16, 200], strides = [1, 1]} : vector<20x200xf32> to vector<16x200xf32>
    %c1_123 = arith.constant 1 : index
    %c1_124 = arith.constant 1 : index
    %c0_125 = arith.constant 0 : index
    %c0_126 = arith.constant 0 : index
    %131 = vector.load %arg5[%c1_123, %c1_124, %c0_125, %c0_126] : memref<3x5x200x100xf32, #tpu.memory_space<vmem>>, vector<1x1x200x100xf32>
    %132 = vector.shape_cast %131 : vector<1x1x200x100xf32> to vector<200x100xf32>
    %cst_127 = arith.constant dense<0.000000e+00> : vector<16x100xf32>
    %133 = tpu.matmul %130, %132, %cst_127 {dimension_numbers = #tpu.dot_dimension_numbers<[1], [0], [0], [1], [0, 0, 1, 1], [], []>} : vector<16x200xf32>, vector<200x100xf32>, vector<16x100xf32> -> vector<16x100xf32>
    %134 = arith.addf %129, %133 : vector<16x100xf32>
    %135 = vector.extract_strided_slice %101 {offsets = [2, 0], sizes = [16, 200], strides = [1, 1]} : vector<20x200xf32> to vector<16x200xf32>
    %c1_128 = arith.constant 1 : index
    %c2_129 = arith.constant 2 : index
    %c0_130 = arith.constant 0 : index
    %c0_131 = arith.constant 0 : index
    %136 = vector.load %arg5[%c1_128, %c2_129, %c0_130, %c0_131] : memref<3x5x200x100xf32, #tpu.memory_space<vmem>>, vector<1x1x200x100xf32>
    %137 = vector.shape_cast %136 : vector<1x1x200x100xf32> to vector<200x100xf32>
    %cst_132 = arith.constant dense<0.000000e+00> : vector<16x100xf32>
    %138 = tpu.matmul %135, %137, %cst_132 {dimension_numbers = #tpu.dot_dimension_numbers<[1], [0], [0], [1], [0, 0, 1, 1], [], []>} : vector<16x200xf32>, vector<200x100xf32>, vector<16x100xf32> -> vector<16x100xf32>
    %139 = arith.addf %134, %138 : vector<16x100xf32>
    %140 = vector.extract_strided_slice %101 {offsets = [3, 0], sizes = [16, 200], strides = [1, 1]} : vector<20x200xf32> to vector<16x200xf32>
    %c1_133 = arith.constant 1 : index
    %c3_134 = arith.constant 3 : index
    %c0_135 = arith.constant 0 : index
    %c0_136 = arith.constant 0 : index
    %141 = vector.load %arg5[%c1_133, %c3_134, %c0_135, %c0_136] : memref<3x5x200x100xf32, #tpu.memory_space<vmem>>, vector<1x1x200x100xf32>
    %142 = vector.shape_cast %141 : vector<1x1x200x100xf32> to vector<200x100xf32>
    %cst_137 = arith.constant dense<0.000000e+00> : vector<16x100xf32>
    %143 = tpu.matmul %140, %142, %cst_137 {dimension_numbers = #tpu.dot_dimension_numbers<[1], [0], [0], [1], [0, 0, 1, 1], [], []>} : vector<16x200xf32>, vector<200x100xf32>, vector<16x100xf32> -> vector<16x100xf32>
    %144 = arith.addf %139, %143 : vector<16x100xf32>
    %145 = vector.extract_strided_slice %101 {offsets = [4, 0], sizes = [16, 200], strides = [1, 1]} : vector<20x200xf32> to vector<16x200xf32>
    %c1_138 = arith.constant 1 : index
    %c4_139 = arith.constant 4 : index
    %c0_140 = arith.constant 0 : index
    %c0_141 = arith.constant 0 : index
    %146 = vector.load %arg5[%c1_138, %c4_139, %c0_140, %c0_141] : memref<3x5x200x100xf32, #tpu.memory_space<vmem>>, vector<1x1x200x100xf32>
    %147 = vector.shape_cast %146 : vector<1x1x200x100xf32> to vector<200x100xf32>
    %cst_142 = arith.constant dense<0.000000e+00> : vector<16x100xf32>
    %148 = tpu.matmul %145, %147, %cst_142 {dimension_numbers = #tpu.dot_dimension_numbers<[1], [0], [0], [1], [0, 0, 1, 1], [], []>} : vector<16x200xf32>, vector<200x100xf32>, vector<16x100xf32> -> vector<16x100xf32>
    %149 = arith.addf %144, %148 : vector<16x100xf32>
    %150 = vector.extract_strided_slice %101 {offsets = [0, 0], sizes = [16, 200], strides = [1, 1]} : vector<20x200xf32> to vector<16x200xf32>
    %c2_143 = arith.constant 2 : index
    %c0_144 = arith.constant 0 : index
    %c0_145 = arith.constant 0 : index
    %c0_146 = arith.constant 0 : index
    %151 = vector.load %arg5[%c2_143, %c0_144, %c0_145, %c0_146] : memref<3x5x200x100xf32, #tpu.memory_space<vmem>>, vector<1x1x200x100xf32>
    %152 = vector.shape_cast %151 : vector<1x1x200x100xf32> to vector<200x100xf32>
    %cst_147 = arith.constant dense<0.000000e+00> : vector<16x100xf32>
    %153 = tpu.matmul %150, %152, %cst_147 {dimension_numbers = #tpu.dot_dimension_numbers<[1], [0], [0], [1], [0, 0, 1, 1], [], []>} : vector<16x200xf32>, vector<200x100xf32>, vector<16x100xf32> -> vector<16x100xf32>
    %154 = vector.extract_strided_slice %101 {offsets = [1, 0], sizes = [16, 200], strides = [1, 1]} : vector<20x200xf32> to vector<16x200xf32>
    %c2_148 = arith.constant 2 : index
    %c1_149 = arith.constant 1 : index
    %c0_150 = arith.constant 0 : index
    %c0_151 = arith.constant 0 : index
    %155 = vector.load %arg5[%c2_148, %c1_149, %c0_150, %c0_151] : memref<3x5x200x100xf32, #tpu.memory_space<vmem>>, vector<1x1x200x100xf32>
    %156 = vector.shape_cast %155 : vector<1x1x200x100xf32> to vector<200x100xf32>
    %cst_152 = arith.constant dense<0.000000e+00> : vector<16x100xf32>
    %157 = tpu.matmul %154, %156, %cst_152 {dimension_numbers = #tpu.dot_dimension_numbers<[1], [0], [0], [1], [0, 0, 1, 1], [], []>} : vector<16x200xf32>, vector<200x100xf32>, vector<16x100xf32> -> vector<16x100xf32>
    %158 = arith.addf %153, %157 : vector<16x100xf32>
    %159 = vector.extract_strided_slice %101 {offsets = [2, 0], sizes = [16, 200], strides = [1, 1]} : vector<20x200xf32> to vector<16x200xf32>
    %c2_153 = arith.constant 2 : index
    %c2_154 = arith.constant 2 : index
    %c0_155 = arith.constant 0 : index
    %c0_156 = arith.constant 0 : index
    %160 = vector.load %arg5[%c2_153, %c2_154, %c0_155, %c0_156] : memref<3x5x200x100xf32, #tpu.memory_space<vmem>>, vector<1x1x200x100xf32>
    %161 = vector.shape_cast %160 : vector<1x1x200x100xf32> to vector<200x100xf32>
    %cst_157 = arith.constant dense<0.000000e+00> : vector<16x100xf32>
    %162 = tpu.matmul %159, %161, %cst_157 {dimension_numbers = #tpu.dot_dimension_numbers<[1], [0], [0], [1], [0, 0, 1, 1], [], []>} : vector<16x200xf32>, vector<200x100xf32>, vector<16x100xf32> -> vector<16x100xf32>
    %163 = arith.addf %158, %162 : vector<16x100xf32>
    %164 = vector.extract_strided_slice %101 {offsets = [3, 0], sizes = [16, 200], strides = [1, 1]} : vector<20x200xf32> to vector<16x200xf32>
    %c2_158 = arith.constant 2 : index
    %c3_159 = arith.constant 3 : index
    %c0_160 = arith.constant 0 : index
    %c0_161 = arith.constant 0 : index
    %165 = vector.load %arg5[%c2_158, %c3_159, %c0_160, %c0_161] : memref<3x5x200x100xf32, #tpu.memory_space<vmem>>, vector<1x1x200x100xf32>
    %166 = vector.shape_cast %165 : vector<1x1x200x100xf32> to vector<200x100xf32>
    %cst_162 = arith.constant dense<0.000000e+00> : vector<16x100xf32>
    %167 = tpu.matmul %164, %166, %cst_162 {dimension_numbers = #tpu.dot_dimension_numbers<[1], [0], [0], [1], [0, 0, 1, 1], [], []>} : vector<16x200xf32>, vector<200x100xf32>, vector<16x100xf32> -> vector<16x100xf32>
    %168 = arith.addf %163, %167 : vector<16x100xf32>
    %169 = vector.extract_strided_slice %101 {offsets = [4, 0], sizes = [16, 200], strides = [1, 1]} : vector<20x200xf32> to vector<16x200xf32>
    %c2_163 = arith.constant 2 : index
    %c4_164 = arith.constant 4 : index
    %c0_165 = arith.constant 0 : index
    %c0_166 = arith.constant 0 : index
    %170 = vector.load %arg5[%c2_163, %c4_164, %c0_165, %c0_166] : memref<3x5x200x100xf32, #tpu.memory_space<vmem>>, vector<1x1x200x100xf32>
    %171 = vector.shape_cast %170 : vector<1x1x200x100xf32> to vector<200x100xf32>
    %cst_167 = arith.constant dense<0.000000e+00> : vector<16x100xf32>
    %172 = tpu.matmul %169, %171, %cst_167 {dimension_numbers = #tpu.dot_dimension_numbers<[1], [0], [0], [1], [0, 0, 1, 1], [], []>} : vector<16x200xf32>, vector<200x100xf32>, vector<16x100xf32> -> vector<16x100xf32>
    %173 = arith.addf %168, %172 : vector<16x100xf32>
    %c0_168 = arith.constant 0 : index
    %c0_169 = arith.constant 0 : index
    %c0_170 = arith.constant 0 : index
    %174 = vector.load %arg6[%c0_168, %c0_169, %c0_170] : memref<3x5x16xf32, #tpu.memory_space<vmem>>, vector<1x5x16xf32>
    %175 = vector.shape_cast %174 : vector<1x5x16xf32> to vector<5x16xf32>
    %cst_171 = arith.constant dense<0.000000e+00> : vector<5x100xf32>
    %176 = tpu.matmul %175, %125, %cst_171 {dimension_numbers = #tpu.dot_dimension_numbers<[1], [0], [0], [1], [0, 0, 1, 1], [], []>} : vector<5x16xf32>, vector<16x100xf32>, vector<5x100xf32> -> vector<5x100xf32>
    %cst_172 = arith.constant dense<0.000000e+00> : vector<5x100xf32>
    %177 = tpu.matmul %175, %149, %cst_172 {dimension_numbers = #tpu.dot_dimension_numbers<[1], [0], [0], [1], [0, 0, 1, 1], [], []>} : vector<5x16xf32>, vector<16x100xf32>, vector<5x100xf32> -> vector<5x100xf32>
    %178 = arith.maximumf %176, %177 : vector<5x100xf32>
    %cst_173 = arith.constant dense<0.000000e+00> : vector<5x100xf32>
    %179 = tpu.matmul %175, %173, %cst_173 {dimension_numbers = #tpu.dot_dimension_numbers<[1], [0], [0], [1], [0, 0, 1, 1], [], []>} : vector<5x16xf32>, vector<16x100xf32>, vector<5x100xf32> -> vector<5x100xf32>
    %180 = arith.maximumf %178, %179 : vector<5x100xf32>
    %c1_174 = arith.constant 1 : index
    %c0_175 = arith.constant 0 : index
    %c0_176 = arith.constant 0 : index
    %181 = vector.load %arg6[%c1_174, %c0_175, %c0_176] : memref<3x5x16xf32, #tpu.memory_space<vmem>>, vector<1x5x16xf32>
    %182 = vector.shape_cast %181 : vector<1x5x16xf32> to vector<5x16xf32>
    %cst_177 = arith.constant dense<0.000000e+00> : vector<5x100xf32>
    %183 = tpu.matmul %182, %125, %cst_177 {dimension_numbers = #tpu.dot_dimension_numbers<[1], [0], [0], [1], [0, 0, 1, 1], [], []>} : vector<5x16xf32>, vector<16x100xf32>, vector<5x100xf32> -> vector<5x100xf32>
    %184 = arith.maximumf %180, %183 : vector<5x100xf32>
    %cst_178 = arith.constant dense<0.000000e+00> : vector<5x100xf32>
    %185 = tpu.matmul %182, %149, %cst_178 {dimension_numbers = #tpu.dot_dimension_numbers<[1], [0], [0], [1], [0, 0, 1, 1], [], []>} : vector<5x16xf32>, vector<16x100xf32>, vector<5x100xf32> -> vector<5x100xf32>
    %186 = arith.maximumf %184, %185 : vector<5x100xf32>
    %cst_179 = arith.constant dense<0.000000e+00> : vector<5x100xf32>
    %187 = tpu.matmul %182, %173, %cst_179 {dimension_numbers = #tpu.dot_dimension_numbers<[1], [0], [0], [1], [0, 0, 1, 1], [], []>} : vector<5x16xf32>, vector<16x100xf32>, vector<5x100xf32> -> vector<5x100xf32>
    %188 = arith.maximumf %186, %187 : vector<5x100xf32>
    %c2_180 = arith.constant 2 : index
    %c0_181 = arith.constant 0 : index
    %c0_182 = arith.constant 0 : index
    %189 = vector.load %arg6[%c2_180, %c0_181, %c0_182] : memref<3x5x16xf32, #tpu.memory_space<vmem>>, vector<1x5x16xf32>
    %190 = vector.shape_cast %189 : vector<1x5x16xf32> to vector<5x16xf32>
    %cst_183 = arith.constant dense<0.000000e+00> : vector<5x100xf32>
    %191 = tpu.matmul %190, %125, %cst_183 {dimension_numbers = #tpu.dot_dimension_numbers<[1], [0], [0], [1], [0, 0, 1, 1], [], []>} : vector<5x16xf32>, vector<16x100xf32>, vector<5x100xf32> -> vector<5x100xf32>
    %192 = arith.maximumf %188, %191 : vector<5x100xf32>
    %cst_184 = arith.constant dense<0.000000e+00> : vector<5x100xf32>
    %193 = tpu.matmul %190, %149, %cst_184 {dimension_numbers = #tpu.dot_dimension_numbers<[1], [0], [0], [1], [0, 0, 1, 1], [], []>} : vector<5x16xf32>, vector<16x100xf32>, vector<5x100xf32> -> vector<5x100xf32>
    %194 = arith.maximumf %192, %193 : vector<5x100xf32>
    %cst_185 = arith.constant dense<0.000000e+00> : vector<5x100xf32>
    %195 = tpu.matmul %190, %173, %cst_185 {dimension_numbers = #tpu.dot_dimension_numbers<[1], [0], [0], [1], [0, 0, 1, 1], [], []>} : vector<5x16xf32>, vector<16x100xf32>, vector<5x100xf32> -> vector<5x100xf32>
    %196 = arith.maximumf %194, %195 : vector<5x100xf32>
    %c0_186 = arith.constant 0 : index
    %c0_187 = arith.constant 0 : index
    %197 = vector.load %arg7[%c0_186, %c0_187] : memref<1x100xf32, #tpu.memory_space<vmem>>, vector<1x100xf32>
    %198 = vector.broadcast %197 : vector<1x100xf32> to vector<5x100xf32>
    %199 = arith.addf %196, %198 : vector<5x100xf32>
    %cst_188 = arith.constant 0.000000e+00 : f32
    %200 = vector.broadcast %cst_188 : f32 to vector<5x100xf32>
    %201 = arith.maximumf %199, %200 : vector<5x100xf32>
    %202 = vector.extract_strided_slice %201 {offsets = [0, 0], sizes = [1, 100], strides = [1, 1]} : vector<5x100xf32> to vector<1x100xf32>
    %c0_189 = arith.constant 0 : index
    %c0_190 = arith.constant 0 : index
    %c0_191 = arith.constant 0 : index
    %203 = vector.load %arg8[%c0_189, %c0_190, %c0_191] : memref<5x100x100xf32, #tpu.memory_space<vmem>>, vector<1x100x100xf32>
    %204 = vector.shape_cast %203 : vector<1x100x100xf32> to vector<100x100xf32>
    %cst_192 = arith.constant dense<0.000000e+00> : vector<1x100xf32>
    %205 = tpu.matmul %202, %204, %cst_192 {dimension_numbers = #tpu.dot_dimension_numbers<[1], [0], [0], [1], [0, 0, 1, 1], [], []>} : vector<1x100xf32>, vector<100x100xf32>, vector<1x100xf32> -> vector<1x100xf32>
    %206 = vector.extract_strided_slice %201 {offsets = [1, 0], sizes = [1, 100], strides = [1, 1]} : vector<5x100xf32> to vector<1x100xf32>
    %c1_193 = arith.constant 1 : index
    %c0_194 = arith.constant 0 : index
    %c0_195 = arith.constant 0 : index
    %207 = vector.load %arg8[%c1_193, %c0_194, %c0_195] : memref<5x100x100xf32, #tpu.memory_space<vmem>>, vector<1x100x100xf32>
    %208 = vector.shape_cast %207 : vector<1x100x100xf32> to vector<100x100xf32>
    %cst_196 = arith.constant dense<0.000000e+00> : vector<1x100xf32>
    %209 = tpu.matmul %206, %208, %cst_196 {dimension_numbers = #tpu.dot_dimension_numbers<[1], [0], [0], [1], [0, 0, 1, 1], [], []>} : vector<1x100xf32>, vector<100x100xf32>, vector<1x100xf32> -> vector<1x100xf32>
    %210 = arith.addf %205, %209 : vector<1x100xf32>
    %211 = vector.extract_strided_slice %201 {offsets = [2, 0], sizes = [1, 100], strides = [1, 1]} : vector<5x100xf32> to vector<1x100xf32>
    %c2_197 = arith.constant 2 : index
    %c0_198 = arith.constant 0 : index
    %c0_199 = arith.constant 0 : index
    %212 = vector.load %arg8[%c2_197, %c0_198, %c0_199] : memref<5x100x100xf32, #tpu.memory_space<vmem>>, vector<1x100x100xf32>
    %213 = vector.shape_cast %212 : vector<1x100x100xf32> to vector<100x100xf32>
    %cst_200 = arith.constant dense<0.000000e+00> : vector<1x100xf32>
    %214 = tpu.matmul %211, %213, %cst_200 {dimension_numbers = #tpu.dot_dimension_numbers<[1], [0], [0], [1], [0, 0, 1, 1], [], []>} : vector<1x100xf32>, vector<100x100xf32>, vector<1x100xf32> -> vector<1x100xf32>
    %215 = arith.addf %210, %214 : vector<1x100xf32>
    %216 = vector.extract_strided_slice %201 {offsets = [3, 0], sizes = [1, 100], strides = [1, 1]} : vector<5x100xf32> to vector<1x100xf32>
    %c3_201 = arith.constant 3 : index
    %c0_202 = arith.constant 0 : index
    %c0_203 = arith.constant 0 : index
    %217 = vector.load %arg8[%c3_201, %c0_202, %c0_203] : memref<5x100x100xf32, #tpu.memory_space<vmem>>, vector<1x100x100xf32>
    %218 = vector.shape_cast %217 : vector<1x100x100xf32> to vector<100x100xf32>
    %cst_204 = arith.constant dense<0.000000e+00> : vector<1x100xf32>
    %219 = tpu.matmul %216, %218, %cst_204 {dimension_numbers = #tpu.dot_dimension_numbers<[1], [0], [0], [1], [0, 0, 1, 1], [], []>} : vector<1x100xf32>, vector<100x100xf32>, vector<1x100xf32> -> vector<1x100xf32>
    %220 = arith.addf %215, %219 : vector<1x100xf32>
    %221 = vector.extract_strided_slice %201 {offsets = [4, 0], sizes = [1, 100], strides = [1, 1]} : vector<5x100xf32> to vector<1x100xf32>
    %c4_205 = arith.constant 4 : index
    %c0_206 = arith.constant 0 : index
    %c0_207 = arith.constant 0 : index
    %222 = vector.load %arg8[%c4_205, %c0_206, %c0_207] : memref<5x100x100xf32, #tpu.memory_space<vmem>>, vector<1x100x100xf32>
    %223 = vector.shape_cast %222 : vector<1x100x100xf32> to vector<100x100xf32>
    %cst_208 = arith.constant dense<0.000000e+00> : vector<1x100xf32>
    %224 = tpu.matmul %221, %223, %cst_208 {dimension_numbers = #tpu.dot_dimension_numbers<[1], [0], [0], [1], [0, 0, 1, 1], [], []>} : vector<1x100xf32>, vector<100x100xf32>, vector<1x100xf32> -> vector<1x100xf32>
    %225 = arith.addf %220, %224 : vector<1x100xf32>
    %c0_209 = arith.constant 0 : index
    %c0_210 = arith.constant 0 : index
    %226 = vector.load %arg9[%c0_209, %c0_210] : memref<1x100xf32, #tpu.memory_space<vmem>>, vector<1x100xf32>
    %227 = arith.addf %225, %226 : vector<1x100xf32>
    %c0_211 = arith.constant 0 : index
    %c0_212 = arith.constant 0 : index
    %228 = vector.load %arg10[%c0_211, %c0_212] : memref<100x15xf32, #tpu.memory_space<vmem>>, vector<100x15xf32>
    %cst_213 = arith.constant dense<0.000000e+00> : vector<1x15xf32>
    %229 = tpu.matmul %227, %228, %cst_213 {dimension_numbers = #tpu.dot_dimension_numbers<[1], [0], [0], [1], [0, 0, 1, 1], [], []>} : vector<1x100xf32>, vector<100x15xf32>, vector<1x15xf32> -> vector<1x15xf32>
    %c0_214 = arith.constant 0 : index
    %c0_215 = arith.constant 0 : index
    %230 = vector.load %arg11[%c0_214, %c0_215] : memref<1x15xf32, #tpu.memory_space<vmem>>, vector<1x15xf32>
    %231 = arith.addf %229, %230 : vector<1x15xf32>
    %c0_216 = arith.constant 0 : index
    %c0_217 = arith.constant 0 : index
    %c0_218 = arith.constant 0 : index
    %232 = vector.load %arg12[%c0_216, %c0_217, %c0_218] : memref<1x1x15xf32, #tpu.memory_space<vmem>>, vector<1x1x15xf32>
    %233 = vector.shape_cast %232 : vector<1x1x15xf32> to vector<1x15xf32>
    %234 = vector.shape_cast %231 : vector<1x15xf32> to vector<1x1x15xf32>
    tpu.vector_store %arg12[%c0_216, %c0_217, %c0_218], %234 {strides = array<i32>} : memref<1x1x15xf32, #tpu.memory_space<vmem>>, vector<1x1x15xf32>,
    return
  }
  func.func @transform_0(%arg0: i32) -> (i32, i32, i32) {
    %c0_i32 = arith.constant 0 : i32
    %c0_i32_0 = arith.constant 0 : i32
    %c0_i32_1 = arith.constant 0 : i32
    return %arg0, %c0_i32, %c0_i32_0 : i32, i32, i32
  }
  func.func @transform_1(%arg0: i32) -> (i32, i32, i32, i32) {
    %c0_i32 = arith.constant 0 : i32
    %c0_i32_0 = arith.constant 0 : i32
    %c0_i32_1 = arith.constant 0 : i32
    %c0_i32_2 = arith.constant 0 : i32
    %c0_i32_3 = arith.constant 0 : i32
    return %c0_i32, %c0_i32_0, %c0_i32_1, %c0_i32_2 : i32, i32, i32, i32
  }
  func.func @transform_2(%arg0: i32) -> (i32, i32, i32) {
    %c0_i32 = arith.constant 0 : i32
    %c0_i32_0 = arith.constant 0 : i32
    %c0_i32_1 = arith.constant 0 : i32
    %c0_i32_2 = arith.constant 0 : i32
    return %c0_i32, %c0_i32_0, %c0_i32_1 : i32, i32, i32
  }
  func.func @transform_3(%arg0: i32) -> (i32, i32) {
    %c0_i32 = arith.constant 0 : i32
    %c0_i32_0 = arith.constant 0 : i32
    %c0_i32_1 = arith.constant 0 : i32
    return %c0_i32, %c0_i32_0 : i32, i32
  }
  func.func @transform_4(%arg0: i32) -> (i32, i32, i32, i32) {
    %c0_i32 = arith.constant 0 : i32
    %c0_i32_0 = arith.constant 0 : i32
    %c0_i32_1 = arith.constant 0 : i32
    %c0_i32_2 = arith.constant 0 : i32
    %c0_i32_3 = arith.constant 0 : i32
    return %c0_i32, %c0_i32_0, %c0_i32_1, %c0_i32_2 : i32, i32, i32, i32
  }
  func.func @transform_5(%arg0: i32) -> (i32, i32, i32) {
    %c0_i32 = arith.constant 0 : i32
    %c0_i32_0 = arith.constant 0 : i32
    %c0_i32_1 = arith.constant 0 : i32
    %c0_i32_2 = arith.constant 0 : i32
    return %c0_i32, %c0_i32_0, %c0_i32_1 : i32, i32, i32
  }
  func.func @transform_6(%arg0: i32) -> (i32, i32) {
    %c0_i32 = arith.constant 0 : i32
    %c0_i32_0 = arith.constant 0 : i32
    %c0_i32_1 = arith.constant 0 : i32
    return %c0_i32, %c0_i32_0 : i32, i32
  }
  func.func @transform_7(%arg0: i32) -> (i32, i32, i32) {
    %c0_i32 = arith.constant 0 : i32
    %c0_i32_0 = arith.constant 0 : i32
    %c0_i32_1 = arith.constant 0 : i32
    %c0_i32_2 = arith.constant 0 : i32
    return %c0_i32, %c0_i32_0, %c0_i32_1 : i32, i32, i32
  }
  func.func @transform_8(%arg0: i32) -> (i32, i32) {
    %c0_i32 = arith.constant 0 : i32
    %c0_i32_0 = arith.constant 0 : i32
    %c0_i32_1 = arith.constant 0 : i32
    return %c0_i32, %c0_i32_0 : i32, i32
  }
  func.func @transform_9(%arg0: i32) -> (i32, i32) {
    %c0_i32 = arith.constant 0 : i32
    %c0_i32_0 = arith.constant 0 : i32
    %c0_i32_1 = arith.constant 0 : i32
    return %c0_i32, %c0_i32_0 : i32, i32
  }
  func.func @transform_10(%arg0: i32) -> (i32, i32) {
    %c0_i32 = arith.constant 0 : i32
    %c0_i32_0 = arith.constant 0 : i32
    %c0_i32_1 = arith.constant 0 : i32
    return %c0_i32, %c0_i32_0 : i32, i32
  }
  func.func @transform_11(%arg0: i32) -> (i32, i32, i32) {
    %c0_i32 = arith.constant 0 : i32
    %c0_i32_0 = arith.constant 0 : i32
    %c0_i32_1 = arith.constant 0 : i32
    return %arg0, %c0_i32, %c0_i32_0 : i32, i32, i32
  }
}

</mosaic_0001>

<llo_original>
// kernel: simple_net_forward.1
$region0: #{simple_net_forward.1}
  #allocation0 [shape = 'u32[]', space=smem, size = 0x4, offset = 0x4, fixed_abs, tag = 'smem constant byte address 0x4 - core index']
  #allocation1 [shape = 'u32[144,128]{1,0:T(1,128)}', space=vmem, size = 0x12000, scoped, tag = 'internal scratch']
  %s0 = inlined_call_operand.hbm [shape: f32[2,64,64], index: 0, kind: input, shape index: {}]
  %s1 = inlined_call_operand.hbm [shape: f32[3,5,64,200], index: 1, kind: input, shape index: {}]
  %s2 = inlined_call_operand.hbm [shape: f32[3,20,60], index: 2, kind: input, shape index: {}]
  %s3 = inlined_call_operand.hbm [shape: f32[1,200], index: 3, kind: input, shape index: {}]
  %s4 = inlined_call_operand.hbm [shape: f32[3,5,200,100], index: 4, kind: input, shape index: {}]
  %s5 = inlined_call_operand.vmem [shape: f32[3,5,16], index: 5, kind: input, shape index: {}]
  %s6 = inlined_call_operand.hbm [shape: f32[1,100], index: 6, kind: input, shape index: {}]
  %s7 = inlined_call_operand.hbm [shape: f32[5,100,100], index: 7, kind: input, shape index: {}]
  %s8 = inlined_call_operand.hbm [shape: f32[1,100], index: 8, kind: input, shape index: {}]
  %s9 = inlined_call_operand.vmem [shape: f32[100,15], index: 9, kind: input, shape index: {}]
  %s10 = inlined_call_operand.hbm [shape: f32[1,15], index: 10, kind: input, shape index: {}]
  %s11 = inlined_call_operand.hbm [shape: f32[2,1,15], index: 11, kind: output, shape index: {}]
  %s12 = sld [smem:[#allocation0]]
  $region113: #{simple_net_forward.1} parent=0
    _
  %s14 = ssub.s32 1, %s12
  %s15 = scalar_select 0, %s14, %s12
  $region1: #{simple_net_forward.1} parent=0
    #allocation2 [shape = 'u8[65536]{0}', space=vmem, size = 0x10000, scoped, tag = 'input window, operand 0']
    #allocation3 [shape = 's32[2]{0}', space=sflag, size = 0x8, scoped, tag = 'scoped memory for simple_net_forward.1']
    #allocation4 [shape = 's32[2]{0}', space=sflag, size = 0x8, scoped, tag = 'scoped memory for simple_net_forward.1']
    #allocation5 [shape = 'u8[983040]{0}', space=vmem, size = 0xf0000, scoped, tag = 'input window, operand 1, single buffered']
    #allocation6 [shape = 's32[1]{0}', space=sflag, size = 0x4, scoped, tag = 'scoped memory for simple_net_forward.1']
    #allocation7 [shape = 'u8[36864]{0}', space=vmem, size = 0x9000, scoped, tag = 'input window, operand 2, single buffered']
    #allocation8 [shape = 'u8[1024]{0}', space=vmem, size = 0x400, scoped, tag = 'input window, operand 3, single buffered']
    #allocation9 [shape = 's32[1]{0}', space=sflag, size = 0x4, scoped, tag = 'scoped memory for simple_net_forward.1']
    #allocation10 [shape = 'u8[1536000]{0}', space=vmem, size = 0x177000, scoped, tag = 'input window, operand 4, single buffered']
    #allocation11 [shape = 'u8[512]{0}', space=vmem, size = 0x400, scoped, tag = 'input window, operand 6, single buffered']
    #allocation12 [shape = 's32[1]{0}', space=sflag, size = 0x4, scoped, tag = 'scoped memory for simple_net_forward.1']
    #allocation13 [shape = 'u8[266240]{0}', space=vmem, size = 0x41000, scoped, tag = 'input window, operand 7, single buffered']
    #allocation14 [shape = 'u8[512]{0}', space=vmem, size = 0x400, scoped, tag = 'input window, operand 8, single buffered']
    #allocation15 [shape = 's32[1]{0}', space=sflag, size = 0x4, scoped, tag = 'scoped memory for simple_net_forward.1']
    #allocation16 [shape = 'u8[512]{0}', space=vmem, size = 0x400, scoped, tag = 'input window, operand 10, single buffered']
    #allocation17 [shape = 'u8[1024]{0}', space=vmem, size = 0x400, scoped, tag = 'output window, operand 0']
    %16 = vsyncpa [#allocation3], 0
    %s17 = scalar_lea.sflag [#allocation3], 1
    %18 = vsyncpa %s17, 0
    %19 = vsyncpa [#allocation6], 0
    %20 = vsyncpa [#allocation9], 0
    %21 = vsyncpa [#allocation12], 0
    %22 = vsyncpa [#allocation15], 0
    %23 = vsyncpa [#allocation4], 0
    %s24 = scalar_lea.sflag [#allocation4], 1
    %25 = vsyncpa %s24, 0
    loop: start=0, step=1, limit=4
    $region2: #{simple_net_forward.1} parent=1 // loop_pre_header
      _
    $region3: #{simple_net_forward.1} parent=1 // loop_header
      %s27 = sphi 0, %s31
      %p28 = scmp.ge.s32.totalorder %s27, 4
      %s37 = sphi 0, %s39
      %s40 = sphi 0, %s37
      %s41 = sphi 0, %s40
      %s57 = sphi 0, %s41
      %s61 = sphi 0, %s61
      %s63 = sphi 0, %s61
      %s64 = sphi 0, %s63
      %s78 = sphi 0, %s64
      %s82 = sphi 0, %s82
      %s84 = sphi 0, %s82
      %s85 = sphi 0, %s84
      %s99 = sphi 0, %s85
      %s103 = sphi 0, %s103
      %s105 = sphi 0, %s103
      %s106 = sphi 0, %s105
      %s120 = sphi 0, %s106
      %s124 = sphi 0, %s124
      %s126 = sphi 0, %s124
      %s127 = sphi 0, %s126
      %s141 = sphi 0, %s127
      %s145 = sphi 0, %s145
      %s147 = sphi 0, %s145
      %s148 = sphi 0, %s147
      %s162 = sphi 0, %s148
      %s166 = sphi 0, %s166
      %s168 = sphi 0, %s166
      %s169 = sphi 0, %s168
      %s183 = sphi 0, %s169
      %s187 = sphi 0, %s187
      %s189 = sphi 0, %s187
      %s190 = sphi 0, %s189
      %s204 = sphi 0, %s190
      %s208 = sphi 0, %s208
      %s210 = sphi 0, %s208
      %s211 = sphi 0, %s210
      %s225 = sphi 0, %s211
      %s229 = sphi 0, %s229
      %s231 = sphi 0, %s229
      %s232 = sphi 0, %s231
      %s246 = sphi 0, %s232
      %s250 = sphi 0, %s250
      %s252 = sphi 0, %s250
      %s253 = sphi 0, %s252
      %s267 = sphi 0, %s253
      %s273 = sphi 0, %s275
      %s276 = sphi 0, %s273
      %s277 = sphi 0, %s276
      %s293 = sphi 0, %s277
    $region4: #{simple_net_forward.1} parent=1 // loop_header_branch
      %30 = sbr.rel (%p28) target = $region8
    $region5: #{simple_net_forward.1} parent=1 // loop_body
      %s32 = ssub.s32 %s27, 1
      %s33 = ssub.s32 %s27, 2
      %s34 = sadd.s32 %s27, 1
      %s35 = ssub.s32 %s27, %s34
      %p36 = scmp.eq.s32.totalorder %s35, 0
      %s38 = sadd.s32 %s37, 1
      %s39 = scalar_select %p36, %s37, %s38
      %p42 = pneg %p36
      %p43 = scmp.eq.s32.totalorder %s27, 1
      %p44 = por %p42, %p43
      %p45 = scmp.ne.s32.totalorder %s37, %s40
      %p46 = scmp.eq.s32.totalorder %s27, 0
      %p47 = por %p45, %p46
      %p48 = scmp.ne.s32.totalorder %s37, %s40
      %p49 = scmp.eq.s32.totalorder %s32, 1
      %p50 = por %p48, %p49
      %p51 = scmp.ne.s32.totalorder %s40, %s41
      %p52 = scmp.eq.s32.totalorder %s32, 0
      %p53 = por %p51, %p52
      %p54 = scmp.ne.s32.totalorder %s40, %s41
      %p55 = scmp.eq.s32.totalorder %s33, 1
      %p56 = por %p54, %p55
      %p58 = scmp.ne.s32.totalorder %s41, %s57
      %p59 = scmp.eq.s32.totalorder %s33, 0
      %p60 = por %p58, %p59
      %s62 = sadd.s32 %s61, 1
      %p65 = scmp.eq.s32.totalorder %s27, 1
      %p66 = scmp.ne.s32.totalorder %s61, %s63
      %p67 = scmp.eq.s32.totalorder %s27, 0
      %p68 = por %p66, %p67
      %p69 = scmp.ne.s32.totalorder %s61, %s63
      %p70 = scmp.eq.s32.totalorder %s32, 1
      %p71 = por %p69, %p70
      %p72 = scmp.ne.s32.totalorder %s63, %s64
      %p73 = scmp.eq.s32.totalorder %s32, 0
      %p74 = por %p72, %p73
      %p75 = scmp.ne.s32.totalorder %s63, %s64
      %p76 = scmp.eq.s32.totalorder %s33, 1
      %p77 = por %p75, %p76
      %p79 = scmp.ne.s32.totalorder %s64, %s78
      %p80 = scmp.eq.s32.totalorder %s33, 0
      %p81 = por %p79, %p80
      %s83 = sadd.s32 %s82, 1
      %p86 = scmp.eq.s32.totalorder %s27, 1
      %p87 = scmp.ne.s32.totalorder %s82, %s84
      %p88 = scmp.eq.s32.totalorder %s27, 0
      %p89 = por %p87, %p88
      %p90 = scmp.ne.s32.totalorder %s82, %s84
      %p91 = scmp.eq.s32.totalorder %s32, 1
      %p92 = por %p90, %p91
      %p93 = scmp.ne.s32.totalorder %s84, %s85
      %p94 = scmp.eq.s32.totalorder %s32, 0
      %p95 = por %p93, %p94
      %p96 = scmp.ne.s32.totalorder %s84, %s85
      %p97 = scmp.eq.s32.totalorder %s33, 1
      %p98 = por %p96, %p97
      %p100 = scmp.ne.s32.totalorder %s85, %s99
      %p101 = scmp.eq.s32.totalorder %s33, 0
      %p102 = por %p100, %p101
      %s104 = sadd.s32 %s103, 1
      %p107 = scmp.eq.s32.totalorder %s27, 1
      %p108 = scmp.ne.s32.totalorder %s103, %s105
      %p109 = scmp.eq.s32.totalorder %s27, 0
      %p110 = por %p108, %p109
      %p111 = scmp.ne.s32.totalorder %s103, %s105
      %p112 = scmp.eq.s32.totalorder %s32, 1
      %p113 = por %p111, %p112
      %p114 = scmp.ne.s32.totalorder %s105, %s106
      %p115 = scmp.eq.s32.totalorder %s32, 0
      %p116 = por %p114, %p115
      %p117 = scmp.ne.s32.totalorder %s105, %s106
      %p118 = scmp.eq.s32.totalorder %s33, 1
      %p119 = por %p117, %p118
      %p121 = scmp.ne.s32.totalorder %s106, %s120
      %p122 = scmp.eq.s32.totalorder %s33, 0
      %p123 = por %p121, %p122
      %s125 = sadd.s32 %s124, 1
      %p128 = scmp.eq.s32.totalorder %s27, 1
      %p129 = scmp.ne.s32.totalorder %s124, %s126
      %p130 = scmp.eq.s32.totalorder %s27, 0
      %p131 = por %p129, %p130
      %p132 = scmp.ne.s32.totalorder %s124, %s126
      %p133 = scmp.eq.s32.totalorder %s32, 1
      %p134 = por %p132, %p133
      %p135 = scmp.ne.s32.totalorder %s126, %s127
      %p136 = scmp.eq.s32.totalorder %s32, 0
      %p137 = por %p135, %p136
      %p138 = scmp.ne.s32.totalorder %s126, %s127
      %p139 = scmp.eq.s32.totalorder %s33, 1
      %p140 = por %p138, %p139
      %p142 = scmp.ne.s32.totalorder %s127, %s141
      %p143 = scmp.eq.s32.totalorder %s33, 0
      %p144 = por %p142, %p143
      %s146 = sadd.s32 %s145, 1
      %p149 = scmp.eq.s32.totalorder %s27, 1
      %p150 = scmp.ne.s32.totalorder %s145, %s147
      %p151 = scmp.eq.s32.totalorder %s27, 0
      %p152 = por %p150, %p151
      %p153 = scmp.ne.s32.totalorder %s145, %s147
      %p154 = scmp.eq.s32.totalorder %s32, 1
      %p155 = por %p153, %p154
      %p156 = scmp.ne.s32.totalorder %s147, %s148
      %p157 = scmp.eq.s32.totalorder %s32, 0
      %p158 = por %p156, %p157
      %p159 = scmp.ne.s32.totalorder %s147, %s148
      %p160 = scmp.eq.s32.totalorder %s33, 1
      %p161 = por %p159, %p160
      %p163 = scmp.ne.s32.totalorder %s148, %s162
      %p164 = scmp.eq.s32.totalorder %s33, 0
      %p165 = por %p163, %p164
      %s167 = sadd.s32 %s166, 1
      %p170 = scmp.eq.s32.totalorder %s27, 1
      %p171 = scmp.ne.s32.totalorder %s166, %s168
      %p172 = scmp.eq.s32.totalorder %s27, 0
      %p173 = por %p171, %p172
      %p174 = scmp.ne.s32.totalorder %s166, %s168
      %p175 = scmp.eq.s32.totalorder %s32, 1
      %p176 = por %p174, %p175
      %p177 = scmp.ne.s32.totalorder %s168, %s169
      %p178 = scmp.eq.s32.totalorder %s32, 0
      %p179 = por %p177, %p178
      %p180 = scmp.ne.s32.totalorder %s168, %s169
      %p181 = scmp.eq.s32.totalorder %s33, 1
      %p182 = por %p180, %p181
      %p184 = scmp.ne.s32.totalorder %s169, %s183
      %p185 = scmp.eq.s32.totalorder %s33, 0
      %p186 = por %p184, %p185
      %s188 = sadd.s32 %s187, 1
      %p191 = scmp.eq.s32.totalorder %s27, 1
      %p192 = scmp.ne.s32.totalorder %s187, %s189
      %p193 = scmp.eq.s32.totalorder %s27, 0
      %p194 = por %p192, %p193
      %p195 = scmp.ne.s32.totalorder %s187, %s189
      %p196 = scmp.eq.s32.totalorder %s32, 1
      %p197 = por %p195, %p196
      %p198 = scmp.ne.s32.totalorder %s189, %s190
      %p199 = scmp.eq.s32.totalorder %s32, 0
      %p200 = por %p198, %p199
      %p201 = scmp.ne.s32.totalorder %s189, %s190
      %p202 = scmp.eq.s32.totalorder %s33, 1
      %p203 = por %p201, %p202
      %p205 = scmp.ne.s32.totalorder %s190, %s204
      %p206 = scmp.eq.s32.totalorder %s33, 0
      %p207 = por %p205, %p206
      %s209 = sadd.s32 %s208, 1
      %p212 = scmp.eq.s32.totalorder %s27, 1
      %p213 = scmp.ne.s32.totalorder %s208, %s210
      %p214 = scmp.eq.s32.totalorder %s27, 0
      %p215 = por %p213, %p214
      %p216 = scmp.ne.s32.totalorder %s208, %s210
      %p217 = scmp.eq.s32.totalorder %s32, 1
      %p218 = por %p216, %p217
      %p219 = scmp.ne.s32.totalorder %s210, %s211
      %p220 = scmp.eq.s32.totalorder %s32, 0
      %p221 = por %p219, %p220
      %p222 = scmp.ne.s32.totalorder %s210, %s211
      %p223 = scmp.eq.s32.totalorder %s33, 1
      %p224 = por %p222, %p223
      %p226 = scmp.ne.s32.totalorder %s211, %s225
      %p227 = scmp.eq.s32.totalorder %s33, 0
      %p228 = por %p226, %p227
      %s230 = sadd.s32 %s229, 1
      %p233 = scmp.eq.s32.totalorder %s27, 1
      %p234 = scmp.ne.s32.totalorder %s229, %s231
      %p235 = scmp.eq.s32.totalorder %s27, 0
      %p236 = por %p234, %p235
      %p237 = scmp.ne.s32.totalorder %s229, %s231
      %p238 = scmp.eq.s32.totalorder %s32, 1
      %p239 = por %p237, %p238
      %p240 = scmp.ne.s32.totalorder %s231, %s232
      %p241 = scmp.eq.s32.totalorder %s32, 0
      %p242 = por %p240, %p241
      %p243 = scmp.ne.s32.totalorder %s231, %s232
      %p244 = scmp.eq.s32.totalorder %s33, 1
      %p245 = por %p243, %p244
      %p247 = scmp.ne.s32.totalorder %s232, %s246
      %p248 = scmp.eq.s32.totalorder %s33, 0
      %p249 = por %p247, %p248
      %s251 = sadd.s32 %s250, 1
      %p254 = scmp.eq.s32.totalorder %s27, 1
      %p255 = scmp.ne.s32.totalorder %s250, %s252
      %p256 = scmp.eq.s32.totalorder %s27, 0
      %p257 = por %p255, %p256
      %p258 = scmp.ne.s32.totalorder %s250, %s252
      %p259 = scmp.eq.s32.totalorder %s32, 1
      %p260 = por %p258, %p259
      %p261 = scmp.ne.s32.totalorder %s252, %s253
      %p262 = scmp.eq.s32.totalorder %s32, 0
      %p263 = por %p261, %p262
      %p264 = scmp.ne.s32.totalorder %s252, %s253
      %p265 = scmp.eq.s32.totalorder %s33, 1
      %p266 = por %p264, %p265
      %p268 = scmp.ne.s32.totalorder %s253, %s267
      %p269 = scmp.eq.s32.totalorder %s33, 0
      %p270 = por %p268, %p269
      %s271 = ssub.s32 %s27, %s34
      %p272 = scmp.eq.s32.totalorder %s271, 0
      %s274 = sadd.s32 %s273, 1
      %s275 = scalar_select %p272, %s273, %s274
      %p278 = pneg %p272
      %p279 = scmp.eq.s32.totalorder %s27, 1
      %p280 = por %p278, %p279
      %p281 = scmp.ne.s32.totalorder %s273, %s276
      %p282 = scmp.eq.s32.totalorder %s27, 0
      %p283 = por %p281, %p282
      %p284 = scmp.ne.s32.totalorder %s273, %s276
      %p285 = scmp.eq.s32.totalorder %s32, 1
      %p286 = por %p284, %p285
      %p287 = scmp.ne.s32.totalorder %s276, %s277
      %p288 = scmp.eq.s32.totalorder %s32, 0
      %p289 = por %p287, %p288
      %p290 = scmp.ne.s32.totalorder %s276, %s277
      %p291 = scmp.eq.s32.totalorder %s33, 1
      %p292 = por %p290, %p291
      %p294 = scmp.ne.s32.totalorder %s277, %s293
      %p295 = scmp.eq.s32.totalorder %s33, 0
      %p296 = por %p294, %p295
      %p297 = scmp.le.s32.totalorder 1, %s27
      %p298 = scmp.lt.s32.totalorder %s27, 3
      %p299 = pnand %p297, %p298
      %p300 = pneg %p299
      // Predicated region
      $region9: #{simple_net_forward.1} parent=5 // pred_check
        _
      $region10: #{simple_net_forward.1} parent=5 // pred_check_branch
        %302 = sbr.rel (%p299) target = $region12
      $region11: #{simple_net_forward.1} parent=5 // pred_region
        %s303 = ssub.s32 %s27, 1
        // Predicated region
        $region13: #{simple_net_forward.1} parent=11 // pred_check
          %p304 = pneg %p74
        $region14: #{simple_net_forward.1} parent=11 // pred_check_branch
          %306 = sbr.rel (%p304) target = $region16
        $region15: #{simple_net_forward.1} parent=11 // pred_region
          %s308 = ssub.s32 30720, 30720
          %309 = vsyncadd [#allocation6], %s308
          %s310 = sshll.u32 [#allocation5], 4
          %s311 = int_to_ptr.vmem [resolvable:$true] %s310
          %316 = dma.hbm_to_vmem [thread:$0]  %s1, 30720, %s311, [#allocation6], 256, 256, 16
        $region16: #{simple_net_forward.1} parent=11 // pred_fallthru
          _
        // Predicated region
        $region17: #{simple_net_forward.1} parent=11 // pred_check
          %p317 = pneg %p95
        $region18: #{simple_net_forward.1} parent=11 // pred_check_branch
          %319 = sbr.rel (%p317) target = $region20
        $region19: #{simple_net_forward.1} parent=11 // pred_region
          %s321 = ssub.s32 1152, 1152
          %322 = vsyncadd [#allocation6], %s321
          %s323 = sshll.u32 [#allocation7], 4
          %s324 = int_to_ptr.vmem [resolvable:$true] %s323
          %329 = dma.hbm_to_vmem [thread:$0]  %s2, 1152, %s324, [#allocation6], 128, 128, 8
        $region20: #{simple_net_forward.1} parent=11 // pred_fallthru
          _
        // Predicated region
        $region21: #{simple_net_forward.1} parent=11 // pred_check
          %p330 = pneg %p116
        $region22: #{simple_net_forward.1} parent=11 // pred_check_branch
          %332 = sbr.rel (%p330) target = $region24
        $region23: #{simple_net_forward.1} parent=11 // pred_region
          %s334 = ssub.s32 32, 32
          %335 = vsyncadd [#allocation9], %s334
          %s337 = sshll.u32 [#allocation8], 4
          %s338 = int_to_ptr.vmem [resolvable:$true] %s337
          %340 = dma.hbm_to_vmem [thread:$0]  %s3, 32, %s338, [#allocation9]
        $region24: #{simple_net_forward.1} parent=11 // pred_fallthru
          _
        // Predicated region
        $region25: #{simple_net_forward.1} parent=11 // pred_check
          %p341 = pneg %p137
        $region26: #{simple_net_forward.1} parent=11 // pred_check_branch
          %343 = sbr.rel (%p341) target = $region28
        $region27: #{simple_net_forward.1} parent=11 // pred_region
          %s345 = ssub.s32 48000, 48000
          %346 = vsyncadd [#allocation9], %s345
          %s347 = sshll.u32 [#allocation10], 4
          %s348 = int_to_ptr.vmem [resolvable:$true] %s347
          %353 = dma.hbm_to_vmem [thread:$0]  %s4, 48000, %s348, [#allocation9], 128, 128, 8
        $region28: #{simple_net_forward.1} parent=11 // pred_fallthru
          _
        // Predicated region
        $region29: #{simple_net_forward.1} parent=11 // pred_check
          %p354 = pneg %p158
        $region30: #{simple_net_forward.1} parent=11 // pred_check_branch
          %356 = sbr.rel (%p354) target = $region32
        $region31: #{simple_net_forward.1} parent=11 // pred_region
          _
        $region32: #{simple_net_forward.1} parent=11 // pred_fallthru
          _
        // Predicated region
        $region33: #{simple_net_forward.1} parent=11 // pred_check
          %p357 = pneg %p179
        $region34: #{simple_net_forward.1} parent=11 // pred_check_branch
          %359 = sbr.rel (%p357) target = $region36
        $region35: #{simple_net_forward.1} parent=11 // pred_region
          %s361 = ssub.s32 16, 16
          %362 = vsyncadd [#allocation12], %s361
          %s364 = sshll.u32 [#allocation11], 4
          %s365 = int_to_ptr.vmem [resolvable:$true] %s364
          %367 = dma.hbm_to_vmem [thread:$0]  %s6, 16, %s365, [#allocation12]
        $region36: #{simple_net_forward.1} parent=11 // pred_fallthru
          _
        // Predicated region
        $region37: #{simple_net_forward.1} parent=11 // pred_check
          %p368 = pneg %p200
        $region38: #{simple_net_forward.1} parent=11 // pred_check_branch
          %370 = sbr.rel (%p368) target = $region40
        $region39: #{simple_net_forward.1} parent=11 // pred_region
          %s372 = ssub.s32 8320, 8320
          %373 = vsyncadd [#allocation12], %s372
          %s374 = sshll.u32 [#allocation13], 4
          %s375 = int_to_ptr.vmem [resolvable:$true] %s374
          %380 = dma.hbm_to_vmem [thread:$0]  %s7, 8320, %s375, [#allocation12], 128, 128, 8
        $region40: #{simple_net_forward.1} parent=11 // pred_fallthru
          _
        // Predicated region
        $region41: #{simple_net_forward.1} parent=11 // pred_check
          %p381 = pneg %p221
        $region42: #{simple_net_forward.1} parent=11 // pred_check_branch
          %383 = sbr.rel (%p381) target = $region44
        $region43: #{simple_net_forward.1} parent=11 // pred_region
          %s385 = ssub.s32 16, 16
          %386 = vsyncadd [#allocation15], %s385
          %s388 = sshll.u32 [#allocation14], 4
          %s389 = int_to_ptr.vmem [resolvable:$true] %s388
          %391 = dma.hbm_to_vmem [thread:$0]  %s8, 16, %s389, [#allocation15]
        $region44: #{simple_net_forward.1} parent=11 // pred_fallthru
          _
        // Predicated region
        $region45: #{simple_net_forward.1} parent=11 // pred_check
          %p392 = pneg %p242
        $region46: #{simple_net_forward.1} parent=11 // pred_check_branch
          %394 = sbr.rel (%p392) target = $region48
        $region47: #{simple_net_forward.1} parent=11 // pred_region
          _
        $region48: #{simple_net_forward.1} parent=11 // pred_fallthru
          _
        // Predicated region
        $region49: #{simple_net_forward.1} parent=11 // pred_check
          %p395 = pneg %p263
        $region50: #{simple_net_forward.1} parent=11 // pred_check_branch
          %397 = sbr.rel (%p395) target = $region52
        $region51: #{simple_net_forward.1} parent=11 // pred_region
          %s399 = ssub.s32 16, 16
          %400 = vsyncadd [#allocation15], %s399
          %s402 = sshll.u32 [#allocation16], 4
          %s403 = int_to_ptr.vmem [resolvable:$true] %s402
          %405 = dma.hbm_to_vmem [thread:$0]  %s10, 16, %s403, [#allocation15]
        $region52: #{simple_net_forward.1} parent=11 // pred_fallthru
          _
      $region12: #{simple_net_forward.1} parent=5 // pred_fallthru
        _
      %p406 = scmp.lt.s32.totalorder %s27, 2
      // Predicated region
      $region53: #{simple_net_forward.1} parent=5 // pred_check
        %p407 = pneg %p406
      $region54: #{simple_net_forward.1} parent=5 // pred_check_branch
        %409 = sbr.rel (%p407) target = $region56
      $region55: #{simple_net_forward.1} parent=5 // pred_region
        // Predicated region
        $region57: #{simple_net_forward.1} parent=55 // pred_check
          %p410 = pneg %p47
        $region58: #{simple_net_forward.1} parent=55 // pred_check_branch
          %412 = sbr.rel (%p410) target = $region60
        $region59: #{simple_net_forward.1} parent=55 // pred_region
          %s413 = sand.u32 %s37, 1
          %s414 = scalar_lea.sflag [#allocation3], %s413
          %s415 = sand.u32 %s37, 1
          %s416 = smul.addr %s415, 64
          %s417 = scalar_lea.vmem [#allocation2], %s416
          %s419 = ssub.s32 1024, 1024
          %420 = vsyncadd %s414, %s419
          %s421 = smul.addr %s27, 8
          %s422 = smul.addr %s421, 128
          %s423 = scalar_lea.hbm %s0, %s422
          %s424 = sshll.u32 %s417, 4
          %s425 = int_to_ptr.vmem [resolvable:$true] %s424
          %430 = dma.hbm_to_vmem [thread:$0]  %s423, 1024, %s425, %s414, 128, 128, 8
        $region60: #{simple_net_forward.1} parent=55 // pred_fallthru
          _
      $region56: #{simple_net_forward.1} parent=5 // pred_fallthru
        _
      %p431 = scmp.le.s32.totalorder 1, %s27
      %p432 = scmp.lt.s32.totalorder %s27, 3
      %p433 = pnand %p431, %p432
      %p434 = pneg %p433
      // Predicated region
      $region61: #{simple_net_forward.1} parent=5 // pred_check
        _
      $region62: #{simple_net_forward.1} parent=5 // pred_check_branch
        %436 = sbr.rel (%p433) target = $region64
      $region63: #{simple_net_forward.1} parent=5 // pred_region
        %s437 = ssub.s32 %s27, 1
        %s438 = sand.u32 %s40, 1
        %s439 = scalar_lea.sflag [#allocation3], %s438
        %s440 = sand.u32 %s40, 1
        %s441 = smul.addr %s440, 64
        %s442 = scalar_lea.vmem [#allocation2], %s441
        // Predicated region
        $region65: #{simple_net_forward.1} parent=63 // pred_check
          %p443 = pneg %p53
        $region66: #{simple_net_forward.1} parent=63 // pred_check_branch
          %445 = sbr.rel (%p443) target = $region68
        $region67: #{simple_net_forward.1} parent=63 // pred_region
          %446 = dma.done %s439, 1024
        $region68: #{simple_net_forward.1} parent=63 // pred_fallthru
          _
        // Predicated region
        $region69: #{simple_net_forward.1} parent=63 // pred_check
          %p447 = pneg %p74
        $region70: #{simple_net_forward.1} parent=63 // pred_check_branch
          %449 = sbr.rel (%p447) target = $region72
        $region71: #{simple_net_forward.1} parent=63 // pred_region
          %450 = dma.done [#allocation6], 30720
        $region72: #{simple_net_forward.1} parent=63 // pred_fallthru
          _
        // Predicated region
        $region73: #{simple_net_forward.1} parent=63 // pred_check
          %p451 = pneg %p95
        $region74: #{simple_net_forward.1} parent=63 // pred_check_branch
          %453 = sbr.rel (%p451) target = $region76
        $region75: #{simple_net_forward.1} parent=63 // pred_region
          %454 = dma.done [#allocation6], 1152
        $region76: #{simple_net_forward.1} parent=63 // pred_fallthru
          _
        // Predicated region
        $region77: #{simple_net_forward.1} parent=63 // pred_check
          %p455 = pneg %p116
        $region78: #{simple_net_forward.1} parent=63 // pred_check_branch
          %457 = sbr.rel (%p455) target = $region80
        $region79: #{simple_net_forward.1} parent=63 // pred_region
          %458 = dma.done [#allocation9], 32
        $region80: #{simple_net_forward.1} parent=63 // pred_fallthru
          _
        // Predicated region
        $region81: #{simple_net_forward.1} parent=63 // pred_check
          %p459 = pneg %p137
        $region82: #{simple_net_forward.1} parent=63 // pred_check_branch
          %461 = sbr.rel (%p459) target = $region84
        $region83: #{simple_net_forward.1} parent=63 // pred_region
          %462 = dma.done [#allocation9], 48000
        $region84: #{simple_net_forward.1} parent=63 // pred_fallthru
          _
        // Predicated region
        $region85: #{simple_net_forward.1} parent=63 // pred_check
          %p463 = pneg %p179
        $region86: #{simple_net_forward.1} parent=63 // pred_check_branch
          %465 = sbr.rel (%p463) target = $region88
        $region87: #{simple_net_forward.1} parent=63 // pred_region
          %466 = dma.done [#allocation12], 16
        $region88: #{simple_net_forward.1} parent=63 // pred_fallthru
          _
        // Predicated region
        $region89: #{simple_net_forward.1} parent=63 // pred_check
          %p467 = pneg %p200
        $region90: #{simple_net_forward.1} parent=63 // pred_check_branch
          %469 = sbr.rel (%p467) target = $region92
        $region91: #{simple_net_forward.1} parent=63 // pred_region
          %470 = dma.done [#allocation12], 8320
        $region92: #{simple_net_forward.1} parent=63 // pred_fallthru
          _
        // Predicated region
        $region93: #{simple_net_forward.1} parent=63 // pred_check
          %p471 = pneg %p221
        $region94: #{simple_net_forward.1} parent=63 // pred_check_branch
          %473 = sbr.rel (%p471) target = $region96
        $region95: #{simple_net_forward.1} parent=63 // pred_region
          %474 = dma.done [#allocation15], 16
        $region96: #{simple_net_forward.1} parent=63 // pred_fallthru
          _
        // Predicated region
        $region97: #{simple_net_forward.1} parent=63 // pred_check
          %p475 = pneg %p263
        $region98: #{simple_net_forward.1} parent=63 // pred_check_branch
          %477 = sbr.rel (%p475) target = $region100
        $region99: #{simple_net_forward.1} parent=63 // pred_region
          %478 = dma.done [#allocation15], 16
        $region100: #{simple_net_forward.1} parent=63 // pred_fallthru
          _
        %s479 = sand.u32 %s40, 1
        %s480 = scalar_lea.sflag [#allocation3], %s479
        %s481 = sand.u32 %s40, 1
        %s482 = smul.addr %s481, 64
        %s483 = scalar_lea.vmem [#allocation2], %s482
        %p484 = pneg %p53
        %p485 = pneg %p50
        %p486 = pneg %p74
        %p487 = pneg %p71
        %p488 = pneg %p95
        %p489 = pneg %p92
        %p490 = pneg %p116
        %p491 = pneg %p113
        %p492 = pneg %p137
        %p493 = pneg %p134
        %p494 = pneg %p158
        %p495 = pneg %p155
        %p496 = pneg %p179
        %p497 = pneg %p176
        %p498 = pneg %p200
        %p499 = pneg %p197
        %p500 = pneg %p221
        %p501 = pneg %p218
        %p502 = pneg %p242
        %p503 = pneg %p239
        %p504 = pneg %p263
        %p505 = pneg %p260
        %p506 = pneg %p289
        %p507 = pneg %p286
        %s508 = sand.u32 %s276, 1
        %s509 = scalar_lea.sflag [#allocation4], %s508
        %s510 = sand.u32 %s276, 1
        %s511 = scalar_lea.vmem [#allocation17], %s510
        %v512 = vld [vmem:[%s442] sm:$0xff]
        %v513 = vld [vmem:[%s442 + $0x8] sm:$0xff]
        %v514 = vld [vmem:[%s442 + $0x10] sm:$0xff]
        %v515 = vld [vmem:[%s442 + $0x18] sm:$0xff]
        %v516 = vld [vmem:[%s442 + $0x20] sm:$0xff]
        %v517 = vld [vmem:[%s442 + $0x28] sm:$0xff]
        %v518 = vld [vmem:[%s442 + $0x30] sm:$0xff]
        %v519 = vld [vmem:[%s442 + $0x38] sm:$0xff]
        %v520 = vld [vmem:[#allocation5] sm:$0xff]
        %v521 = vld [vmem:[#allocation5 + $0x8] sm:$0xff]
        %v522 = vld [vmem:[#allocation5 + $0x10] sm:$0xff]
        %v523 = vld [vmem:[#allocation5 + $0x18] sm:$0xff]
        %v524 = vld [vmem:[#allocation5 + $0x20] sm:$0xff]
        %v525 = vld [vmem:[#allocation5 + $0x28] sm:$0xff]
        %v526 = vld [vmem:[#allocation5 + $0x30] sm:$0xff]
        %v527 = vld [vmem:[#allocation5 + $0x38] sm:$0xff]
        %v528 = vld [vmem:[#allocation5 + $0x40] sm:$0xff]
        %v529 = vld [vmem:[#allocation5 + $0x48] sm:$0xff]
        %v530 = vld [vmem:[#allocation5 + $0x50] sm:$0xff]
        %v531 = vld [vmem:[#allocation5 + $0x58] sm:$0xff]
        %v532 = vld [vmem:[#allocation5 + $0x60] sm:$0xff]
        %v533 = vld [vmem:[#allocation5 + $0x68] sm:$0xff]
        %v534 = vld [vmem:[#allocation5 + $0x70] sm:$0xff]
        %v535 = vld [vmem:[#allocation5 + $0x78] sm:$0xff]
        %s536 = scalar_lea.vmem [#allocation5], 128
        %v537 = vld [vmem:[%s536] sm:$0xff]
        %v538 = vld [vmem:[%s536 + $0x8] sm:$0xff]
        %v539 = vld [vmem:[%s536 + $0x10] sm:$0xff]
        %v540 = vld [vmem:[%s536 + $0x18] sm:$0xff]
        %v541 = vld [vmem:[%s536 + $0x20] sm:$0xff]
        %v542 = vld [vmem:[%s536 + $0x28] sm:$0xff]
        %v543 = vld [vmem:[%s536 + $0x30] sm:$0xff]
        %v544 = vld [vmem:[%s536 + $0x38] sm:$0xff]
        %v545 = vld [vmem:[%s536 + $0x40] sm:$0xff]
        %v546 = vld [vmem:[%s536 + $0x48] sm:$0xff]
        %v547 = vld [vmem:[%s536 + $0x50] sm:$0xff]
        %v548 = vld [vmem:[%s536 + $0x58] sm:$0xff]
        %v549 = vld [vmem:[%s536 + $0x60] sm:$0xff]
        %v550 = vld [vmem:[%s536 + $0x68] sm:$0xff]
        %v551 = vld [vmem:[%s536 + $0x70] sm:$0xff]
        %v552 = vld [vmem:[%s536 + $0x78] sm:$0xff]
        %vm561 = vcmask 1046528
        %v562 = vrot.slane %v512, 1
        %v563 = vrot.slane %v513, 1
        %v564 = vsel %vm561, %v562, %v563
        %v565 = vrot.slane %v514, 1
        %v566 = vsel %vm561, %v563, %v565
        %v567 = vrot.slane %v515, 1
        %v568 = vsel %vm561, %v565, %v567
        %v569 = vrot.slane %v516, 1
        %v570 = vsel %vm561, %v567, %v569
        %v571 = vrot.slane %v517, 1
        %v572 = vsel %vm561, %v569, %v571
        %v573 = vrot.slane %v518, 1
        %v574 = vsel %vm561, %v571, %v573
        %v575 = vrot.slane %v519, 1
        %v576 = vsel %vm561, %v573, %v575
        %vm577 = vcmask 523264
        %v578 = vsel %vm577, %v564, 0
        %v580 = vsel %vm577, %v566, 0
        %v582 = vsel %vm577, %v568, 0
        %v584 = vsel %vm577, %v570, 0
        %v586 = vsel %vm577, %v572, 0
        %v588 = vsel %vm577, %v574, 0
        %v590 = vsel %vm577, %v576, 0
        %v592 = vsel %vm577, %v575, 0
        %594 = vmatprep.subr.mxu0 0.0
        %595 = vmatpush1.msra.mxu0 0.0
        %596 = vmatprep.subr.mxu0 0.0
        %597 = vmatpush1.msra.mxu0 0.0
        %598 = vmatprep.subr.mxu0 0.0
        %599 = vmatpush1.msra.mxu0 0.0
        %600 = vmatprep.subr.mxu0 0.0
        %601 = vmatpush1.msra.mxu0 0.0
        %602 = vmatprep.subr.mxu0 0.0
        %603 = vmatpush1.msra.mxu0 0.0
        %604 = vmatprep.subr.mxu0 0.0
        %605 = vmatpush1.msra.mxu0 0.0
        %606 = vmatprep.subr.mxu0 0.0
        %607 = vmatpush1.msra.mxu0 0.0
        %608 = vmatprep.subr.mxu0 0.0
        %609 = vmatpush1.msra.mxu0 0.0
        %610 = vmatprep.subr.mxu0 %v552
        %611 = vmatpush1.msra.mxu0 %v551
        %612 = vmatprep.subr.mxu0 %v550
        %613 = vmatpush1.msra.mxu0 %v549
        %614 = vmatprep.subr.mxu0 %v548
        %615 = vmatpush1.msra.mxu0 %v547
        %616 = vmatprep.subr.mxu0 %v546
        %617 = vmatpush1.msra.mxu0 %v545
        %618 = vmatprep.subr.mxu0 %v544
        %619 = vmatpush1.msra.mxu0 %v543
        %620 = vmatprep.subr.mxu0 %v542
        %621 = vmatpush1.msra.mxu0 %v541
        %622 = vmatprep.subr.mxu0 %v540
        %623 = vmatpush1.msra.mxu0 %v539
        %624 = vmatprep.subr.mxu0 %v538
        %625 = vmatpush1.msra.mxu0 %v537
        %626 = vmatprep.subr.mxu0 0.0
        %627 = vmatpush2.msra.mxu0 0.0
        %628 = vmatprep.subr.mxu0 0.0
        %629 = vmatpush2.msra.mxu0 0.0
        %630 = vmatprep.subr.mxu0 0.0
        %631 = vmatpush2.msra.mxu0 0.0
        %632 = vmatprep.subr.mxu0 0.0
        %633 = vmatpush2.msra.mxu0 0.0
        %634 = vmatprep.subr.mxu0 0.0
        %635 = vmatpush2.msra.mxu0 0.0
        %636 = vmatprep.subr.mxu0 0.0
        %637 = vmatpush2.msra.mxu0 0.0
        %638 = vmatprep.subr.mxu0 0.0
        %639 = vmatpush2.msra.mxu0 0.0
        %640 = vmatprep.subr.mxu0 0.0
        %641 = vmatpush2.msra.mxu0 0.0
        %642 = vmatprep.subr.mxu0 0.0
        %643 = vmatpush2.msra.mxu0 0.0
        %644 = vmatprep.subr.mxu0 0.0
        %645 = vmatpush2.msra.mxu0 0.0
        %646 = vmatprep.subr.mxu0 0.0
        %647 = vmatpush2.msra.mxu0 0.0
        %648 = vmatprep.subr.mxu0 0.0
        %649 = vmatpush2.msra.mxu0 0.0
        %650 = vmatprep.subr.mxu0 0.0
        %651 = vmatpush2.msra.mxu0 0.0
        %652 = vmatprep.subr.mxu0 0.0
        %653 = vmatpush2.msra.mxu0 0.0
        %654 = vmatprep.subr.mxu0 0.0
        %655 = vmatpush2.msra.mxu0 0.0
        %656 = vmatprep.subr.mxu0 0.0
        %657 = vmatpush2.msra.mxu0 0.0
        %658 = vmatprep.mubr.f32.mxu0 0.0
        %659 = vmatmul.mubr.f32.gmra.mxu0 %v578
        %v660 = vpop.f32.mrf.mxu0
        %v661 = vadd.f32 0.0, %v660
        %v662 = vpop.f32.mrf.mxu0
        %v663 = vadd.f32 0.0, %v662
        %664 = vmatprep.mubr.f32.mxu0 0.0
        %665 = vmatmul.mubr.f32.gmra.mxu0 %v580
        %v666 = vpop.f32.mrf.mxu0
        %v667 = vadd.f32 0.0, %v666
        %v668 = vpop.f32.mrf.mxu0
        %v669 = vadd.f32 0.0, %v668
        %670 = vmatprep.mubr.f32.mxu0 0.0
        %671 = vmatmul.mubr.f32.gmra.mxu0 %v582
        %v672 = vpop.f32.mrf.mxu0
        %v673 = vadd.f32 0.0, %v672
        %v674 = vpop.f32.mrf.mxu0
        %v675 = vadd.f32 0.0, %v674
        %676 = vmatprep.mubr.f32.mxu0 0.0
        %677 = vmatmul.mubr.f32.gmra.mxu0 %v584
        %v678 = vpop.f32.mrf.mxu0
        %v679 = vadd.f32 0.0, %v678
        %v680 = vpop.f32.mrf.mxu0
        %v681 = vadd.f32 0.0, %v680
        %682 = vmatprep.mubr.f32.mxu0 0.0
        %683 = vmatmul.mubr.f32.gmra.mxu0 %v586
        %v684 = vpop.f32.mrf.mxu0
        %v685 = vadd.f32 0.0, %v684
        %v686 = vpop.f32.mrf.mxu0
        %v687 = vadd.f32 0.0, %v686
        %688 = vmatprep.mubr.f32.mxu0 0.0
        %689 = vmatmul.mubr.f32.gmra.mxu0 %v588
        %v690 = vpop.f32.mrf.mxu0
        %v691 = vadd.f32 0.0, %v690
        %v692 = vpop.f32.mrf.mxu0
        %v693 = vadd.f32 0.0, %v692
        %694 = vmatprep.mubr.f32.mxu0 0.0
        %695 = vmatmul.mubr.f32.gmra.mxu0 %v590
        %v696 = vpop.f32.mrf.mxu0
        %v697 = vadd.f32 0.0, %v696
        %v698 = vpop.f32.mrf.mxu0
        %v699 = vadd.f32 0.0, %v698
        %700 = vmatprep.mubr.f32.mxu0 0.0
        %701 = vmatmul.mubr.f32.gmra.mxu0 %v592
        %v702 = vpop.f32.mrf.mxu0
        %v703 = vadd.f32 0.0, %v702
        %v704 = vpop.f32.mrf.mxu0
        %v705 = vadd.f32 0.0, %v704
        %706 = vdwg.mxu0
        %v707 = vsel %vm577, %v512, 0
        %v709 = vsel %vm577, %v513, 0
        %v711 = vsel %vm577, %v514, 0
        %v713 = vsel %vm577, %v515, 0
        %v715 = vsel %vm577, %v516, 0
        %v717 = vsel %vm577, %v517, 0
        %v719 = vsel %vm577, %v518, 0
        %v721 = vsel %vm577, %v519, 0
        %723 = vmatprep.subr.mxu0 0.0
        %724 = vmatpush1.msra.mxu0 0.0
        %725 = vmatprep.subr.mxu0 0.0
        %726 = vmatpush1.msra.mxu0 0.0
        %727 = vmatprep.subr.mxu0 0.0
        %728 = vmatpush1.msra.mxu0 0.0
        %729 = vmatprep.subr.mxu0 0.0
        %730 = vmatpush1.msra.mxu0 0.0
        %731 = vmatprep.subr.mxu0 0.0
        %732 = vmatpush1.msra.mxu0 0.0
        %733 = vmatprep.subr.mxu0 0.0
        %734 = vmatpush1.msra.mxu0 0.0
        %735 = vmatprep.subr.mxu0 0.0
        %736 = vmatpush1.msra.mxu0 0.0
        %737 = vmatprep.subr.mxu0 0.0
        %738 = vmatpush1.msra.mxu0 0.0
        %739 = vmatprep.subr.mxu0 %v535
        %740 = vmatpush1.msra.mxu0 %v534
        %741 = vmatprep.subr.mxu0 %v533
        %742 = vmatpush1.msra.mxu0 %v532
        %743 = vmatprep.subr.mxu0 %v531
        %744 = vmatpush1.msra.mxu0 %v530
        %745 = vmatprep.subr.mxu0 %v529
        %746 = vmatpush1.msra.mxu0 %v528
        %747 = vmatprep.subr.mxu0 %v527
        %748 = vmatpush1.msra.mxu0 %v526
        %749 = vmatprep.subr.mxu0 %v525
        %750 = vmatpush1.msra.mxu0 %v524
        %751 = vmatprep.subr.mxu0 %v523
        %752 = vmatpush1.msra.mxu0 %v522
        %753 = vmatprep.subr.mxu0 %v521
        %754 = vmatpush1.msra.mxu0 %v520
        %755 = vmatprep.subr.mxu0 0.0
        %756 = vmatpush2.msra.mxu0 0.0
        %757 = vmatprep.subr.mxu0 0.0
        %758 = vmatpush2.msra.mxu0 0.0
        %759 = vmatprep.subr.mxu0 0.0
        %760 = vmatpush2.msra.mxu0 0.0
        %761 = vmatprep.subr.mxu0 0.0
        %762 = vmatpush2.msra.mxu0 0.0
        %763 = vmatprep.subr.mxu0 0.0
        %764 = vmatpush2.msra.mxu0 0.0
        %765 = vmatprep.subr.mxu0 0.0
        %766 = vmatpush2.msra.mxu0 0.0
        %767 = vmatprep.subr.mxu0 0.0
        %768 = vmatpush2.msra.mxu0 0.0
        %769 = vmatprep.subr.mxu0 0.0
        %770 = vmatpush2.msra.mxu0 0.0
        %771 = vmatprep.subr.mxu0 0.0
        %772 = vmatpush2.msra.mxu0 0.0
        %773 = vmatprep.subr.mxu0 0.0
        %774 = vmatpush2.msra.mxu0 0.0
        %775 = vmatprep.subr.mxu0 0.0
        %776 = vmatpush2.msra.mxu0 0.0
        %777 = vmatprep.subr.mxu0 0.0
        %778 = vmatpush2.msra.mxu0 0.0
        %779 = vmatprep.subr.mxu0 0.0
        %780 = vmatpush2.msra.mxu0 0.0
        %781 = vmatprep.subr.mxu0 0.0
        %782 = vmatpush2.msra.mxu0 0.0
        %783 = vmatprep.subr.mxu0 0.0
        %784 = vmatpush2.msra.mxu0 0.0
        %785 = vmatprep.subr.mxu0 0.0
        %786 = vmatpush2.msra.mxu0 0.0
        %787 = vmatprep.mubr.f32.mxu0 0.0
        %788 = vmatmul.mubr.f32.gmra.mxu0 %v707
        %v789 = vpop.f32.mrf.mxu0
        %v790 = vadd.f32 %v661, %v789
        %v791 = vpop.f32.mrf.mxu0
        %v792 = vadd.f32 %v663, %v791
        %793 = vmatprep.mubr.f32.mxu0 0.0
        %794 = vmatmul.mubr.f32.gmra.mxu0 %v709
        %v795 = vpop.f32.mrf.mxu0
        %v796 = vadd.f32 %v667, %v795
        %v797 = vpop.f32.mrf.mxu0
        %v798 = vadd.f32 %v669, %v797
        %799 = vmatprep.mubr.f32.mxu0 0.0
        %800 = vmatmul.mubr.f32.gmra.mxu0 %v711
        %v801 = vpop.f32.mrf.mxu0
        %v802 = vadd.f32 %v673, %v801
        %v803 = vpop.f32.mrf.mxu0
        %v804 = vadd.f32 %v675, %v803
        %805 = vmatprep.mubr.f32.mxu0 0.0
        %806 = vmatmul.mubr.f32.gmra.mxu0 %v713
        %v807 = vpop.f32.mrf.mxu0
        %v808 = vadd.f32 %v679, %v807
        %v809 = vpop.f32.mrf.mxu0
        %v810 = vadd.f32 %v681, %v809
        %811 = vmatprep.mubr.f32.mxu0 0.0
        %812 = vmatmul.mubr.f32.gmra.mxu0 %v715
        %v813 = vpop.f32.mrf.mxu0
        %v814 = vadd.f32 %v685, %v813
        %v815 = vpop.f32.mrf.mxu0
        %v816 = vadd.f32 %v687, %v815
        %817 = vmatprep.mubr.f32.mxu0 0.0
        %818 = vmatmul.mubr.f32.gmra.mxu0 %v717
        %v819 = vpop.f32.mrf.mxu0
        %v820 = vadd.f32 %v691, %v819
        %v821 = vpop.f32.mrf.mxu0
        %v822 = vadd.f32 %v693, %v821
        %823 = vmatprep.mubr.f32.mxu0 0.0
        %824 = vmatmul.mubr.f32.gmra.mxu0 %v719
        %v825 = vpop.f32.mrf.mxu0
        %v826 = vadd.f32 %v697, %v825
        %v827 = vpop.f32.mrf.mxu0
        %v828 = vadd.f32 %v699, %v827
        %829 = vmatprep.mubr.f32.mxu0 0.0
        %830 = vmatmul.mubr.f32.gmra.mxu0 %v721
        %v831 = vpop.f32.mrf.mxu0
        %v832 = vadd.f32 %v703, %v831
        %v833 = vpop.f32.mrf.mxu0
        %v834 = vadd.f32 %v705, %v833
        %835 = vdwg.mxu0
        %s836 = scalar_lea.vmem [#allocation5], 256
        %v837 = vld [vmem:[%s836] sm:$0xff]
        %v838 = vld [vmem:[%s836 + $0x8] sm:$0xff]
        %v839 = vld [vmem:[%s836 + $0x10] sm:$0xff]
        %v840 = vld [vmem:[%s836 + $0x18] sm:$0xff]
        %v841 = vld [vmem:[%s836 + $0x20] sm:$0xff]
        %v842 = vld [vmem:[%s836 + $0x28] sm:$0xff]
        %v843 = vld [vmem:[%s836 + $0x30] sm:$0xff]
        %v844 = vld [vmem:[%s836 + $0x38] sm:$0xff]
        %v845 = vld [vmem:[%s836 + $0x40] sm:$0xff]
        %v846 = vld [vmem:[%s836 + $0x48] sm:$0xff]
        %v847 = vld [vmem:[%s836 + $0x50] sm:$0xff]
        %v848 = vld [vmem:[%s836 + $0x58] sm:$0xff]
        %v849 = vld [vmem:[%s836 + $0x60] sm:$0xff]
        %v850 = vld [vmem:[%s836 + $0x68] sm:$0xff]
        %v851 = vld [vmem:[%s836 + $0x70] sm:$0xff]
        %v852 = vld [vmem:[%s836 + $0x78] sm:$0xff]
        %vm853 = vcmask 1045504
        %v854 = vrot.slane %v512, 2
        %v855 = vrot.slane %v513, 2
        %v856 = vsel %vm853, %v854, %v855
        %v857 = vrot.slane %v514, 2
        %v858 = vsel %vm853, %v855, %v857
        %v859 = vrot.slane %v515, 2
        %v860 = vsel %vm853, %v857, %v859
        %v861 = vrot.slane %v516, 2
        %v862 = vsel %vm853, %v859, %v861
        %v863 = vrot.slane %v517, 2
        %v864 = vsel %vm853, %v861, %v863
        %v865 = vrot.slane %v518, 2
        %v866 = vsel %vm853, %v863, %v865
        %v867 = vrot.slane %v519, 2
        %v868 = vsel %vm853, %v865, %v867
        %v869 = vsel %vm577, %v856, 0
        %v871 = vsel %vm577, %v858, 0
        %v873 = vsel %vm577, %v860, 0
        %v875 = vsel %vm577, %v862, 0
        %v877 = vsel %vm577, %v864, 0
        %v879 = vsel %vm577, %v866, 0
        %v881 = vsel %vm577, %v868, 0
        %v883 = vsel %vm577, %v867, 0
        %885 = vmatprep.subr.mxu0 0.0
        %886 = vmatpush1.msra.mxu0 0.0
        %887 = vmatprep.subr.mxu0 0.0
        %888 = vmatpush1.msra.mxu0 0.0
        %889 = vmatprep.subr.mxu0 0.0
        %890 = vmatpush1.msra.mxu0 0.0
        %891 = vmatprep.subr.mxu0 0.0
        %892 = vmatpush1.msra.mxu0 0.0
        %893 = vmatprep.subr.mxu0 0.0
        %894 = vmatpush1.msra.mxu0 0.0
        %895 = vmatprep.subr.mxu0 0.0
        %896 = vmatpush1.msra.mxu0 0.0
        %897 = vmatprep.subr.mxu0 0.0
        %898 = vmatpush1.msra.mxu0 0.0
        %899 = vmatprep.subr.mxu0 0.0
        %900 = vmatpush1.msra.mxu0 0.0
        %901 = vmatprep.subr.mxu0 %v852
        %902 = vmatpush1.msra.mxu0 %v851
        %903 = vmatprep.subr.mxu0 %v850
        %904 = vmatpush1.msra.mxu0 %v849
        %905 = vmatprep.subr.mxu0 %v848
        %906 = vmatpush1.msra.mxu0 %v847
        %907 = vmatprep.subr.mxu0 %v846
        %908 = vmatpush1.msra.mxu0 %v845
        %909 = vmatprep.subr.mxu0 %v844
        %910 = vmatpush1.msra.mxu0 %v843
        %911 = vmatprep.subr.mxu0 %v842
        %912 = vmatpush1.msra.mxu0 %v841
        %913 = vmatprep.subr.mxu0 %v840
        %914 = vmatpush1.msra.mxu0 %v839
        %915 = vmatprep.subr.mxu0 %v838
        %916 = vmatpush1.msra.mxu0 %v837
        %917 = vmatprep.subr.mxu0 0.0
        %918 = vmatpush2.msra.mxu0 0.0
        %919 = vmatprep.subr.mxu0 0.0
        %920 = vmatpush2.msra.mxu0 0.0
        %921 = vmatprep.subr.mxu0 0.0
        %922 = vmatpush2.msra.mxu0 0.0
        %923 = vmatprep.subr.mxu0 0.0
        %924 = vmatpush2.msra.mxu0 0.0
        %925 = vmatprep.subr.mxu0 0.0
        %926 = vmatpush2.msra.mxu0 0.0
        %927 = vmatprep.subr.mxu0 0.0
        %928 = vmatpush2.msra.mxu0 0.0
        %929 = vmatprep.subr.mxu0 0.0
        %930 = vmatpush2.msra.mxu0 0.0
        %931 = vmatprep.subr.mxu0 0.0
        %932 = vmatpush2.msra.mxu0 0.0
        %933 = vmatprep.subr.mxu0 0.0
        %934 = vmatpush2.msra.mxu0 0.0
        %935 = vmatprep.subr.mxu0 0.0
        %936 = vmatpush2.msra.mxu0 0.0
        %937 = vmatprep.subr.mxu0 0.0
        %938 = vmatpush2.msra.mxu0 0.0
        %939 = vmatprep.subr.mxu0 0.0
        %940 = vmatpush2.msra.mxu0 0.0
        %941 = vmatprep.subr.mxu0 0.0
        %942 = vmatpush2.msra.mxu0 0.0
        %943 = vmatprep.subr.mxu0 0.0
        %944 = vmatpush2.msra.mxu0 0.0
        %945 = vmatprep.subr.mxu0 0.0
        %946 = vmatpush2.msra.mxu0 0.0
        %947 = vmatprep.subr.mxu0 0.0
        %948 = vmatpush2.msra.mxu0 0.0
        %949 = vmatprep.mubr.f32.mxu0 0.0
        %950 = vmatmul.mubr.f32.gmra.mxu0 %v869
        %v951 = vpop.f32.mrf.mxu0
        %v952 = vadd.f32 0.0, %v951
        %v953 = vpop.f32.mrf.mxu0
        %v954 = vadd.f32 0.0, %v953
        %955 = vmatprep.mubr.f32.mxu0 0.0
        %956 = vmatmul.mubr.f32.gmra.mxu0 %v871
        %v957 = vpop.f32.mrf.mxu0
        %v958 = vadd.f32 0.0, %v957
        %v959 = vpop.f32.mrf.mxu0
        %v960 = vadd.f32 0.0, %v959
        %961 = vmatprep.mubr.f32.mxu0 0.0
        %962 = vmatmul.mubr.f32.gmra.mxu0 %v873
        %v963 = vpop.f32.mrf.mxu0
        %v964 = vadd.f32 0.0, %v963
        %v965 = vpop.f32.mrf.mxu0
        %v966 = vadd.f32 0.0, %v965
        %967 = vmatprep.mubr.f32.mxu0 0.0
        %968 = vmatmul.mubr.f32.gmra.mxu0 %v875
        %v969 = vpop.f32.mrf.mxu0
        %v970 = vadd.f32 0.0, %v969
        %v971 = vpop.f32.mrf.mxu0
        %v972 = vadd.f32 0.0, %v971
        %973 = vmatprep.mubr.f32.mxu0 0.0
        %974 = vmatmul.mubr.f32.gmra.mxu0 %v877
        %v975 = vpop.f32.mrf.mxu0
        %v976 = vadd.f32 0.0, %v975
        %v977 = vpop.f32.mrf.mxu0
        %v978 = vadd.f32 0.0, %v977
        %979 = vmatprep.mubr.f32.mxu0 0.0
        %980 = vmatmul.mubr.f32.gmra.mxu0 %v879
        %v981 = vpop.f32.mrf.mxu0
        %v982 = vadd.f32 0.0, %v981
        %v983 = vpop.f32.mrf.mxu0
        %v984 = vadd.f32 0.0, %v983
        %985 = vmatprep.mubr.f32.mxu0 0.0
        %986 = vmatmul.mubr.f32.gmra.mxu0 %v881
        %v987 = vpop.f32.mrf.mxu0
        %v988 = vadd.f32 0.0, %v987
        %v989 = vpop.f32.mrf.mxu0
        %v990 = vadd.f32 0.0, %v989
        %991 = vmatprep.mubr.f32.mxu0 0.0
        %992 = vmatmul.mubr.f32.gmra.mxu0 %v883
        %v993 = vpop.f32.mrf.mxu0
        %v994 = vadd.f32 0.0, %v993
        %v995 = vpop.f32.mrf.mxu0
        %v996 = vadd.f32 0.0, %v995
        %997 = vdwg.mxu0
        %v998 = vadd.f32 %v790, %v952
        %v999 = vadd.f32 %v792, %v954
        %v1000 = vadd.f32 %v796, %v958
        %v1001 = vadd.f32 %v798, %v960
        %v1002 = vadd.f32 %v802, %v964
        %v1003 = vadd.f32 %v804, %v966
        %v1004 = vadd.f32 %v808, %v970
        %v1005 = vadd.f32 %v810, %v972
        %v1006 = vadd.f32 %v814, %v976
        %v1007 = vadd.f32 %v816, %v978
        %v1008 = vadd.f32 %v820, %v982
        %v1009 = vadd.f32 %v822, %v984
        %v1010 = vadd.f32 %v826, %v988
        %v1011 = vadd.f32 %v828, %v990
        %v1012 = vadd.f32 %v832, %v994
        %v1013 = vadd.f32 %v834, %v996
        %s1014 = scalar_lea.vmem [#allocation5], 384
        %v1015 = vld [vmem:[%s1014] sm:$0xff]
        %v1016 = vld [vmem:[%s1014 + $0x8] sm:$0xff]
        %v1017 = vld [vmem:[%s1014 + $0x10] sm:$0xff]
        %v1018 = vld [vmem:[%s1014 + $0x18] sm:$0xff]
        %v1019 = vld [vmem:[%s1014 + $0x20] sm:$0xff]
        %v1020 = vld [vmem:[%s1014 + $0x28] sm:$0xff]
        %v1021 = vld [vmem:[%s1014 + $0x30] sm:$0xff]
        %v1022 = vld [vmem:[%s1014 + $0x38] sm:$0xff]
        %v1023 = vld [vmem:[%s1014 + $0x40] sm:$0xff]
        %v1024 = vld [vmem:[%s1014 + $0x48] sm:$0xff]
        %v1025 = vld [vmem:[%s1014 + $0x50] sm:$0xff]
        %v1026 = vld [vmem:[%s1014 + $0x58] sm:$0xff]
        %v1027 = vld [vmem:[%s1014 + $0x60] sm:$0xff]
        %v1028 = vld [vmem:[%s1014 + $0x68] sm:$0xff]
        %v1029 = vld [vmem:[%s1014 + $0x70] sm:$0xff]
        %v1030 = vld [vmem:[%s1014 + $0x78] sm:$0xff]
        %vm1031 = vcmask 1044480
        %v1032 = vrot.slane %v512, 3
        %v1033 = vrot.slane %v513, 3
        %v1034 = vsel %vm1031, %v1032, %v1033
        %v1035 = vrot.slane %v514, 3
        %v1036 = vsel %vm1031, %v1033, %v1035
        %v1037 = vrot.slane %v515, 3
        %v1038 = vsel %vm1031, %v1035, %v1037
        %v1039 = vrot.slane %v516, 3
        %v1040 = vsel %vm1031, %v1037, %v1039
        %v1041 = vrot.slane %v517, 3
        %v1042 = vsel %vm1031, %v1039, %v1041
        %v1043 = vrot.slane %v518, 3
        %v1044 = vsel %vm1031, %v1041, %v1043
        %v1045 = vrot.slane %v519, 3
        %v1046 = vsel %vm1031, %v1043, %v1045
        %v1047 = vsel %vm577, %v1034, 0
        %v1049 = vsel %vm577, %v1036, 0
        %v1051 = vsel %vm577, %v1038, 0
        %v1053 = vsel %vm577, %v1040, 0
        %v1055 = vsel %vm577, %v1042, 0
        %v1057 = vsel %vm577, %v1044, 0
        %v1059 = vsel %vm577, %v1046, 0
        %v1061 = vsel %vm577, %v1045, 0
        %1063 = vmatprep.subr.mxu0 0.0
        %1064 = vmatpush1.msra.mxu0 0.0
        %1065 = vmatprep.subr.mxu0 0.0
        %1066 = vmatpush1.msra.mxu0 0.0
        %1067 = vmatprep.subr.mxu0 0.0
        %1068 = vmatpush1.msra.mxu0 0.0
        %1069 = vmatprep.subr.mxu0 0.0
        %1070 = vmatpush1.msra.mxu0 0.0
        %1071 = vmatprep.subr.mxu0 0.0
        %1072 = vmatpush1.msra.mxu0 0.0
        %1073 = vmatprep.subr.mxu0 0.0
        %1074 = vmatpush1.msra.mxu0 0.0
        %1075 = vmatprep.subr.mxu0 0.0
        %1076 = vmatpush1.msra.mxu0 0.0
        %1077 = vmatprep.subr.mxu0 0.0
        %1078 = vmatpush1.msra.mxu0 0.0
        %1079 = vmatprep.subr.mxu0 %v1030
        %1080 = vmatpush1.msra.mxu0 %v1029
        %1081 = vmatprep.subr.mxu0 %v1028
        %1082 = vmatpush1.msra.mxu0 %v1027
        %1083 = vmatprep.subr.mxu0 %v1026
        %1084 = vmatpush1.msra.mxu0 %v1025
        %1085 = vmatprep.subr.mxu0 %v1024
        %1086 = vmatpush1.msra.mxu0 %v1023
        %1087 = vmatprep.subr.mxu0 %v1022
        %1088 = vmatpush1.msra.mxu0 %v1021
        %1089 = vmatprep.subr.mxu0 %v1020
        %1090 = vmatpush1.msra.mxu0 %v1019
        %1091 = vmatprep.subr.mxu0 %v1018
        %1092 = vmatpush1.msra.mxu0 %v1017
        %1093 = vmatprep.subr.mxu0 %v1016
        %1094 = vmatpush1.msra.mxu0 %v1015
        %1095 = vmatprep.subr.mxu0 0.0
        %1096 = vmatpush2.msra.mxu0 0.0
        %1097 = vmatprep.subr.mxu0 0.0
        %1098 = vmatpush2.msra.mxu0 0.0
        %1099 = vmatprep.subr.mxu0 0.0
        %1100 = vmatpush2.msra.mxu0 0.0
        %1101 = vmatprep.subr.mxu0 0.0
        %1102 = vmatpush2.msra.mxu0 0.0
        %1103 = vmatprep.subr.mxu0 0.0
        %1104 = vmatpush2.msra.mxu0 0.0
        %1105 = vmatprep.subr.mxu0 0.0
        %1106 = vmatpush2.msra.mxu0 0.0
        %1107 = vmatprep.subr.mxu0 0.0
        %1108 = vmatpush2.msra.mxu0 0.0
        %1109 = vmatprep.subr.mxu0 0.0
        %1110 = vmatpush2.msra.mxu0 0.0
        %1111 = vmatprep.subr.mxu0 0.0
        %1112 = vmatpush2.msra.mxu0 0.0
        %1113 = vmatprep.subr.mxu0 0.0
        %1114 = vmatpush2.msra.mxu0 0.0
        %1115 = vmatprep.subr.mxu0 0.0
        %1116 = vmatpush2.msra.mxu0 0.0
        %1117 = vmatprep.subr.mxu0 0.0
        %1118 = vmatpush2.msra.mxu0 0.0
        %1119 = vmatprep.subr.mxu0 0.0
        %1120 = vmatpush2.msra.mxu0 0.0
        %1121 = vmatprep.subr.mxu0 0.0
        %1122 = vmatpush2.msra.mxu0 0.0
        %1123 = vmatprep.subr.mxu0 0.0
        %1124 = vmatpush2.msra.mxu0 0.0
        %1125 = vmatprep.subr.mxu0 0.0
        %1126 = vmatpush2.msra.mxu0 0.0
        %1127 = vmatprep.mubr.f32.mxu0 0.0
        %1128 = vmatmul.mubr.f32.gmra.mxu0 %v1047
        %v1129 = vpop.f32.mrf.mxu0
        %v1130 = vadd.f32 0.0, %v1129
        %v1131 = vpop.f32.mrf.mxu0
        %v1132 = vadd.f32 0.0, %v1131
        %1133 = vmatprep.mubr.f32.mxu0 0.0
        %1134 = vmatmul.mubr.f32.gmra.mxu0 %v1049
        %v1135 = vpop.f32.mrf.mxu0
        %v1136 = vadd.f32 0.0, %v1135
        %v1137 = vpop.f32.mrf.mxu0
        %v1138 = vadd.f32 0.0, %v1137
        %1139 = vmatprep.mubr.f32.mxu0 0.0
        %1140 = vmatmul.mubr.f32.gmra.mxu0 %v1051
        %v1141 = vpop.f32.mrf.mxu0
        %v1142 = vadd.f32 0.0, %v1141
        %v1143 = vpop.f32.mrf.mxu0
        %v1144 = vadd.f32 0.0, %v1143
        %1145 = vmatprep.mubr.f32.mxu0 0.0
        %1146 = vmatmul.mubr.f32.gmra.mxu0 %v1053
        %v1147 = vpop.f32.mrf.mxu0
        %v1148 = vadd.f32 0.0, %v1147
        %v1149 = vpop.f32.mrf.mxu0
        %v1150 = vadd.f32 0.0, %v1149
        %1151 = vmatprep.mubr.f32.mxu0 0.0
        %1152 = vmatmul.mubr.f32.gmra.mxu0 %v1055
        %v1153 = vpop.f32.mrf.mxu0
        %v1154 = vadd.f32 0.0, %v1153
        %v1155 = vpop.f32.mrf.mxu0
        %v1156 = vadd.f32 0.0, %v1155
        %1157 = vmatprep.mubr.f32.mxu0 0.0
        %1158 = vmatmul.mubr.f32.gmra.mxu0 %v1057
        %v1159 = vpop.f32.mrf.mxu0
        %v1160 = vadd.f32 0.0, %v1159
        %v1161 = vpop.f32.mrf.mxu0
        %v1162 = vadd.f32 0.0, %v1161
        %1163 = vmatprep.mubr.f32.mxu0 0.0
        %1164 = vmatmul.mubr.f32.gmra.mxu0 %v1059
        %v1165 = vpop.f32.mrf.mxu0
        %v1166 = vadd.f32 0.0, %v1165
        %v1167 = vpop.f32.mrf.mxu0
        %v1168 = vadd.f32 0.0, %v1167
        %1169 = vmatprep.mubr.f32.mxu0 0.0
        %1170 = vmatmul.mubr.f32.gmra.mxu0 %v1061
        %v1171 = vpop.f32.mrf.mxu0
        %v1172 = vadd.f32 0.0, %v1171
        %v1173 = vpop.f32.mrf.mxu0
        %v1174 = vadd.f32 0.0, %v1173
        %1175 = vdwg.mxu0
        %v1176 = vadd.f32 %v998, %v1130
        %v1177 = vadd.f32 %v999, %v1132
        %v1178 = vadd.f32 %v1000, %v1136
        %v1179 = vadd.f32 %v1001, %v1138
        %v1180 = vadd.f32 %v1002, %v1142
        %v1181 = vadd.f32 %v1003, %v1144
        %v1182 = vadd.f32 %v1004, %v1148
        %v1183 = vadd.f32 %v1005, %v1150
        %v1184 = vadd.f32 %v1006, %v1154
        %v1185 = vadd.f32 %v1007, %v1156
        %v1186 = vadd.f32 %v1008, %v1160
        %v1187 = vadd.f32 %v1009, %v1162
        %v1188 = vadd.f32 %v1010, %v1166
        %v1189 = vadd.f32 %v1011, %v1168
        %v1190 = vadd.f32 %v1012, %v1172
        %v1191 = vadd.f32 %v1013, %v1174
        %s1192 = scalar_lea.vmem [#allocation5], 512
        %v1193 = vld [vmem:[%s1192] sm:$0xff]
        %v1194 = vld [vmem:[%s1192 + $0x8] sm:$0xff]
        %v1195 = vld [vmem:[%s1192 + $0x10] sm:$0xff]
        %v1196 = vld [vmem:[%s1192 + $0x18] sm:$0xff]
        %v1197 = vld [vmem:[%s1192 + $0x20] sm:$0xff]
        %v1198 = vld [vmem:[%s1192 + $0x28] sm:$0xff]
        %v1199 = vld [vmem:[%s1192 + $0x30] sm:$0xff]
        %v1200 = vld [vmem:[%s1192 + $0x38] sm:$0xff]
        %v1201 = vld [vmem:[%s1192 + $0x40] sm:$0xff]
        %v1202 = vld [vmem:[%s1192 + $0x48] sm:$0xff]
        %v1203 = vld [vmem:[%s1192 + $0x50] sm:$0xff]
        %v1204 = vld [vmem:[%s1192 + $0x58] sm:$0xff]
        %v1205 = vld [vmem:[%s1192 + $0x60] sm:$0xff]
        %v1206 = vld [vmem:[%s1192 + $0x68] sm:$0xff]
        %v1207 = vld [vmem:[%s1192 + $0x70] sm:$0xff]
        %v1208 = vld [vmem:[%s1192 + $0x78] sm:$0xff]
        %vm1209 = vcmask 1043456
        %v1210 = vrot.slane %v512, 4
        %v1211 = vrot.slane %v513, 4
        %v1212 = vsel %vm1209, %v1210, %v1211
        %v1213 = vrot.slane %v514, 4
        %v1214 = vsel %vm1209, %v1211, %v1213
        %v1215 = vrot.slane %v515, 4
        %v1216 = vsel %vm1209, %v1213, %v1215
        %v1217 = vrot.slane %v516, 4
        %v1218 = vsel %vm1209, %v1215, %v1217
        %v1219 = vrot.slane %v517, 4
        %v1220 = vsel %vm1209, %v1217, %v1219
        %v1221 = vrot.slane %v518, 4
        %v1222 = vsel %vm1209, %v1219, %v1221
        %v1223 = vrot.slane %v519, 4
        %v1224 = vsel %vm1209, %v1221, %v1223
        %v1225 = vsel %vm577, %v1212, 0
        %v1227 = vsel %vm577, %v1214, 0
        %v1229 = vsel %vm577, %v1216, 0
        %v1231 = vsel %vm577, %v1218, 0
        %v1233 = vsel %vm577, %v1220, 0
        %v1235 = vsel %vm577, %v1222, 0
        %v1237 = vsel %vm577, %v1224, 0
        %v1239 = vsel %vm577, %v1223, 0
        %1241 = vmatprep.subr.mxu0 0.0
        %1242 = vmatpush1.msra.mxu0 0.0
        %1243 = vmatprep.subr.mxu0 0.0
        %1244 = vmatpush1.msra.mxu0 0.0
        %1245 = vmatprep.subr.mxu0 0.0
        %1246 = vmatpush1.msra.mxu0 0.0
        %1247 = vmatprep.subr.mxu0 0.0
        %1248 = vmatpush1.msra.mxu0 0.0
        %1249 = vmatprep.subr.mxu0 0.0
        %1250 = vmatpush1.msra.mxu0 0.0
        %1251 = vmatprep.subr.mxu0 0.0
        %1252 = vmatpush1.msra.mxu0 0.0
        %1253 = vmatprep.subr.mxu0 0.0
        %1254 = vmatpush1.msra.mxu0 0.0
        %1255 = vmatprep.subr.mxu0 0.0
        %1256 = vmatpush1.msra.mxu0 0.0
        %1257 = vmatprep.subr.mxu0 %v1208
        %1258 = vmatpush1.msra.mxu0 %v1207
        %1259 = vmatprep.subr.mxu0 %v1206
        %1260 = vmatpush1.msra.mxu0 %v1205
        %1261 = vmatprep.subr.mxu0 %v1204
        %1262 = vmatpush1.msra.mxu0 %v1203
        %1263 = vmatprep.subr.mxu0 %v1202
        %1264 = vmatpush1.msra.mxu0 %v1201
        %1265 = vmatprep.subr.mxu0 %v1200
        %1266 = vmatpush1.msra.mxu0 %v1199
        %1267 = vmatprep.subr.mxu0 %v1198
        %1268 = vmatpush1.msra.mxu0 %v1197
        %1269 = vmatprep.subr.mxu0 %v1196
        %1270 = vmatpush1.msra.mxu0 %v1195
        %1271 = vmatprep.subr.mxu0 %v1194
        %1272 = vmatpush1.msra.mxu0 %v1193
        %1273 = vmatprep.subr.mxu0 0.0
        %1274 = vmatpush2.msra.mxu0 0.0
        %1275 = vmatprep.subr.mxu0 0.0
        %1276 = vmatpush2.msra.mxu0 0.0
        %1277 = vmatprep.subr.mxu0 0.0
        %1278 = vmatpush2.msra.mxu0 0.0
        %1279 = vmatprep.subr.mxu0 0.0
        %1280 = vmatpush2.msra.mxu0 0.0
        %1281 = vmatprep.subr.mxu0 0.0
        %1282 = vmatpush2.msra.mxu0 0.0
        %1283 = vmatprep.subr.mxu0 0.0
        %1284 = vmatpush2.msra.mxu0 0.0
        %1285 = vmatprep.subr.mxu0 0.0
        %1286 = vmatpush2.msra.mxu0 0.0
        %1287 = vmatprep.subr.mxu0 0.0
        %1288 = vmatpush2.msra.mxu0 0.0
        %1289 = vmatprep.subr.mxu0 0.0
        %1290 = vmatpush2.msra.mxu0 0.0
        %1291 = vmatprep.subr.mxu0 0.0
        %1292 = vmatpush2.msra.mxu0 0.0
        %1293 = vmatprep.subr.mxu0 0.0
        %1294 = vmatpush2.msra.mxu0 0.0
        %1295 = vmatprep.subr.mxu0 0.0
        %1296 = vmatpush2.msra.mxu0 0.0
        %1297 = vmatprep.subr.mxu0 0.0
        %1298 = vmatpush2.msra.mxu0 0.0
        %1299 = vmatprep.subr.mxu0 0.0
        %1300 = vmatpush2.msra.mxu0 0.0
        %1301 = vmatprep.subr.mxu0 0.0
        %1302 = vmatpush2.msra.mxu0 0.0
        %1303 = vmatprep.subr.mxu0 0.0
        %1304 = vmatpush2.msra.mxu0 0.0
        %1305 = vmatprep.mubr.f32.mxu0 0.0
        %1306 = vmatmul.mubr.f32.gmra.mxu0 %v1225
        %v1307 = vpop.f32.mrf.mxu0
        %v1308 = vadd.f32 0.0, %v1307
        %v1309 = vpop.f32.mrf.mxu0
        %v1310 = vadd.f32 0.0, %v1309
        %1311 = vmatprep.mubr.f32.mxu0 0.0
        %1312 = vmatmul.mubr.f32.gmra.mxu0 %v1227
        %v1313 = vpop.f32.mrf.mxu0
        %v1314 = vadd.f32 0.0, %v1313
        %v1315 = vpop.f32.mrf.mxu0
        %v1316 = vadd.f32 0.0, %v1315
        %1317 = vmatprep.mubr.f32.mxu0 0.0
        %1318 = vmatmul.mubr.f32.gmra.mxu0 %v1229
        %v1319 = vpop.f32.mrf.mxu0
        %v1320 = vadd.f32 0.0, %v1319
        %v1321 = vpop.f32.mrf.mxu0
        %v1322 = vadd.f32 0.0, %v1321
        %1323 = vmatprep.mubr.f32.mxu0 0.0
        %1324 = vmatmul.mubr.f32.gmra.mxu0 %v1231
        %v1325 = vpop.f32.mrf.mxu0
        %v1326 = vadd.f32 0.0, %v1325
        %v1327 = vpop.f32.mrf.mxu0
        %v1328 = vadd.f32 0.0, %v1327
        %1329 = vmatprep.mubr.f32.mxu0 0.0
        %1330 = vmatmul.mubr.f32.gmra.mxu0 %v1233
        %v1331 = vpop.f32.mrf.mxu0
        %v1332 = vadd.f32 0.0, %v1331
        %v1333 = vpop.f32.mrf.mxu0
        %v1334 = vadd.f32 0.0, %v1333
        %1335 = vmatprep.mubr.f32.mxu0 0.0
        %1336 = vmatmul.mubr.f32.gmra.mxu0 %v1235
        %v1337 = vpop.f32.mrf.mxu0
        %v1338 = vadd.f32 0.0, %v1337
        %v1339 = vpop.f32.mrf.mxu0
        %v1340 = vadd.f32 0.0, %v1339
        %1341 = vmatprep.mubr.f32.mxu0 0.0
        %1342 = vmatmul.mubr.f32.gmra.mxu0 %v1237
        %v1343 = vpop.f32.mrf.mxu0
        %v1344 = vadd.f32 0.0, %v1343
        %v1345 = vpop.f32.mrf.mxu0
        %v1346 = vadd.f32 0.0, %v1345
        %1347 = vmatprep.mubr.f32.mxu0 0.0
        %1348 = vmatmul.mubr.f32.gmra.mxu0 %v1239
        %v1349 = vpop.f32.mrf.mxu0
        %v1350 = vadd.f32 0.0, %v1349
        %v1351 = vpop.f32.mrf.mxu0
        %v1352 = vadd.f32 0.0, %v1351
        %1353 = vdwg.mxu0
        %v1354 = vadd.f32 %v1176, %v1308
        %v1355 = vadd.f32 %v1177, %v1310
        %v1356 = vadd.f32 %v1178, %v1314
        %v1357 = vadd.f32 %v1179, %v1316
        %v1358 = vadd.f32 %v1180, %v1320
        %v1359 = vadd.f32 %v1181, %v1322
        %v1360 = vadd.f32 %v1182, %v1326
        %v1361 = vadd.f32 %v1183, %v1328
        %v1362 = vadd.f32 %v1184, %v1332
        %v1363 = vadd.f32 %v1185, %v1334
        %v1364 = vadd.f32 %v1186, %v1338
        %v1365 = vadd.f32 %v1187, %v1340
        %v1366 = vadd.f32 %v1188, %v1344
        %v1367 = vadd.f32 %v1189, %v1346
        %v1368 = vadd.f32 %v1190, %v1350
        %v1369 = vadd.f32 %v1191, %v1352
        %s1370 = scalar_lea.vmem [#allocation5], 640
        %v1371 = vld [vmem:[%s1370] sm:$0xff]
        %v1372 = vld [vmem:[%s1370 + $0x8] sm:$0xff]
        %v1373 = vld [vmem:[%s1370 + $0x10] sm:$0xff]
        %v1374 = vld [vmem:[%s1370 + $0x18] sm:$0xff]
        %v1375 = vld [vmem:[%s1370 + $0x20] sm:$0xff]
        %v1376 = vld [vmem:[%s1370 + $0x28] sm:$0xff]
        %v1377 = vld [vmem:[%s1370 + $0x30] sm:$0xff]
        %v1378 = vld [vmem:[%s1370 + $0x38] sm:$0xff]
        %v1379 = vld [vmem:[%s1370 + $0x40] sm:$0xff]
        %v1380 = vld [vmem:[%s1370 + $0x48] sm:$0xff]
        %v1381 = vld [vmem:[%s1370 + $0x50] sm:$0xff]
        %v1382 = vld [vmem:[%s1370 + $0x58] sm:$0xff]
        %v1383 = vld [vmem:[%s1370 + $0x60] sm:$0xff]
        %v1384 = vld [vmem:[%s1370 + $0x68] sm:$0xff]
        %v1385 = vld [vmem:[%s1370 + $0x70] sm:$0xff]
        %v1386 = vld [vmem:[%s1370 + $0x78] sm:$0xff]
        %s1387 = scalar_lea.vmem [#allocation5], 768
        %v1388 = vld [vmem:[%s1387] sm:$0xff]
        %v1389 = vld [vmem:[%s1387 + $0x8] sm:$0xff]
        %v1390 = vld [vmem:[%s1387 + $0x10] sm:$0xff]
        %v1391 = vld [vmem:[%s1387 + $0x18] sm:$0xff]
        %v1392 = vld [vmem:[%s1387 + $0x20] sm:$0xff]
        %v1393 = vld [vmem:[%s1387 + $0x28] sm:$0xff]
        %v1394 = vld [vmem:[%s1387 + $0x30] sm:$0xff]
        %v1395 = vld [vmem:[%s1387 + $0x38] sm:$0xff]
        %v1396 = vld [vmem:[%s1387 + $0x40] sm:$0xff]
        %v1397 = vld [vmem:[%s1387 + $0x48] sm:$0xff]
        %v1398 = vld [vmem:[%s1387 + $0x50] sm:$0xff]
        %v1399 = vld [vmem:[%s1387 + $0x58] sm:$0xff]
        %v1400 = vld [vmem:[%s1387 + $0x60] sm:$0xff]
        %v1401 = vld [vmem:[%s1387 + $0x68] sm:$0xff]
        %v1402 = vld [vmem:[%s1387 + $0x70] sm:$0xff]
        %v1403 = vld [vmem:[%s1387 + $0x78] sm:$0xff]
        %1404 = vmatprep.subr.mxu0 0.0
        %1405 = vmatpush1.msra.mxu0 0.0
        %1406 = vmatprep.subr.mxu0 0.0
        %1407 = vmatpush1.msra.mxu0 0.0
        %1408 = vmatprep.subr.mxu0 0.0
        %1409 = vmatpush1.msra.mxu0 0.0
        %1410 = vmatprep.subr.mxu0 0.0
        %1411 = vmatpush1.msra.mxu0 0.0
        %1412 = vmatprep.subr.mxu0 0.0
        %1413 = vmatpush1.msra.mxu0 0.0
        %1414 = vmatprep.subr.mxu0 0.0
        %1415 = vmatpush1.msra.mxu0 0.0
        %1416 = vmatprep.subr.mxu0 0.0
        %1417 = vmatpush1.msra.mxu0 0.0
        %1418 = vmatprep.subr.mxu0 0.0
        %1419 = vmatpush1.msra.mxu0 0.0
        %1420 = vmatprep.subr.mxu0 %v1403
        %1421 = vmatpush1.msra.mxu0 %v1402
        %1422 = vmatprep.subr.mxu0 %v1401
        %1423 = vmatpush1.msra.mxu0 %v1400
        %1424 = vmatprep.subr.mxu0 %v1399
        %1425 = vmatpush1.msra.mxu0 %v1398
        %1426 = vmatprep.subr.mxu0 %v1397
        %1427 = vmatpush1.msra.mxu0 %v1396
        %1428 = vmatprep.subr.mxu0 %v1395
        %1429 = vmatpush1.msra.mxu0 %v1394
        %1430 = vmatprep.subr.mxu0 %v1393
        %1431 = vmatpush1.msra.mxu0 %v1392
        %1432 = vmatprep.subr.mxu0 %v1391
        %1433 = vmatpush1.msra.mxu0 %v1390
        %1434 = vmatprep.subr.mxu0 %v1389
        %1435 = vmatpush1.msra.mxu0 %v1388
        %1436 = vmatprep.subr.mxu0 0.0
        %1437 = vmatpush2.msra.mxu0 0.0
        %1438 = vmatprep.subr.mxu0 0.0
        %1439 = vmatpush2.msra.mxu0 0.0
        %1440 = vmatprep.subr.mxu0 0.0
        %1441 = vmatpush2.msra.mxu0 0.0
        %1442 = vmatprep.subr.mxu0 0.0
        %1443 = vmatpush2.msra.mxu0 0.0
        %1444 = vmatprep.subr.mxu0 0.0
        %1445 = vmatpush2.msra.mxu0 0.0
        %1446 = vmatprep.subr.mxu0 0.0
        %1447 = vmatpush2.msra.mxu0 0.0
        %1448 = vmatprep.subr.mxu0 0.0
        %1449 = vmatpush2.msra.mxu0 0.0
        %1450 = vmatprep.subr.mxu0 0.0
        %1451 = vmatpush2.msra.mxu0 0.0
        %1452 = vmatprep.subr.mxu0 0.0
        %1453 = vmatpush2.msra.mxu0 0.0
        %1454 = vmatprep.subr.mxu0 0.0
        %1455 = vmatpush2.msra.mxu0 0.0
        %1456 = vmatprep.subr.mxu0 0.0
        %1457 = vmatpush2.msra.mxu0 0.0
        %1458 = vmatprep.subr.mxu0 0.0
        %1459 = vmatpush2.msra.mxu0 0.0
        %1460 = vmatprep.subr.mxu0 0.0
        %1461 = vmatpush2.msra.mxu0 0.0
        %1462 = vmatprep.subr.mxu0 0.0
        %1463 = vmatpush2.msra.mxu0 0.0
        %1464 = vmatprep.subr.mxu0 0.0
        %1465 = vmatpush2.msra.mxu0 0.0
        %1466 = vmatprep.subr.mxu0 0.0
        %1467 = vmatpush2.msra.mxu0 0.0
        %1468 = vmatprep.mubr.f32.mxu0 0.0
        %1469 = vmatmul.mubr.f32.gmra.mxu0 %v578
        %v1470 = vpop.f32.mrf.mxu0
        %v1471 = vadd.f32 0.0, %v1470
        %v1472 = vpop.f32.mrf.mxu0
        %v1473 = vadd.f32 0.0, %v1472
        %1474 = vmatprep.mubr.f32.mxu0 0.0
        %1475 = vmatmul.mubr.f32.gmra.mxu0 %v580
        %v1476 = vpop.f32.mrf.mxu0
        %v1477 = vadd.f32 0.0, %v1476
        %v1478 = vpop.f32.mrf.mxu0
        %v1479 = vadd.f32 0.0, %v1478
        %1480 = vmatprep.mubr.f32.mxu0 0.0
        %1481 = vmatmul.mubr.f32.gmra.mxu0 %v582
        %v1482 = vpop.f32.mrf.mxu0
        %v1483 = vadd.f32 0.0, %v1482
        %v1484 = vpop.f32.mrf.mxu0
        %v1485 = vadd.f32 0.0, %v1484
        %1486 = vmatprep.mubr.f32.mxu0 0.0
        %1487 = vmatmul.mubr.f32.gmra.mxu0 %v584
        %v1488 = vpop.f32.mrf.mxu0
        %v1489 = vadd.f32 0.0, %v1488
        %v1490 = vpop.f32.mrf.mxu0
        %v1491 = vadd.f32 0.0, %v1490
        %1492 = vmatprep.mubr.f32.mxu0 0.0
        %1493 = vmatmul.mubr.f32.gmra.mxu0 %v586
        %v1494 = vpop.f32.mrf.mxu0
        %v1495 = vadd.f32 0.0, %v1494
        %v1496 = vpop.f32.mrf.mxu0
        %v1497 = vadd.f32 0.0, %v1496
        %1498 = vmatprep.mubr.f32.mxu0 0.0
        %1499 = vmatmul.mubr.f32.gmra.mxu0 %v588
        %v1500 = vpop.f32.mrf.mxu0
        %v1501 = vadd.f32 0.0, %v1500
        %v1502 = vpop.f32.mrf.mxu0
        %v1503 = vadd.f32 0.0, %v1502
        %1504 = vmatprep.mubr.f32.mxu0 0.0
        %1505 = vmatmul.mubr.f32.gmra.mxu0 %v590
        %v1506 = vpop.f32.mrf.mxu0
        %v1507 = vadd.f32 0.0, %v1506
        %v1508 = vpop.f32.mrf.mxu0
        %v1509 = vadd.f32 0.0, %v1508
        %1510 = vmatprep.mubr.f32.mxu0 0.0
        %1511 = vmatmul.mubr.f32.gmra.mxu0 %v592
        %v1512 = vpop.f32.mrf.mxu0
        %v1513 = vadd.f32 0.0, %v1512
        %v1514 = vpop.f32.mrf.mxu0
        %v1515 = vadd.f32 0.0, %v1514
        %1516 = vdwg.mxu0
        %1517 = vmatprep.subr.mxu0 0.0
        %1518 = vmatpush1.msra.mxu0 0.0
        %1519 = vmatprep.subr.mxu0 0.0
        %1520 = vmatpush1.msra.mxu0 0.0
        %1521 = vmatprep.subr.mxu0 0.0
        %1522 = vmatpush1.msra.mxu0 0.0
        %1523 = vmatprep.subr.mxu0 0.0
        %1524 = vmatpush1.msra.mxu0 0.0
        %1525 = vmatprep.subr.mxu0 0.0
        %1526 = vmatpush1.msra.mxu0 0.0
        %1527 = vmatprep.subr.mxu0 0.0
        %1528 = vmatpush1.msra.mxu0 0.0
        %1529 = vmatprep.subr.mxu0 0.0
        %1530 = vmatpush1.msra.mxu0 0.0
        %1531 = vmatprep.subr.mxu0 0.0
        %1532 = vmatpush1.msra.mxu0 0.0
        %1533 = vmatprep.subr.mxu0 %v1386
        %1534 = vmatpush1.msra.mxu0 %v1385
        %1535 = vmatprep.subr.mxu0 %v1384
        %1536 = vmatpush1.msra.mxu0 %v1383
        %1537 = vmatprep.subr.mxu0 %v1382
        %1538 = vmatpush1.msra.mxu0 %v1381
        %1539 = vmatprep.subr.mxu0 %v1380
        %1540 = vmatpush1.msra.mxu0 %v1379
        %1541 = vmatprep.subr.mxu0 %v1378
        %1542 = vmatpush1.msra.mxu0 %v1377
        %1543 = vmatprep.subr.mxu0 %v1376
        %1544 = vmatpush1.msra.mxu0 %v1375
        %1545 = vmatprep.subr.mxu0 %v1374
        %1546 = vmatpush1.msra.mxu0 %v1373
        %1547 = vmatprep.subr.mxu0 %v1372
        %1548 = vmatpush1.msra.mxu0 %v1371
        %1549 = vmatprep.subr.mxu0 0.0
        %1550 = vmatpush2.msra.mxu0 0.0
        %1551 = vmatprep.subr.mxu0 0.0
        %1552 = vmatpush2.msra.mxu0 0.0
        %1553 = vmatprep.subr.mxu0 0.0
        %1554 = vmatpush2.msra.mxu0 0.0
        %1555 = vmatprep.subr.mxu0 0.0
        %1556 = vmatpush2.msra.mxu0 0.0
        %1557 = vmatprep.subr.mxu0 0.0
        %1558 = vmatpush2.msra.mxu0 0.0
        %1559 = vmatprep.subr.mxu0 0.0
        %1560 = vmatpush2.msra.mxu0 0.0
        %1561 = vmatprep.subr.mxu0 0.0
        %1562 = vmatpush2.msra.mxu0 0.0
        %1563 = vmatprep.subr.mxu0 0.0
        %1564 = vmatpush2.msra.mxu0 0.0
        %1565 = vmatprep.subr.mxu0 0.0
        %1566 = vmatpush2.msra.mxu0 0.0
        %1567 = vmatprep.subr.mxu0 0.0
        %1568 = vmatpush2.msra.mxu0 0.0
        %1569 = vmatprep.subr.mxu0 0.0
        %1570 = vmatpush2.msra.mxu0 0.0
        %1571 = vmatprep.subr.mxu0 0.0
        %1572 = vmatpush2.msra.mxu0 0.0
        %1573 = vmatprep.subr.mxu0 0.0
        %1574 = vmatpush2.msra.mxu0 0.0
        %1575 = vmatprep.subr.mxu0 0.0
        %1576 = vmatpush2.msra.mxu0 0.0
        %1577 = vmatprep.subr.mxu0 0.0
        %1578 = vmatpush2.msra.mxu0 0.0
        %1579 = vmatprep.subr.mxu0 0.0
        %1580 = vmatpush2.msra.mxu0 0.0
        %1581 = vmatprep.mubr.f32.mxu0 0.0
        %1582 = vmatmul.mubr.f32.gmra.mxu0 %v707
        %v1583 = vpop.f32.mrf.mxu0
        %v1584 = vadd.f32 %v1471, %v1583
        %v1585 = vpop.f32.mrf.mxu0
        %v1586 = vadd.f32 %v1473, %v1585
        %1587 = vmatprep.mubr.f32.mxu0 0.0
        %1588 = vmatmul.mubr.f32.gmra.mxu0 %v709
        %v1589 = vpop.f32.mrf.mxu0
        %v1590 = vadd.f32 %v1477, %v1589
        %v1591 = vpop.f32.mrf.mxu0
        %v1592 = vadd.f32 %v1479, %v1591
        %1593 = vmatprep.mubr.f32.mxu0 0.0
        %1594 = vmatmul.mubr.f32.gmra.mxu0 %v711
        %v1595 = vpop.f32.mrf.mxu0
        %v1596 = vadd.f32 %v1483, %v1595
        %v1597 = vpop.f32.mrf.mxu0
        %v1598 = vadd.f32 %v1485, %v1597
        %1599 = vmatprep.mubr.f32.mxu0 0.0
        %1600 = vmatmul.mubr.f32.gmra.mxu0 %v713
        %v1601 = vpop.f32.mrf.mxu0
        %v1602 = vadd.f32 %v1489, %v1601
        %v1603 = vpop.f32.mrf.mxu0
        %v1604 = vadd.f32 %v1491, %v1603
        %1605 = vmatprep.mubr.f32.mxu0 0.0
        %1606 = vmatmul.mubr.f32.gmra.mxu0 %v715
        %v1607 = vpop.f32.mrf.mxu0
        %v1608 = vadd.f32 %v1495, %v1607
        %v1609 = vpop.f32.mrf.mxu0
        %v1610 = vadd.f32 %v1497, %v1609
        %1611 = vmatprep.mubr.f32.mxu0 0.0
        %1612 = vmatmul.mubr.f32.gmra.mxu0 %v717
        %v1613 = vpop.f32.mrf.mxu0
        %v1614 = vadd.f32 %v1501, %v1613
        %v1615 = vpop.f32.mrf.mxu0
        %v1616 = vadd.f32 %v1503, %v1615
        %1617 = vmatprep.mubr.f32.mxu0 0.0
        %1618 = vmatmul.mubr.f32.gmra.mxu0 %v719
        %v1619 = vpop.f32.mrf.mxu0
        %v1620 = vadd.f32 %v1507, %v1619
        %v1621 = vpop.f32.mrf.mxu0
        %v1622 = vadd.f32 %v1509, %v1621
        %1623 = vmatprep.mubr.f32.mxu0 0.0
        %1624 = vmatmul.mubr.f32.gmra.mxu0 %v721
        %v1625 = vpop.f32.mrf.mxu0
        %v1626 = vadd.f32 %v1513, %v1625
        %v1627 = vpop.f32.mrf.mxu0
        %v1628 = vadd.f32 %v1515, %v1627
        %1629 = vdwg.mxu0
        %s1630 = scalar_lea.vmem [#allocation5], 896
        %v1631 = vld [vmem:[%s1630] sm:$0xff]
        %v1632 = vld [vmem:[%s1630 + $0x8] sm:$0xff]
        %v1633 = vld [vmem:[%s1630 + $0x10] sm:$0xff]
        %v1634 = vld [vmem:[%s1630 + $0x18] sm:$0xff]
        %v1635 = vld [vmem:[%s1630 + $0x20] sm:$0xff]
        %v1636 = vld [vmem:[%s1630 + $0x28] sm:$0xff]
        %v1637 = vld [vmem:[%s1630 + $0x30] sm:$0xff]
        %v1638 = vld [vmem:[%s1630 + $0x38] sm:$0xff]
        %v1639 = vld [vmem:[%s1630 + $0x40] sm:$0xff]
        %v1640 = vld [vmem:[%s1630 + $0x48] sm:$0xff]
        %v1641 = vld [vmem:[%s1630 + $0x50] sm:$0xff]
        %v1642 = vld [vmem:[%s1630 + $0x58] sm:$0xff]
        %v1643 = vld [vmem:[%s1630 + $0x60] sm:$0xff]
        %v1644 = vld [vmem:[%s1630 + $0x68] sm:$0xff]
        %v1645 = vld [vmem:[%s1630 + $0x70] sm:$0xff]
        %v1646 = vld [vmem:[%s1630 + $0x78] sm:$0xff]
        %1647 = vmatprep.subr.mxu0 0.0
        %1648 = vmatpush1.msra.mxu0 0.0
        %1649 = vmatprep.subr.mxu0 0.0
        %1650 = vmatpush1.msra.mxu0 0.0
        %1651 = vmatprep.subr.mxu0 0.0
        %1652 = vmatpush1.msra.mxu0 0.0
        %1653 = vmatprep.subr.mxu0 0.0
        %1654 = vmatpush1.msra.mxu0 0.0
        %1655 = vmatprep.subr.mxu0 0.0
        %1656 = vmatpush1.msra.mxu0 0.0
        %1657 = vmatprep.subr.mxu0 0.0
        %1658 = vmatpush1.msra.mxu0 0.0
        %1659 = vmatprep.subr.mxu0 0.0
        %1660 = vmatpush1.msra.mxu0 0.0
        %1661 = vmatprep.subr.mxu0 0.0
        %1662 = vmatpush1.msra.mxu0 0.0
        %1663 = vmatprep.subr.mxu0 %v1646
        %1664 = vmatpush1.msra.mxu0 %v1645
        %1665 = vmatprep.subr.mxu0 %v1644
        %1666 = vmatpush1.msra.mxu0 %v1643
        %1667 = vmatprep.subr.mxu0 %v1642
        %1668 = vmatpush1.msra.mxu0 %v1641
        %1669 = vmatprep.subr.mxu0 %v1640
        %1670 = vmatpush1.msra.mxu0 %v1639
        %1671 = vmatprep.subr.mxu0 %v1638
        %1672 = vmatpush1.msra.mxu0 %v1637
        %1673 = vmatprep.subr.mxu0 %v1636
        %1674 = vmatpush1.msra.mxu0 %v1635
        %1675 = vmatprep.subr.mxu0 %v1634
        %1676 = vmatpush1.msra.mxu0 %v1633
        %1677 = vmatprep.subr.mxu0 %v1632
        %1678 = vmatpush1.msra.mxu0 %v1631
        %1679 = vmatprep.subr.mxu0 0.0
        %1680 = vmatpush2.msra.mxu0 0.0
        %1681 = vmatprep.subr.mxu0 0.0
        %1682 = vmatpush2.msra.mxu0 0.0
        %1683 = vmatprep.subr.mxu0 0.0
        %1684 = vmatpush2.msra.mxu0 0.0
        %1685 = vmatprep.subr.mxu0 0.0
        %1686 = vmatpush2.msra.mxu0 0.0
        %1687 = vmatprep.subr.mxu0 0.0
        %1688 = vmatpush2.msra.mxu0 0.0
        %1689 = vmatprep.subr.mxu0 0.0
        %1690 = vmatpush2.msra.mxu0 0.0
        %1691 = vmatprep.subr.mxu0 0.0
        %1692 = vmatpush2.msra.mxu0 0.0
        %1693 = vmatprep.subr.mxu0 0.0
        %1694 = vmatpush2.msra.mxu0 0.0
        %1695 = vmatprep.subr.mxu0 0.0
        %1696 = vmatpush2.msra.mxu0 0.0
        %1697 = vmatprep.subr.mxu0 0.0
        %1698 = vmatpush2.msra.mxu0 0.0
        %1699 = vmatprep.subr.mxu0 0.0
        %1700 = vmatpush2.msra.mxu0 0.0
        %1701 = vmatprep.subr.mxu0 0.0
        %1702 = vmatpush2.msra.mxu0 0.0
        %1703 = vmatprep.subr.mxu0 0.0
        %1704 = vmatpush2.msra.mxu0 0.0
        %1705 = vmatprep.subr.mxu0 0.0
        %1706 = vmatpush2.msra.mxu0 0.0
        %1707 = vmatprep.subr.mxu0 0.0
        %1708 = vmatpush2.msra.mxu0 0.0
        %1709 = vmatprep.subr.mxu0 0.0
        %1710 = vmatpush2.msra.mxu0 0.0
        %1711 = vmatprep.mubr.f32.mxu0 0.0
        %1712 = vmatmul.mubr.f32.gmra.mxu0 %v869
        %v1713 = vpop.f32.mrf.mxu0
        %v1714 = vadd.f32 0.0, %v1713
        %v1715 = vpop.f32.mrf.mxu0
        %v1716 = vadd.f32 0.0, %v1715
        %1717 = vmatprep.mubr.f32.mxu0 0.0
        %1718 = vmatmul.mubr.f32.gmra.mxu0 %v871
        %v1719 = vpop.f32.mrf.mxu0
        %v1720 = vadd.f32 0.0, %v1719
        %v1721 = vpop.f32.mrf.mxu0
        %v1722 = vadd.f32 0.0, %v1721
        %1723 = vmatprep.mubr.f32.mxu0 0.0
        %1724 = vmatmul.mubr.f32.gmra.mxu0 %v873
        %v1725 = vpop.f32.mrf.mxu0
        %v1726 = vadd.f32 0.0, %v1725
        %v1727 = vpop.f32.mrf.mxu0
        %v1728 = vadd.f32 0.0, %v1727
        %1729 = vmatprep.mubr.f32.mxu0 0.0
        %1730 = vmatmul.mubr.f32.gmra.mxu0 %v875
        %v1731 = vpop.f32.mrf.mxu0
        %v1732 = vadd.f32 0.0, %v1731
        %v1733 = vpop.f32.mrf.mxu0
        %v1734 = vadd.f32 0.0, %v1733
        %1735 = vmatprep.mubr.f32.mxu0 0.0
        %1736 = vmatmul.mubr.f32.gmra.mxu0 %v877
        %v1737 = vpop.f32.mrf.mxu0
        %v1738 = vadd.f32 0.0, %v1737
        %v1739 = vpop.f32.mrf.mxu0
        %v1740 = vadd.f32 0.0, %v1739
        %1741 = vmatprep.mubr.f32.mxu0 0.0
        %1742 = vmatmul.mubr.f32.gmra.mxu0 %v879
        %v1743 = vpop.f32.mrf.mxu0
        %v1744 = vadd.f32 0.0, %v1743
        %v1745 = vpop.f32.mrf.mxu0
        %v1746 = vadd.f32 0.0, %v1745
        %1747 = vmatprep.mubr.f32.mxu0 0.0
        %1748 = vmatmul.mubr.f32.gmra.mxu0 %v881
        %v1749 = vpop.f32.mrf.mxu0
        %v1750 = vadd.f32 0.0, %v1749
        %v1751 = vpop.f32.mrf.mxu0
        %v1752 = vadd.f32 0.0, %v1751
        %1753 = vmatprep.mubr.f32.mxu0 0.0
        %1754 = vmatmul.mubr.f32.gmra.mxu0 %v883
        %v1755 = vpop.f32.mrf.mxu0
        %v1756 = vadd.f32 0.0, %v1755
        %v1757 = vpop.f32.mrf.mxu0
        %v1758 = vadd.f32 0.0, %v1757
        %1759 = vdwg.mxu0
        %v1760 = vadd.f32 %v1584, %v1714
        %v1761 = vadd.f32 %v1586, %v1716
        %v1762 = vadd.f32 %v1590, %v1720
        %v1763 = vadd.f32 %v1592, %v1722
        %v1764 = vadd.f32 %v1596, %v1726
        %v1765 = vadd.f32 %v1598, %v1728
        %v1766 = vadd.f32 %v1602, %v1732
        %v1767 = vadd.f32 %v1604, %v1734
        %v1768 = vadd.f32 %v1608, %v1738
        %v1769 = vadd.f32 %v1610, %v1740
        %v1770 = vadd.f32 %v1614, %v1744
        %v1771 = vadd.f32 %v1616, %v1746
        %v1772 = vadd.f32 %v1620, %v1750
        %v1773 = vadd.f32 %v1622, %v1752
        %v1774 = vadd.f32 %v1626, %v1756
        %v1775 = vadd.f32 %v1628, %v1758
        %s1776 = scalar_lea.vmem [#allocation5], 1024
        %v1777 = vld [vmem:[%s1776] sm:$0xff]
        %v1778 = vld [vmem:[%s1776 + $0x8] sm:$0xff]
        %v1779 = vld [vmem:[%s1776 + $0x10] sm:$0xff]
        %v1780 = vld [vmem:[%s1776 + $0x18] sm:$0xff]
        %v1781 = vld [vmem:[%s1776 + $0x20] sm:$0xff]
        %v1782 = vld [vmem:[%s1776 + $0x28] sm:$0xff]
        %v1783 = vld [vmem:[%s1776 + $0x30] sm:$0xff]
        %v1784 = vld [vmem:[%s1776 + $0x38] sm:$0xff]
        %v1785 = vld [vmem:[%s1776 + $0x40] sm:$0xff]
        %v1786 = vld [vmem:[%s1776 + $0x48] sm:$0xff]
        %v1787 = vld [vmem:[%s1776 + $0x50] sm:$0xff]
        %v1788 = vld [vmem:[%s1776 + $0x58] sm:$0xff]
        %v1789 = vld [vmem:[%s1776 + $0x60] sm:$0xff]
        %v1790 = vld [vmem:[%s1776 + $0x68] sm:$0xff]
        %v1791 = vld [vmem:[%s1776 + $0x70] sm:$0xff]
        %v1792 = vld [vmem:[%s1776 + $0x78] sm:$0xff]
        %1793 = vmatprep.subr.mxu0 0.0
        %1794 = vmatpush1.msra.mxu0 0.0
        %1795 = vmatprep.subr.mxu0 0.0
        %1796 = vmatpush1.msra.mxu0 0.0
        %1797 = vmatprep.subr.mxu0 0.0
        %1798 = vmatpush1.msra.mxu0 0.0
        %1799 = vmatprep.subr.mxu0 0.0
        %1800 = vmatpush1.msra.mxu0 0.0
        %1801 = vmatprep.subr.mxu0 0.0
        %1802 = vmatpush1.msra.mxu0 0.0
        %1803 = vmatprep.subr.mxu0 0.0
        %1804 = vmatpush1.msra.mxu0 0.0
        %1805 = vmatprep.subr.mxu0 0.0
        %1806 = vmatpush1.msra.mxu0 0.0
        %1807 = vmatprep.subr.mxu0 0.0
        %1808 = vmatpush1.msra.mxu0 0.0
        %1809 = vmatprep.subr.mxu0 %v1792
        %1810 = vmatpush1.msra.mxu0 %v1791
        %1811 = vmatprep.subr.mxu0 %v1790
        %1812 = vmatpush1.msra.mxu0 %v1789
        %1813 = vmatprep.subr.mxu0 %v1788
        %1814 = vmatpush1.msra.mxu0 %v1787
        %1815 = vmatprep.subr.mxu0 %v1786
        %1816 = vmatpush1.msra.mxu0 %v1785
        %1817 = vmatprep.subr.mxu0 %v1784
        %1818 = vmatpush1.msra.mxu0 %v1783
        %1819 = vmatprep.subr.mxu0 %v1782
        %1820 = vmatpush1.msra.mxu0 %v1781
        %1821 = vmatprep.subr.mxu0 %v1780
        %1822 = vmatpush1.msra.mxu0 %v1779
        %1823 = vmatprep.subr.mxu0 %v1778
        %1824 = vmatpush1.msra.mxu0 %v1777
        %1825 = vmatprep.subr.mxu0 0.0
        %1826 = vmatpush2.msra.mxu0 0.0
        %1827 = vmatprep.subr.mxu0 0.0
        %1828 = vmatpush2.msra.mxu0 0.0
        %1829 = vmatprep.subr.mxu0 0.0
        %1830 = vmatpush2.msra.mxu0 0.0
        %1831 = vmatprep.subr.mxu0 0.0
        %1832 = vmatpush2.msra.mxu0 0.0
        %1833 = vmatprep.subr.mxu0 0.0
        %1834 = vmatpush2.msra.mxu0 0.0
        %1835 = vmatprep.subr.mxu0 0.0
        %1836 = vmatpush2.msra.mxu0 0.0
        %1837 = vmatprep.subr.mxu0 0.0
        %1838 = vmatpush2.msra.mxu0 0.0
        %1839 = vmatprep.subr.mxu0 0.0
        %1840 = vmatpush2.msra.mxu0 0.0
        %1841 = vmatprep.subr.mxu0 0.0
        %1842 = vmatpush2.msra.mxu0 0.0
        %1843 = vmatprep.subr.mxu0 0.0
        %1844 = vmatpush2.msra.mxu0 0.0
        %1845 = vmatprep.subr.mxu0 0.0
        %1846 = vmatpush2.msra.mxu0 0.0
        %1847 = vmatprep.subr.mxu0 0.0
        %1848 = vmatpush2.msra.mxu0 0.0
        %1849 = vmatprep.subr.mxu0 0.0
        %1850 = vmatpush2.msra.mxu0 0.0
        %1851 = vmatprep.subr.mxu0 0.0
        %1852 = vmatpush2.msra.mxu0 0.0
        %1853 = vmatprep.subr.mxu0 0.0
        %1854 = vmatpush2.msra.mxu0 0.0
        %1855 = vmatprep.subr.mxu0 0.0
        %1856 = vmatpush2.msra.mxu0 0.0
        %1857 = vmatprep.mubr.f32.mxu0 0.0
        %1858 = vmatmul.mubr.f32.gmra.mxu0 %v1047
        %v1859 = vpop.f32.mrf.mxu0
        %v1860 = vadd.f32 0.0, %v1859
        %v1861 = vpop.f32.mrf.mxu0
        %v1862 = vadd.f32 0.0, %v1861
        %1863 = vmatprep.mubr.f32.mxu0 0.0
        %1864 = vmatmul.mubr.f32.gmra.mxu0 %v1049
        %v1865 = vpop.f32.mrf.mxu0
        %v1866 = vadd.f32 0.0, %v1865
        %v1867 = vpop.f32.mrf.mxu0
        %v1868 = vadd.f32 0.0, %v1867
        %1869 = vmatprep.mubr.f32.mxu0 0.0
        %1870 = vmatmul.mubr.f32.gmra.mxu0 %v1051
        %v1871 = vpop.f32.mrf.mxu0
        %v1872 = vadd.f32 0.0, %v1871
        %v1873 = vpop.f32.mrf.mxu0
        %v1874 = vadd.f32 0.0, %v1873
        %1875 = vmatprep.mubr.f32.mxu0 0.0
        %1876 = vmatmul.mubr.f32.gmra.mxu0 %v1053
        %v1877 = vpop.f32.mrf.mxu0
        %v1878 = vadd.f32 0.0, %v1877
        %v1879 = vpop.f32.mrf.mxu0
        %v1880 = vadd.f32 0.0, %v1879
        %1881 = vmatprep.mubr.f32.mxu0 0.0
        %1882 = vmatmul.mubr.f32.gmra.mxu0 %v1055
        %v1883 = vpop.f32.mrf.mxu0
        %v1884 = vadd.f32 0.0, %v1883
        %v1885 = vpop.f32.mrf.mxu0
        %v1886 = vadd.f32 0.0, %v1885
        %1887 = vmatprep.mubr.f32.mxu0 0.0
        %1888 = vmatmul.mubr.f32.gmra.mxu0 %v1057
        %v1889 = vpop.f32.mrf.mxu0
        %v1890 = vadd.f32 0.0, %v1889
        %v1891 = vpop.f32.mrf.mxu0
        %v1892 = vadd.f32 0.0, %v1891
        %1893 = vmatprep.mubr.f32.mxu0 0.0
        %1894 = vmatmul.mubr.f32.gmra.mxu0 %v1059
        %v1895 = vpop.f32.mrf.mxu0
        %v1896 = vadd.f32 0.0, %v1895
        %v1897 = vpop.f32.mrf.mxu0
        %v1898 = vadd.f32 0.0, %v1897
        %1899 = vmatprep.mubr.f32.mxu0 0.0
        %1900 = vmatmul.mubr.f32.gmra.mxu0 %v1061
        %v1901 = vpop.f32.mrf.mxu0
        %v1902 = vadd.f32 0.0, %v1901
        %v1903 = vpop.f32.mrf.mxu0
        %v1904 = vadd.f32 0.0, %v1903
        %1905 = vdwg.mxu0
        %v1906 = vadd.f32 %v1760, %v1860
        %v1907 = vadd.f32 %v1761, %v1862
        %v1908 = vadd.f32 %v1762, %v1866
        %v1909 = vadd.f32 %v1763, %v1868
        %v1910 = vadd.f32 %v1764, %v1872
        %v1911 = vadd.f32 %v1765, %v1874
        %v1912 = vadd.f32 %v1766, %v1878
        %v1913 = vadd.f32 %v1767, %v1880
        %v1914 = vadd.f32 %v1768, %v1884
        %v1915 = vadd.f32 %v1769, %v1886
        %v1916 = vadd.f32 %v1770, %v1890
        %v1917 = vadd.f32 %v1771, %v1892
        %v1918 = vadd.f32 %v1772, %v1896
        %v1919 = vadd.f32 %v1773, %v1898
        %v1920 = vadd.f32 %v1774, %v1902
        %v1921 = vadd.f32 %v1775, %v1904
        %s1922 = scalar_lea.vmem [#allocation5], 1152
        %v1923 = vld [vmem:[%s1922] sm:$0xff]
        %v1924 = vld [vmem:[%s1922 + $0x8] sm:$0xff]
        %v1925 = vld [vmem:[%s1922 + $0x10] sm:$0xff]
        %v1926 = vld [vmem:[%s1922 + $0x18] sm:$0xff]
        %v1927 = vld [vmem:[%s1922 + $0x20] sm:$0xff]
        %v1928 = vld [vmem:[%s1922 + $0x28] sm:$0xff]
        %v1929 = vld [vmem:[%s1922 + $0x30] sm:$0xff]
        %v1930 = vld [vmem:[%s1922 + $0x38] sm:$0xff]
        %v1931 = vld [vmem:[%s1922 + $0x40] sm:$0xff]
        %v1932 = vld [vmem:[%s1922 + $0x48] sm:$0xff]
        %v1933 = vld [vmem:[%s1922 + $0x50] sm:$0xff]
        %v1934 = vld [vmem:[%s1922 + $0x58] sm:$0xff]
        %v1935 = vld [vmem:[%s1922 + $0x60] sm:$0xff]
        %v1936 = vld [vmem:[%s1922 + $0x68] sm:$0xff]
        %v1937 = vld [vmem:[%s1922 + $0x70] sm:$0xff]
        %v1938 = vld [vmem:[%s1922 + $0x78] sm:$0xff]
        %1939 = vmatprep.subr.mxu0 0.0
        %1940 = vmatpush1.msra.mxu0 0.0
        %1941 = vmatprep.subr.mxu0 0.0
        %1942 = vmatpush1.msra.mxu0 0.0
        %1943 = vmatprep.subr.mxu0 0.0
        %1944 = vmatpush1.msra.mxu0 0.0
        %1945 = vmatprep.subr.mxu0 0.0
        %1946 = vmatpush1.msra.mxu0 0.0
        %1947 = vmatprep.subr.mxu0 0.0
        %1948 = vmatpush1.msra.mxu0 0.0
        %1949 = vmatprep.subr.mxu0 0.0
        %1950 = vmatpush1.msra.mxu0 0.0
        %1951 = vmatprep.subr.mxu0 0.0
        %1952 = vmatpush1.msra.mxu0 0.0
        %1953 = vmatprep.subr.mxu0 0.0
        %1954 = vmatpush1.msra.mxu0 0.0
        %1955 = vmatprep.subr.mxu0 %v1938
        %1956 = vmatpush1.msra.mxu0 %v1937
        %1957 = vmatprep.subr.mxu0 %v1936
        %1958 = vmatpush1.msra.mxu0 %v1935
        %1959 = vmatprep.subr.mxu0 %v1934
        %1960 = vmatpush1.msra.mxu0 %v1933
        %1961 = vmatprep.subr.mxu0 %v1932
        %1962 = vmatpush1.msra.mxu0 %v1931
        %1963 = vmatprep.subr.mxu0 %v1930
        %1964 = vmatpush1.msra.mxu0 %v1929
        %1965 = vmatprep.subr.mxu0 %v1928
        %1966 = vmatpush1.msra.mxu0 %v1927
        %1967 = vmatprep.subr.mxu0 %v1926
        %1968 = vmatpush1.msra.mxu0 %v1925
        %1969 = vmatprep.subr.mxu0 %v1924
        %1970 = vmatpush1.msra.mxu0 %v1923
        %1971 = vmatprep.subr.mxu0 0.0
        %1972 = vmatpush2.msra.mxu0 0.0
        %1973 = vmatprep.subr.mxu0 0.0
        %1974 = vmatpush2.msra.mxu0 0.0
        %1975 = vmatprep.subr.mxu0 0.0
        %1976 = vmatpush2.msra.mxu0 0.0
        %1977 = vmatprep.subr.mxu0 0.0
        %1978 = vmatpush2.msra.mxu0 0.0
        %1979 = vmatprep.subr.mxu0 0.0
        %1980 = vmatpush2.msra.mxu0 0.0
        %1981 = vmatprep.subr.mxu0 0.0
        %1982 = vmatpush2.msra.mxu0 0.0
        %1983 = vmatprep.subr.mxu0 0.0
        %1984 = vmatpush2.msra.mxu0 0.0
        %1985 = vmatprep.subr.mxu0 0.0
        %1986 = vmatpush2.msra.mxu0 0.0
        %1987 = vmatprep.subr.mxu0 0.0
        %1988 = vmatpush2.msra.mxu0 0.0
        %1989 = vmatprep.subr.mxu0 0.0
        %1990 = vmatpush2.msra.mxu0 0.0
        %1991 = vmatprep.subr.mxu0 0.0
        %1992 = vmatpush2.msra.mxu0 0.0
        %1993 = vmatprep.subr.mxu0 0.0
        %1994 = vmatpush2.msra.mxu0 0.0
        %1995 = vmatprep.subr.mxu0 0.0
        %1996 = vmatpush2.msra.mxu0 0.0
        %1997 = vmatprep.subr.mxu0 0.0
        %1998 = vmatpush2.msra.mxu0 0.0
        %1999 = vmatprep.subr.mxu0 0.0
        %2000 = vmatpush2.msra.mxu0 0.0
        %2001 = vmatprep.subr.mxu0 0.0
        %2002 = vmatpush2.msra.mxu0 0.0
        %2003 = vmatprep.mubr.f32.mxu0 0.0
        %2004 = vmatmul.mubr.f32.gmra.mxu0 %v1225
        %v2005 = vpop.f32.mrf.mxu0
        %v2006 = vadd.f32 0.0, %v2005
        %v2007 = vpop.f32.mrf.mxu0
        %v2008 = vadd.f32 0.0, %v2007
        %2009 = vmatprep.mubr.f32.mxu0 0.0
        %2010 = vmatmul.mubr.f32.gmra.mxu0 %v1227
        %v2011 = vpop.f32.mrf.mxu0
        %v2012 = vadd.f32 0.0, %v2011
        %v2013 = vpop.f32.mrf.mxu0
        %v2014 = vadd.f32 0.0, %v2013
        %2015 = vmatprep.mubr.f32.mxu0 0.0
        %2016 = vmatmul.mubr.f32.gmra.mxu0 %v1229
        %v2017 = vpop.f32.mrf.mxu0
        %v2018 = vadd.f32 0.0, %v2017
        %v2019 = vpop.f32.mrf.mxu0
        %v2020 = vadd.f32 0.0, %v2019
        %2021 = vmatprep.mubr.f32.mxu0 0.0
        %2022 = vmatmul.mubr.f32.gmra.mxu0 %v1231
        %v2023 = vpop.f32.mrf.mxu0
        %v2024 = vadd.f32 0.0, %v2023
        %v2025 = vpop.f32.mrf.mxu0
        %v2026 = vadd.f32 0.0, %v2025
        %2027 = vmatprep.mubr.f32.mxu0 0.0
        %2028 = vmatmul.mubr.f32.gmra.mxu0 %v1233
        %v2029 = vpop.f32.mrf.mxu0
        %v2030 = vadd.f32 0.0, %v2029
        %v2031 = vpop.f32.mrf.mxu0
        %v2032 = vadd.f32 0.0, %v2031
        %2033 = vmatprep.mubr.f32.mxu0 0.0
        %2034 = vmatmul.mubr.f32.gmra.mxu0 %v1235
        %v2035 = vpop.f32.mrf.mxu0
        %v2036 = vadd.f32 0.0, %v2035
        %v2037 = vpop.f32.mrf.mxu0
        %v2038 = vadd.f32 0.0, %v2037
        %2039 = vmatprep.mubr.f32.mxu0 0.0
        %2040 = vmatmul.mubr.f32.gmra.mxu0 %v1237
        %v2041 = vpop.f32.mrf.mxu0
        %v2042 = vadd.f32 0.0, %v2041
        %v2043 = vpop.f32.mrf.mxu0
        %v2044 = vadd.f32 0.0, %v2043
        %2045 = vmatprep.mubr.f32.mxu0 0.0
        %2046 = vmatmul.mubr.f32.gmra.mxu0 %v1239
        %v2047 = vpop.f32.mrf.mxu0
        %v2048 = vadd.f32 0.0, %v2047
        %v2049 = vpop.f32.mrf.mxu0
        %v2050 = vadd.f32 0.0, %v2049
        %2051 = vdwg.mxu0
        %v2052 = vadd.f32 %v1906, %v2006
        %v2053 = vadd.f32 %v1907, %v2008
        %v2054 = vadd.f32 %v1908, %v2012
        %v2055 = vadd.f32 %v1909, %v2014
        %v2056 = vadd.f32 %v1910, %v2018
        %v2057 = vadd.f32 %v1911, %v2020
        %v2058 = vadd.f32 %v1912, %v2024
        %v2059 = vadd.f32 %v1913, %v2026
        %v2060 = vadd.f32 %v1914, %v2030
        %v2061 = vadd.f32 %v1915, %v2032
        %v2062 = vadd.f32 %v1916, %v2036
        %v2063 = vadd.f32 %v1917, %v2038
        %v2064 = vadd.f32 %v1918, %v2042
        %v2065 = vadd.f32 %v1919, %v2044
        %v2066 = vadd.f32 %v1920, %v2048
        %v2067 = vadd.f32 %v1921, %v2050
        %s2068 = scalar_lea.vmem [#allocation5], 1280
        %v2069 = vld [vmem:[%s2068] sm:$0xff]
        %v2070 = vld [vmem:[%s2068 + $0x8] sm:$0xff]
        %v2071 = vld [vmem:[%s2068 + $0x10] sm:$0xff]
        %v2072 = vld [vmem:[%s2068 + $0x18] sm:$0xff]
        %v2073 = vld [vmem:[%s2068 + $0x20] sm:$0xff]
        %v2074 = vld [vmem:[%s2068 + $0x28] sm:$0xff]
        %v2075 = vld [vmem:[%s2068 + $0x30] sm:$0xff]
        %v2076 = vld [vmem:[%s2068 + $0x38] sm:$0xff]
        %v2077 = vld [vmem:[%s2068 + $0x40] sm:$0xff]
        %v2078 = vld [vmem:[%s2068 + $0x48] sm:$0xff]
        %v2079 = vld [vmem:[%s2068 + $0x50] sm:$0xff]
        %v2080 = vld [vmem:[%s2068 + $0x58] sm:$0xff]
        %v2081 = vld [vmem:[%s2068 + $0x60] sm:$0xff]
        %v2082 = vld [vmem:[%s2068 + $0x68] sm:$0xff]
        %v2083 = vld [vmem:[%s2068 + $0x70] sm:$0xff]
        %v2084 = vld [vmem:[%s2068 + $0x78] sm:$0xff]
        %s2085 = scalar_lea.vmem [#allocation5], 1408
        %v2086 = vld [vmem:[%s2085] sm:$0xff]
        %v2087 = vld [vmem:[%s2085 + $0x8] sm:$0xff]
        %v2088 = vld [vmem:[%s2085 + $0x10] sm:$0xff]
        %v2089 = vld [vmem:[%s2085 + $0x18] sm:$0xff]
        %v2090 = vld [vmem:[%s2085 + $0x20] sm:$0xff]
        %v2091 = vld [vmem:[%s2085 + $0x28] sm:$0xff]
        %v2092 = vld [vmem:[%s2085 + $0x30] sm:$0xff]
        %v2093 = vld [vmem:[%s2085 + $0x38] sm:$0xff]
        %v2094 = vld [vmem:[%s2085 + $0x40] sm:$0xff]
        %v2095 = vld [vmem:[%s2085 + $0x48] sm:$0xff]
        %v2096 = vld [vmem:[%s2085 + $0x50] sm:$0xff]
        %v2097 = vld [vmem:[%s2085 + $0x58] sm:$0xff]
        %v2098 = vld [vmem:[%s2085 + $0x60] sm:$0xff]
        %v2099 = vld [vmem:[%s2085 + $0x68] sm:$0xff]
        %v2100 = vld [vmem:[%s2085 + $0x70] sm:$0xff]
        %v2101 = vld [vmem:[%s2085 + $0x78] sm:$0xff]
        %2102 = vmatprep.subr.mxu0 0.0
        %2103 = vmatpush1.msra.mxu0 0.0
        %2104 = vmatprep.subr.mxu0 0.0
        %2105 = vmatpush1.msra.mxu0 0.0
        %2106 = vmatprep.subr.mxu0 0.0
        %2107 = vmatpush1.msra.mxu0 0.0
        %2108 = vmatprep.subr.mxu0 0.0
        %2109 = vmatpush1.msra.mxu0 0.0
        %2110 = vmatprep.subr.mxu0 0.0
        %2111 = vmatpush1.msra.mxu0 0.0
        %2112 = vmatprep.subr.mxu0 0.0
        %2113 = vmatpush1.msra.mxu0 0.0
        %2114 = vmatprep.subr.mxu0 0.0
        %2115 = vmatpush1.msra.mxu0 0.0
        %2116 = vmatprep.subr.mxu0 0.0
        %2117 = vmatpush1.msra.mxu0 0.0
        %2118 = vmatprep.subr.mxu0 %v2101
        %2119 = vmatpush1.msra.mxu0 %v2100
        %2120 = vmatprep.subr.mxu0 %v2099
        %2121 = vmatpush1.msra.mxu0 %v2098
        %2122 = vmatprep.subr.mxu0 %v2097
        %2123 = vmatpush1.msra.mxu0 %v2096
        %2124 = vmatprep.subr.mxu0 %v2095
        %2125 = vmatpush1.msra.mxu0 %v2094
        %2126 = vmatprep.subr.mxu0 %v2093
        %2127 = vmatpush1.msra.mxu0 %v2092
        %2128 = vmatprep.subr.mxu0 %v2091
        %2129 = vmatpush1.msra.mxu0 %v2090
        %2130 = vmatprep.subr.mxu0 %v2089
        %2131 = vmatpush1.msra.mxu0 %v2088
        %2132 = vmatprep.subr.mxu0 %v2087
        %2133 = vmatpush1.msra.mxu0 %v2086
        %2134 = vmatprep.subr.mxu0 0.0
        %2135 = vmatpush2.msra.mxu0 0.0
        %2136 = vmatprep.subr.mxu0 0.0
        %2137 = vmatpush2.msra.mxu0 0.0
        %2138 = vmatprep.subr.mxu0 0.0
        %2139 = vmatpush2.msra.mxu0 0.0
        %2140 = vmatprep.subr.mxu0 0.0
        %2141 = vmatpush2.msra.mxu0 0.0
        %2142 = vmatprep.subr.mxu0 0.0
        %2143 = vmatpush2.msra.mxu0 0.0
        %2144 = vmatprep.subr.mxu0 0.0
        %2145 = vmatpush2.msra.mxu0 0.0
        %2146 = vmatprep.subr.mxu0 0.0
        %2147 = vmatpush2.msra.mxu0 0.0
        %2148 = vmatprep.subr.mxu0 0.0
        %2149 = vmatpush2.msra.mxu0 0.0
        %2150 = vmatprep.subr.mxu0 0.0
        %2151 = vmatpush2.msra.mxu0 0.0
        %2152 = vmatprep.subr.mxu0 0.0
        %2153 = vmatpush2.msra.mxu0 0.0
        %2154 = vmatprep.subr.mxu0 0.0
        %2155 = vmatpush2.msra.mxu0 0.0
        %2156 = vmatprep.subr.mxu0 0.0
        %2157 = vmatpush2.msra.mxu0 0.0
        %2158 = vmatprep.subr.mxu0 0.0
        %2159 = vmatpush2.msra.mxu0 0.0
        %2160 = vmatprep.subr.mxu0 0.0
        %2161 = vmatpush2.msra.mxu0 0.0
        %2162 = vmatprep.subr.mxu0 0.0
        %2163 = vmatpush2.msra.mxu0 0.0
        %2164 = vmatprep.subr.mxu0 0.0
        %2165 = vmatpush2.msra.mxu0 0.0
        %2166 = vmatprep.mubr.f32.mxu0 0.0
        %2167 = vmatmul.mubr.f32.gmra.mxu0 %v578
        %v2168 = vpop.f32.mrf.mxu0
        %v2169 = vadd.f32 0.0, %v2168
        %v2170 = vpop.f32.mrf.mxu0
        %v2171 = vadd.f32 0.0, %v2170
        %2172 = vmatprep.mubr.f32.mxu0 0.0
        %2173 = vmatmul.mubr.f32.gmra.mxu0 %v580
        %v2174 = vpop.f32.mrf.mxu0
        %v2175 = vadd.f32 0.0, %v2174
        %v2176 = vpop.f32.mrf.mxu0
        %v2177 = vadd.f32 0.0, %v2176
        %2178 = vmatprep.mubr.f32.mxu0 0.0
        %2179 = vmatmul.mubr.f32.gmra.mxu0 %v582
        %v2180 = vpop.f32.mrf.mxu0
        %v2181 = vadd.f32 0.0, %v2180
        %v2182 = vpop.f32.mrf.mxu0
        %v2183 = vadd.f32 0.0, %v2182
        %2184 = vmatprep.mubr.f32.mxu0 0.0
        %2185 = vmatmul.mubr.f32.gmra.mxu0 %v584
        %v2186 = vpop.f32.mrf.mxu0
        %v2187 = vadd.f32 0.0, %v2186
        %v2188 = vpop.f32.mrf.mxu0
        %v2189 = vadd.f32 0.0, %v2188
        %2190 = vmatprep.mubr.f32.mxu0 0.0
        %2191 = vmatmul.mubr.f32.gmra.mxu0 %v586
        %v2192 = vpop.f32.mrf.mxu0
        %v2193 = vadd.f32 0.0, %v2192
        %v2194 = vpop.f32.mrf.mxu0
        %v2195 = vadd.f32 0.0, %v2194
        %2196 = vmatprep.mubr.f32.mxu0 0.0
        %2197 = vmatmul.mubr.f32.gmra.mxu0 %v588
        %v2198 = vpop.f32.mrf.mxu0
        %v2199 = vadd.f32 0.0, %v2198
        %v2200 = vpop.f32.mrf.mxu0
        %v2201 = vadd.f32 0.0, %v2200
        %2202 = vmatprep.mubr.f32.mxu0 0.0
        %2203 = vmatmul.mubr.f32.gmra.mxu0 %v590
        %v2204 = vpop.f32.mrf.mxu0
        %v2205 = vadd.f32 0.0, %v2204
        %v2206 = vpop.f32.mrf.mxu0
        %v2207 = vadd.f32 0.0, %v2206
        %2208 = vmatprep.mubr.f32.mxu0 0.0
        %2209 = vmatmul.mubr.f32.gmra.mxu0 %v592
        %v2210 = vpop.f32.mrf.mxu0
        %v2211 = vadd.f32 0.0, %v2210
        %v2212 = vpop.f32.mrf.mxu0
        %v2213 = vadd.f32 0.0, %v2212
        %2214 = vdwg.mxu0
        %2215 = vmatprep.subr.mxu0 0.0
        %2216 = vmatpush1.msra.mxu0 0.0
        %2217 = vmatprep.subr.mxu0 0.0
        %2218 = vmatpush1.msra.mxu0 0.0
        %2219 = vmatprep.subr.mxu0 0.0
        %2220 = vmatpush1.msra.mxu0 0.0
        %2221 = vmatprep.subr.mxu0 0.0
        %2222 = vmatpush1.msra.mxu0 0.0
        %2223 = vmatprep.subr.mxu0 0.0
        %2224 = vmatpush1.msra.mxu0 0.0
        %2225 = vmatprep.subr.mxu0 0.0
        %2226 = vmatpush1.msra.mxu0 0.0
        %2227 = vmatprep.subr.mxu0 0.0
        %2228 = vmatpush1.msra.mxu0 0.0
        %2229 = vmatprep.subr.mxu0 0.0
        %2230 = vmatpush1.msra.mxu0 0.0
        %2231 = vmatprep.subr.mxu0 %v2084
        %2232 = vmatpush1.msra.mxu0 %v2083
        %2233 = vmatprep.subr.mxu0 %v2082
        %2234 = vmatpush1.msra.mxu0 %v2081
        %2235 = vmatprep.subr.mxu0 %v2080
        %2236 = vmatpush1.msra.mxu0 %v2079
        %2237 = vmatprep.subr.mxu0 %v2078
        %2238 = vmatpush1.msra.mxu0 %v2077
        %2239 = vmatprep.subr.mxu0 %v2076
        %2240 = vmatpush1.msra.mxu0 %v2075
        %2241 = vmatprep.subr.mxu0 %v2074
        %2242 = vmatpush1.msra.mxu0 %v2073
        %2243 = vmatprep.subr.mxu0 %v2072
        %2244 = vmatpush1.msra.mxu0 %v2071
        %2245 = vmatprep.subr.mxu0 %v2070
        %2246 = vmatpush1.msra.mxu0 %v2069
        %2247 = vmatprep.subr.mxu0 0.0
        %2248 = vmatpush2.msra.mxu0 0.0
        %2249 = vmatprep.subr.mxu0 0.0
        %2250 = vmatpush2.msra.mxu0 0.0
        %2251 = vmatprep.subr.mxu0 0.0
        %2252 = vmatpush2.msra.mxu0 0.0
        %2253 = vmatprep.subr.mxu0 0.0
        %2254 = vmatpush2.msra.mxu0 0.0
        %2255 = vmatprep.subr.mxu0 0.0
        %2256 = vmatpush2.msra.mxu0 0.0
        %2257 = vmatprep.subr.mxu0 0.0
        %2258 = vmatpush2.msra.mxu0 0.0
        %2259 = vmatprep.subr.mxu0 0.0
        %2260 = vmatpush2.msra.mxu0 0.0
        %2261 = vmatprep.subr.mxu0 0.0
        %2262 = vmatpush2.msra.mxu0 0.0
        %2263 = vmatprep.subr.mxu0 0.0
        %2264 = vmatpush2.msra.mxu0 0.0
        %2265 = vmatprep.subr.mxu0 0.0
        %2266 = vmatpush2.msra.mxu0 0.0
        %2267 = vmatprep.subr.mxu0 0.0
        %2268 = vmatpush2.msra.mxu0 0.0
        %2269 = vmatprep.subr.mxu0 0.0
        %2270 = vmatpush2.msra.mxu0 0.0
        %2271 = vmatprep.subr.mxu0 0.0
        %2272 = vmatpush2.msra.mxu0 0.0
        %2273 = vmatprep.subr.mxu0 0.0
        %2274 = vmatpush2.msra.mxu0 0.0
        %2275 = vmatprep.subr.mxu0 0.0
        %2276 = vmatpush2.msra.mxu0 0.0
        %2277 = vmatprep.subr.mxu0 0.0
        %2278 = vmatpush2.msra.mxu0 0.0
        %2279 = vmatprep.mubr.f32.mxu0 0.0
        %2280 = vmatmul.mubr.f32.gmra.mxu0 %v707
        %v2281 = vpop.f32.mrf.mxu0
        %v2282 = vadd.f32 %v2169, %v2281
        %v2283 = vpop.f32.mrf.mxu0
        %v2284 = vadd.f32 %v2171, %v2283
        %2285 = vmatprep.mubr.f32.mxu0 0.0
        %2286 = vmatmul.mubr.f32.gmra.mxu0 %v709
        %v2287 = vpop.f32.mrf.mxu0
        %v2288 = vadd.f32 %v2175, %v2287
        %v2289 = vpop.f32.mrf.mxu0
        %v2290 = vadd.f32 %v2177, %v2289
        %2291 = vmatprep.mubr.f32.mxu0 0.0
        %2292 = vmatmul.mubr.f32.gmra.mxu0 %v711
        %v2293 = vpop.f32.mrf.mxu0
        %v2294 = vadd.f32 %v2181, %v2293
        %v2295 = vpop.f32.mrf.mxu0
        %v2296 = vadd.f32 %v2183, %v2295
        %2297 = vmatprep.mubr.f32.mxu0 0.0
        %2298 = vmatmul.mubr.f32.gmra.mxu0 %v713
        %v2299 = vpop.f32.mrf.mxu0
        %v2300 = vadd.f32 %v2187, %v2299
        %v2301 = vpop.f32.mrf.mxu0
        %v2302 = vadd.f32 %v2189, %v2301
        %2303 = vmatprep.mubr.f32.mxu0 0.0
        %2304 = vmatmul.mubr.f32.gmra.mxu0 %v715
        %v2305 = vpop.f32.mrf.mxu0
        %v2306 = vadd.f32 %v2193, %v2305
        %v2307 = vpop.f32.mrf.mxu0
        %v2308 = vadd.f32 %v2195, %v2307
        %2309 = vmatprep.mubr.f32.mxu0 0.0
        %2310 = vmatmul.mubr.f32.gmra.mxu0 %v717
        %v2311 = vpop.f32.mrf.mxu0
        %v2312 = vadd.f32 %v2199, %v2311
        %v2313 = vpop.f32.mrf.mxu0
        %v2314 = vadd.f32 %v2201, %v2313
        %2315 = vmatprep.mubr.f32.mxu0 0.0
        %2316 = vmatmul.mubr.f32.gmra.mxu0 %v719
        %v2317 = vpop.f32.mrf.mxu0
        %v2318 = vadd.f32 %v2205, %v2317
        %v2319 = vpop.f32.mrf.mxu0
        %v2320 = vadd.f32 %v2207, %v2319
        %2321 = vmatprep.mubr.f32.mxu0 0.0
        %2322 = vmatmul.mubr.f32.gmra.mxu0 %v721
        %v2323 = vpop.f32.mrf.mxu0
        %v2324 = vadd.f32 %v2211, %v2323
        %v2325 = vpop.f32.mrf.mxu0
        %v2326 = vadd.f32 %v2213, %v2325
        %2327 = vdwg.mxu0
        %s2328 = scalar_lea.vmem [#allocation5], 1536
        %v2329 = vld [vmem:[%s2328] sm:$0xff]
        %v2330 = vld [vmem:[%s2328 + $0x8] sm:$0xff]
        %v2331 = vld [vmem:[%s2328 + $0x10] sm:$0xff]
        %v2332 = vld [vmem:[%s2328 + $0x18] sm:$0xff]
        %v2333 = vld [vmem:[%s2328 + $0x20] sm:$0xff]
        %v2334 = vld [vmem:[%s2328 + $0x28] sm:$0xff]
        %v2335 = vld [vmem:[%s2328 + $0x30] sm:$0xff]
        %v2336 = vld [vmem:[%s2328 + $0x38] sm:$0xff]
        %v2337 = vld [vmem:[%s2328 + $0x40] sm:$0xff]
        %v2338 = vld [vmem:[%s2328 + $0x48] sm:$0xff]
        %v2339 = vld [vmem:[%s2328 + $0x50] sm:$0xff]
        %v2340 = vld [vmem:[%s2328 + $0x58] sm:$0xff]
        %v2341 = vld [vmem:[%s2328 + $0x60] sm:$0xff]
        %v2342 = vld [vmem:[%s2328 + $0x68] sm:$0xff]
        %v2343 = vld [vmem:[%s2328 + $0x70] sm:$0xff]
        %v2344 = vld [vmem:[%s2328 + $0x78] sm:$0xff]
        %2345 = vmatprep.subr.mxu0 0.0
        %2346 = vmatpush1.msra.mxu0 0.0
        %2347 = vmatprep.subr.mxu0 0.0
        %2348 = vmatpush1.msra.mxu0 0.0
        %2349 = vmatprep.subr.mxu0 0.0
        %2350 = vmatpush1.msra.mxu0 0.0
        %2351 = vmatprep.subr.mxu0 0.0
        %2352 = vmatpush1.msra.mxu0 0.0
        %2353 = vmatprep.subr.mxu0 0.0
        %2354 = vmatpush1.msra.mxu0 0.0
        %2355 = vmatprep.subr.mxu0 0.0
        %2356 = vmatpush1.msra.mxu0 0.0
        %2357 = vmatprep.subr.mxu0 0.0
        %2358 = vmatpush1.msra.mxu0 0.0
        %2359 = vmatprep.subr.mxu0 0.0
        %2360 = vmatpush1.msra.mxu0 0.0
        %2361 = vmatprep.subr.mxu0 %v2344
        %2362 = vmatpush1.msra.mxu0 %v2343
        %2363 = vmatprep.subr.mxu0 %v2342
        %2364 = vmatpush1.msra.mxu0 %v2341
        %2365 = vmatprep.subr.mxu0 %v2340
        %2366 = vmatpush1.msra.mxu0 %v2339
        %2367 = vmatprep.subr.mxu0 %v2338
        %2368 = vmatpush1.msra.mxu0 %v2337
        %2369 = vmatprep.subr.mxu0 %v2336
        %2370 = vmatpush1.msra.mxu0 %v2335
        %2371 = vmatprep.subr.mxu0 %v2334
        %2372 = vmatpush1.msra.mxu0 %v2333
        %2373 = vmatprep.subr.mxu0 %v2332
        %2374 = vmatpush1.msra.mxu0 %v2331
        %2375 = vmatprep.subr.mxu0 %v2330
        %2376 = vmatpush1.msra.mxu0 %v2329
        %2377 = vmatprep.subr.mxu0 0.0
        %2378 = vmatpush2.msra.mxu0 0.0
        %2379 = vmatprep.subr.mxu0 0.0
        %2380 = vmatpush2.msra.mxu0 0.0
        %2381 = vmatprep.subr.mxu0 0.0
        %2382 = vmatpush2.msra.mxu0 0.0
        %2383 = vmatprep.subr.mxu0 0.0
        %2384 = vmatpush2.msra.mxu0 0.0
        %2385 = vmatprep.subr.mxu0 0.0
        %2386 = vmatpush2.msra.mxu0 0.0
        %2387 = vmatprep.subr.mxu0 0.0
        %2388 = vmatpush2.msra.mxu0 0.0
        %2389 = vmatprep.subr.mxu0 0.0
        %2390 = vmatpush2.msra.mxu0 0.0
        %2391 = vmatprep.subr.mxu0 0.0
        %2392 = vmatpush2.msra.mxu0 0.0
        %2393 = vmatprep.subr.mxu0 0.0
        %2394 = vmatpush2.msra.mxu0 0.0
        %2395 = vmatprep.subr.mxu0 0.0
        %2396 = vmatpush2.msra.mxu0 0.0
        %2397 = vmatprep.subr.mxu0 0.0
        %2398 = vmatpush2.msra.mxu0 0.0
        %2399 = vmatprep.subr.mxu0 0.0
        %2400 = vmatpush2.msra.mxu0 0.0
        %2401 = vmatprep.subr.mxu0 0.0
        %2402 = vmatpush2.msra.mxu0 0.0
        %2403 = vmatprep.subr.mxu0 0.0
        %2404 = vmatpush2.msra.mxu0 0.0
        %2405 = vmatprep.subr.mxu0 0.0
        %2406 = vmatpush2.msra.mxu0 0.0
        %2407 = vmatprep.subr.mxu0 0.0
        %2408 = vmatpush2.msra.mxu0 0.0
        %2409 = vmatprep.mubr.f32.mxu0 0.0
        %2410 = vmatmul.mubr.f32.gmra.mxu0 %v869
        %v2411 = vpop.f32.mrf.mxu0
        %v2412 = vadd.f32 0.0, %v2411
        %v2413 = vpop.f32.mrf.mxu0
        %v2414 = vadd.f32 0.0, %v2413
        %2415 = vmatprep.mubr.f32.mxu0 0.0
        %2416 = vmatmul.mubr.f32.gmra.mxu0 %v871
        %v2417 = vpop.f32.mrf.mxu0
        %v2418 = vadd.f32 0.0, %v2417
        %v2419 = vpop.f32.mrf.mxu0
        %v2420 = vadd.f32 0.0, %v2419
        %2421 = vmatprep.mubr.f32.mxu0 0.0
        %2422 = vmatmul.mubr.f32.gmra.mxu0 %v873
        %v2423 = vpop.f32.mrf.mxu0
        %v2424 = vadd.f32 0.0, %v2423
        %v2425 = vpop.f32.mrf.mxu0
        %v2426 = vadd.f32 0.0, %v2425
        %2427 = vmatprep.mubr.f32.mxu0 0.0
        %2428 = vmatmul.mubr.f32.gmra.mxu0 %v875
        %v2429 = vpop.f32.mrf.mxu0
        %v2430 = vadd.f32 0.0, %v2429
        %v2431 = vpop.f32.mrf.mxu0
        %v2432 = vadd.f32 0.0, %v2431
        %2433 = vmatprep.mubr.f32.mxu0 0.0
        %2434 = vmatmul.mubr.f32.gmra.mxu0 %v877
        %v2435 = vpop.f32.mrf.mxu0
        %v2436 = vadd.f32 0.0, %v2435
        %v2437 = vpop.f32.mrf.mxu0
        %v2438 = vadd.f32 0.0, %v2437
        %2439 = vmatprep.mubr.f32.mxu0 0.0
        %2440 = vmatmul.mubr.f32.gmra.mxu0 %v879
        %v2441 = vpop.f32.mrf.mxu0
        %v2442 = vadd.f32 0.0, %v2441
        %v2443 = vpop.f32.mrf.mxu0
        %v2444 = vadd.f32 0.0, %v2443
        %2445 = vmatprep.mubr.f32.mxu0 0.0
        %2446 = vmatmul.mubr.f32.gmra.mxu0 %v881
        %v2447 = vpop.f32.mrf.mxu0
        %v2448 = vadd.f32 0.0, %v2447
        %v2449 = vpop.f32.mrf.mxu0
        %v2450 = vadd.f32 0.0, %v2449
        %2451 = vmatprep.mubr.f32.mxu0 0.0
        %2452 = vmatmul.mubr.f32.gmra.mxu0 %v883
        %v2453 = vpop.f32.mrf.mxu0
        %v2454 = vadd.f32 0.0, %v2453
        %v2455 = vpop.f32.mrf.mxu0
        %v2456 = vadd.f32 0.0, %v2455
        %2457 = vdwg.mxu0
        %v2458 = vadd.f32 %v2282, %v2412
        %v2459 = vadd.f32 %v2284, %v2414
        %v2460 = vadd.f32 %v2288, %v2418
        %v2461 = vadd.f32 %v2290, %v2420
        %v2462 = vadd.f32 %v2294, %v2424
        %v2463 = vadd.f32 %v2296, %v2426
        %v2464 = vadd.f32 %v2300, %v2430
        %v2465 = vadd.f32 %v2302, %v2432
        %v2466 = vadd.f32 %v2306, %v2436
        %v2467 = vadd.f32 %v2308, %v2438
        %v2468 = vadd.f32 %v2312, %v2442
        %v2469 = vadd.f32 %v2314, %v2444
        %v2470 = vadd.f32 %v2318, %v2448
        %v2471 = vadd.f32 %v2320, %v2450
        %v2472 = vadd.f32 %v2324, %v2454
        %v2473 = vadd.f32 %v2326, %v2456
        %s2474 = scalar_lea.vmem [#allocation5], 1664
        %v2475 = vld [vmem:[%s2474] sm:$0xff]
        %v2476 = vld [vmem:[%s2474 + $0x8] sm:$0xff]
        %v2477 = vld [vmem:[%s2474 + $0x10] sm:$0xff]
        %v2478 = vld [vmem:[%s2474 + $0x18] sm:$0xff]
        %v2479 = vld [vmem:[%s2474 + $0x20] sm:$0xff]
        %v2480 = vld [vmem:[%s2474 + $0x28] sm:$0xff]
        %v2481 = vld [vmem:[%s2474 + $0x30] sm:$0xff]
        %v2482 = vld [vmem:[%s2474 + $0x38] sm:$0xff]
        %v2483 = vld [vmem:[%s2474 + $0x40] sm:$0xff]
        %v2484 = vld [vmem:[%s2474 + $0x48] sm:$0xff]
        %v2485 = vld [vmem:[%s2474 + $0x50] sm:$0xff]
        %v2486 = vld [vmem:[%s2474 + $0x58] sm:$0xff]
        %v2487 = vld [vmem:[%s2474 + $0x60] sm:$0xff]
        %v2488 = vld [vmem:[%s2474 + $0x68] sm:$0xff]
        %v2489 = vld [vmem:[%s2474 + $0x70] sm:$0xff]
        %v2490 = vld [vmem:[%s2474 + $0x78] sm:$0xff]
        %2491 = vmatprep.subr.mxu0 0.0
        %2492 = vmatpush1.msra.mxu0 0.0
        %2493 = vmatprep.subr.mxu0 0.0
        %2494 = vmatpush1.msra.mxu0 0.0
        %2495 = vmatprep.subr.mxu0 0.0
        %2496 = vmatpush1.msra.mxu0 0.0
        %2497 = vmatprep.subr.mxu0 0.0
        %2498 = vmatpush1.msra.mxu0 0.0
        %2499 = vmatprep.subr.mxu0 0.0
        %2500 = vmatpush1.msra.mxu0 0.0
        %2501 = vmatprep.subr.mxu0 0.0
        %2502 = vmatpush1.msra.mxu0 0.0
        %2503 = vmatprep.subr.mxu0 0.0
        %2504 = vmatpush1.msra.mxu0 0.0
        %2505 = vmatprep.subr.mxu0 0.0
        %2506 = vmatpush1.msra.mxu0 0.0
        %2507 = vmatprep.subr.mxu0 %v2490
        %2508 = vmatpush1.msra.mxu0 %v2489
        %2509 = vmatprep.subr.mxu0 %v2488
        %2510 = vmatpush1.msra.mxu0 %v2487
        %2511 = vmatprep.subr.mxu0 %v2486
        %2512 = vmatpush1.msra.mxu0 %v2485
        %2513 = vmatprep.subr.mxu0 %v2484
        %2514 = vmatpush1.msra.mxu0 %v2483
        %2515 = vmatprep.subr.mxu0 %v2482
        %2516 = vmatpush1.msra.mxu0 %v2481
        %2517 = vmatprep.subr.mxu0 %v2480
        %2518 = vmatpush1.msra.mxu0 %v2479
        %2519 = vmatprep.subr.mxu0 %v2478
        %2520 = vmatpush1.msra.mxu0 %v2477
        %2521 = vmatprep.subr.mxu0 %v2476
        %2522 = vmatpush1.msra.mxu0 %v2475
        %2523 = vmatprep.subr.mxu0 0.0
        %2524 = vmatpush2.msra.mxu0 0.0
        %2525 = vmatprep.subr.mxu0 0.0
        %2526 = vmatpush2.msra.mxu0 0.0
        %2527 = vmatprep.subr.mxu0 0.0
        %2528 = vmatpush2.msra.mxu0 0.0
        %2529 = vmatprep.subr.mxu0 0.0
        %2530 = vmatpush2.msra.mxu0 0.0
        %2531 = vmatprep.subr.mxu0 0.0
        %2532 = vmatpush2.msra.mxu0 0.0
        %2533 = vmatprep.subr.mxu0 0.0
        %2534 = vmatpush2.msra.mxu0 0.0
        %2535 = vmatprep.subr.mxu0 0.0
        %2536 = vmatpush2.msra.mxu0 0.0
        %2537 = vmatprep.subr.mxu0 0.0
        %2538 = vmatpush2.msra.mxu0 0.0
        %2539 = vmatprep.subr.mxu0 0.0
        %2540 = vmatpush2.msra.mxu0 0.0
        %2541 = vmatprep.subr.mxu0 0.0
        %2542 = vmatpush2.msra.mxu0 0.0
        %2543 = vmatprep.subr.mxu0 0.0
        %2544 = vmatpush2.msra.mxu0 0.0
        %2545 = vmatprep.subr.mxu0 0.0
        %2546 = vmatpush2.msra.mxu0 0.0
        %2547 = vmatprep.subr.mxu0 0.0
        %2548 = vmatpush2.msra.mxu0 0.0
        %2549 = vmatprep.subr.mxu0 0.0
        %2550 = vmatpush2.msra.mxu0 0.0
        %2551 = vmatprep.subr.mxu0 0.0
        %2552 = vmatpush2.msra.mxu0 0.0
        %2553 = vmatprep.subr.mxu0 0.0
        %2554 = vmatpush2.msra.mxu0 0.0
        %2555 = vmatprep.mubr.f32.mxu0 0.0
        %2556 = vmatmul.mubr.f32.gmra.mxu0 %v1047
        %v2557 = vpop.f32.mrf.mxu0
        %v2558 = vadd.f32 0.0, %v2557
        %v2559 = vpop.f32.mrf.mxu0
        %v2560 = vadd.f32 0.0, %v2559
        %2561 = vmatprep.mubr.f32.mxu0 0.0
        %2562 = vmatmul.mubr.f32.gmra.mxu0 %v1049
        %v2563 = vpop.f32.mrf.mxu0
        %v2564 = vadd.f32 0.0, %v2563
        %v2565 = vpop.f32.mrf.mxu0
        %v2566 = vadd.f32 0.0, %v2565
        %2567 = vmatprep.mubr.f32.mxu0 0.0
        %2568 = vmatmul.mubr.f32.gmra.mxu0 %v1051
        %v2569 = vpop.f32.mrf.mxu0
        %v2570 = vadd.f32 0.0, %v2569
        %v2571 = vpop.f32.mrf.mxu0
        %v2572 = vadd.f32 0.0, %v2571
        %2573 = vmatprep.mubr.f32.mxu0 0.0
        %2574 = vmatmul.mubr.f32.gmra.mxu0 %v1053
        %v2575 = vpop.f32.mrf.mxu0
        %v2576 = vadd.f32 0.0, %v2575
        %v2577 = vpop.f32.mrf.mxu0
        %v2578 = vadd.f32 0.0, %v2577
        %2579 = vmatprep.mubr.f32.mxu0 0.0
        %2580 = vmatmul.mubr.f32.gmra.mxu0 %v1055
        %v2581 = vpop.f32.mrf.mxu0
        %v2582 = vadd.f32 0.0, %v2581
        %v2583 = vpop.f32.mrf.mxu0
        %v2584 = vadd.f32 0.0, %v2583
        %2585 = vmatprep.mubr.f32.mxu0 0.0
        %2586 = vmatmul.mubr.f32.gmra.mxu0 %v1057
        %v2587 = vpop.f32.mrf.mxu0
        %v2588 = vadd.f32 0.0, %v2587
        %v2589 = vpop.f32.mrf.mxu0
        %v2590 = vadd.f32 0.0, %v2589
        %2591 = vmatprep.mubr.f32.mxu0 0.0
        %2592 = vmatmul.mubr.f32.gmra.mxu0 %v1059
        %v2593 = vpop.f32.mrf.mxu0
        %v2594 = vadd.f32 0.0, %v2593
        %v2595 = vpop.f32.mrf.mxu0
        %v2596 = vadd.f32 0.0, %v2595
        %2597 = vmatprep.mubr.f32.mxu0 0.0
        %2598 = vmatmul.mubr.f32.gmra.mxu0 %v1061
        %v2599 = vpop.f32.mrf.mxu0
        %v2600 = vadd.f32 0.0, %v2599
        %v2601 = vpop.f32.mrf.mxu0
        %v2602 = vadd.f32 0.0, %v2601
        %2603 = vdwg.mxu0
        %v2604 = vadd.f32 %v2458, %v2558
        %v2605 = vadd.f32 %v2459, %v2560
        %v2606 = vadd.f32 %v2460, %v2564
        %v2607 = vadd.f32 %v2461, %v2566
        %v2608 = vadd.f32 %v2462, %v2570
        %v2609 = vadd.f32 %v2463, %v2572
        %v2610 = vadd.f32 %v2464, %v2576
        %v2611 = vadd.f32 %v2465, %v2578
        %v2612 = vadd.f32 %v2466, %v2582
        %v2613 = vadd.f32 %v2467, %v2584
        %v2614 = vadd.f32 %v2468, %v2588
        %v2615 = vadd.f32 %v2469, %v2590
        %v2616 = vadd.f32 %v2470, %v2594
        %v2617 = vadd.f32 %v2471, %v2596
        %v2618 = vadd.f32 %v2472, %v2600
        %v2619 = vadd.f32 %v2473, %v2602
        %s2620 = scalar_lea.vmem [#allocation5], 1792
        %v2621 = vld [vmem:[%s2620] sm:$0xff]
        %v2622 = vld [vmem:[%s2620 + $0x8] sm:$0xff]
        %v2623 = vld [vmem:[%s2620 + $0x10] sm:$0xff]
        %v2624 = vld [vmem:[%s2620 + $0x18] sm:$0xff]
        %v2625 = vld [vmem:[%s2620 + $0x20] sm:$0xff]
        %v2626 = vld [vmem:[%s2620 + $0x28] sm:$0xff]
        %v2627 = vld [vmem:[%s2620 + $0x30] sm:$0xff]
        %v2628 = vld [vmem:[%s2620 + $0x38] sm:$0xff]
        %v2629 = vld [vmem:[%s2620 + $0x40] sm:$0xff]
        %v2630 = vld [vmem:[%s2620 + $0x48] sm:$0xff]
        %v2631 = vld [vmem:[%s2620 + $0x50] sm:$0xff]
        %v2632 = vld [vmem:[%s2620 + $0x58] sm:$0xff]
        %v2633 = vld [vmem:[%s2620 + $0x60] sm:$0xff]
        %v2634 = vld [vmem:[%s2620 + $0x68] sm:$0xff]
        %v2635 = vld [vmem:[%s2620 + $0x70] sm:$0xff]
        %v2636 = vld [vmem:[%s2620 + $0x78] sm:$0xff]
        %2637 = vmatprep.subr.mxu0 0.0
        %2638 = vmatpush1.msra.mxu0 0.0
        %2639 = vmatprep.subr.mxu0 0.0
        %2640 = vmatpush1.msra.mxu0 0.0
        %2641 = vmatprep.subr.mxu0 0.0
        %2642 = vmatpush1.msra.mxu0 0.0
        %2643 = vmatprep.subr.mxu0 0.0
        %2644 = vmatpush1.msra.mxu0 0.0
        %2645 = vmatprep.subr.mxu0 0.0
        %2646 = vmatpush1.msra.mxu0 0.0
        %2647 = vmatprep.subr.mxu0 0.0
        %2648 = vmatpush1.msra.mxu0 0.0
        %2649 = vmatprep.subr.mxu0 0.0
        %2650 = vmatpush1.msra.mxu0 0.0
        %2651 = vmatprep.subr.mxu0 0.0
        %2652 = vmatpush1.msra.mxu0 0.0
        %2653 = vmatprep.subr.mxu0 %v2636
        %2654 = vmatpush1.msra.mxu0 %v2635
        %2655 = vmatprep.subr.mxu0 %v2634
        %2656 = vmatpush1.msra.mxu0 %v2633
        %2657 = vmatprep.subr.mxu0 %v2632
        %2658 = vmatpush1.msra.mxu0 %v2631
        %2659 = vmatprep.subr.mxu0 %v2630
        %2660 = vmatpush1.msra.mxu0 %v2629
        %2661 = vmatprep.subr.mxu0 %v2628
        %2662 = vmatpush1.msra.mxu0 %v2627
        %2663 = vmatprep.subr.mxu0 %v2626
        %2664 = vmatpush1.msra.mxu0 %v2625
        %2665 = vmatprep.subr.mxu0 %v2624
        %2666 = vmatpush1.msra.mxu0 %v2623
        %2667 = vmatprep.subr.mxu0 %v2622
        %2668 = vmatpush1.msra.mxu0 %v2621
        %2669 = vmatprep.subr.mxu0 0.0
        %2670 = vmatpush2.msra.mxu0 0.0
        %2671 = vmatprep.subr.mxu0 0.0
        %2672 = vmatpush2.msra.mxu0 0.0
        %2673 = vmatprep.subr.mxu0 0.0
        %2674 = vmatpush2.msra.mxu0 0.0
        %2675 = vmatprep.subr.mxu0 0.0
        %2676 = vmatpush2.msra.mxu0 0.0
        %2677 = vmatprep.subr.mxu0 0.0
        %2678 = vmatpush2.msra.mxu0 0.0
        %2679 = vmatprep.subr.mxu0 0.0
        %2680 = vmatpush2.msra.mxu0 0.0
        %2681 = vmatprep.subr.mxu0 0.0
        %2682 = vmatpush2.msra.mxu0 0.0
        %2683 = vmatprep.subr.mxu0 0.0
        %2684 = vmatpush2.msra.mxu0 0.0
        %2685 = vmatprep.subr.mxu0 0.0
        %2686 = vmatpush2.msra.mxu0 0.0
        %2687 = vmatprep.subr.mxu0 0.0
        %2688 = vmatpush2.msra.mxu0 0.0
        %2689 = vmatprep.subr.mxu0 0.0
        %2690 = vmatpush2.msra.mxu0 0.0
        %2691 = vmatprep.subr.mxu0 0.0
        %2692 = vmatpush2.msra.mxu0 0.0
        %2693 = vmatprep.subr.mxu0 0.0
        %2694 = vmatpush2.msra.mxu0 0.0
        %2695 = vmatprep.subr.mxu0 0.0
        %2696 = vmatpush2.msra.mxu0 0.0
        %2697 = vmatprep.subr.mxu0 0.0
        %2698 = vmatpush2.msra.mxu0 0.0
        %2699 = vmatprep.subr.mxu0 0.0
        %2700 = vmatpush2.msra.mxu0 0.0
        %2701 = vmatprep.mubr.f32.mxu0 0.0
        %2702 = vmatmul.mubr.f32.gmra.mxu0 %v1225
        %v2703 = vpop.f32.mrf.mxu0
        %v2704 = vadd.f32 0.0, %v2703
        %v2705 = vpop.f32.mrf.mxu0
        %v2706 = vadd.f32 0.0, %v2705
        %2707 = vmatprep.mubr.f32.mxu0 0.0
        %2708 = vmatmul.mubr.f32.gmra.mxu0 %v1227
        %v2709 = vpop.f32.mrf.mxu0
        %v2710 = vadd.f32 0.0, %v2709
        %v2711 = vpop.f32.mrf.mxu0
        %v2712 = vadd.f32 0.0, %v2711
        %2713 = vmatprep.mubr.f32.mxu0 0.0
        %2714 = vmatmul.mubr.f32.gmra.mxu0 %v1229
        %v2715 = vpop.f32.mrf.mxu0
        %v2716 = vadd.f32 0.0, %v2715
        %v2717 = vpop.f32.mrf.mxu0
        %v2718 = vadd.f32 0.0, %v2717
        %2719 = vmatprep.mubr.f32.mxu0 0.0
        %2720 = vmatmul.mubr.f32.gmra.mxu0 %v1231
        %v2721 = vpop.f32.mrf.mxu0
        %v2722 = vadd.f32 0.0, %v2721
        %v2723 = vpop.f32.mrf.mxu0
        %v2724 = vadd.f32 0.0, %v2723
        %2725 = vmatprep.mubr.f32.mxu0 0.0
        %2726 = vmatmul.mubr.f32.gmra.mxu0 %v1233
        %v2727 = vpop.f32.mrf.mxu0
        %v2728 = vadd.f32 0.0, %v2727
        %v2729 = vpop.f32.mrf.mxu0
        %v2730 = vadd.f32 0.0, %v2729
        %2731 = vmatprep.mubr.f32.mxu0 0.0
        %2732 = vmatmul.mubr.f32.gmra.mxu0 %v1235
        %v2733 = vpop.f32.mrf.mxu0
        %v2734 = vadd.f32 0.0, %v2733
        %v2735 = vpop.f32.mrf.mxu0
        %v2736 = vadd.f32 0.0, %v2735
        %2737 = vmatprep.mubr.f32.mxu0 0.0
        %2738 = vmatmul.mubr.f32.gmra.mxu0 %v1237
        %v2739 = vpop.f32.mrf.mxu0
        %v2740 = vadd.f32 0.0, %v2739
        %v2741 = vpop.f32.mrf.mxu0
        %v2742 = vadd.f32 0.0, %v2741
        %2743 = vmatprep.mubr.f32.mxu0 0.0
        %2744 = vmatmul.mubr.f32.gmra.mxu0 %v1239
        %v2745 = vpop.f32.mrf.mxu0
        %v2746 = vadd.f32 0.0, %v2745
        %v2747 = vpop.f32.mrf.mxu0
        %v2748 = vadd.f32 0.0, %v2747
        %2749 = vdwg.mxu0
        %v2750 = vadd.f32 %v2604, %v2704
        %v2751 = vadd.f32 %v2605, %v2706
        %v2752 = vadd.f32 %v2606, %v2710
        %v2753 = vadd.f32 %v2607, %v2712
        %v2754 = vadd.f32 %v2608, %v2716
        %v2755 = vadd.f32 %v2609, %v2718
        %v2756 = vadd.f32 %v2610, %v2722
        %v2757 = vadd.f32 %v2611, %v2724
        %v2758 = vadd.f32 %v2612, %v2728
        %v2759 = vadd.f32 %v2613, %v2730
        %v2760 = vadd.f32 %v2614, %v2734
        %v2761 = vadd.f32 %v2615, %v2736
        %v2762 = vadd.f32 %v2616, %v2740
        %v2763 = vadd.f32 %v2617, %v2742
        %v2764 = vadd.f32 %v2618, %v2746
        %v2765 = vadd.f32 %v2619, %v2748
        %v2766 = vld [vmem:[#allocation7] sm:$0xff]
        %v2767 = vld [vmem:[#allocation7 + $0x8] sm:$0xff]
        %v2768 = vld [vmem:[#allocation7 + $0x10] sm:$0xf]
        %vm2769 = vcmask 490496
        %v2771 = vsel %vm2769, %v2766, 0
        %v2774 = vsel %vm2769, %v2767, 0
        %v2777 = vsel %vm2769, %v2768, 0
        %v2780 = vsel %vm1209, %v1368, 0
        %v2783 = vsel %vm1209, %v1369, 0
        %2785 = vmatprep.subr.mxu0 0.0
        %2786 = vmatpush1.msra.mxu0 0.0
        %2787 = vmatprep.subr.mxu0 0.0
        %2788 = vmatpush1.msra.mxu0 0.0
        %2789 = vmatprep.subr.mxu0 0.0
        %2790 = vmatpush1.msra.mxu0 0.0
        %2791 = vmatprep.subr.mxu0 0.0
        %2792 = vmatpush1.msra.mxu0 0.0
        %2793 = vmatprep.subr.mxu0 0.0
        %2794 = vmatpush1.msra.mxu0 0.0
        %2795 = vmatprep.subr.mxu0 0.0
        %2796 = vmatpush1.msra.mxu0 0.0
        %2797 = vmatprep.subr.mxu0 0.0
        %2798 = vmatpush1.msra.mxu0 0.0
        %2799 = vmatprep.subr.mxu0 0.0
        %2800 = vmatpush1.msra.mxu0 0.0
        %2801 = vmatprep.subr.mxu0 %v2783
        %2802 = vmatpush1.msra.mxu0 %v2780
        %2803 = vmatprep.subr.mxu0 %v1367
        %2804 = vmatpush1.msra.mxu0 %v1366
        %2805 = vmatprep.subr.mxu0 %v1365
        %2806 = vmatpush1.msra.mxu0 %v1364
        %2807 = vmatprep.subr.mxu0 %v1363
        %2808 = vmatpush1.msra.mxu0 %v1362
        %2809 = vmatprep.subr.mxu0 %v1361
        %2810 = vmatpush1.msra.mxu0 %v1360
        %2811 = vmatprep.subr.mxu0 %v1359
        %2812 = vmatpush1.msra.mxu0 %v1358
        %2813 = vmatprep.subr.mxu0 %v1357
        %2814 = vmatpush1.msra.mxu0 %v1356
        %2815 = vmatprep.subr.mxu0 %v1355
        %2816 = vmatpush1.msra.mxu0 %v1354
        %2817 = vmatprep.subr.mxu0 0.0
        %2818 = vmatpush2.msra.mxu0 0.0
        %2819 = vmatprep.subr.mxu0 0.0
        %2820 = vmatpush2.msra.mxu0 0.0
        %2821 = vmatprep.subr.mxu0 0.0
        %2822 = vmatpush2.msra.mxu0 0.0
        %2823 = vmatprep.subr.mxu0 0.0
        %2824 = vmatpush2.msra.mxu0 0.0
        %2825 = vmatprep.subr.mxu0 0.0
        %2826 = vmatpush2.msra.mxu0 0.0
        %2827 = vmatprep.subr.mxu0 0.0
        %2828 = vmatpush2.msra.mxu0 0.0
        %2829 = vmatprep.subr.mxu0 0.0
        %2830 = vmatpush2.msra.mxu0 0.0
        %2831 = vmatprep.subr.mxu0 0.0
        %2832 = vmatpush2.msra.mxu0 0.0
        %2833 = vmatprep.subr.mxu0 0.0
        %2834 = vmatpush2.msra.mxu0 0.0
        %2835 = vmatprep.subr.mxu0 0.0
        %2836 = vmatpush2.msra.mxu0 0.0
        %2837 = vmatprep.subr.mxu0 0.0
        %2838 = vmatpush2.msra.mxu0 0.0
        %2839 = vmatprep.subr.mxu0 0.0
        %2840 = vmatpush2.msra.mxu0 0.0
        %2841 = vmatprep.subr.mxu0 0.0
        %2842 = vmatpush2.msra.mxu0 0.0
        %2843 = vmatprep.subr.mxu0 0.0
        %2844 = vmatpush2.msra.mxu0 0.0
        %2845 = vmatprep.subr.mxu0 0.0
        %2846 = vmatpush2.msra.mxu0 0.0
        %2847 = vmatprep.subr.mxu0 0.0
        %2848 = vmatpush2.msra.mxu0 0.0
        %2849 = vmatprep.mubr.f32.mxu0 0.0
        %2850 = vmatmul.mubr.f32.gmra.mxu0 %v2771
        %v2851 = vpop.f32.mrf.mxu0
        %v2852 = vadd.f32 0.0, %v2851
        %v2853 = vpop.f32.mrf.mxu0
        %v2854 = vadd.f32 0.0, %v2853
        %2855 = vmatprep.mubr.f32.mxu0 0.0
        %2856 = vmatmul.mubr.f32.gmra.mxu0 %v2774
        %v2857 = vpop.f32.mrf.mxu0
        %v2858 = vadd.f32 0.0, %v2857
        %v2859 = vpop.f32.mrf.mxu0
        %v2860 = vadd.f32 0.0, %v2859
        %2861 = vmatprep.mubr.f32.mxu0 0.0
        %2862 = vmatmul.mubr.f32.gmra.mxu0 %v2777
        %v2863 = vpop.f32.mrf.mxu0
        %v2864 = vadd.f32 0.0, %v2863
        %v2865 = vpop.f32.mrf.mxu0
        %v2866 = vadd.f32 0.0, %v2865
        %2867 = vdwg.mxu0
        %v2869 = vsel %vm1209, %v2066, 0
        %v2872 = vsel %vm1209, %v2067, 0
        %2874 = vmatprep.subr.mxu0 0.0
        %2875 = vmatpush1.msra.mxu0 0.0
        %2876 = vmatprep.subr.mxu0 0.0
        %2877 = vmatpush1.msra.mxu0 0.0
        %2878 = vmatprep.subr.mxu0 0.0
        %2879 = vmatpush1.msra.mxu0 0.0
        %2880 = vmatprep.subr.mxu0 0.0
        %2881 = vmatpush1.msra.mxu0 0.0
        %2882 = vmatprep.subr.mxu0 0.0
        %2883 = vmatpush1.msra.mxu0 0.0
        %2884 = vmatprep.subr.mxu0 0.0
        %2885 = vmatpush1.msra.mxu0 0.0
        %2886 = vmatprep.subr.mxu0 0.0
        %2887 = vmatpush1.msra.mxu0 0.0
        %2888 = vmatprep.subr.mxu0 0.0
        %2889 = vmatpush1.msra.mxu0 0.0
        %2890 = vmatprep.subr.mxu0 %v2872
        %2891 = vmatpush1.msra.mxu0 %v2869
        %2892 = vmatprep.subr.mxu0 %v2065
        %2893 = vmatpush1.msra.mxu0 %v2064
        %2894 = vmatprep.subr.mxu0 %v2063
        %2895 = vmatpush1.msra.mxu0 %v2062
        %2896 = vmatprep.subr.mxu0 %v2061
        %2897 = vmatpush1.msra.mxu0 %v2060
        %2898 = vmatprep.subr.mxu0 %v2059
        %2899 = vmatpush1.msra.mxu0 %v2058
        %2900 = vmatprep.subr.mxu0 %v2057
        %2901 = vmatpush1.msra.mxu0 %v2056
        %2902 = vmatprep.subr.mxu0 %v2055
        %2903 = vmatpush1.msra.mxu0 %v2054
        %2904 = vmatprep.subr.mxu0 %v2053
        %2905 = vmatpush1.msra.mxu0 %v2052
        %2906 = vmatprep.subr.mxu0 0.0
        %2907 = vmatpush2.msra.mxu0 0.0
        %2908 = vmatprep.subr.mxu0 0.0
        %2909 = vmatpush2.msra.mxu0 0.0
        %2910 = vmatprep.subr.mxu0 0.0
        %2911 = vmatpush2.msra.mxu0 0.0
        %2912 = vmatprep.subr.mxu0 0.0
        %2913 = vmatpush2.msra.mxu0 0.0
        %2914 = vmatprep.subr.mxu0 0.0
        %2915 = vmatpush2.msra.mxu0 0.0
        %2916 = vmatprep.subr.mxu0 0.0
        %2917 = vmatpush2.msra.mxu0 0.0
        %2918 = vmatprep.subr.mxu0 0.0
        %2919 = vmatpush2.msra.mxu0 0.0
        %2920 = vmatprep.subr.mxu0 0.0
        %2921 = vmatpush2.msra.mxu0 0.0
        %2922 = vmatprep.subr.mxu0 0.0
        %2923 = vmatpush2.msra.mxu0 0.0
        %2924 = vmatprep.subr.mxu0 0.0
        %2925 = vmatpush2.msra.mxu0 0.0
        %2926 = vmatprep.subr.mxu0 0.0
        %2927 = vmatpush2.msra.mxu0 0.0
        %2928 = vmatprep.subr.mxu0 0.0
        %2929 = vmatpush2.msra.mxu0 0.0
        %2930 = vmatprep.subr.mxu0 0.0
        %2931 = vmatpush2.msra.mxu0 0.0
        %2932 = vmatprep.subr.mxu0 0.0
        %2933 = vmatpush2.msra.mxu0 0.0
        %2934 = vmatprep.subr.mxu0 0.0
        %2935 = vmatpush2.msra.mxu0 0.0
        %2936 = vmatprep.subr.mxu0 0.0
        %2937 = vmatpush2.msra.mxu0 0.0
        %2938 = vmatprep.mubr.f32.mxu0 0.0
        %2939 = vmatmul.mubr.f32.gmra.mxu0 %v2771
        %v2940 = vpop.f32.mrf.mxu0
        %v2941 = vadd.f32 0.0, %v2940
        %v2942 = vpop.f32.mrf.mxu0
        %v2943 = vadd.f32 0.0, %v2942
        %2944 = vmatprep.mubr.f32.mxu0 0.0
        %2945 = vmatmul.mubr.f32.gmra.mxu0 %v2774
        %v2946 = vpop.f32.mrf.mxu0
        %v2947 = vadd.f32 0.0, %v2946
        %v2948 = vpop.f32.mrf.mxu0
        %v2949 = vadd.f32 0.0, %v2948
        %2950 = vmatprep.mubr.f32.mxu0 0.0
        %2951 = vmatmul.mubr.f32.gmra.mxu0 %v2777
        %v2952 = vpop.f32.mrf.mxu0
        %v2953 = vadd.f32 0.0, %v2952
        %v2954 = vpop.f32.mrf.mxu0
        %v2955 = vadd.f32 0.0, %v2954
        %2956 = vdwg.mxu0
        %v2957 = vmax.f32 %v2852, %v2941
        %v2958 = vmax.f32 %v2854, %v2943
        %v2959 = vmax.f32 %v2858, %v2947
        %v2960 = vmax.f32 %v2860, %v2949
        %v2961 = vmax.f32 %v2864, %v2953
        %v2962 = vmax.f32 %v2866, %v2955
        %v2964 = vsel %vm1209, %v2764, 0
        %v2967 = vsel %vm1209, %v2765, 0
        %2969 = vmatprep.subr.mxu0 0.0
        %2970 = vmatpush1.msra.mxu0 0.0
        %2971 = vmatprep.subr.mxu0 0.0
        %2972 = vmatpush1.msra.mxu0 0.0
        %2973 = vmatprep.subr.mxu0 0.0
        %2974 = vmatpush1.msra.mxu0 0.0
        %2975 = vmatprep.subr.mxu0 0.0
        %2976 = vmatpush1.msra.mxu0 0.0
        %2977 = vmatprep.subr.mxu0 0.0
        %2978 = vmatpush1.msra.mxu0 0.0
        %2979 = vmatprep.subr.mxu0 0.0
        %2980 = vmatpush1.msra.mxu0 0.0
        %2981 = vmatprep.subr.mxu0 0.0
        %2982 = vmatpush1.msra.mxu0 0.0
        %2983 = vmatprep.subr.mxu0 0.0
        %2984 = vmatpush1.msra.mxu0 0.0
        %2985 = vmatprep.subr.mxu0 %v2967
        %2986 = vmatpush1.msra.mxu0 %v2964
        %2987 = vmatprep.subr.mxu0 %v2763
        %2988 = vmatpush1.msra.mxu0 %v2762
        %2989 = vmatprep.subr.mxu0 %v2761
        %2990 = vmatpush1.msra.mxu0 %v2760
        %2991 = vmatprep.subr.mxu0 %v2759
        %2992 = vmatpush1.msra.mxu0 %v2758
        %2993 = vmatprep.subr.mxu0 %v2757
        %2994 = vmatpush1.msra.mxu0 %v2756
        %2995 = vmatprep.subr.mxu0 %v2755
        %2996 = vmatpush1.msra.mxu0 %v2754
        %2997 = vmatprep.subr.mxu0 %v2753
        %2998 = vmatpush1.msra.mxu0 %v2752
        %2999 = vmatprep.subr.mxu0 %v2751
        %3000 = vmatpush1.msra.mxu0 %v2750
        %3001 = vmatprep.subr.mxu0 0.0
        %3002 = vmatpush2.msra.mxu0 0.0
        %3003 = vmatprep.subr.mxu0 0.0
        %3004 = vmatpush2.msra.mxu0 0.0
        %3005 = vmatprep.subr.mxu0 0.0
        %3006 = vmatpush2.msra.mxu0 0.0
        %3007 = vmatprep.subr.mxu0 0.0
        %3008 = vmatpush2.msra.mxu0 0.0
        %3009 = vmatprep.subr.mxu0 0.0
        %3010 = vmatpush2.msra.mxu0 0.0
        %3011 = vmatprep.subr.mxu0 0.0
        %3012 = vmatpush2.msra.mxu0 0.0
        %3013 = vmatprep.subr.mxu0 0.0
        %3014 = vmatpush2.msra.mxu0 0.0
        %3015 = vmatprep.subr.mxu0 0.0
        %3016 = vmatpush2.msra.mxu0 0.0
        %3017 = vmatprep.subr.mxu0 0.0
        %3018 = vmatpush2.msra.mxu0 0.0
        %3019 = vmatprep.subr.mxu0 0.0
        %3020 = vmatpush2.msra.mxu0 0.0
        %3021 = vmatprep.subr.mxu0 0.0
        %3022 = vmatpush2.msra.mxu0 0.0
        %3023 = vmatprep.subr.mxu0 0.0
        %3024 = vmatpush2.msra.mxu0 0.0
        %3025 = vmatprep.subr.mxu0 0.0
        %3026 = vmatpush2.msra.mxu0 0.0
        %3027 = vmatprep.subr.mxu0 0.0
        %3028 = vmatpush2.msra.mxu0 0.0
        %3029 = vmatprep.subr.mxu0 0.0
        %3030 = vmatpush2.msra.mxu0 0.0
        %3031 = vmatprep.subr.mxu0 0.0
        %3032 = vmatpush2.msra.mxu0 0.0
        %3033 = vmatprep.mubr.f32.mxu0 0.0
        %3034 = vmatmul.mubr.f32.gmra.mxu0 %v2771
        %v3035 = vpop.f32.mrf.mxu0
        %v3036 = vadd.f32 0.0, %v3035
        %v3037 = vpop.f32.mrf.mxu0
        %v3038 = vadd.f32 0.0, %v3037
        %3039 = vmatprep.mubr.f32.mxu0 0.0
        %3040 = vmatmul.mubr.f32.gmra.mxu0 %v2774
        %v3041 = vpop.f32.mrf.mxu0
        %v3042 = vadd.f32 0.0, %v3041
        %v3043 = vpop.f32.mrf.mxu0
        %v3044 = vadd.f32 0.0, %v3043
        %3045 = vmatprep.mubr.f32.mxu0 0.0
        %3046 = vmatmul.mubr.f32.gmra.mxu0 %v2777
        %v3047 = vpop.f32.mrf.mxu0
        %v3048 = vadd.f32 0.0, %v3047
        %v3049 = vpop.f32.mrf.mxu0
        %v3050 = vadd.f32 0.0, %v3049
        %3051 = vdwg.mxu0
        %v3052 = vmax.f32 %v2957, %v3036
        %v3053 = vmax.f32 %v2958, %v3038
        %v3054 = vmax.f32 %v2959, %v3042
        %v3055 = vmax.f32 %v2960, %v3044
        %v3056 = vmax.f32 %v2961, %v3048
        %v3057 = vmax.f32 %v2962, %v3050
        %s3058 = scalar_lea.vmem [#allocation7], 24
        %v3059 = vld [vmem:[%s3058] sm:$0xff]
        %v3060 = vld [vmem:[%s3058 + $0x8] sm:$0xff]
        %v3061 = vld [vmem:[%s3058 + $0x10] sm:$0xf]
        %v3063 = vsel %vm2769, %v3059, 0
        %v3066 = vsel %vm2769, %v3060, 0
        %v3069 = vsel %vm2769, %v3061, 0
        %3071 = vmatprep.subr.mxu0 0.0
        %3072 = vmatpush1.msra.mxu0 0.0
        %3073 = vmatprep.subr.mxu0 0.0
        %3074 = vmatpush1.msra.mxu0 0.0
        %3075 = vmatprep.subr.mxu0 0.0
        %3076 = vmatpush1.msra.mxu0 0.0
        %3077 = vmatprep.subr.mxu0 0.0
        %3078 = vmatpush1.msra.mxu0 0.0
        %3079 = vmatprep.subr.mxu0 0.0
        %3080 = vmatpush1.msra.mxu0 0.0
        %3081 = vmatprep.subr.mxu0 0.0
        %3082 = vmatpush1.msra.mxu0 0.0
        %3083 = vmatprep.subr.mxu0 0.0
        %3084 = vmatpush1.msra.mxu0 0.0
        %3085 = vmatprep.subr.mxu0 0.0
        %3086 = vmatpush1.msra.mxu0 0.0
        %3087 = vmatprep.subr.mxu0 %v2783
        %3088 = vmatpush1.msra.mxu0 %v2780
        %3089 = vmatprep.subr.mxu0 %v1367
        %3090 = vmatpush1.msra.mxu0 %v1366
        %3091 = vmatprep.subr.mxu0 %v1365
        %3092 = vmatpush1.msra.mxu0 %v1364
        %3093 = vmatprep.subr.mxu0 %v1363
        %3094 = vmatpush1.msra.mxu0 %v1362
        %3095 = vmatprep.subr.mxu0 %v1361
        %3096 = vmatpush1.msra.mxu0 %v1360
        %3097 = vmatprep.subr.mxu0 %v1359
        %3098 = vmatpush1.msra.mxu0 %v1358
        %3099 = vmatprep.subr.mxu0 %v1357
        %3100 = vmatpush1.msra.mxu0 %v1356
        %3101 = vmatprep.subr.mxu0 %v1355
        %3102 = vmatpush1.msra.mxu0 %v1354
        %3103 = vmatprep.subr.mxu0 0.0
        %3104 = vmatpush2.msra.mxu0 0.0
        %3105 = vmatprep.subr.mxu0 0.0
        %3106 = vmatpush2.msra.mxu0 0.0
        %3107 = vmatprep.subr.mxu0 0.0
        %3108 = vmatpush2.msra.mxu0 0.0
        %3109 = vmatprep.subr.mxu0 0.0
        %3110 = vmatpush2.msra.mxu0 0.0
        %3111 = vmatprep.subr.mxu0 0.0
        %3112 = vmatpush2.msra.mxu0 0.0
        %3113 = vmatprep.subr.mxu0 0.0
        %3114 = vmatpush2.msra.mxu0 0.0
        %3115 = vmatprep.subr.mxu0 0.0
        %3116 = vmatpush2.msra.mxu0 0.0
        %3117 = vmatprep.subr.mxu0 0.0
        %3118 = vmatpush2.msra.mxu0 0.0
        %3119 = vmatprep.subr.mxu0 0.0
        %3120 = vmatpush2.msra.mxu0 0.0
        %3121 = vmatprep.subr.mxu0 0.0
        %3122 = vmatpush2.msra.mxu0 0.0
        %3123 = vmatprep.subr.mxu0 0.0
        %3124 = vmatpush2.msra.mxu0 0.0
        %3125 = vmatprep.subr.mxu0 0.0
        %3126 = vmatpush2.msra.mxu0 0.0
        %3127 = vmatprep.subr.mxu0 0.0
        %3128 = vmatpush2.msra.mxu0 0.0
        %3129 = vmatprep.subr.mxu0 0.0
        %3130 = vmatpush2.msra.mxu0 0.0
        %3131 = vmatprep.subr.mxu0 0.0
        %3132 = vmatpush2.msra.mxu0 0.0
        %3133 = vmatprep.subr.mxu0 0.0
        %3134 = vmatpush2.msra.mxu0 0.0
        %3135 = vmatprep.mubr.f32.mxu0 0.0
        %3136 = vmatmul.mubr.f32.gmra.mxu0 %v3063
        %v3137 = vpop.f32.mrf.mxu0
        %v3138 = vadd.f32 0.0, %v3137
        %v3139 = vpop.f32.mrf.mxu0
        %v3140 = vadd.f32 0.0, %v3139
        %3141 = vmatprep.mubr.f32.mxu0 0.0
        %3142 = vmatmul.mubr.f32.gmra.mxu0 %v3066
        %v3143 = vpop.f32.mrf.mxu0
        %v3144 = vadd.f32 0.0, %v3143
        %v3145 = vpop.f32.mrf.mxu0
        %v3146 = vadd.f32 0.0, %v3145
        %3147 = vmatprep.mubr.f32.mxu0 0.0
        %3148 = vmatmul.mubr.f32.gmra.mxu0 %v3069
        %v3149 = vpop.f32.mrf.mxu0
        %v3150 = vadd.f32 0.0, %v3149
        %v3151 = vpop.f32.mrf.mxu0
        %v3152 = vadd.f32 0.0, %v3151
        %3153 = vdwg.mxu0
        %v3154 = vmax.f32 %v3052, %v3138
        %v3155 = vmax.f32 %v3053, %v3140
        %v3156 = vmax.f32 %v3054, %v3144
        %v3157 = vmax.f32 %v3055, %v3146
        %v3158 = vmax.f32 %v3056, %v3150
        %v3159 = vmax.f32 %v3057, %v3152
        %3160 = vmatprep.subr.mxu0 0.0
        %3161 = vmatpush1.msra.mxu0 0.0
        %3162 = vmatprep.subr.mxu0 0.0
        %3163 = vmatpush1.msra.mxu0 0.0
        %3164 = vmatprep.subr.mxu0 0.0
        %3165 = vmatpush1.msra.mxu0 0.0
        %3166 = vmatprep.subr.mxu0 0.0
        %3167 = vmatpush1.msra.mxu0 0.0
        %3168 = vmatprep.subr.mxu0 0.0
        %3169 = vmatpush1.msra.mxu0 0.0
        %3170 = vmatprep.subr.mxu0 0.0
        %3171 = vmatpush1.msra.mxu0 0.0
        %3172 = vmatprep.subr.mxu0 0.0
        %3173 = vmatpush1.msra.mxu0 0.0
        %3174 = vmatprep.subr.mxu0 0.0
        %3175 = vmatpush1.msra.mxu0 0.0
        %3176 = vmatprep.subr.mxu0 %v2872
        %3177 = vmatpush1.msra.mxu0 %v2869
        %3178 = vmatprep.subr.mxu0 %v2065
        %3179 = vmatpush1.msra.mxu0 %v2064
        %3180 = vmatprep.subr.mxu0 %v2063
        %3181 = vmatpush1.msra.mxu0 %v2062
        %3182 = vmatprep.subr.mxu0 %v2061
        %3183 = vmatpush1.msra.mxu0 %v2060
        %3184 = vmatprep.subr.mxu0 %v2059
        %3185 = vmatpush1.msra.mxu0 %v2058
        %3186 = vmatprep.subr.mxu0 %v2057
        %3187 = vmatpush1.msra.mxu0 %v2056
        %3188 = vmatprep.subr.mxu0 %v2055
        %3189 = vmatpush1.msra.mxu0 %v2054
        %3190 = vmatprep.subr.mxu0 %v2053
        %3191 = vmatpush1.msra.mxu0 %v2052
        %3192 = vmatprep.subr.mxu0 0.0
        %3193 = vmatpush2.msra.mxu0 0.0
        %3194 = vmatprep.subr.mxu0 0.0
        %3195 = vmatpush2.msra.mxu0 0.0
        %3196 = vmatprep.subr.mxu0 0.0
        %3197 = vmatpush2.msra.mxu0 0.0
        %3198 = vmatprep.subr.mxu0 0.0
        %3199 = vmatpush2.msra.mxu0 0.0
        %3200 = vmatprep.subr.mxu0 0.0
        %3201 = vmatpush2.msra.mxu0 0.0
        %3202 = vmatprep.subr.mxu0 0.0
        %3203 = vmatpush2.msra.mxu0 0.0
        %3204 = vmatprep.subr.mxu0 0.0
        %3205 = vmatpush2.msra.mxu0 0.0
        %3206 = vmatprep.subr.mxu0 0.0
        %3207 = vmatpush2.msra.mxu0 0.0
        %3208 = vmatprep.subr.mxu0 0.0
        %3209 = vmatpush2.msra.mxu0 0.0
        %3210 = vmatprep.subr.mxu0 0.0
        %3211 = vmatpush2.msra.mxu0 0.0
        %3212 = vmatprep.subr.mxu0 0.0
        %3213 = vmatpush2.msra.mxu0 0.0
        %3214 = vmatprep.subr.mxu0 0.0
        %3215 = vmatpush2.msra.mxu0 0.0
        %3216 = vmatprep.subr.mxu0 0.0
        %3217 = vmatpush2.msra.mxu0 0.0
        %3218 = vmatprep.subr.mxu0 0.0
        %3219 = vmatpush2.msra.mxu0 0.0
        %3220 = vmatprep.subr.mxu0 0.0
        %3221 = vmatpush2.msra.mxu0 0.0
        %3222 = vmatprep.subr.mxu0 0.0
        %3223 = vmatpush2.msra.mxu0 0.0
        %3224 = vmatprep.mubr.f32.mxu0 0.0
        %3225 = vmatmul.mubr.f32.gmra.mxu0 %v3063
        %v3226 = vpop.f32.mrf.mxu0
        %v3227 = vadd.f32 0.0, %v3226
        %v3228 = vpop.f32.mrf.mxu0
        %v3229 = vadd.f32 0.0, %v3228
        %3230 = vmatprep.mubr.f32.mxu0 0.0
        %3231 = vmatmul.mubr.f32.gmra.mxu0 %v3066
        %v3232 = vpop.f32.mrf.mxu0
        %v3233 = vadd.f32 0.0, %v3232
        %v3234 = vpop.f32.mrf.mxu0
        %v3235 = vadd.f32 0.0, %v3234
        %3236 = vmatprep.mubr.f32.mxu0 0.0
        %3237 = vmatmul.mubr.f32.gmra.mxu0 %v3069
        %v3238 = vpop.f32.mrf.mxu0
        %v3239 = vadd.f32 0.0, %v3238
        %v3240 = vpop.f32.mrf.mxu0
        %v3241 = vadd.f32 0.0, %v3240
        %3242 = vdwg.mxu0
        %v3243 = vmax.f32 %v3154, %v3227
        %v3244 = vmax.f32 %v3155, %v3229
        %v3245 = vmax.f32 %v3156, %v3233
        %v3246 = vmax.f32 %v3157, %v3235
        %v3247 = vmax.f32 %v3158, %v3239
        %v3248 = vmax.f32 %v3159, %v3241
        %3249 = vmatprep.subr.mxu0 0.0
        %3250 = vmatpush1.msra.mxu0 0.0
        %3251 = vmatprep.subr.mxu0 0.0
        %3252 = vmatpush1.msra.mxu0 0.0
        %3253 = vmatprep.subr.mxu0 0.0
        %3254 = vmatpush1.msra.mxu0 0.0
        %3255 = vmatprep.subr.mxu0 0.0
        %3256 = vmatpush1.msra.mxu0 0.0
        %3257 = vmatprep.subr.mxu0 0.0
        %3258 = vmatpush1.msra.mxu0 0.0
        %3259 = vmatprep.subr.mxu0 0.0
        %3260 = vmatpush1.msra.mxu0 0.0
        %3261 = vmatprep.subr.mxu0 0.0
        %3262 = vmatpush1.msra.mxu0 0.0
        %3263 = vmatprep.subr.mxu0 0.0
        %3264 = vmatpush1.msra.mxu0 0.0
        %3265 = vmatprep.subr.mxu0 %v2967
        %3266 = vmatpush1.msra.mxu0 %v2964
        %3267 = vmatprep.subr.mxu0 %v2763
        %3268 = vmatpush1.msra.mxu0 %v2762
        %3269 = vmatprep.subr.mxu0 %v2761
        %3270 = vmatpush1.msra.mxu0 %v2760
        %3271 = vmatprep.subr.mxu0 %v2759
        %3272 = vmatpush1.msra.mxu0 %v2758
        %3273 = vmatprep.subr.mxu0 %v2757
        %3274 = vmatpush1.msra.mxu0 %v2756
        %3275 = vmatprep.subr.mxu0 %v2755
        %3276 = vmatpush1.msra.mxu0 %v2754
        %3277 = vmatprep.subr.mxu0 %v2753
        %3278 = vmatpush1.msra.mxu0 %v2752
        %3279 = vmatprep.subr.mxu0 %v2751
        %3280 = vmatpush1.msra.mxu0 %v2750
        %3281 = vmatprep.subr.mxu0 0.0
        %3282 = vmatpush2.msra.mxu0 0.0
        %3283 = vmatprep.subr.mxu0 0.0
        %3284 = vmatpush2.msra.mxu0 0.0
        %3285 = vmatprep.subr.mxu0 0.0
        %3286 = vmatpush2.msra.mxu0 0.0
        %3287 = vmatprep.subr.mxu0 0.0
        %3288 = vmatpush2.msra.mxu0 0.0
        %3289 = vmatprep.subr.mxu0 0.0
        %3290 = vmatpush2.msra.mxu0 0.0
        %3291 = vmatprep.subr.mxu0 0.0
        %3292 = vmatpush2.msra.mxu0 0.0
        %3293 = vmatprep.subr.mxu0 0.0
        %3294 = vmatpush2.msra.mxu0 0.0
        %3295 = vmatprep.subr.mxu0 0.0
        %3296 = vmatpush2.msra.mxu0 0.0
        %3297 = vmatprep.subr.mxu0 0.0
        %3298 = vmatpush2.msra.mxu0 0.0
        %3299 = vmatprep.subr.mxu0 0.0
        %3300 = vmatpush2.msra.mxu0 0.0
        %3301 = vmatprep.subr.mxu0 0.0
        %3302 = vmatpush2.msra.mxu0 0.0
        %3303 = vmatprep.subr.mxu0 0.0
        %3304 = vmatpush2.msra.mxu0 0.0
        %3305 = vmatprep.subr.mxu0 0.0
        %3306 = vmatpush2.msra.mxu0 0.0
        %3307 = vmatprep.subr.mxu0 0.0
        %3308 = vmatpush2.msra.mxu0 0.0
        %3309 = vmatprep.subr.mxu0 0.0
        %3310 = vmatpush2.msra.mxu0 0.0
        %3311 = vmatprep.subr.mxu0 0.0
        %3312 = vmatpush2.msra.mxu0 0.0
        %3313 = vmatprep.mubr.f32.mxu0 0.0
        %3314 = vmatmul.mubr.f32.gmra.mxu0 %v3063
        %v3315 = vpop.f32.mrf.mxu0
        %v3316 = vadd.f32 0.0, %v3315
        %v3317 = vpop.f32.mrf.mxu0
        %v3318 = vadd.f32 0.0, %v3317
        %3319 = vmatprep.mubr.f32.mxu0 0.0
        %3320 = vmatmul.mubr.f32.gmra.mxu0 %v3066
        %v3321 = vpop.f32.mrf.mxu0
        %v3322 = vadd.f32 0.0, %v3321
        %v3323 = vpop.f32.mrf.mxu0
        %v3324 = vadd.f32 0.0, %v3323
        %3325 = vmatprep.mubr.f32.mxu0 0.0
        %3326 = vmatmul.mubr.f32.gmra.mxu0 %v3069
        %v3327 = vpop.f32.mrf.mxu0
        %v3328 = vadd.f32 0.0, %v3327
        %v3329 = vpop.f32.mrf.mxu0
        %v3330 = vadd.f32 0.0, %v3329
        %3331 = vdwg.mxu0
        %v3332 = vmax.f32 %v3243, %v3316
        %v3333 = vmax.f32 %v3244, %v3318
        %v3334 = vmax.f32 %v3245, %v3322
        %v3335 = vmax.f32 %v3246, %v3324
        %v3336 = vmax.f32 %v3247, %v3328
        %v3337 = vmax.f32 %v3248, %v3330
        %s3338 = scalar_lea.vmem [#allocation7], 48
        %v3339 = vld [vmem:[%s3338] sm:$0xff]
        %v3340 = vld [vmem:[%s3338 + $0x8] sm:$0xff]
        %v3341 = vld [vmem:[%s3338 + $0x10] sm:$0xf]
        %v3343 = vsel %vm2769, %v3339, 0
        %v3346 = vsel %vm2769, %v3340, 0
        %v3349 = vsel %vm2769, %v3341, 0
        %3351 = vmatprep.subr.mxu0 0.0
        %3352 = vmatpush1.msra.mxu0 0.0
        %3353 = vmatprep.subr.mxu0 0.0
        %3354 = vmatpush1.msra.mxu0 0.0
        %3355 = vmatprep.subr.mxu0 0.0
        %3356 = vmatpush1.msra.mxu0 0.0
        %3357 = vmatprep.subr.mxu0 0.0
        %3358 = vmatpush1.msra.mxu0 0.0
        %3359 = vmatprep.subr.mxu0 0.0
        %3360 = vmatpush1.msra.mxu0 0.0
        %3361 = vmatprep.subr.mxu0 0.0
        %3362 = vmatpush1.msra.mxu0 0.0
        %3363 = vmatprep.subr.mxu0 0.0
        %3364 = vmatpush1.msra.mxu0 0.0
        %3365 = vmatprep.subr.mxu0 0.0
        %3366 = vmatpush1.msra.mxu0 0.0
        %3367 = vmatprep.subr.mxu0 %v2783
        %3368 = vmatpush1.msra.mxu0 %v2780
        %3369 = vmatprep.subr.mxu0 %v1367
        %3370 = vmatpush1.msra.mxu0 %v1366
        %3371 = vmatprep.subr.mxu0 %v1365
        %3372 = vmatpush1.msra.mxu0 %v1364
        %3373 = vmatprep.subr.mxu0 %v1363
        %3374 = vmatpush1.msra.mxu0 %v1362
        %3375 = vmatprep.subr.mxu0 %v1361
        %3376 = vmatpush1.msra.mxu0 %v1360
        %3377 = vmatprep.subr.mxu0 %v1359
        %3378 = vmatpush1.msra.mxu0 %v1358
        %3379 = vmatprep.subr.mxu0 %v1357
        %3380 = vmatpush1.msra.mxu0 %v1356
        %3381 = vmatprep.subr.mxu0 %v1355
        %3382 = vmatpush1.msra.mxu0 %v1354
        %3383 = vmatprep.subr.mxu0 0.0
        %3384 = vmatpush2.msra.mxu0 0.0
        %3385 = vmatprep.subr.mxu0 0.0
        %3386 = vmatpush2.msra.mxu0 0.0
        %3387 = vmatprep.subr.mxu0 0.0
        %3388 = vmatpush2.msra.mxu0 0.0
        %3389 = vmatprep.subr.mxu0 0.0
        %3390 = vmatpush2.msra.mxu0 0.0
        %3391 = vmatprep.subr.mxu0 0.0
        %3392 = vmatpush2.msra.mxu0 0.0
        %3393 = vmatprep.subr.mxu0 0.0
        %3394 = vmatpush2.msra.mxu0 0.0
        %3395 = vmatprep.subr.mxu0 0.0
        %3396 = vmatpush2.msra.mxu0 0.0
        %3397 = vmatprep.subr.mxu0 0.0
        %3398 = vmatpush2.msra.mxu0 0.0
        %3399 = vmatprep.subr.mxu0 0.0
        %3400 = vmatpush2.msra.mxu0 0.0
        %3401 = vmatprep.subr.mxu0 0.0
        %3402 = vmatpush2.msra.mxu0 0.0
        %3403 = vmatprep.subr.mxu0 0.0
        %3404 = vmatpush2.msra.mxu0 0.0
        %3405 = vmatprep.subr.mxu0 0.0
        %3406 = vmatpush2.msra.mxu0 0.0
        %3407 = vmatprep.subr.mxu0 0.0
        %3408 = vmatpush2.msra.mxu0 0.0
        %3409 = vmatprep.subr.mxu0 0.0
        %3410 = vmatpush2.msra.mxu0 0.0
        %3411 = vmatprep.subr.mxu0 0.0
        %3412 = vmatpush2.msra.mxu0 0.0
        %3413 = vmatprep.subr.mxu0 0.0
        %3414 = vmatpush2.msra.mxu0 0.0
        %3415 = vmatprep.mubr.f32.mxu0 0.0
        %3416 = vmatmul.mubr.f32.gmra.mxu0 %v3343
        %v3417 = vpop.f32.mrf.mxu0
        %v3418 = vadd.f32 0.0, %v3417
        %v3419 = vpop.f32.mrf.mxu0
        %v3420 = vadd.f32 0.0, %v3419
        %3421 = vmatprep.mubr.f32.mxu0 0.0
        %3422 = vmatmul.mubr.f32.gmra.mxu0 %v3346
        %v3423 = vpop.f32.mrf.mxu0
        %v3424 = vadd.f32 0.0, %v3423
        %v3425 = vpop.f32.mrf.mxu0
        %v3426 = vadd.f32 0.0, %v3425
        %3427 = vmatprep.mubr.f32.mxu0 0.0
        %3428 = vmatmul.mubr.f32.gmra.mxu0 %v3349
        %v3429 = vpop.f32.mrf.mxu0
        %v3430 = vadd.f32 0.0, %v3429
        %v3431 = vpop.f32.mrf.mxu0
        %v3432 = vadd.f32 0.0, %v3431
        %3433 = vdwg.mxu0
        %v3434 = vmax.f32 %v3332, %v3418
        %v3435 = vmax.f32 %v3333, %v3420
        %v3436 = vmax.f32 %v3334, %v3424
        %v3437 = vmax.f32 %v3335, %v3426
        %v3438 = vmax.f32 %v3336, %v3430
        %v3439 = vmax.f32 %v3337, %v3432
        %3440 = vmatprep.subr.mxu0 0.0
        %3441 = vmatpush1.msra.mxu0 0.0
        %3442 = vmatprep.subr.mxu0 0.0
        %3443 = vmatpush1.msra.mxu0 0.0
        %3444 = vmatprep.subr.mxu0 0.0
        %3445 = vmatpush1.msra.mxu0 0.0
        %3446 = vmatprep.subr.mxu0 0.0
        %3447 = vmatpush1.msra.mxu0 0.0
        %3448 = vmatprep.subr.mxu0 0.0
        %3449 = vmatpush1.msra.mxu0 0.0
        %3450 = vmatprep.subr.mxu0 0.0
        %3451 = vmatpush1.msra.mxu0 0.0
        %3452 = vmatprep.subr.mxu0 0.0
        %3453 = vmatpush1.msra.mxu0 0.0
        %3454 = vmatprep.subr.mxu0 0.0
        %3455 = vmatpush1.msra.mxu0 0.0
        %3456 = vmatprep.subr.mxu0 %v2872
        %3457 = vmatpush1.msra.mxu0 %v2869
        %3458 = vmatprep.subr.mxu0 %v2065
        %3459 = vmatpush1.msra.mxu0 %v2064
        %3460 = vmatprep.subr.mxu0 %v2063
        %3461 = vmatpush1.msra.mxu0 %v2062
        %3462 = vmatprep.subr.mxu0 %v2061
        %3463 = vmatpush1.msra.mxu0 %v2060
        %3464 = vmatprep.subr.mxu0 %v2059
        %3465 = vmatpush1.msra.mxu0 %v2058
        %3466 = vmatprep.subr.mxu0 %v2057
        %3467 = vmatpush1.msra.mxu0 %v2056
        %3468 = vmatprep.subr.mxu0 %v2055
        %3469 = vmatpush1.msra.mxu0 %v2054
        %3470 = vmatprep.subr.mxu0 %v2053
        %3471 = vmatpush1.msra.mxu0 %v2052
        %3472 = vmatprep.subr.mxu0 0.0
        %3473 = vmatpush2.msra.mxu0 0.0
        %3474 = vmatprep.subr.mxu0 0.0
        %3475 = vmatpush2.msra.mxu0 0.0
        %3476 = vmatprep.subr.mxu0 0.0
        %3477 = vmatpush2.msra.mxu0 0.0
        %3478 = vmatprep.subr.mxu0 0.0
        %3479 = vmatpush2.msra.mxu0 0.0
        %3480 = vmatprep.subr.mxu0 0.0
        %3481 = vmatpush2.msra.mxu0 0.0
        %3482 = vmatprep.subr.mxu0 0.0
        %3483 = vmatpush2.msra.mxu0 0.0
        %3484 = vmatprep.subr.mxu0 0.0
        %3485 = vmatpush2.msra.mxu0 0.0
        %3486 = vmatprep.subr.mxu0 0.0
        %3487 = vmatpush2.msra.mxu0 0.0
        %3488 = vmatprep.subr.mxu0 0.0
        %3489 = vmatpush2.msra.mxu0 0.0
        %3490 = vmatprep.subr.mxu0 0.0
        %3491 = vmatpush2.msra.mxu0 0.0
        %3492 = vmatprep.subr.mxu0 0.0
        %3493 = vmatpush2.msra.mxu0 0.0
        %3494 = vmatprep.subr.mxu0 0.0
        %3495 = vmatpush2.msra.mxu0 0.0
        %3496 = vmatprep.subr.mxu0 0.0
        %3497 = vmatpush2.msra.mxu0 0.0
        %3498 = vmatprep.subr.mxu0 0.0
        %3499 = vmatpush2.msra.mxu0 0.0
        %3500 = vmatprep.subr.mxu0 0.0
        %3501 = vmatpush2.msra.mxu0 0.0
        %3502 = vmatprep.subr.mxu0 0.0
        %3503 = vmatpush2.msra.mxu0 0.0
        %3504 = vmatprep.mubr.f32.mxu0 0.0
        %3505 = vmatmul.mubr.f32.gmra.mxu0 %v3343
        %v3506 = vpop.f32.mrf.mxu0
        %v3507 = vadd.f32 0.0, %v3506
        %v3508 = vpop.f32.mrf.mxu0
        %v3509 = vadd.f32 0.0, %v3508
        %3510 = vmatprep.mubr.f32.mxu0 0.0
        %3511 = vmatmul.mubr.f32.gmra.mxu0 %v3346
        %v3512 = vpop.f32.mrf.mxu0
        %v3513 = vadd.f32 0.0, %v3512
        %v3514 = vpop.f32.mrf.mxu0
        %v3515 = vadd.f32 0.0, %v3514
        %3516 = vmatprep.mubr.f32.mxu0 0.0
        %3517 = vmatmul.mubr.f32.gmra.mxu0 %v3349
        %v3518 = vpop.f32.mrf.mxu0
        %v3519 = vadd.f32 0.0, %v3518
        %v3520 = vpop.f32.mrf.mxu0
        %v3521 = vadd.f32 0.0, %v3520
        %3522 = vdwg.mxu0
        %v3523 = vmax.f32 %v3434, %v3507
        %v3524 = vmax.f32 %v3435, %v3509
        %v3525 = vmax.f32 %v3436, %v3513
        %v3526 = vmax.f32 %v3437, %v3515
        %v3527 = vmax.f32 %v3438, %v3519
        %v3528 = vmax.f32 %v3439, %v3521
        %3529 = vmatprep.subr.mxu0 0.0
        %3530 = vmatpush1.msra.mxu0 0.0
        %3531 = vmatprep.subr.mxu0 0.0
        %3532 = vmatpush1.msra.mxu0 0.0
        %3533 = vmatprep.subr.mxu0 0.0
        %3534 = vmatpush1.msra.mxu0 0.0
        %3535 = vmatprep.subr.mxu0 0.0
        %3536 = vmatpush1.msra.mxu0 0.0
        %3537 = vmatprep.subr.mxu0 0.0
        %3538 = vmatpush1.msra.mxu0 0.0
        %3539 = vmatprep.subr.mxu0 0.0
        %3540 = vmatpush1.msra.mxu0 0.0
        %3541 = vmatprep.subr.mxu0 0.0
        %3542 = vmatpush1.msra.mxu0 0.0
        %3543 = vmatprep.subr.mxu0 0.0
        %3544 = vmatpush1.msra.mxu0 0.0
        %3545 = vmatprep.subr.mxu0 %v2967
        %3546 = vmatpush1.msra.mxu0 %v2964
        %3547 = vmatprep.subr.mxu0 %v2763
        %3548 = vmatpush1.msra.mxu0 %v2762
        %3549 = vmatprep.subr.mxu0 %v2761
        %3550 = vmatpush1.msra.mxu0 %v2760
        %3551 = vmatprep.subr.mxu0 %v2759
        %3552 = vmatpush1.msra.mxu0 %v2758
        %3553 = vmatprep.subr.mxu0 %v2757
        %3554 = vmatpush1.msra.mxu0 %v2756
        %3555 = vmatprep.subr.mxu0 %v2755
        %3556 = vmatpush1.msra.mxu0 %v2754
        %3557 = vmatprep.subr.mxu0 %v2753
        %3558 = vmatpush1.msra.mxu0 %v2752
        %3559 = vmatprep.subr.mxu0 %v2751
        %3560 = vmatpush1.msra.mxu0 %v2750
        %3561 = vmatprep.subr.mxu0 0.0
        %3562 = vmatpush2.msra.mxu0 0.0
        %3563 = vmatprep.subr.mxu0 0.0
        %3564 = vmatpush2.msra.mxu0 0.0
        %3565 = vmatprep.subr.mxu0 0.0
        %3566 = vmatpush2.msra.mxu0 0.0
        %3567 = vmatprep.subr.mxu0 0.0
        %3568 = vmatpush2.msra.mxu0 0.0
        %3569 = vmatprep.subr.mxu0 0.0
        %3570 = vmatpush2.msra.mxu0 0.0
        %3571 = vmatprep.subr.mxu0 0.0
        %3572 = vmatpush2.msra.mxu0 0.0
        %3573 = vmatprep.subr.mxu0 0.0
        %3574 = vmatpush2.msra.mxu0 0.0
        %3575 = vmatprep.subr.mxu0 0.0
        %3576 = vmatpush2.msra.mxu0 0.0
        %3577 = vmatprep.subr.mxu0 0.0
        %3578 = vmatpush2.msra.mxu0 0.0
        %3579 = vmatprep.subr.mxu0 0.0
        %3580 = vmatpush2.msra.mxu0 0.0
        %3581 = vmatprep.subr.mxu0 0.0
        %3582 = vmatpush2.msra.mxu0 0.0
        %3583 = vmatprep.subr.mxu0 0.0
        %3584 = vmatpush2.msra.mxu0 0.0
        %3585 = vmatprep.subr.mxu0 0.0
        %3586 = vmatpush2.msra.mxu0 0.0
        %3587 = vmatprep.subr.mxu0 0.0
        %3588 = vmatpush2.msra.mxu0 0.0
        %3589 = vmatprep.subr.mxu0 0.0
        %3590 = vmatpush2.msra.mxu0 0.0
        %3591 = vmatprep.subr.mxu0 0.0
        %3592 = vmatpush2.msra.mxu0 0.0
        %3593 = vmatprep.mubr.f32.mxu0 0.0
        %3594 = vmatmul.mubr.f32.gmra.mxu0 %v3343
        %v3595 = vpop.f32.mrf.mxu0
        %v3596 = vadd.f32 0.0, %v3595
        %v3597 = vpop.f32.mrf.mxu0
        %v3598 = vadd.f32 0.0, %v3597
        %3599 = vmatprep.mubr.f32.mxu0 0.0
        %3600 = vmatmul.mubr.f32.gmra.mxu0 %v3346
        %v3601 = vpop.f32.mrf.mxu0
        %v3602 = vadd.f32 0.0, %v3601
        %v3603 = vpop.f32.mrf.mxu0
        %v3604 = vadd.f32 0.0, %v3603
        %3605 = vmatprep.mubr.f32.mxu0 0.0
        %3606 = vmatmul.mubr.f32.gmra.mxu0 %v3349
        %v3607 = vpop.f32.mrf.mxu0
        %v3608 = vadd.f32 0.0, %v3607
        %v3609 = vpop.f32.mrf.mxu0
        %v3610 = vadd.f32 0.0, %v3609
        %3611 = vdwg.mxu0
        %v3612 = vmax.f32 %v3523, %v3596
        %v3613 = vmax.f32 %v3524, %v3598
        %v3614 = vmax.f32 %v3525, %v3602
        %v3615 = vmax.f32 %v3526, %v3604
        %v3616 = vmax.f32 %v3527, %v3608
        %v3617 = vmax.f32 %v3528, %v3610
        %v3618 = vld [vmem:[#allocation8] sm:$0x3]
        %v3620 = vlaneseq
        %v3621 = vshrl.u32 %v3620, 7
        %v3622 = vsub.s32 0, %v3621
        %v3623 = vrot.slane %v3618, %v3622
        %v3624 = vlaneseq
        %v3625 = vshrl.u32 %v3624, 7
        %v3626 = vsub.s32 1, %v3625
        %v3627 = vrot.slane %v3618, %v3626
        %v3630 = vadd.f32 %v3612, %v3623
        %v3631 = vadd.f32 %v3613, %v3627
        %v3632 = vadd.f32 %v3614, %v3623
        %v3633 = vadd.f32 %v3615, %v3627
        %v3634 = vadd.f32 %v3616, %v3623
        %v3635 = vadd.f32 %v3617, %v3627
        %v3636 = vmax.f32 %v3630, 0.0
        %v3637 = vmax.f32 %v3631, 0.0
        %v3638 = vmax.f32 %v3632, 0.0
        %v3639 = vmax.f32 %v3633, 0.0
        %v3640 = vmax.f32 %v3634, 0.0
        %v3641 = vmax.f32 %v3635, 0.0
        %v3642 = vld [vmem:[#allocation10] sm:$0xff]
        %v3643 = vld [vmem:[#allocation10 + $0x8] sm:$0xff]
        %v3644 = vld [vmem:[#allocation10 + $0x10] sm:$0xff]
        %v3645 = vld [vmem:[#allocation10 + $0x18] sm:$0xff]
        %v3646 = vld [vmem:[#allocation10 + $0x20] sm:$0xff]
        %v3647 = vld [vmem:[#allocation10 + $0x28] sm:$0xff]
        %v3648 = vld [vmem:[#allocation10 + $0x30] sm:$0xff]
        %v3649 = vld [vmem:[#allocation10 + $0x38] sm:$0xff]
        %v3650 = vld [vmem:[#allocation10 + $0x40] sm:$0xff]
        %v3651 = vld [vmem:[#allocation10 + $0x48] sm:$0xff]
        %v3652 = vld [vmem:[#allocation10 + $0x50] sm:$0xff]
        %v3653 = vld [vmem:[#allocation10 + $0x58] sm:$0xff]
        %v3654 = vld [vmem:[#allocation10 + $0x60] sm:$0xff]
        %v3655 = vld [vmem:[#allocation10 + $0x68] sm:$0xff]
        %v3656 = vld [vmem:[#allocation10 + $0x70] sm:$0xff]
        %v3657 = vld [vmem:[#allocation10 + $0x78] sm:$0xff]
        %v3658 = vld [vmem:[#allocation10 + $0x80] sm:$0xff]
        %v3659 = vld [vmem:[#allocation10 + $0x88] sm:$0xff]
        %v3660 = vld [vmem:[#allocation10 + $0x90] sm:$0xff]
        %v3661 = vld [vmem:[#allocation10 + $0x98] sm:$0xff]
        %v3662 = vld [vmem:[#allocation10 + $0xa0] sm:$0xff]
        %v3663 = vld [vmem:[#allocation10 + $0xa8] sm:$0xff]
        %v3664 = vld [vmem:[#allocation10 + $0xb0] sm:$0xff]
        %v3665 = vld [vmem:[#allocation10 + $0xb8] sm:$0xff]
        %v3666 = vld [vmem:[#allocation10 + $0xc0] sm:$0xff]
        %s3667 = scalar_lea.vmem [#allocation10], 200
        %v3668 = vld [vmem:[%s3667] sm:$0xff]
        %v3669 = vld [vmem:[%s3667 + $0x8] sm:$0xff]
        %v3670 = vld [vmem:[%s3667 + $0x10] sm:$0xff]
        %v3671 = vld [vmem:[%s3667 + $0x18] sm:$0xff]
        %v3672 = vld [vmem:[%s3667 + $0x20] sm:$0xff]
        %v3673 = vld [vmem:[%s3667 + $0x28] sm:$0xff]
        %v3674 = vld [vmem:[%s3667 + $0x30] sm:$0xff]
        %v3675 = vld [vmem:[%s3667 + $0x38] sm:$0xff]
        %v3676 = vld [vmem:[%s3667 + $0x40] sm:$0xff]
        %v3677 = vld [vmem:[%s3667 + $0x48] sm:$0xff]
        %v3678 = vld [vmem:[%s3667 + $0x50] sm:$0xff]
        %v3679 = vld [vmem:[%s3667 + $0x58] sm:$0xff]
        %v3680 = vld [vmem:[%s3667 + $0x60] sm:$0xff]
        %v3681 = vld [vmem:[%s3667 + $0x68] sm:$0xff]
        %v3682 = vld [vmem:[%s3667 + $0x70] sm:$0xff]
        %v3683 = vld [vmem:[%s3667 + $0x78] sm:$0xff]
        %v3684 = vld [vmem:[%s3667 + $0x80] sm:$0xff]
        %v3685 = vld [vmem:[%s3667 + $0x88] sm:$0xff]
        %v3686 = vld [vmem:[%s3667 + $0x90] sm:$0xff]
        %v3687 = vld [vmem:[%s3667 + $0x98] sm:$0xff]
        %v3688 = vld [vmem:[%s3667 + $0xa0] sm:$0xff]
        %v3689 = vld [vmem:[%s3667 + $0xa8] sm:$0xff]
        %v3690 = vld [vmem:[%s3667 + $0xb0] sm:$0xff]
        %v3691 = vld [vmem:[%s3667 + $0xb8] sm:$0xff]
        %v3692 = vld [vmem:[%s3667 + $0xc0] sm:$0xff]
        %v3699 = vrot.slane %v3636, 1
        %v3700 = vrot.slane %v3638, 1
        %v3701 = vsel %vm561, %v3699, %v3700
        %v3702 = vrot.slane %v3637, 1
        %v3703 = vrot.slane %v3639, 1
        %v3704 = vsel %vm561, %v3702, %v3703
        %v3705 = vrot.slane %v3640, 1
        %v3706 = vsel %vm561, %v3700, %v3705
        %v3707 = vrot.slane %v3641, 1
        %v3708 = vsel %vm561, %v3703, %v3707
        %vm3711 = vcmask 588800
        %v3712 = vsel %vm3711, %v3704, 0
        %v3714 = vsel %vm3711, %v3708, 0
        %3716 = vmatprep.subr.mxu0 0.0
        %3717 = vmatpush1.msra.mxu0 %v3683
        %3718 = vmatprep.subr.mxu0 0.0
        %3719 = vmatpush1.msra.mxu0 %v3682
        %3720 = vmatprep.subr.mxu0 0.0
        %3721 = vmatpush1.msra.mxu0 %v3681
        %3722 = vmatprep.subr.mxu0 0.0
        %3723 = vmatpush1.msra.mxu0 %v3680
        %3724 = vmatprep.subr.mxu0 0.0
        %3725 = vmatpush1.msra.mxu0 %v3679
        %3726 = vmatprep.subr.mxu0 0.0
        %3727 = vmatpush1.msra.mxu0 %v3678
        %3728 = vmatprep.subr.mxu0 0.0
        %3729 = vmatpush1.msra.mxu0 %v3677
        %3730 = vmatprep.subr.mxu0 0.0
        %3731 = vmatpush1.msra.mxu0 %v3676
        %3732 = vmatprep.subr.mxu0 0.0
        %3733 = vmatpush1.msra.mxu0 %v3675
        %3734 = vmatprep.subr.mxu0 0.0
        %3735 = vmatpush1.msra.mxu0 %v3674
        %3736 = vmatprep.subr.mxu0 0.0
        %3737 = vmatpush1.msra.mxu0 %v3673
        %3738 = vmatprep.subr.mxu0 0.0
        %3739 = vmatpush1.msra.mxu0 %v3672
        %3740 = vmatprep.subr.mxu0 0.0
        %3741 = vmatpush1.msra.mxu0 %v3671
        %3742 = vmatprep.subr.mxu0 0.0
        %3743 = vmatpush1.msra.mxu0 %v3670
        %3744 = vmatprep.subr.mxu0 0.0
        %3745 = vmatpush1.msra.mxu0 %v3669
        %3746 = vmatprep.subr.mxu0 0.0
        %3747 = vmatpush1.msra.mxu0 %v3668
        %3748 = vmatprep.subr.mxu0 0.0
        %3749 = vmatpush2.msra.mxu0 0.0
        %3750 = vmatprep.subr.mxu0 0.0
        %3751 = vmatpush2.msra.mxu0 0.0
        %3752 = vmatprep.subr.mxu0 0.0
        %3753 = vmatpush2.msra.mxu0 0.0
        %3754 = vmatprep.subr.mxu0 0.0
        %3755 = vmatpush2.msra.mxu0 0.0
        %3756 = vmatprep.subr.mxu0 0.0
        %3757 = vmatpush2.msra.mxu0 0.0
        %3758 = vmatprep.subr.mxu0 0.0
        %3759 = vmatpush2.msra.mxu0 0.0
        %3760 = vmatprep.subr.mxu0 0.0
        %3761 = vmatpush2.msra.mxu0 0.0
        %3762 = vmatprep.subr.mxu0 0.0
        %3763 = vmatpush2.msra.mxu0 %v3692
        %3764 = vmatprep.subr.mxu0 0.0
        %3765 = vmatpush2.msra.mxu0 %v3691
        %3766 = vmatprep.subr.mxu0 0.0
        %3767 = vmatpush2.msra.mxu0 %v3690
        %3768 = vmatprep.subr.mxu0 0.0
        %3769 = vmatpush2.msra.mxu0 %v3689
        %3770 = vmatprep.subr.mxu0 0.0
        %3771 = vmatpush2.msra.mxu0 %v3688
        %3772 = vmatprep.subr.mxu0 0.0
        %3773 = vmatpush2.msra.mxu0 %v3687
        %3774 = vmatprep.subr.mxu0 0.0
        %3775 = vmatpush2.msra.mxu0 %v3686
        %3776 = vmatprep.subr.mxu0 0.0
        %3777 = vmatpush2.msra.mxu0 %v3685
        %3778 = vmatprep.subr.mxu0 0.0
        %3779 = vmatpush2.msra.mxu0 %v3684
        %3780 = vmatprep.mubr.f32.mxu0 %v3712
        %3781 = vmatmul.mubr.f32.gmra.mxu0 %v3701
        %v3782 = vpop.f32.mrf.mxu0
        %v3783 = vadd.f32 0.0, %v3782
        %v3784 = vpop.f32.mrf.mxu0
        %3785 = vmatprep.mubr.f32.mxu0 %v3714
        %3786 = vmatmul.mubr.f32.gmra.mxu0 %v3706
        %v3787 = vpop.f32.mrf.mxu0
        %v3788 = vadd.f32 0.0, %v3787
        %v3789 = vpop.f32.mrf.mxu0
        %3790 = vdwg.mxu0
        %v3791 = vsel %vm3711, %v3637, 0
        %v3793 = vsel %vm3711, %v3639, 0
        %3795 = vmatprep.subr.mxu0 0.0
        %3796 = vmatpush1.msra.mxu0 %v3657
        %3797 = vmatprep.subr.mxu0 0.0
        %3798 = vmatpush1.msra.mxu0 %v3656
        %3799 = vmatprep.subr.mxu0 0.0
        %3800 = vmatpush1.msra.mxu0 %v3655
        %3801 = vmatprep.subr.mxu0 0.0
        %3802 = vmatpush1.msra.mxu0 %v3654
        %3803 = vmatprep.subr.mxu0 0.0
        %3804 = vmatpush1.msra.mxu0 %v3653
        %3805 = vmatprep.subr.mxu0 0.0
        %3806 = vmatpush1.msra.mxu0 %v3652
        %3807 = vmatprep.subr.mxu0 0.0
        %3808 = vmatpush1.msra.mxu0 %v3651
        %3809 = vmatprep.subr.mxu0 0.0
        %3810 = vmatpush1.msra.mxu0 %v3650
        %3811 = vmatprep.subr.mxu0 0.0
        %3812 = vmatpush1.msra.mxu0 %v3649
        %3813 = vmatprep.subr.mxu0 0.0
        %3814 = vmatpush1.msra.mxu0 %v3648
        %3815 = vmatprep.subr.mxu0 0.0
        %3816 = vmatpush1.msra.mxu0 %v3647
        %3817 = vmatprep.subr.mxu0 0.0
        %3818 = vmatpush1.msra.mxu0 %v3646
        %3819 = vmatprep.subr.mxu0 0.0
        %3820 = vmatpush1.msra.mxu0 %v3645
        %3821 = vmatprep.subr.mxu0 0.0
        %3822 = vmatpush1.msra.mxu0 %v3644
        %3823 = vmatprep.subr.mxu0 0.0
        %3824 = vmatpush1.msra.mxu0 %v3643
        %3825 = vmatprep.subr.mxu0 0.0
        %3826 = vmatpush1.msra.mxu0 %v3642
        %3827 = vmatprep.subr.mxu0 0.0
        %3828 = vmatpush2.msra.mxu0 0.0
        %3829 = vmatprep.subr.mxu0 0.0
        %3830 = vmatpush2.msra.mxu0 0.0
        %3831 = vmatprep.subr.mxu0 0.0
        %3832 = vmatpush2.msra.mxu0 0.0
        %3833 = vmatprep.subr.mxu0 0.0
        %3834 = vmatpush2.msra.mxu0 0.0
        %3835 = vmatprep.subr.mxu0 0.0
        %3836 = vmatpush2.msra.mxu0 0.0
        %3837 = vmatprep.subr.mxu0 0.0
        %3838 = vmatpush2.msra.mxu0 0.0
        %3839 = vmatprep.subr.mxu0 0.0
        %3840 = vmatpush2.msra.mxu0 0.0
        %3841 = vmatprep.subr.mxu0 0.0
        %3842 = vmatpush2.msra.mxu0 %v3666
        %3843 = vmatprep.subr.mxu0 0.0
        %3844 = vmatpush2.msra.mxu0 %v3665
        %3845 = vmatprep.subr.mxu0 0.0
        %3846 = vmatpush2.msra.mxu0 %v3664
        %3847 = vmatprep.subr.mxu0 0.0
        %3848 = vmatpush2.msra.mxu0 %v3663
        %3849 = vmatprep.subr.mxu0 0.0
        %3850 = vmatpush2.msra.mxu0 %v3662
        %3851 = vmatprep.subr.mxu0 0.0
        %3852 = vmatpush2.msra.mxu0 %v3661
        %3853 = vmatprep.subr.mxu0 0.0
        %3854 = vmatpush2.msra.mxu0 %v3660
        %3855 = vmatprep.subr.mxu0 0.0
        %3856 = vmatpush2.msra.mxu0 %v3659
        %3857 = vmatprep.subr.mxu0 0.0
        %3858 = vmatpush2.msra.mxu0 %v3658
        %3859 = vmatprep.mubr.f32.mxu0 %v3791
        %3860 = vmatmul.mubr.f32.gmra.mxu0 %v3636
        %v3861 = vpop.f32.mrf.mxu0
        %v3862 = vadd.f32 %v3783, %v3861
        %v3863 = vpop.f32.mrf.mxu0
        %3864 = vmatprep.mubr.f32.mxu0 %v3793
        %3865 = vmatmul.mubr.f32.gmra.mxu0 %v3638
        %v3866 = vpop.f32.mrf.mxu0
        %v3867 = vadd.f32 %v3788, %v3866
        %v3868 = vpop.f32.mrf.mxu0
        %3869 = vdwg.mxu0
        %s3870 = scalar_lea.vmem [#allocation10], 400
        %v3871 = vld [vmem:[%s3870] sm:$0xff]
        %v3872 = vld [vmem:[%s3870 + $0x8] sm:$0xff]
        %v3873 = vld [vmem:[%s3870 + $0x10] sm:$0xff]
        %v3874 = vld [vmem:[%s3870 + $0x18] sm:$0xff]
        %v3875 = vld [vmem:[%s3870 + $0x20] sm:$0xff]
        %v3876 = vld [vmem:[%s3870 + $0x28] sm:$0xff]
        %v3877 = vld [vmem:[%s3870 + $0x30] sm:$0xff]
        %v3878 = vld [vmem:[%s3870 + $0x38] sm:$0xff]
        %v3879 = vld [vmem:[%s3870 + $0x40] sm:$0xff]
        %v3880 = vld [vmem:[%s3870 + $0x48] sm:$0xff]
        %v3881 = vld [vmem:[%s3870 + $0x50] sm:$0xff]
        %v3882 = vld [vmem:[%s3870 + $0x58] sm:$0xff]
        %v3883 = vld [vmem:[%s3870 + $0x60] sm:$0xff]
        %v3884 = vld [vmem:[%s3870 + $0x68] sm:$0xff]
        %v3885 = vld [vmem:[%s3870 + $0x70] sm:$0xff]
        %v3886 = vld [vmem:[%s3870 + $0x78] sm:$0xff]
        %v3887 = vld [vmem:[%s3870 + $0x80] sm:$0xff]
        %v3888 = vld [vmem:[%s3870 + $0x88] sm:$0xff]
        %v3889 = vld [vmem:[%s3870 + $0x90] sm:$0xff]
        %v3890 = vld [vmem:[%s3870 + $0x98] sm:$0xff]
        %v3891 = vld [vmem:[%s3870 + $0xa0] sm:$0xff]
        %v3892 = vld [vmem:[%s3870 + $0xa8] sm:$0xff]
        %v3893 = vld [vmem:[%s3870 + $0xb0] sm:$0xff]
        %v3894 = vld [vmem:[%s3870 + $0xb8] sm:$0xff]
        %v3895 = vld [vmem:[%s3870 + $0xc0] sm:$0xff]
        %v3896 = vrot.slane %v3636, 2
        %v3897 = vrot.slane %v3638, 2
        %v3898 = vsel %vm853, %v3896, %v3897
        %v3899 = vrot.slane %v3637, 2
        %v3900 = vrot.slane %v3639, 2
        %v3901 = vsel %vm853, %v3899, %v3900
        %v3902 = vrot.slane %v3640, 2
        %v3903 = vsel %vm853, %v3897, %v3902
        %v3904 = vrot.slane %v3641, 2
        %v3905 = vsel %vm853, %v3900, %v3904
        %v3908 = vsel %vm3711, %v3901, 0
        %v3910 = vsel %vm3711, %v3905, 0
        %3912 = vmatprep.subr.mxu0 0.0
        %3913 = vmatpush1.msra.mxu0 %v3886
        %3914 = vmatprep.subr.mxu0 0.0
        %3915 = vmatpush1.msra.mxu0 %v3885
        %3916 = vmatprep.subr.mxu0 0.0
        %3917 = vmatpush1.msra.mxu0 %v3884
        %3918 = vmatprep.subr.mxu0 0.0
        %3919 = vmatpush1.msra.mxu0 %v3883
        %3920 = vmatprep.subr.mxu0 0.0
        %3921 = vmatpush1.msra.mxu0 %v3882
        %3922 = vmatprep.subr.mxu0 0.0
        %3923 = vmatpush1.msra.mxu0 %v3881
        %3924 = vmatprep.subr.mxu0 0.0
        %3925 = vmatpush1.msra.mxu0 %v3880
        %3926 = vmatprep.subr.mxu0 0.0
        %3927 = vmatpush1.msra.mxu0 %v3879
        %3928 = vmatprep.subr.mxu0 0.0
        %3929 = vmatpush1.msra.mxu0 %v3878
        %3930 = vmatprep.subr.mxu0 0.0
        %3931 = vmatpush1.msra.mxu0 %v3877
        %3932 = vmatprep.subr.mxu0 0.0
        %3933 = vmatpush1.msra.mxu0 %v3876
        %3934 = vmatprep.subr.mxu0 0.0
        %3935 = vmatpush1.msra.mxu0 %v3875
        %3936 = vmatprep.subr.mxu0 0.0
        %3937 = vmatpush1.msra.mxu0 %v3874
        %3938 = vmatprep.subr.mxu0 0.0
        %3939 = vmatpush1.msra.mxu0 %v3873
        %3940 = vmatprep.subr.mxu0 0.0
        %3941 = vmatpush1.msra.mxu0 %v3872
        %3942 = vmatprep.subr.mxu0 0.0
        %3943 = vmatpush1.msra.mxu0 %v3871
        %3944 = vmatprep.subr.mxu0 0.0
        %3945 = vmatpush2.msra.mxu0 0.0
        %3946 = vmatprep.subr.mxu0 0.0
        %3947 = vmatpush2.msra.mxu0 0.0
        %3948 = vmatprep.subr.mxu0 0.0
        %3949 = vmatpush2.msra.mxu0 0.0
        %3950 = vmatprep.subr.mxu0 0.0
        %3951 = vmatpush2.msra.mxu0 0.0
        %3952 = vmatprep.subr.mxu0 0.0
        %3953 = vmatpush2.msra.mxu0 0.0
        %3954 = vmatprep.subr.mxu0 0.0
        %3955 = vmatpush2.msra.mxu0 0.0
        %3956 = vmatprep.subr.mxu0 0.0
        %3957 = vmatpush2.msra.mxu0 0.0
        %3958 = vmatprep.subr.mxu0 0.0
        %3959 = vmatpush2.msra.mxu0 %v3895
        %3960 = vmatprep.subr.mxu0 0.0
        %3961 = vmatpush2.msra.mxu0 %v3894
        %3962 = vmatprep.subr.mxu0 0.0
        %3963 = vmatpush2.msra.mxu0 %v3893
        %3964 = vmatprep.subr.mxu0 0.0
        %3965 = vmatpush2.msra.mxu0 %v3892
        %3966 = vmatprep.subr.mxu0 0.0
        %3967 = vmatpush2.msra.mxu0 %v3891
        %3968 = vmatprep.subr.mxu0 0.0
        %3969 = vmatpush2.msra.mxu0 %v3890
        %3970 = vmatprep.subr.mxu0 0.0
        %3971 = vmatpush2.msra.mxu0 %v3889
        %3972 = vmatprep.subr.mxu0 0.0
        %3973 = vmatpush2.msra.mxu0 %v3888
        %3974 = vmatprep.subr.mxu0 0.0
        %3975 = vmatpush2.msra.mxu0 %v3887
        %3976 = vmatprep.mubr.f32.mxu0 %v3908
        %3977 = vmatmul.mubr.f32.gmra.mxu0 %v3898
        %v3978 = vpop.f32.mrf.mxu0
        %v3979 = vadd.f32 0.0, %v3978
        %v3980 = vpop.f32.mrf.mxu0
        %3981 = vmatprep.mubr.f32.mxu0 %v3910
        %3982 = vmatmul.mubr.f32.gmra.mxu0 %v3903
        %v3983 = vpop.f32.mrf.mxu0
        %v3984 = vadd.f32 0.0, %v3983
        %v3985 = vpop.f32.mrf.mxu0
        %3986 = vdwg.mxu0
        %v3987 = vadd.f32 %v3862, %v3979
        %v3988 = vadd.f32 %v3867, %v3984
        %s3989 = scalar_lea.vmem [#allocation10], 600
        %v3990 = vld [vmem:[%s3989] sm:$0xff]
        %v3991 = vld [vmem:[%s3989 + $0x8] sm:$0xff]
        %v3992 = vld [vmem:[%s3989 + $0x10] sm:$0xff]
        %v3993 = vld [vmem:[%s3989 + $0x18] sm:$0xff]
        %v3994 = vld [vmem:[%s3989 + $0x20] sm:$0xff]
        %v3995 = vld [vmem:[%s3989 + $0x28] sm:$0xff]
        %v3996 = vld [vmem:[%s3989 + $0x30] sm:$0xff]
        %v3997 = vld [vmem:[%s3989 + $0x38] sm:$0xff]
        %v3998 = vld [vmem:[%s3989 + $0x40] sm:$0xff]
        %v3999 = vld [vmem:[%s3989 + $0x48] sm:$0xff]
        %v4000 = vld [vmem:[%s3989 + $0x50] sm:$0xff]
        %v4001 = vld [vmem:[%s3989 + $0x58] sm:$0xff]
        %v4002 = vld [vmem:[%s3989 + $0x60] sm:$0xff]
        %v4003 = vld [vmem:[%s3989 + $0x68] sm:$0xff]
        %v4004 = vld [vmem:[%s3989 + $0x70] sm:$0xff]
        %v4005 = vld [vmem:[%s3989 + $0x78] sm:$0xff]
        %v4006 = vld [vmem:[%s3989 + $0x80] sm:$0xff]
        %v4007 = vld [vmem:[%s3989 + $0x88] sm:$0xff]
        %v4008 = vld [vmem:[%s3989 + $0x90] sm:$0xff]
        %v4009 = vld [vmem:[%s3989 + $0x98] sm:$0xff]
        %v4010 = vld [vmem:[%s3989 + $0xa0] sm:$0xff]
        %v4011 = vld [vmem:[%s3989 + $0xa8] sm:$0xff]
        %v4012 = vld [vmem:[%s3989 + $0xb0] sm:$0xff]
        %v4013 = vld [vmem:[%s3989 + $0xb8] sm:$0xff]
        %v4014 = vld [vmem:[%s3989 + $0xc0] sm:$0xff]
        %v4015 = vrot.slane %v3636, 3
        %v4016 = vrot.slane %v3638, 3
        %v4017 = vsel %vm1031, %v4015, %v4016
        %v4018 = vrot.slane %v3637, 3
        %v4019 = vrot.slane %v3639, 3
        %v4020 = vsel %vm1031, %v4018, %v4019
        %v4021 = vrot.slane %v3640, 3
        %v4022 = vsel %vm1031, %v4016, %v4021
        %v4023 = vrot.slane %v3641, 3
        %v4024 = vsel %vm1031, %v4019, %v4023
        %v4027 = vsel %vm3711, %v4020, 0
        %v4029 = vsel %vm3711, %v4024, 0
        %4031 = vmatprep.subr.mxu0 0.0
        %4032 = vmatpush1.msra.mxu0 %v4005
        %4033 = vmatprep.subr.mxu0 0.0
        %4034 = vmatpush1.msra.mxu0 %v4004
        %4035 = vmatprep.subr.mxu0 0.0
        %4036 = vmatpush1.msra.mxu0 %v4003
        %4037 = vmatprep.subr.mxu0 0.0
        %4038 = vmatpush1.msra.mxu0 %v4002
        %4039 = vmatprep.subr.mxu0 0.0
        %4040 = vmatpush1.msra.mxu0 %v4001
        %4041 = vmatprep.subr.mxu0 0.0
        %4042 = vmatpush1.msra.mxu0 %v4000
        %4043 = vmatprep.subr.mxu0 0.0
        %4044 = vmatpush1.msra.mxu0 %v3999
        %4045 = vmatprep.subr.mxu0 0.0
        %4046 = vmatpush1.msra.mxu0 %v3998
        %4047 = vmatprep.subr.mxu0 0.0
        %4048 = vmatpush1.msra.mxu0 %v3997
        %4049 = vmatprep.subr.mxu0 0.0
        %4050 = vmatpush1.msra.mxu0 %v3996
        %4051 = vmatprep.subr.mxu0 0.0
        %4052 = vmatpush1.msra.mxu0 %v3995
        %4053 = vmatprep.subr.mxu0 0.0
        %4054 = vmatpush1.msra.mxu0 %v3994
        %4055 = vmatprep.subr.mxu0 0.0
        %4056 = vmatpush1.msra.mxu0 %v3993
        %4057 = vmatprep.subr.mxu0 0.0
        %4058 = vmatpush1.msra.mxu0 %v3992
        %4059 = vmatprep.subr.mxu0 0.0
        %4060 = vmatpush1.msra.mxu0 %v3991
        %4061 = vmatprep.subr.mxu0 0.0
        %4062 = vmatpush1.msra.mxu0 %v3990
        %4063 = vmatprep.subr.mxu0 0.0
        %4064 = vmatpush2.msra.mxu0 0.0
        %4065 = vmatprep.subr.mxu0 0.0
        %4066 = vmatpush2.msra.mxu0 0.0
        %4067 = vmatprep.subr.mxu0 0.0
        %4068 = vmatpush2.msra.mxu0 0.0
        %4069 = vmatprep.subr.mxu0 0.0
        %4070 = vmatpush2.msra.mxu0 0.0
        %4071 = vmatprep.subr.mxu0 0.0
        %4072 = vmatpush2.msra.mxu0 0.0
        %4073 = vmatprep.subr.mxu0 0.0
        %4074 = vmatpush2.msra.mxu0 0.0
        %4075 = vmatprep.subr.mxu0 0.0
        %4076 = vmatpush2.msra.mxu0 0.0
        %4077 = vmatprep.subr.mxu0 0.0
        %4078 = vmatpush2.msra.mxu0 %v4014
        %4079 = vmatprep.subr.mxu0 0.0
        %4080 = vmatpush2.msra.mxu0 %v4013
        %4081 = vmatprep.subr.mxu0 0.0
        %4082 = vmatpush2.msra.mxu0 %v4012
        %4083 = vmatprep.subr.mxu0 0.0
        %4084 = vmatpush2.msra.mxu0 %v4011
        %4085 = vmatprep.subr.mxu0 0.0
        %4086 = vmatpush2.msra.mxu0 %v4010
        %4087 = vmatprep.subr.mxu0 0.0
        %4088 = vmatpush2.msra.mxu0 %v4009
        %4089 = vmatprep.subr.mxu0 0.0
        %4090 = vmatpush2.msra.mxu0 %v4008
        %4091 = vmatprep.subr.mxu0 0.0
        %4092 = vmatpush2.msra.mxu0 %v4007
        %4093 = vmatprep.subr.mxu0 0.0
        %4094 = vmatpush2.msra.mxu0 %v4006
        %4095 = vmatprep.mubr.f32.mxu0 %v4027
        %4096 = vmatmul.mubr.f32.gmra.mxu0 %v4017
        %v4097 = vpop.f32.mrf.mxu0
        %v4098 = vadd.f32 0.0, %v4097
        %v4099 = vpop.f32.mrf.mxu0
        %4100 = vmatprep.mubr.f32.mxu0 %v4029
        %4101 = vmatmul.mubr.f32.gmra.mxu0 %v4022
        %v4102 = vpop.f32.mrf.mxu0
        %v4103 = vadd.f32 0.0, %v4102
        %v4104 = vpop.f32.mrf.mxu0
        %4105 = vdwg.mxu0
        %v4106 = vadd.f32 %v3987, %v4098
        %v4107 = vadd.f32 %v3988, %v4103
        %s4108 = scalar_lea.vmem [#allocation10], 800
        %v4109 = vld [vmem:[%s4108] sm:$0xff]
        %v4110 = vld [vmem:[%s4108 + $0x8] sm:$0xff]
        %v4111 = vld [vmem:[%s4108 + $0x10] sm:$0xff]
        %v4112 = vld [vmem:[%s4108 + $0x18] sm:$0xff]
        %v4113 = vld [vmem:[%s4108 + $0x20] sm:$0xff]
        %v4114 = vld [vmem:[%s4108 + $0x28] sm:$0xff]
        %v4115 = vld [vmem:[%s4108 + $0x30] sm:$0xff]
        %v4116 = vld [vmem:[%s4108 + $0x38] sm:$0xff]
        %v4117 = vld [vmem:[%s4108 + $0x40] sm:$0xff]
        %v4118 = vld [vmem:[%s4108 + $0x48] sm:$0xff]
        %v4119 = vld [vmem:[%s4108 + $0x50] sm:$0xff]
        %v4120 = vld [vmem:[%s4108 + $0x58] sm:$0xff]
        %v4121 = vld [vmem:[%s4108 + $0x60] sm:$0xff]
        %v4122 = vld [vmem:[%s4108 + $0x68] sm:$0xff]
        %v4123 = vld [vmem:[%s4108 + $0x70] sm:$0xff]
        %v4124 = vld [vmem:[%s4108 + $0x78] sm:$0xff]
        %v4125 = vld [vmem:[%s4108 + $0x80] sm:$0xff]
        %v4126 = vld [vmem:[%s4108 + $0x88] sm:$0xff]
        %v4127 = vld [vmem:[%s4108 + $0x90] sm:$0xff]
        %v4128 = vld [vmem:[%s4108 + $0x98] sm:$0xff]
        %v4129 = vld [vmem:[%s4108 + $0xa0] sm:$0xff]
        %v4130 = vld [vmem:[%s4108 + $0xa8] sm:$0xff]
        %v4131 = vld [vmem:[%s4108 + $0xb0] sm:$0xff]
        %v4132 = vld [vmem:[%s4108 + $0xb8] sm:$0xff]
        %v4133 = vld [vmem:[%s4108 + $0xc0] sm:$0xff]
        %v4134 = vrot.slane %v3636, 4
        %v4135 = vrot.slane %v3638, 4
        %v4136 = vsel %vm1209, %v4134, %v4135
        %v4137 = vrot.slane %v3637, 4
        %v4138 = vrot.slane %v3639, 4
        %v4139 = vsel %vm1209, %v4137, %v4138
        %v4140 = vrot.slane %v3640, 4
        %v4141 = vsel %vm1209, %v4135, %v4140
        %v4142 = vrot.slane %v3641, 4
        %v4143 = vsel %vm1209, %v4138, %v4142
        %v4146 = vsel %vm3711, %v4139, 0
        %v4148 = vsel %vm3711, %v4143, 0
        %4150 = vmatprep.subr.mxu0 0.0
        %4151 = vmatpush1.msra.mxu0 %v4124
        %4152 = vmatprep.subr.mxu0 0.0
        %4153 = vmatpush1.msra.mxu0 %v4123
        %4154 = vmatprep.subr.mxu0 0.0
        %4155 = vmatpush1.msra.mxu0 %v4122
        %4156 = vmatprep.subr.mxu0 0.0
        %4157 = vmatpush1.msra.mxu0 %v4121
        %4158 = vmatprep.subr.mxu0 0.0
        %4159 = vmatpush1.msra.mxu0 %v4120
        %4160 = vmatprep.subr.mxu0 0.0
        %4161 = vmatpush1.msra.mxu0 %v4119
        %4162 = vmatprep.subr.mxu0 0.0
        %4163 = vmatpush1.msra.mxu0 %v4118
        %4164 = vmatprep.subr.mxu0 0.0
        %4165 = vmatpush1.msra.mxu0 %v4117
        %4166 = vmatprep.subr.mxu0 0.0
        %4167 = vmatpush1.msra.mxu0 %v4116
        %4168 = vmatprep.subr.mxu0 0.0
        %4169 = vmatpush1.msra.mxu0 %v4115
        %4170 = vmatprep.subr.mxu0 0.0
        %4171 = vmatpush1.msra.mxu0 %v4114
        %4172 = vmatprep.subr.mxu0 0.0
        %4173 = vmatpush1.msra.mxu0 %v4113
        %4174 = vmatprep.subr.mxu0 0.0
        %4175 = vmatpush1.msra.mxu0 %v4112
        %4176 = vmatprep.subr.mxu0 0.0
        %4177 = vmatpush1.msra.mxu0 %v4111
        %4178 = vmatprep.subr.mxu0 0.0
        %4179 = vmatpush1.msra.mxu0 %v4110
        %4180 = vmatprep.subr.mxu0 0.0
        %4181 = vmatpush1.msra.mxu0 %v4109
        %4182 = vmatprep.subr.mxu0 0.0
        %4183 = vmatpush2.msra.mxu0 0.0
        %4184 = vmatprep.subr.mxu0 0.0
        %4185 = vmatpush2.msra.mxu0 0.0
        %4186 = vmatprep.subr.mxu0 0.0
        %4187 = vmatpush2.msra.mxu0 0.0
        %4188 = vmatprep.subr.mxu0 0.0
        %4189 = vmatpush2.msra.mxu0 0.0
        %4190 = vmatprep.subr.mxu0 0.0
        %4191 = vmatpush2.msra.mxu0 0.0
        %4192 = vmatprep.subr.mxu0 0.0
        %4193 = vmatpush2.msra.mxu0 0.0
        %4194 = vmatprep.subr.mxu0 0.0
        %4195 = vmatpush2.msra.mxu0 0.0
        %4196 = vmatprep.subr.mxu0 0.0
        %4197 = vmatpush2.msra.mxu0 %v4133
        %4198 = vmatprep.subr.mxu0 0.0
        %4199 = vmatpush2.msra.mxu0 %v4132
        %4200 = vmatprep.subr.mxu0 0.0
        %4201 = vmatpush2.msra.mxu0 %v4131
        %4202 = vmatprep.subr.mxu0 0.0
        %4203 = vmatpush2.msra.mxu0 %v4130
        %4204 = vmatprep.subr.mxu0 0.0
        %4205 = vmatpush2.msra.mxu0 %v4129
        %4206 = vmatprep.subr.mxu0 0.0
        %4207 = vmatpush2.msra.mxu0 %v4128
        %4208 = vmatprep.subr.mxu0 0.0
        %4209 = vmatpush2.msra.mxu0 %v4127
        %4210 = vmatprep.subr.mxu0 0.0
        %4211 = vmatpush2.msra.mxu0 %v4126
        %4212 = vmatprep.subr.mxu0 0.0
        %4213 = vmatpush2.msra.mxu0 %v4125
        %4214 = vmatprep.mubr.f32.mxu0 %v4146
        %4215 = vmatmul.mubr.f32.gmra.mxu0 %v4136
        %v4216 = vpop.f32.mrf.mxu0
        %v4217 = vadd.f32 0.0, %v4216
        %v4218 = vpop.f32.mrf.mxu0
        %4219 = vmatprep.mubr.f32.mxu0 %v4148
        %4220 = vmatmul.mubr.f32.gmra.mxu0 %v4141
        %v4221 = vpop.f32.mrf.mxu0
        %v4222 = vadd.f32 0.0, %v4221
        %v4223 = vpop.f32.mrf.mxu0
        %4224 = vdwg.mxu0
        %v4225 = vadd.f32 %v4106, %v4217
        %v4226 = vadd.f32 %v4107, %v4222
        %s4227 = scalar_lea.vmem [#allocation10], 1000
        %v4228 = vld [vmem:[%s4227] sm:$0xff]
        %v4229 = vld [vmem:[%s4227 + $0x8] sm:$0xff]
        %v4230 = vld [vmem:[%s4227 + $0x10] sm:$0xff]
        %v4231 = vld [vmem:[%s4227 + $0x18] sm:$0xff]
        %v4232 = vld [vmem:[%s4227 + $0x20] sm:$0xff]
        %v4233 = vld [vmem:[%s4227 + $0x28] sm:$0xff]
        %v4234 = vld [vmem:[%s4227 + $0x30] sm:$0xff]
        %v4235 = vld [vmem:[%s4227 + $0x38] sm:$0xff]
        %v4236 = vld [vmem:[%s4227 + $0x40] sm:$0xff]
        %v4237 = vld [vmem:[%s4227 + $0x48] sm:$0xff]
        %v4238 = vld [vmem:[%s4227 + $0x50] sm:$0xff]
        %v4239 = vld [vmem:[%s4227 + $0x58] sm:$0xff]
        %v4240 = vld [vmem:[%s4227 + $0x60] sm:$0xff]
        %v4241 = vld [vmem:[%s4227 + $0x68] sm:$0xff]
        %v4242 = vld [vmem:[%s4227 + $0x70] sm:$0xff]
        %v4243 = vld [vmem:[%s4227 + $0x78] sm:$0xff]
        %v4244 = vld [vmem:[%s4227 + $0x80] sm:$0xff]
        %v4245 = vld [vmem:[%s4227 + $0x88] sm:$0xff]
        %v4246 = vld [vmem:[%s4227 + $0x90] sm:$0xff]
        %v4247 = vld [vmem:[%s4227 + $0x98] sm:$0xff]
        %v4248 = vld [vmem:[%s4227 + $0xa0] sm:$0xff]
        %v4249 = vld [vmem:[%s4227 + $0xa8] sm:$0xff]
        %v4250 = vld [vmem:[%s4227 + $0xb0] sm:$0xff]
        %v4251 = vld [vmem:[%s4227 + $0xb8] sm:$0xff]
        %v4252 = vld [vmem:[%s4227 + $0xc0] sm:$0xff]
        %s4253 = scalar_lea.vmem [#allocation10], 1200
        %v4254 = vld [vmem:[%s4253] sm:$0xff]
        %v4255 = vld [vmem:[%s4253 + $0x8] sm:$0xff]
        %v4256 = vld [vmem:[%s4253 + $0x10] sm:$0xff]
        %v4257 = vld [vmem:[%s4253 + $0x18] sm:$0xff]
        %v4258 = vld [vmem:[%s4253 + $0x20] sm:$0xff]
        %v4259 = vld [vmem:[%s4253 + $0x28] sm:$0xff]
        %v4260 = vld [vmem:[%s4253 + $0x30] sm:$0xff]
        %v4261 = vld [vmem:[%s4253 + $0x38] sm:$0xff]
        %v4262 = vld [vmem:[%s4253 + $0x40] sm:$0xff]
        %v4263 = vld [vmem:[%s4253 + $0x48] sm:$0xff]
        %v4264 = vld [vmem:[%s4253 + $0x50] sm:$0xff]
        %v4265 = vld [vmem:[%s4253 + $0x58] sm:$0xff]
        %v4266 = vld [vmem:[%s4253 + $0x60] sm:$0xff]
        %v4267 = vld [vmem:[%s4253 + $0x68] sm:$0xff]
        %v4268 = vld [vmem:[%s4253 + $0x70] sm:$0xff]
        %v4269 = vld [vmem:[%s4253 + $0x78] sm:$0xff]
        %v4270 = vld [vmem:[%s4253 + $0x80] sm:$0xff]
        %v4271 = vld [vmem:[%s4253 + $0x88] sm:$0xff]
        %v4272 = vld [vmem:[%s4253 + $0x90] sm:$0xff]
        %v4273 = vld [vmem:[%s4253 + $0x98] sm:$0xff]
        %v4274 = vld [vmem:[%s4253 + $0xa0] sm:$0xff]
        %v4275 = vld [vmem:[%s4253 + $0xa8] sm:$0xff]
        %v4276 = vld [vmem:[%s4253 + $0xb0] sm:$0xff]
        %v4277 = vld [vmem:[%s4253 + $0xb8] sm:$0xff]
        %v4278 = vld [vmem:[%s4253 + $0xc0] sm:$0xff]
        %4279 = vmatprep.subr.mxu0 0.0
        %4280 = vmatpush1.msra.mxu0 %v4269
        %4281 = vmatprep.subr.mxu0 0.0
        %4282 = vmatpush1.msra.mxu0 %v4268
        %4283 = vmatprep.subr.mxu0 0.0
        %4284 = vmatpush1.msra.mxu0 %v4267
        %4285 = vmatprep.subr.mxu0 0.0
        %4286 = vmatpush1.msra.mxu0 %v4266
        %4287 = vmatprep.subr.mxu0 0.0
        %4288 = vmatpush1.msra.mxu0 %v4265
        %4289 = vmatprep.subr.mxu0 0.0
        %4290 = vmatpush1.msra.mxu0 %v4264
        %4291 = vmatprep.subr.mxu0 0.0
        %4292 = vmatpush1.msra.mxu0 %v4263
        %4293 = vmatprep.subr.mxu0 0.0
        %4294 = vmatpush1.msra.mxu0 %v4262
        %4295 = vmatprep.subr.mxu0 0.0
        %4296 = vmatpush1.msra.mxu0 %v4261
        %4297 = vmatprep.subr.mxu0 0.0
        %4298 = vmatpush1.msra.mxu0 %v4260
        %4299 = vmatprep.subr.mxu0 0.0
        %4300 = vmatpush1.msra.mxu0 %v4259
        %4301 = vmatprep.subr.mxu0 0.0
        %4302 = vmatpush1.msra.mxu0 %v4258
        %4303 = vmatprep.subr.mxu0 0.0
        %4304 = vmatpush1.msra.mxu0 %v4257
        %4305 = vmatprep.subr.mxu0 0.0
        %4306 = vmatpush1.msra.mxu0 %v4256
        %4307 = vmatprep.subr.mxu0 0.0
        %4308 = vmatpush1.msra.mxu0 %v4255
        %4309 = vmatprep.subr.mxu0 0.0
        %4310 = vmatpush1.msra.mxu0 %v4254
        %4311 = vmatprep.subr.mxu0 0.0
        %4312 = vmatpush2.msra.mxu0 0.0
        %4313 = vmatprep.subr.mxu0 0.0
        %4314 = vmatpush2.msra.mxu0 0.0
        %4315 = vmatprep.subr.mxu0 0.0
        %4316 = vmatpush2.msra.mxu0 0.0
        %4317 = vmatprep.subr.mxu0 0.0
        %4318 = vmatpush2.msra.mxu0 0.0
        %4319 = vmatprep.subr.mxu0 0.0
        %4320 = vmatpush2.msra.mxu0 0.0
        %4321 = vmatprep.subr.mxu0 0.0
        %4322 = vmatpush2.msra.mxu0 0.0
        %4323 = vmatprep.subr.mxu0 0.0
        %4324 = vmatpush2.msra.mxu0 0.0
        %4325 = vmatprep.subr.mxu0 0.0
        %4326 = vmatpush2.msra.mxu0 %v4278
        %4327 = vmatprep.subr.mxu0 0.0
        %4328 = vmatpush2.msra.mxu0 %v4277
        %4329 = vmatprep.subr.mxu0 0.0
        %4330 = vmatpush2.msra.mxu0 %v4276
        %4331 = vmatprep.subr.mxu0 0.0
        %4332 = vmatpush2.msra.mxu0 %v4275
        %4333 = vmatprep.subr.mxu0 0.0
        %4334 = vmatpush2.msra.mxu0 %v4274
        %4335 = vmatprep.subr.mxu0 0.0
        %4336 = vmatpush2.msra.mxu0 %v4273
        %4337 = vmatprep.subr.mxu0 0.0
        %4338 = vmatpush2.msra.mxu0 %v4272
        %4339 = vmatprep.subr.mxu0 0.0
        %4340 = vmatpush2.msra.mxu0 %v4271
        %4341 = vmatprep.subr.mxu0 0.0
        %4342 = vmatpush2.msra.mxu0 %v4270
        %4343 = vmatprep.mubr.f32.mxu0 %v3712
        %4344 = vmatmul.mubr.f32.gmra.mxu0 %v3701
        %v4345 = vpop.f32.mrf.mxu0
        %v4346 = vadd.f32 0.0, %v4345
        %v4347 = vpop.f32.mrf.mxu0
        %4348 = vmatprep.mubr.f32.mxu0 %v3714
        %4349 = vmatmul.mubr.f32.gmra.mxu0 %v3706
        %v4350 = vpop.f32.mrf.mxu0
        %v4351 = vadd.f32 0.0, %v4350
        %v4352 = vpop.f32.mrf.mxu0
        %4353 = vdwg.mxu0
        %4354 = vmatprep.subr.mxu0 0.0
        %4355 = vmatpush1.msra.mxu0 %v4243
        %4356 = vmatprep.subr.mxu0 0.0
        %4357 = vmatpush1.msra.mxu0 %v4242
        %4358 = vmatprep.subr.mxu0 0.0
        %4359 = vmatpush1.msra.mxu0 %v4241
        %4360 = vmatprep.subr.mxu0 0.0
        %4361 = vmatpush1.msra.mxu0 %v4240
        %4362 = vmatprep.subr.mxu0 0.0
        %4363 = vmatpush1.msra.mxu0 %v4239
        %4364 = vmatprep.subr.mxu0 0.0
        %4365 = vmatpush1.msra.mxu0 %v4238
        %4366 = vmatprep.subr.mxu0 0.0
        %4367 = vmatpush1.msra.mxu0 %v4237
        %4368 = vmatprep.subr.mxu0 0.0
        %4369 = vmatpush1.msra.mxu0 %v4236
        %4370 = vmatprep.subr.mxu0 0.0
        %4371 = vmatpush1.msra.mxu0 %v4235
        %4372 = vmatprep.subr.mxu0 0.0
        %4373 = vmatpush1.msra.mxu0 %v4234
        %4374 = vmatprep.subr.mxu0 0.0
        %4375 = vmatpush1.msra.mxu0 %v4233
        %4376 = vmatprep.subr.mxu0 0.0
        %4377 = vmatpush1.msra.mxu0 %v4232
        %4378 = vmatprep.subr.mxu0 0.0
        %4379 = vmatpush1.msra.mxu0 %v4231
        %4380 = vmatprep.subr.mxu0 0.0
        %4381 = vmatpush1.msra.mxu0 %v4230
        %4382 = vmatprep.subr.mxu0 0.0
        %4383 = vmatpush1.msra.mxu0 %v4229
        %4384 = vmatprep.subr.mxu0 0.0
        %4385 = vmatpush1.msra.mxu0 %v4228
        %4386 = vmatprep.subr.mxu0 0.0
        %4387 = vmatpush2.msra.mxu0 0.0
        %4388 = vmatprep.subr.mxu0 0.0
        %4389 = vmatpush2.msra.mxu0 0.0
        %4390 = vmatprep.subr.mxu0 0.0
        %4391 = vmatpush2.msra.mxu0 0.0
        %4392 = vmatprep.subr.mxu0 0.0
        %4393 = vmatpush2.msra.mxu0 0.0
        %4394 = vmatprep.subr.mxu0 0.0
        %4395 = vmatpush2.msra.mxu0 0.0
        %4396 = vmatprep.subr.mxu0 0.0
        %4397 = vmatpush2.msra.mxu0 0.0
        %4398 = vmatprep.subr.mxu0 0.0
        %4399 = vmatpush2.msra.mxu0 0.0
        %4400 = vmatprep.subr.mxu0 0.0
        %4401 = vmatpush2.msra.mxu0 %v4252
        %4402 = vmatprep.subr.mxu0 0.0
        %4403 = vmatpush2.msra.mxu0 %v4251
        %4404 = vmatprep.subr.mxu0 0.0
        %4405 = vmatpush2.msra.mxu0 %v4250
        %4406 = vmatprep.subr.mxu0 0.0
        %4407 = vmatpush2.msra.mxu0 %v4249
        %4408 = vmatprep.subr.mxu0 0.0
        %4409 = vmatpush2.msra.mxu0 %v4248
        %4410 = vmatprep.subr.mxu0 0.0
        %4411 = vmatpush2.msra.mxu0 %v4247
        %4412 = vmatprep.subr.mxu0 0.0
        %4413 = vmatpush2.msra.mxu0 %v4246
        %4414 = vmatprep.subr.mxu0 0.0
        %4415 = vmatpush2.msra.mxu0 %v4245
        %4416 = vmatprep.subr.mxu0 0.0
        %4417 = vmatpush2.msra.mxu0 %v4244
        %4418 = vmatprep.mubr.f32.mxu0 %v3791
        %4419 = vmatmul.mubr.f32.gmra.mxu0 %v3636
        %v4420 = vpop.f32.mrf.mxu0
        %v4421 = vadd.f32 %v4346, %v4420
        %v4422 = vpop.f32.mrf.mxu0
        %4423 = vmatprep.mubr.f32.mxu0 %v3793
        %4424 = vmatmul.mubr.f32.gmra.mxu0 %v3638
        %v4425 = vpop.f32.mrf.mxu0
        %v4426 = vadd.f32 %v4351, %v4425
        %v4427 = vpop.f32.mrf.mxu0
        %4428 = vdwg.mxu0
        %s4429 = scalar_lea.vmem [#allocation10], 1400
        %v4430 = vld [vmem:[%s4429] sm:$0xff]
        %v4431 = vld [vmem:[%s4429 + $0x8] sm:$0xff]
        %v4432 = vld [vmem:[%s4429 + $0x10] sm:$0xff]
        %v4433 = vld [vmem:[%s4429 + $0x18] sm:$0xff]
        %v4434 = vld [vmem:[%s4429 + $0x20] sm:$0xff]
        %v4435 = vld [vmem:[%s4429 + $0x28] sm:$0xff]
        %v4436 = vld [vmem:[%s4429 + $0x30] sm:$0xff]
        %v4437 = vld [vmem:[%s4429 + $0x38] sm:$0xff]
        %v4438 = vld [vmem:[%s4429 + $0x40] sm:$0xff]
        %v4439 = vld [vmem:[%s4429 + $0x48] sm:$0xff]
        %v4440 = vld [vmem:[%s4429 + $0x50] sm:$0xff]
        %v4441 = vld [vmem:[%s4429 + $0x58] sm:$0xff]
        %v4442 = vld [vmem:[%s4429 + $0x60] sm:$0xff]
        %v4443 = vld [vmem:[%s4429 + $0x68] sm:$0xff]
        %v4444 = vld [vmem:[%s4429 + $0x70] sm:$0xff]
        %v4445 = vld [vmem:[%s4429 + $0x78] sm:$0xff]
        %v4446 = vld [vmem:[%s4429 + $0x80] sm:$0xff]
        %v4447 = vld [vmem:[%s4429 + $0x88] sm:$0xff]
        %v4448 = vld [vmem:[%s4429 + $0x90] sm:$0xff]
        %v4449 = vld [vmem:[%s4429 + $0x98] sm:$0xff]
        %v4450 = vld [vmem:[%s4429 + $0xa0] sm:$0xff]
        %v4451 = vld [vmem:[%s4429 + $0xa8] sm:$0xff]
        %v4452 = vld [vmem:[%s4429 + $0xb0] sm:$0xff]
        %v4453 = vld [vmem:[%s4429 + $0xb8] sm:$0xff]
        %v4454 = vld [vmem:[%s4429 + $0xc0] sm:$0xff]
        %4455 = vmatprep.subr.mxu0 0.0
        %4456 = vmatpush1.msra.mxu0 %v4445
        %4457 = vmatprep.subr.mxu0 0.0
        %4458 = vmatpush1.msra.mxu0 %v4444
        %4459 = vmatprep.subr.mxu0 0.0
        %4460 = vmatpush1.msra.mxu0 %v4443
        %4461 = vmatprep.subr.mxu0 0.0
        %4462 = vmatpush1.msra.mxu0 %v4442
        %4463 = vmatprep.subr.mxu0 0.0
        %4464 = vmatpush1.msra.mxu0 %v4441
        %4465 = vmatprep.subr.mxu0 0.0
        %4466 = vmatpush1.msra.mxu0 %v4440
        %4467 = vmatprep.subr.mxu0 0.0
        %4468 = vmatpush1.msra.mxu0 %v4439
        %4469 = vmatprep.subr.mxu0 0.0
        %4470 = vmatpush1.msra.mxu0 %v4438
        %4471 = vmatprep.subr.mxu0 0.0
        %4472 = vmatpush1.msra.mxu0 %v4437
        %4473 = vmatprep.subr.mxu0 0.0
        %4474 = vmatpush1.msra.mxu0 %v4436
        %4475 = vmatprep.subr.mxu0 0.0
        %4476 = vmatpush1.msra.mxu0 %v4435
        %4477 = vmatprep.subr.mxu0 0.0
        %4478 = vmatpush1.msra.mxu0 %v4434
        %4479 = vmatprep.subr.mxu0 0.0
        %4480 = vmatpush1.msra.mxu0 %v4433
        %4481 = vmatprep.subr.mxu0 0.0
        %4482 = vmatpush1.msra.mxu0 %v4432
        %4483 = vmatprep.subr.mxu0 0.0
        %4484 = vmatpush1.msra.mxu0 %v4431
        %4485 = vmatprep.subr.mxu0 0.0
        %4486 = vmatpush1.msra.mxu0 %v4430
        %4487 = vmatprep.subr.mxu0 0.0
        %4488 = vmatpush2.msra.mxu0 0.0
        %4489 = vmatprep.subr.mxu0 0.0
        %4490 = vmatpush2.msra.mxu0 0.0
        %4491 = vmatprep.subr.mxu0 0.0
        %4492 = vmatpush2.msra.mxu0 0.0
        %4493 = vmatprep.subr.mxu0 0.0
        %4494 = vmatpush2.msra.mxu0 0.0
        %4495 = vmatprep.subr.mxu0 0.0
        %4496 = vmatpush2.msra.mxu0 0.0
        %4497 = vmatprep.subr.mxu0 0.0
        %4498 = vmatpush2.msra.mxu0 0.0
        %4499 = vmatprep.subr.mxu0 0.0
        %4500 = vmatpush2.msra.mxu0 0.0
        %4501 = vmatprep.subr.mxu0 0.0
        %4502 = vmatpush2.msra.mxu0 %v4454
        %4503 = vmatprep.subr.mxu0 0.0
        %4504 = vmatpush2.msra.mxu0 %v4453
        %4505 = vmatprep.subr.mxu0 0.0
        %4506 = vmatpush2.msra.mxu0 %v4452
        %4507 = vmatprep.subr.mxu0 0.0
        %4508 = vmatpush2.msra.mxu0 %v4451
        %4509 = vmatprep.subr.mxu0 0.0
        %4510 = vmatpush2.msra.mxu0 %v4450
        %4511 = vmatprep.subr.mxu0 0.0
        %4512 = vmatpush2.msra.mxu0 %v4449
        %4513 = vmatprep.subr.mxu0 0.0
        %4514 = vmatpush2.msra.mxu0 %v4448
        %4515 = vmatprep.subr.mxu0 0.0
        %4516 = vmatpush2.msra.mxu0 %v4447
        %4517 = vmatprep.subr.mxu0 0.0
        %4518 = vmatpush2.msra.mxu0 %v4446
        %4519 = vmatprep.mubr.f32.mxu0 %v3908
        %4520 = vmatmul.mubr.f32.gmra.mxu0 %v3898
        %v4521 = vpop.f32.mrf.mxu0
        %v4522 = vadd.f32 0.0, %v4521
        %v4523 = vpop.f32.mrf.mxu0
        %4524 = vmatprep.mubr.f32.mxu0 %v3910
        %4525 = vmatmul.mubr.f32.gmra.mxu0 %v3903
        %v4526 = vpop.f32.mrf.mxu0
        %v4527 = vadd.f32 0.0, %v4526
        %v4528 = vpop.f32.mrf.mxu0
        %4529 = vdwg.mxu0
        %v4530 = vadd.f32 %v4421, %v4522
        %v4531 = vadd.f32 %v4426, %v4527
        %s4532 = scalar_lea.vmem [#allocation10], 1600
        %v4533 = vld [vmem:[%s4532] sm:$0xff]
        %v4534 = vld [vmem:[%s4532 + $0x8] sm:$0xff]
        %v4535 = vld [vmem:[%s4532 + $0x10] sm:$0xff]
        %v4536 = vld [vmem:[%s4532 + $0x18] sm:$0xff]
        %v4537 = vld [vmem:[%s4532 + $0x20] sm:$0xff]
        %v4538 = vld [vmem:[%s4532 + $0x28] sm:$0xff]
        %v4539 = vld [vmem:[%s4532 + $0x30] sm:$0xff]
        %v4540 = vld [vmem:[%s4532 + $0x38] sm:$0xff]
        %v4541 = vld [vmem:[%s4532 + $0x40] sm:$0xff]
        %v4542 = vld [vmem:[%s4532 + $0x48] sm:$0xff]
        %v4543 = vld [vmem:[%s4532 + $0x50] sm:$0xff]
        %v4544 = vld [vmem:[%s4532 + $0x58] sm:$0xff]
        %v4545 = vld [vmem:[%s4532 + $0x60] sm:$0xff]
        %v4546 = vld [vmem:[%s4532 + $0x68] sm:$0xff]
        %v4547 = vld [vmem:[%s4532 + $0x70] sm:$0xff]
        %v4548 = vld [vmem:[%s4532 + $0x78] sm:$0xff]
        %v4549 = vld [vmem:[%s4532 + $0x80] sm:$0xff]
        %v4550 = vld [vmem:[%s4532 + $0x88] sm:$0xff]
        %v4551 = vld [vmem:[%s4532 + $0x90] sm:$0xff]
        %v4552 = vld [vmem:[%s4532 + $0x98] sm:$0xff]
        %v4553 = vld [vmem:[%s4532 + $0xa0] sm:$0xff]
        %v4554 = vld [vmem:[%s4532 + $0xa8] sm:$0xff]
        %v4555 = vld [vmem:[%s4532 + $0xb0] sm:$0xff]
        %v4556 = vld [vmem:[%s4532 + $0xb8] sm:$0xff]
        %v4557 = vld [vmem:[%s4532 + $0xc0] sm:$0xff]
        %4558 = vmatprep.subr.mxu0 0.0
        %4559 = vmatpush1.msra.mxu0 %v4548
        %4560 = vmatprep.subr.mxu0 0.0
        %4561 = vmatpush1.msra.mxu0 %v4547
        %4562 = vmatprep.subr.mxu0 0.0
        %4563 = vmatpush1.msra.mxu0 %v4546
        %4564 = vmatprep.subr.mxu0 0.0
        %4565 = vmatpush1.msra.mxu0 %v4545
        %4566 = vmatprep.subr.mxu0 0.0
        %4567 = vmatpush1.msra.mxu0 %v4544
        %4568 = vmatprep.subr.mxu0 0.0
        %4569 = vmatpush1.msra.mxu0 %v4543
        %4570 = vmatprep.subr.mxu0 0.0
        %4571 = vmatpush1.msra.mxu0 %v4542
        %4572 = vmatprep.subr.mxu0 0.0
        %4573 = vmatpush1.msra.mxu0 %v4541
        %4574 = vmatprep.subr.mxu0 0.0
        %4575 = vmatpush1.msra.mxu0 %v4540
        %4576 = vmatprep.subr.mxu0 0.0
        %4577 = vmatpush1.msra.mxu0 %v4539
        %4578 = vmatprep.subr.mxu0 0.0
        %4579 = vmatpush1.msra.mxu0 %v4538
        %4580 = vmatprep.subr.mxu0 0.0
        %4581 = vmatpush1.msra.mxu0 %v4537
        %4582 = vmatprep.subr.mxu0 0.0
        %4583 = vmatpush1.msra.mxu0 %v4536
        %4584 = vmatprep.subr.mxu0 0.0
        %4585 = vmatpush1.msra.mxu0 %v4535
        %4586 = vmatprep.subr.mxu0 0.0
        %4587 = vmatpush1.msra.mxu0 %v4534
        %4588 = vmatprep.subr.mxu0 0.0
        %4589 = vmatpush1.msra.mxu0 %v4533
        %4590 = vmatprep.subr.mxu0 0.0
        %4591 = vmatpush2.msra.mxu0 0.0
        %4592 = vmatprep.subr.mxu0 0.0
        %4593 = vmatpush2.msra.mxu0 0.0
        %4594 = vmatprep.subr.mxu0 0.0
        %4595 = vmatpush2.msra.mxu0 0.0
        %4596 = vmatprep.subr.mxu0 0.0
        %4597 = vmatpush2.msra.mxu0 0.0
        %4598 = vmatprep.subr.mxu0 0.0
        %4599 = vmatpush2.msra.mxu0 0.0
        %4600 = vmatprep.subr.mxu0 0.0
        %4601 = vmatpush2.msra.mxu0 0.0
        %4602 = vmatprep.subr.mxu0 0.0
        %4603 = vmatpush2.msra.mxu0 0.0
        %4604 = vmatprep.subr.mxu0 0.0
        %4605 = vmatpush2.msra.mxu0 %v4557
        %4606 = vmatprep.subr.mxu0 0.0
        %4607 = vmatpush2.msra.mxu0 %v4556
        %4608 = vmatprep.subr.mxu0 0.0
        %4609 = vmatpush2.msra.mxu0 %v4555
        %4610 = vmatprep.subr.mxu0 0.0
        %4611 = vmatpush2.msra.mxu0 %v4554
        %4612 = vmatprep.subr.mxu0 0.0
        %4613 = vmatpush2.msra.mxu0 %v4553
        %4614 = vmatprep.subr.mxu0 0.0
        %4615 = vmatpush2.msra.mxu0 %v4552
        %4616 = vmatprep.subr.mxu0 0.0
        %4617 = vmatpush2.msra.mxu0 %v4551
        %4618 = vmatprep.subr.mxu0 0.0
        %4619 = vmatpush2.msra.mxu0 %v4550
        %4620 = vmatprep.subr.mxu0 0.0
        %4621 = vmatpush2.msra.mxu0 %v4549
        %4622 = vmatprep.mubr.f32.mxu0 %v4027
        %4623 = vmatmul.mubr.f32.gmra.mxu0 %v4017
        %v4624 = vpop.f32.mrf.mxu0
        %v4625 = vadd.f32 0.0, %v4624
        %v4626 = vpop.f32.mrf.mxu0
        %4627 = vmatprep.mubr.f32.mxu0 %v4029
        %4628 = vmatmul.mubr.f32.gmra.mxu0 %v4022
        %v4629 = vpop.f32.mrf.mxu0
        %v4630 = vadd.f32 0.0, %v4629
        %v4631 = vpop.f32.mrf.mxu0
        %4632 = vdwg.mxu0
        %v4633 = vadd.f32 %v4530, %v4625
        %v4634 = vadd.f32 %v4531, %v4630
        %s4635 = scalar_lea.vmem [#allocation10], 1800
        %v4636 = vld [vmem:[%s4635] sm:$0xff]
        %v4637 = vld [vmem:[%s4635 + $0x8] sm:$0xff]
        %v4638 = vld [vmem:[%s4635 + $0x10] sm:$0xff]
        %v4639 = vld [vmem:[%s4635 + $0x18] sm:$0xff]
        %v4640 = vld [vmem:[%s4635 + $0x20] sm:$0xff]
        %v4641 = vld [vmem:[%s4635 + $0x28] sm:$0xff]
        %v4642 = vld [vmem:[%s4635 + $0x30] sm:$0xff]
        %v4643 = vld [vmem:[%s4635 + $0x38] sm:$0xff]
        %v4644 = vld [vmem:[%s4635 + $0x40] sm:$0xff]
        %v4645 = vld [vmem:[%s4635 + $0x48] sm:$0xff]
        %v4646 = vld [vmem:[%s4635 + $0x50] sm:$0xff]
        %v4647 = vld [vmem:[%s4635 + $0x58] sm:$0xff]
        %v4648 = vld [vmem:[%s4635 + $0x60] sm:$0xff]
        %v4649 = vld [vmem:[%s4635 + $0x68] sm:$0xff]
        %v4650 = vld [vmem:[%s4635 + $0x70] sm:$0xff]
        %v4651 = vld [vmem:[%s4635 + $0x78] sm:$0xff]
        %v4652 = vld [vmem:[%s4635 + $0x80] sm:$0xff]
        %v4653 = vld [vmem:[%s4635 + $0x88] sm:$0xff]
        %v4654 = vld [vmem:[%s4635 + $0x90] sm:$0xff]
        %v4655 = vld [vmem:[%s4635 + $0x98] sm:$0xff]
        %v4656 = vld [vmem:[%s4635 + $0xa0] sm:$0xff]
        %v4657 = vld [vmem:[%s4635 + $0xa8] sm:$0xff]
        %v4658 = vld [vmem:[%s4635 + $0xb0] sm:$0xff]
        %v4659 = vld [vmem:[%s4635 + $0xb8] sm:$0xff]
        %v4660 = vld [vmem:[%s4635 + $0xc0] sm:$0xff]
        %4661 = vmatprep.subr.mxu0 0.0
        %4662 = vmatpush1.msra.mxu0 %v4651
        %4663 = vmatprep.subr.mxu0 0.0
        %4664 = vmatpush1.msra.mxu0 %v4650
        %4665 = vmatprep.subr.mxu0 0.0
        %4666 = vmatpush1.msra.mxu0 %v4649
        %4667 = vmatprep.subr.mxu0 0.0
        %4668 = vmatpush1.msra.mxu0 %v4648
        %4669 = vmatprep.subr.mxu0 0.0
        %4670 = vmatpush1.msra.mxu0 %v4647
        %4671 = vmatprep.subr.mxu0 0.0
        %4672 = vmatpush1.msra.mxu0 %v4646
        %4673 = vmatprep.subr.mxu0 0.0
        %4674 = vmatpush1.msra.mxu0 %v4645
        %4675 = vmatprep.subr.mxu0 0.0
        %4676 = vmatpush1.msra.mxu0 %v4644
        %4677 = vmatprep.subr.mxu0 0.0
        %4678 = vmatpush1.msra.mxu0 %v4643
        %4679 = vmatprep.subr.mxu0 0.0
        %4680 = vmatpush1.msra.mxu0 %v4642
        %4681 = vmatprep.subr.mxu0 0.0
        %4682 = vmatpush1.msra.mxu0 %v4641
        %4683 = vmatprep.subr.mxu0 0.0
        %4684 = vmatpush1.msra.mxu0 %v4640
        %4685 = vmatprep.subr.mxu0 0.0
        %4686 = vmatpush1.msra.mxu0 %v4639
        %4687 = vmatprep.subr.mxu0 0.0
        %4688 = vmatpush1.msra.mxu0 %v4638
        %4689 = vmatprep.subr.mxu0 0.0
        %4690 = vmatpush1.msra.mxu0 %v4637
        %4691 = vmatprep.subr.mxu0 0.0
        %4692 = vmatpush1.msra.mxu0 %v4636
        %4693 = vmatprep.subr.mxu0 0.0
        %4694 = vmatpush2.msra.mxu0 0.0
        %4695 = vmatprep.subr.mxu0 0.0
        %4696 = vmatpush2.msra.mxu0 0.0
        %4697 = vmatprep.subr.mxu0 0.0
        %4698 = vmatpush2.msra.mxu0 0.0
        %4699 = vmatprep.subr.mxu0 0.0
        %4700 = vmatpush2.msra.mxu0 0.0
        %4701 = vmatprep.subr.mxu0 0.0
        %4702 = vmatpush2.msra.mxu0 0.0
        %4703 = vmatprep.subr.mxu0 0.0
        %4704 = vmatpush2.msra.mxu0 0.0
        %4705 = vmatprep.subr.mxu0 0.0
        %4706 = vmatpush2.msra.mxu0 0.0
        %4707 = vmatprep.subr.mxu0 0.0
        %4708 = vmatpush2.msra.mxu0 %v4660
        %4709 = vmatprep.subr.mxu0 0.0
        %4710 = vmatpush2.msra.mxu0 %v4659
        %4711 = vmatprep.subr.mxu0 0.0
        %4712 = vmatpush2.msra.mxu0 %v4658
        %4713 = vmatprep.subr.mxu0 0.0
        %4714 = vmatpush2.msra.mxu0 %v4657
        %4715 = vmatprep.subr.mxu0 0.0
        %4716 = vmatpush2.msra.mxu0 %v4656
        %4717 = vmatprep.subr.mxu0 0.0
        %4718 = vmatpush2.msra.mxu0 %v4655
        %4719 = vmatprep.subr.mxu0 0.0
        %4720 = vmatpush2.msra.mxu0 %v4654
        %4721 = vmatprep.subr.mxu0 0.0
        %4722 = vmatpush2.msra.mxu0 %v4653
        %4723 = vmatprep.subr.mxu0 0.0
        %4724 = vmatpush2.msra.mxu0 %v4652
        %4725 = vmatprep.mubr.f32.mxu0 %v4146
        %4726 = vmatmul.mubr.f32.gmra.mxu0 %v4136
        %v4727 = vpop.f32.mrf.mxu0
        %v4728 = vadd.f32 0.0, %v4727
        %v4729 = vpop.f32.mrf.mxu0
        %4730 = vmatprep.mubr.f32.mxu0 %v4148
        %4731 = vmatmul.mubr.f32.gmra.mxu0 %v4141
        %v4732 = vpop.f32.mrf.mxu0
        %v4733 = vadd.f32 0.0, %v4732
        %v4734 = vpop.f32.mrf.mxu0
        %4735 = vdwg.mxu0
        %v4736 = vadd.f32 %v4633, %v4728
        %v4737 = vadd.f32 %v4634, %v4733
        %s4738 = scalar_lea.vmem [#allocation10], 2000
        %v4739 = vld [vmem:[%s4738] sm:$0xff]
        %v4740 = vld [vmem:[%s4738 + $0x8] sm:$0xff]
        %v4741 = vld [vmem:[%s4738 + $0x10] sm:$0xff]
        %v4742 = vld [vmem:[%s4738 + $0x18] sm:$0xff]
        %v4743 = vld [vmem:[%s4738 + $0x20] sm:$0xff]
        %v4744 = vld [vmem:[%s4738 + $0x28] sm:$0xff]
        %v4745 = vld [vmem:[%s4738 + $0x30] sm:$0xff]
        %v4746 = vld [vmem:[%s4738 + $0x38] sm:$0xff]
        %v4747 = vld [vmem:[%s4738 + $0x40] sm:$0xff]
        %v4748 = vld [vmem:[%s4738 + $0x48] sm:$0xff]
        %v4749 = vld [vmem:[%s4738 + $0x50] sm:$0xff]
        %v4750 = vld [vmem:[%s4738 + $0x58] sm:$0xff]
        %v4751 = vld [vmem:[%s4738 + $0x60] sm:$0xff]
        %v4752 = vld [vmem:[%s4738 + $0x68] sm:$0xff]
        %v4753 = vld [vmem:[%s4738 + $0x70] sm:$0xff]
        %v4754 = vld [vmem:[%s4738 + $0x78] sm:$0xff]
        %v4755 = vld [vmem:[%s4738 + $0x80] sm:$0xff]
        %v4756 = vld [vmem:[%s4738 + $0x88] sm:$0xff]
        %v4757 = vld [vmem:[%s4738 + $0x90] sm:$0xff]
        %v4758 = vld [vmem:[%s4738 + $0x98] sm:$0xff]
        %v4759 = vld [vmem:[%s4738 + $0xa0] sm:$0xff]
        %v4760 = vld [vmem:[%s4738 + $0xa8] sm:$0xff]
        %v4761 = vld [vmem:[%s4738 + $0xb0] sm:$0xff]
        %v4762 = vld [vmem:[%s4738 + $0xb8] sm:$0xff]
        %v4763 = vld [vmem:[%s4738 + $0xc0] sm:$0xff]
        %s4764 = scalar_lea.vmem [#allocation10], 2200
        %v4765 = vld [vmem:[%s4764] sm:$0xff]
        %v4766 = vld [vmem:[%s4764 + $0x8] sm:$0xff]
        %v4767 = vld [vmem:[%s4764 + $0x10] sm:$0xff]
        %v4768 = vld [vmem:[%s4764 + $0x18] sm:$0xff]
        %v4769 = vld [vmem:[%s4764 + $0x20] sm:$0xff]
        %v4770 = vld [vmem:[%s4764 + $0x28] sm:$0xff]
        %v4771 = vld [vmem:[%s4764 + $0x30] sm:$0xff]
        %v4772 = vld [vmem:[%s4764 + $0x38] sm:$0xff]
        %v4773 = vld [vmem:[%s4764 + $0x40] sm:$0xff]
        %v4774 = vld [vmem:[%s4764 + $0x48] sm:$0xff]
        %v4775 = vld [vmem:[%s4764 + $0x50] sm:$0xff]
        %v4776 = vld [vmem:[%s4764 + $0x58] sm:$0xff]
        %v4777 = vld [vmem:[%s4764 + $0x60] sm:$0xff]
        %v4778 = vld [vmem:[%s4764 + $0x68] sm:$0xff]
        %v4779 = vld [vmem:[%s4764 + $0x70] sm:$0xff]
        %v4780 = vld [vmem:[%s4764 + $0x78] sm:$0xff]
        %v4781 = vld [vmem:[%s4764 + $0x80] sm:$0xff]
        %v4782 = vld [vmem:[%s4764 + $0x88] sm:$0xff]
        %v4783 = vld [vmem:[%s4764 + $0x90] sm:$0xff]
        %v4784 = vld [vmem:[%s4764 + $0x98] sm:$0xff]
        %v4785 = vld [vmem:[%s4764 + $0xa0] sm:$0xff]
        %v4786 = vld [vmem:[%s4764 + $0xa8] sm:$0xff]
        %v4787 = vld [vmem:[%s4764 + $0xb0] sm:$0xff]
        %v4788 = vld [vmem:[%s4764 + $0xb8] sm:$0xff]
        %v4789 = vld [vmem:[%s4764 + $0xc0] sm:$0xff]
        %4790 = vmatprep.subr.mxu0 0.0
        %4791 = vmatpush1.msra.mxu0 %v4780
        %4792 = vmatprep.subr.mxu0 0.0
        %4793 = vmatpush1.msra.mxu0 %v4779
        %4794 = vmatprep.subr.mxu0 0.0
        %4795 = vmatpush1.msra.mxu0 %v4778
        %4796 = vmatprep.subr.mxu0 0.0
        %4797 = vmatpush1.msra.mxu0 %v4777
        %4798 = vmatprep.subr.mxu0 0.0
        %4799 = vmatpush1.msra.mxu0 %v4776
        %4800 = vmatprep.subr.mxu0 0.0
        %4801 = vmatpush1.msra.mxu0 %v4775
        %4802 = vmatprep.subr.mxu0 0.0
        %4803 = vmatpush1.msra.mxu0 %v4774
        %4804 = vmatprep.subr.mxu0 0.0
        %4805 = vmatpush1.msra.mxu0 %v4773
        %4806 = vmatprep.subr.mxu0 0.0
        %4807 = vmatpush1.msra.mxu0 %v4772
        %4808 = vmatprep.subr.mxu0 0.0
        %4809 = vmatpush1.msra.mxu0 %v4771
        %4810 = vmatprep.subr.mxu0 0.0
        %4811 = vmatpush1.msra.mxu0 %v4770
        %4812 = vmatprep.subr.mxu0 0.0
        %4813 = vmatpush1.msra.mxu0 %v4769
        %4814 = vmatprep.subr.mxu0 0.0
        %4815 = vmatpush1.msra.mxu0 %v4768
        %4816 = vmatprep.subr.mxu0 0.0
        %4817 = vmatpush1.msra.mxu0 %v4767
        %4818 = vmatprep.subr.mxu0 0.0
        %4819 = vmatpush1.msra.mxu0 %v4766
        %4820 = vmatprep.subr.mxu0 0.0
        %4821 = vmatpush1.msra.mxu0 %v4765
        %4822 = vmatprep.subr.mxu0 0.0
        %4823 = vmatpush2.msra.mxu0 0.0
        %4824 = vmatprep.subr.mxu0 0.0
        %4825 = vmatpush2.msra.mxu0 0.0
        %4826 = vmatprep.subr.mxu0 0.0
        %4827 = vmatpush2.msra.mxu0 0.0
        %4828 = vmatprep.subr.mxu0 0.0
        %4829 = vmatpush2.msra.mxu0 0.0
        %4830 = vmatprep.subr.mxu0 0.0
        %4831 = vmatpush2.msra.mxu0 0.0
        %4832 = vmatprep.subr.mxu0 0.0
        %4833 = vmatpush2.msra.mxu0 0.0
        %4834 = vmatprep.subr.mxu0 0.0
        %4835 = vmatpush2.msra.mxu0 0.0
        %4836 = vmatprep.subr.mxu0 0.0
        %4837 = vmatpush2.msra.mxu0 %v4789
        %4838 = vmatprep.subr.mxu0 0.0
        %4839 = vmatpush2.msra.mxu0 %v4788
        %4840 = vmatprep.subr.mxu0 0.0
        %4841 = vmatpush2.msra.mxu0 %v4787
        %4842 = vmatprep.subr.mxu0 0.0
        %4843 = vmatpush2.msra.mxu0 %v4786
        %4844 = vmatprep.subr.mxu0 0.0
        %4845 = vmatpush2.msra.mxu0 %v4785
        %4846 = vmatprep.subr.mxu0 0.0
        %4847 = vmatpush2.msra.mxu0 %v4784
        %4848 = vmatprep.subr.mxu0 0.0
        %4849 = vmatpush2.msra.mxu0 %v4783
        %4850 = vmatprep.subr.mxu0 0.0
        %4851 = vmatpush2.msra.mxu0 %v4782
        %4852 = vmatprep.subr.mxu0 0.0
        %4853 = vmatpush2.msra.mxu0 %v4781
        %4854 = vmatprep.mubr.f32.mxu0 %v3712
        %4855 = vmatmul.mubr.f32.gmra.mxu0 %v3701
        %v4856 = vpop.f32.mrf.mxu0
        %v4857 = vadd.f32 0.0, %v4856
        %v4858 = vpop.f32.mrf.mxu0
        %4859 = vmatprep.mubr.f32.mxu0 %v3714
        %4860 = vmatmul.mubr.f32.gmra.mxu0 %v3706
        %v4861 = vpop.f32.mrf.mxu0
        %v4862 = vadd.f32 0.0, %v4861
        %v4863 = vpop.f32.mrf.mxu0
        %4864 = vdwg.mxu0
        %4865 = vmatprep.subr.mxu0 0.0
        %4866 = vmatpush1.msra.mxu0 %v4754
        %4867 = vmatprep.subr.mxu0 0.0
        %4868 = vmatpush1.msra.mxu0 %v4753
        %4869 = vmatprep.subr.mxu0 0.0
        %4870 = vmatpush1.msra.mxu0 %v4752
        %4871 = vmatprep.subr.mxu0 0.0
        %4872 = vmatpush1.msra.mxu0 %v4751
        %4873 = vmatprep.subr.mxu0 0.0
        %4874 = vmatpush1.msra.mxu0 %v4750
        %4875 = vmatprep.subr.mxu0 0.0
        %4876 = vmatpush1.msra.mxu0 %v4749
        %4877 = vmatprep.subr.mxu0 0.0
        %4878 = vmatpush1.msra.mxu0 %v4748
        %4879 = vmatprep.subr.mxu0 0.0
        %4880 = vmatpush1.msra.mxu0 %v4747
        %4881 = vmatprep.subr.mxu0 0.0
        %4882 = vmatpush1.msra.mxu0 %v4746
        %4883 = vmatprep.subr.mxu0 0.0
        %4884 = vmatpush1.msra.mxu0 %v4745
        %4885 = vmatprep.subr.mxu0 0.0
        %4886 = vmatpush1.msra.mxu0 %v4744
        %4887 = vmatprep.subr.mxu0 0.0
        %4888 = vmatpush1.msra.mxu0 %v4743
        %4889 = vmatprep.subr.mxu0 0.0
        %4890 = vmatpush1.msra.mxu0 %v4742
        %4891 = vmatprep.subr.mxu0 0.0
        %4892 = vmatpush1.msra.mxu0 %v4741
        %4893 = vmatprep.subr.mxu0 0.0
        %4894 = vmatpush1.msra.mxu0 %v4740
        %4895 = vmatprep.subr.mxu0 0.0
        %4896 = vmatpush1.msra.mxu0 %v4739
        %4897 = vmatprep.subr.mxu0 0.0
        %4898 = vmatpush2.msra.mxu0 0.0
        %4899 = vmatprep.subr.mxu0 0.0
        %4900 = vmatpush2.msra.mxu0 0.0
        %4901 = vmatprep.subr.mxu0 0.0
        %4902 = vmatpush2.msra.mxu0 0.0
        %4903 = vmatprep.subr.mxu0 0.0
        %4904 = vmatpush2.msra.mxu0 0.0
        %4905 = vmatprep.subr.mxu0 0.0
        %4906 = vmatpush2.msra.mxu0 0.0
        %4907 = vmatprep.subr.mxu0 0.0
        %4908 = vmatpush2.msra.mxu0 0.0
        %4909 = vmatprep.subr.mxu0 0.0
        %4910 = vmatpush2.msra.mxu0 0.0
        %4911 = vmatprep.subr.mxu0 0.0
        %4912 = vmatpush2.msra.mxu0 %v4763
        %4913 = vmatprep.subr.mxu0 0.0
        %4914 = vmatpush2.msra.mxu0 %v4762
        %4915 = vmatprep.subr.mxu0 0.0
        %4916 = vmatpush2.msra.mxu0 %v4761
        %4917 = vmatprep.subr.mxu0 0.0
        %4918 = vmatpush2.msra.mxu0 %v4760
        %4919 = vmatprep.subr.mxu0 0.0
        %4920 = vmatpush2.msra.mxu0 %v4759
        %4921 = vmatprep.subr.mxu0 0.0
        %4922 = vmatpush2.msra.mxu0 %v4758
        %4923 = vmatprep.subr.mxu0 0.0
        %4924 = vmatpush2.msra.mxu0 %v4757
        %4925 = vmatprep.subr.mxu0 0.0
        %4926 = vmatpush2.msra.mxu0 %v4756
        %4927 = vmatprep.subr.mxu0 0.0
        %4928 = vmatpush2.msra.mxu0 %v4755
        %4929 = vmatprep.mubr.f32.mxu0 %v3791
        %4930 = vmatmul.mubr.f32.gmra.mxu0 %v3636
        %v4931 = vpop.f32.mrf.mxu0
        %v4932 = vadd.f32 %v4857, %v4931
        %v4933 = vpop.f32.mrf.mxu0
        %4934 = vmatprep.mubr.f32.mxu0 %v3793
        %4935 = vmatmul.mubr.f32.gmra.mxu0 %v3638
        %v4936 = vpop.f32.mrf.mxu0
        %v4937 = vadd.f32 %v4862, %v4936
        %v4938 = vpop.f32.mrf.mxu0
        %4939 = vdwg.mxu0
        %s4940 = scalar_lea.vmem [#allocation10], 2400
        %v4941 = vld [vmem:[%s4940] sm:$0xff]
        %v4942 = vld [vmem:[%s4940 + $0x8] sm:$0xff]
        %v4943 = vld [vmem:[%s4940 + $0x10] sm:$0xff]
        %v4944 = vld [vmem:[%s4940 + $0x18] sm:$0xff]
        %v4945 = vld [vmem:[%s4940 + $0x20] sm:$0xff]
        %v4946 = vld [vmem:[%s4940 + $0x28] sm:$0xff]
        %v4947 = vld [vmem:[%s4940 + $0x30] sm:$0xff]
        %v4948 = vld [vmem:[%s4940 + $0x38] sm:$0xff]
        %v4949 = vld [vmem:[%s4940 + $0x40] sm:$0xff]
        %v4950 = vld [vmem:[%s4940 + $0x48] sm:$0xff]
        %v4951 = vld [vmem:[%s4940 + $0x50] sm:$0xff]
        %v4952 = vld [vmem:[%s4940 + $0x58] sm:$0xff]
        %v4953 = vld [vmem:[%s4940 + $0x60] sm:$0xff]
        %v4954 = vld [vmem:[%s4940 + $0x68] sm:$0xff]
        %v4955 = vld [vmem:[%s4940 + $0x70] sm:$0xff]
        %v4956 = vld [vmem:[%s4940 + $0x78] sm:$0xff]
        %v4957 = vld [vmem:[%s4940 + $0x80] sm:$0xff]
        %v4958 = vld [vmem:[%s4940 + $0x88] sm:$0xff]
        %v4959 = vld [vmem:[%s4940 + $0x90] sm:$0xff]
        %v4960 = vld [vmem:[%s4940 + $0x98] sm:$0xff]
        %v4961 = vld [vmem:[%s4940 + $0xa0] sm:$0xff]
        %v4962 = vld [vmem:[%s4940 + $0xa8] sm:$0xff]
        %v4963 = vld [vmem:[%s4940 + $0xb0] sm:$0xff]
        %v4964 = vld [vmem:[%s4940 + $0xb8] sm:$0xff]
        %v4965 = vld [vmem:[%s4940 + $0xc0] sm:$0xff]
        %4966 = vmatprep.subr.mxu0 0.0
        %4967 = vmatpush1.msra.mxu0 %v4956
        %4968 = vmatprep.subr.mxu0 0.0
        %4969 = vmatpush1.msra.mxu0 %v4955
        %4970 = vmatprep.subr.mxu0 0.0
        %4971 = vmatpush1.msra.mxu0 %v4954
        %4972 = vmatprep.subr.mxu0 0.0
        %4973 = vmatpush1.msra.mxu0 %v4953
        %4974 = vmatprep.subr.mxu0 0.0
        %4975 = vmatpush1.msra.mxu0 %v4952
        %4976 = vmatprep.subr.mxu0 0.0
        %4977 = vmatpush1.msra.mxu0 %v4951
        %4978 = vmatprep.subr.mxu0 0.0
        %4979 = vmatpush1.msra.mxu0 %v4950
        %4980 = vmatprep.subr.mxu0 0.0
        %4981 = vmatpush1.msra.mxu0 %v4949
        %4982 = vmatprep.subr.mxu0 0.0
        %4983 = vmatpush1.msra.mxu0 %v4948
        %4984 = vmatprep.subr.mxu0 0.0
        %4985 = vmatpush1.msra.mxu0 %v4947
        %4986 = vmatprep.subr.mxu0 0.0
        %4987 = vmatpush1.msra.mxu0 %v4946
        %4988 = vmatprep.subr.mxu0 0.0
        %4989 = vmatpush1.msra.mxu0 %v4945
        %4990 = vmatprep.subr.mxu0 0.0
        %4991 = vmatpush1.msra.mxu0 %v4944
        %4992 = vmatprep.subr.mxu0 0.0
        %4993 = vmatpush1.msra.mxu0 %v4943
        %4994 = vmatprep.subr.mxu0 0.0
        %4995 = vmatpush1.msra.mxu0 %v4942
        %4996 = vmatprep.subr.mxu0 0.0
        %4997 = vmatpush1.msra.mxu0 %v4941
        %4998 = vmatprep.subr.mxu0 0.0
        %4999 = vmatpush2.msra.mxu0 0.0
        %5000 = vmatprep.subr.mxu0 0.0
        %5001 = vmatpush2.msra.mxu0 0.0
        %5002 = vmatprep.subr.mxu0 0.0
        %5003 = vmatpush2.msra.mxu0 0.0
        %5004 = vmatprep.subr.mxu0 0.0
        %5005 = vmatpush2.msra.mxu0 0.0
        %5006 = vmatprep.subr.mxu0 0.0
        %5007 = vmatpush2.msra.mxu0 0.0
        %5008 = vmatprep.subr.mxu0 0.0
        %5009 = vmatpush2.msra.mxu0 0.0
        %5010 = vmatprep.subr.mxu0 0.0
        %5011 = vmatpush2.msra.mxu0 0.0
        %5012 = vmatprep.subr.mxu0 0.0
        %5013 = vmatpush2.msra.mxu0 %v4965
        %5014 = vmatprep.subr.mxu0 0.0
        %5015 = vmatpush2.msra.mxu0 %v4964
        %5016 = vmatprep.subr.mxu0 0.0
        %5017 = vmatpush2.msra.mxu0 %v4963
        %5018 = vmatprep.subr.mxu0 0.0
        %5019 = vmatpush2.msra.mxu0 %v4962
        %5020 = vmatprep.subr.mxu0 0.0
        %5021 = vmatpush2.msra.mxu0 %v4961
        %5022 = vmatprep.subr.mxu0 0.0
        %5023 = vmatpush2.msra.mxu0 %v4960
        %5024 = vmatprep.subr.mxu0 0.0
        %5025 = vmatpush2.msra.mxu0 %v4959
        %5026 = vmatprep.subr.mxu0 0.0
        %5027 = vmatpush2.msra.mxu0 %v4958
        %5028 = vmatprep.subr.mxu0 0.0
        %5029 = vmatpush2.msra.mxu0 %v4957
        %5030 = vmatprep.mubr.f32.mxu0 %v3908
        %5031 = vmatmul.mubr.f32.gmra.mxu0 %v3898
        %v5032 = vpop.f32.mrf.mxu0
        %v5033 = vadd.f32 0.0, %v5032
        %v5034 = vpop.f32.mrf.mxu0
        %5035 = vmatprep.mubr.f32.mxu0 %v3910
        %5036 = vmatmul.mubr.f32.gmra.mxu0 %v3903
        %v5037 = vpop.f32.mrf.mxu0
        %v5038 = vadd.f32 0.0, %v5037
        %v5039 = vpop.f32.mrf.mxu0
        %5040 = vdwg.mxu0
        %v5041 = vadd.f32 %v4932, %v5033
        %v5042 = vadd.f32 %v4937, %v5038
        %s5043 = scalar_lea.vmem [#allocation10], 2600
        %v5044 = vld [vmem:[%s5043] sm:$0xff]
        %v5045 = vld [vmem:[%s5043 + $0x8] sm:$0xff]
        %v5046 = vld [vmem:[%s5043 + $0x10] sm:$0xff]
        %v5047 = vld [vmem:[%s5043 + $0x18] sm:$0xff]
        %v5048 = vld [vmem:[%s5043 + $0x20] sm:$0xff]
        %v5049 = vld [vmem:[%s5043 + $0x28] sm:$0xff]
        %v5050 = vld [vmem:[%s5043 + $0x30] sm:$0xff]
        %v5051 = vld [vmem:[%s5043 + $0x38] sm:$0xff]
        %v5052 = vld [vmem:[%s5043 + $0x40] sm:$0xff]
        %v5053 = vld [vmem:[%s5043 + $0x48] sm:$0xff]
        %v5054 = vld [vmem:[%s5043 + $0x50] sm:$0xff]
        %v5055 = vld [vmem:[%s5043 + $0x58] sm:$0xff]
        %v5056 = vld [vmem:[%s5043 + $0x60] sm:$0xff]
        %v5057 = vld [vmem:[%s5043 + $0x68] sm:$0xff]
        %v5058 = vld [vmem:[%s5043 + $0x70] sm:$0xff]
        %v5059 = vld [vmem:[%s5043 + $0x78] sm:$0xff]
        %v5060 = vld [vmem:[%s5043 + $0x80] sm:$0xff]
        %v5061 = vld [vmem:[%s5043 + $0x88] sm:$0xff]
        %v5062 = vld [vmem:[%s5043 + $0x90] sm:$0xff]
        %v5063 = vld [vmem:[%s5043 + $0x98] sm:$0xff]
        %v5064 = vld [vmem:[%s5043 + $0xa0] sm:$0xff]
        %v5065 = vld [vmem:[%s5043 + $0xa8] sm:$0xff]
        %v5066 = vld [vmem:[%s5043 + $0xb0] sm:$0xff]
        %v5067 = vld [vmem:[%s5043 + $0xb8] sm:$0xff]
        %v5068 = vld [vmem:[%s5043 + $0xc0] sm:$0xff]
        %5069 = vmatprep.subr.mxu0 0.0
        %5070 = vmatpush1.msra.mxu0 %v5059
        %5071 = vmatprep.subr.mxu0 0.0
        %5072 = vmatpush1.msra.mxu0 %v5058
        %5073 = vmatprep.subr.mxu0 0.0
        %5074 = vmatpush1.msra.mxu0 %v5057
        %5075 = vmatprep.subr.mxu0 0.0
        %5076 = vmatpush1.msra.mxu0 %v5056
        %5077 = vmatprep.subr.mxu0 0.0
        %5078 = vmatpush1.msra.mxu0 %v5055
        %5079 = vmatprep.subr.mxu0 0.0
        %5080 = vmatpush1.msra.mxu0 %v5054
        %5081 = vmatprep.subr.mxu0 0.0
        %5082 = vmatpush1.msra.mxu0 %v5053
        %5083 = vmatprep.subr.mxu0 0.0
        %5084 = vmatpush1.msra.mxu0 %v5052
        %5085 = vmatprep.subr.mxu0 0.0
        %5086 = vmatpush1.msra.mxu0 %v5051
        %5087 = vmatprep.subr.mxu0 0.0
        %5088 = vmatpush1.msra.mxu0 %v5050
        %5089 = vmatprep.subr.mxu0 0.0
        %5090 = vmatpush1.msra.mxu0 %v5049
        %5091 = vmatprep.subr.mxu0 0.0
        %5092 = vmatpush1.msra.mxu0 %v5048
        %5093 = vmatprep.subr.mxu0 0.0
        %5094 = vmatpush1.msra.mxu0 %v5047
        %5095 = vmatprep.subr.mxu0 0.0
        %5096 = vmatpush1.msra.mxu0 %v5046
        %5097 = vmatprep.subr.mxu0 0.0
        %5098 = vmatpush1.msra.mxu0 %v5045
        %5099 = vmatprep.subr.mxu0 0.0
        %5100 = vmatpush1.msra.mxu0 %v5044
        %5101 = vmatprep.subr.mxu0 0.0
        %5102 = vmatpush2.msra.mxu0 0.0
        %5103 = vmatprep.subr.mxu0 0.0
        %5104 = vmatpush2.msra.mxu0 0.0
        %5105 = vmatprep.subr.mxu0 0.0
        %5106 = vmatpush2.msra.mxu0 0.0
        %5107 = vmatprep.subr.mxu0 0.0
        %5108 = vmatpush2.msra.mxu0 0.0
        %5109 = vmatprep.subr.mxu0 0.0
        %5110 = vmatpush2.msra.mxu0 0.0
        %5111 = vmatprep.subr.mxu0 0.0
        %5112 = vmatpush2.msra.mxu0 0.0
        %5113 = vmatprep.subr.mxu0 0.0
        %5114 = vmatpush2.msra.mxu0 0.0
        %5115 = vmatprep.subr.mxu0 0.0
        %5116 = vmatpush2.msra.mxu0 %v5068
        %5117 = vmatprep.subr.mxu0 0.0
        %5118 = vmatpush2.msra.mxu0 %v5067
        %5119 = vmatprep.subr.mxu0 0.0
        %5120 = vmatpush2.msra.mxu0 %v5066
        %5121 = vmatprep.subr.mxu0 0.0
        %5122 = vmatpush2.msra.mxu0 %v5065
        %5123 = vmatprep.subr.mxu0 0.0
        %5124 = vmatpush2.msra.mxu0 %v5064
        %5125 = vmatprep.subr.mxu0 0.0
        %5126 = vmatpush2.msra.mxu0 %v5063
        %5127 = vmatprep.subr.mxu0 0.0
        %5128 = vmatpush2.msra.mxu0 %v5062
        %5129 = vmatprep.subr.mxu0 0.0
        %5130 = vmatpush2.msra.mxu0 %v5061
        %5131 = vmatprep.subr.mxu0 0.0
        %5132 = vmatpush2.msra.mxu0 %v5060
        %5133 = vmatprep.mubr.f32.mxu0 %v4027
        %5134 = vmatmul.mubr.f32.gmra.mxu0 %v4017
        %v5135 = vpop.f32.mrf.mxu0
        %v5136 = vadd.f32 0.0, %v5135
        %v5137 = vpop.f32.mrf.mxu0
        %5138 = vmatprep.mubr.f32.mxu0 %v4029
        %5139 = vmatmul.mubr.f32.gmra.mxu0 %v4022
        %v5140 = vpop.f32.mrf.mxu0
        %v5141 = vadd.f32 0.0, %v5140
        %v5142 = vpop.f32.mrf.mxu0
        %5143 = vdwg.mxu0
        %v5144 = vadd.f32 %v5041, %v5136
        %v5145 = vadd.f32 %v5042, %v5141
        %s5146 = scalar_lea.vmem [#allocation10], 2800
        %v5147 = vld [vmem:[%s5146] sm:$0xff]
        %v5148 = vld [vmem:[%s5146 + $0x8] sm:$0xff]
        %v5149 = vld [vmem:[%s5146 + $0x10] sm:$0xff]
        %v5150 = vld [vmem:[%s5146 + $0x18] sm:$0xff]
        %v5151 = vld [vmem:[%s5146 + $0x20] sm:$0xff]
        %v5152 = vld [vmem:[%s5146 + $0x28] sm:$0xff]
        %v5153 = vld [vmem:[%s5146 + $0x30] sm:$0xff]
        %v5154 = vld [vmem:[%s5146 + $0x38] sm:$0xff]
        %v5155 = vld [vmem:[%s5146 + $0x40] sm:$0xff]
        %v5156 = vld [vmem:[%s5146 + $0x48] sm:$0xff]
        %v5157 = vld [vmem:[%s5146 + $0x50] sm:$0xff]
        %v5158 = vld [vmem:[%s5146 + $0x58] sm:$0xff]
        %v5159 = vld [vmem:[%s5146 + $0x60] sm:$0xff]
        %v5160 = vld [vmem:[%s5146 + $0x68] sm:$0xff]
        %v5161 = vld [vmem:[%s5146 + $0x70] sm:$0xff]
        %v5162 = vld [vmem:[%s5146 + $0x78] sm:$0xff]
        %v5163 = vld [vmem:[%s5146 + $0x80] sm:$0xff]
        %v5164 = vld [vmem:[%s5146 + $0x88] sm:$0xff]
        %v5165 = vld [vmem:[%s5146 + $0x90] sm:$0xff]
        %v5166 = vld [vmem:[%s5146 + $0x98] sm:$0xff]
        %v5167 = vld [vmem:[%s5146 + $0xa0] sm:$0xff]
        %v5168 = vld [vmem:[%s5146 + $0xa8] sm:$0xff]
        %v5169 = vld [vmem:[%s5146 + $0xb0] sm:$0xff]
        %v5170 = vld [vmem:[%s5146 + $0xb8] sm:$0xff]
        %v5171 = vld [vmem:[%s5146 + $0xc0] sm:$0xff]
        %5172 = vmatprep.subr.mxu0 0.0
        %5173 = vmatpush1.msra.mxu0 %v5162
        %5174 = vmatprep.subr.mxu0 0.0
        %5175 = vmatpush1.msra.mxu0 %v5161
        %5176 = vmatprep.subr.mxu0 0.0
        %5177 = vmatpush1.msra.mxu0 %v5160
        %5178 = vmatprep.subr.mxu0 0.0
        %5179 = vmatpush1.msra.mxu0 %v5159
        %5180 = vmatprep.subr.mxu0 0.0
        %5181 = vmatpush1.msra.mxu0 %v5158
        %5182 = vmatprep.subr.mxu0 0.0
        %5183 = vmatpush1.msra.mxu0 %v5157
        %5184 = vmatprep.subr.mxu0 0.0
        %5185 = vmatpush1.msra.mxu0 %v5156
        %5186 = vmatprep.subr.mxu0 0.0
        %5187 = vmatpush1.msra.mxu0 %v5155
        %5188 = vmatprep.subr.mxu0 0.0
        %5189 = vmatpush1.msra.mxu0 %v5154
        %5190 = vmatprep.subr.mxu0 0.0
        %5191 = vmatpush1.msra.mxu0 %v5153
        %5192 = vmatprep.subr.mxu0 0.0
        %5193 = vmatpush1.msra.mxu0 %v5152
        %5194 = vmatprep.subr.mxu0 0.0
        %5195 = vmatpush1.msra.mxu0 %v5151
        %5196 = vmatprep.subr.mxu0 0.0
        %5197 = vmatpush1.msra.mxu0 %v5150
        %5198 = vmatprep.subr.mxu0 0.0
        %5199 = vmatpush1.msra.mxu0 %v5149
        %5200 = vmatprep.subr.mxu0 0.0
        %5201 = vmatpush1.msra.mxu0 %v5148
        %5202 = vmatprep.subr.mxu0 0.0
        %5203 = vmatpush1.msra.mxu0 %v5147
        %5204 = vmatprep.subr.mxu0 0.0
        %5205 = vmatpush2.msra.mxu0 0.0
        %5206 = vmatprep.subr.mxu0 0.0
        %5207 = vmatpush2.msra.mxu0 0.0
        %5208 = vmatprep.subr.mxu0 0.0
        %5209 = vmatpush2.msra.mxu0 0.0
        %5210 = vmatprep.subr.mxu0 0.0
        %5211 = vmatpush2.msra.mxu0 0.0
        %5212 = vmatprep.subr.mxu0 0.0
        %5213 = vmatpush2.msra.mxu0 0.0
        %5214 = vmatprep.subr.mxu0 0.0
        %5215 = vmatpush2.msra.mxu0 0.0
        %5216 = vmatprep.subr.mxu0 0.0
        %5217 = vmatpush2.msra.mxu0 0.0
        %5218 = vmatprep.subr.mxu0 0.0
        %5219 = vmatpush2.msra.mxu0 %v5171
        %5220 = vmatprep.subr.mxu0 0.0
        %5221 = vmatpush2.msra.mxu0 %v5170
        %5222 = vmatprep.subr.mxu0 0.0
        %5223 = vmatpush2.msra.mxu0 %v5169
        %5224 = vmatprep.subr.mxu0 0.0
        %5225 = vmatpush2.msra.mxu0 %v5168
        %5226 = vmatprep.subr.mxu0 0.0
        %5227 = vmatpush2.msra.mxu0 %v5167
        %5228 = vmatprep.subr.mxu0 0.0
        %5229 = vmatpush2.msra.mxu0 %v5166
        %5230 = vmatprep.subr.mxu0 0.0
        %5231 = vmatpush2.msra.mxu0 %v5165
        %5232 = vmatprep.subr.mxu0 0.0
        %5233 = vmatpush2.msra.mxu0 %v5164
        %5234 = vmatprep.subr.mxu0 0.0
        %5235 = vmatpush2.msra.mxu0 %v5163
        %5236 = vmatprep.mubr.f32.mxu0 %v4146
        %5237 = vmatmul.mubr.f32.gmra.mxu0 %v4136
        %v5238 = vpop.f32.mrf.mxu0
        %v5239 = vadd.f32 0.0, %v5238
        %v5240 = vpop.f32.mrf.mxu0
        %5241 = vmatprep.mubr.f32.mxu0 %v4148
        %5242 = vmatmul.mubr.f32.gmra.mxu0 %v4141
        %v5243 = vpop.f32.mrf.mxu0
        %v5244 = vadd.f32 0.0, %v5243
        %v5245 = vpop.f32.mrf.mxu0
        %5246 = vdwg.mxu0
        %v5247 = vadd.f32 %v5144, %v5239
        %v5248 = vadd.f32 %v5145, %v5244
        %v5249 = vld [vmem:[%s5] sm:$0x1f]
        %vm5250 = vcmask 130048
        %v5252 = vsel %vm5250, %v5249, 0
        %5254 = vmatprep.subr.mxu0 0.0
        %5255 = vmatpush1.msra.mxu0 0.0
        %5256 = vmatprep.subr.mxu0 0.0
        %5257 = vmatpush1.msra.mxu0 0.0
        %5258 = vmatprep.subr.mxu0 0.0
        %5259 = vmatpush1.msra.mxu0 0.0
        %5260 = vmatprep.subr.mxu0 0.0
        %5261 = vmatpush1.msra.mxu0 0.0
        %5262 = vmatprep.subr.mxu0 0.0
        %5263 = vmatpush1.msra.mxu0 0.0
        %5264 = vmatprep.subr.mxu0 0.0
        %5265 = vmatpush1.msra.mxu0 0.0
        %5266 = vmatprep.subr.mxu0 0.0
        %5267 = vmatpush1.msra.mxu0 0.0
        %5268 = vmatprep.subr.mxu0 0.0
        %5269 = vmatpush1.msra.mxu0 0.0
        %5270 = vmatprep.subr.mxu0 0.0
        %5271 = vmatpush1.msra.mxu0 0.0
        %5272 = vmatprep.subr.mxu0 0.0
        %5273 = vmatpush1.msra.mxu0 0.0
        %5274 = vmatprep.subr.mxu0 0.0
        %5275 = vmatpush1.msra.mxu0 0.0
        %5276 = vmatprep.subr.mxu0 0.0
        %5277 = vmatpush1.msra.mxu0 0.0
        %5278 = vmatprep.subr.mxu0 0.0
        %5279 = vmatpush1.msra.mxu0 0.0
        %5280 = vmatprep.subr.mxu0 0.0
        %5281 = vmatpush1.msra.mxu0 0.0
        %5282 = vmatprep.subr.mxu0 0.0
        %5283 = vmatpush1.msra.mxu0 %v4226
        %5284 = vmatprep.subr.mxu0 0.0
        %5285 = vmatpush1.msra.mxu0 %v4225
        %5286 = vmatprep.subr.mxu0 0.0
        %5287 = vmatpush2.msra.mxu0 0.0
        %5288 = vmatprep.subr.mxu0 0.0
        %5289 = vmatpush2.msra.mxu0 0.0
        %5290 = vmatprep.subr.mxu0 0.0
        %5291 = vmatpush2.msra.mxu0 0.0
        %5292 = vmatprep.subr.mxu0 0.0
        %5293 = vmatpush2.msra.mxu0 0.0
        %5294 = vmatprep.subr.mxu0 0.0
        %5295 = vmatpush2.msra.mxu0 0.0
        %5296 = vmatprep.subr.mxu0 0.0
        %5297 = vmatpush2.msra.mxu0 0.0
        %5298 = vmatprep.subr.mxu0 0.0
        %5299 = vmatpush2.msra.mxu0 0.0
        %5300 = vmatprep.subr.mxu0 0.0
        %5301 = vmatpush2.msra.mxu0 0.0
        %5302 = vmatprep.subr.mxu0 0.0
        %5303 = vmatpush2.msra.mxu0 0.0
        %5304 = vmatprep.subr.mxu0 0.0
        %5305 = vmatpush2.msra.mxu0 0.0
        %5306 = vmatprep.subr.mxu0 0.0
        %5307 = vmatpush2.msra.mxu0 0.0
        %5308 = vmatprep.subr.mxu0 0.0
        %5309 = vmatpush2.msra.mxu0 0.0
        %5310 = vmatprep.subr.mxu0 0.0
        %5311 = vmatpush2.msra.mxu0 0.0
        %5312 = vmatprep.subr.mxu0 0.0
        %5313 = vmatpush2.msra.mxu0 0.0
        %5314 = vmatprep.subr.mxu0 0.0
        %5315 = vmatpush2.msra.mxu0 0.0
        %5316 = vmatprep.subr.mxu0 0.0
        %5317 = vmatpush2.msra.mxu0 0.0
        %5318 = vmatprep.mubr.f32.mxu0 0.0
        %5319 = vmatmul.mubr.f32.gmra.mxu0 %v5252
        %v5320 = vpop.f32.mrf.mxu0
        %v5321 = vadd.f32 0.0, %v5320
        %v5322 = vpop.f32.mrf.mxu0
        %5323 = vdwg.mxu0
        %5324 = vmatprep.subr.mxu0 0.0
        %5325 = vmatpush1.msra.mxu0 0.0
        %5326 = vmatprep.subr.mxu0 0.0
        %5327 = vmatpush1.msra.mxu0 0.0
        %5328 = vmatprep.subr.mxu0 0.0
        %5329 = vmatpush1.msra.mxu0 0.0
        %5330 = vmatprep.subr.mxu0 0.0
        %5331 = vmatpush1.msra.mxu0 0.0
        %5332 = vmatprep.subr.mxu0 0.0
        %5333 = vmatpush1.msra.mxu0 0.0
        %5334 = vmatprep.subr.mxu0 0.0
        %5335 = vmatpush1.msra.mxu0 0.0
        %5336 = vmatprep.subr.mxu0 0.0
        %5337 = vmatpush1.msra.mxu0 0.0
        %5338 = vmatprep.subr.mxu0 0.0
        %5339 = vmatpush1.msra.mxu0 0.0
        %5340 = vmatprep.subr.mxu0 0.0
        %5341 = vmatpush1.msra.mxu0 0.0
        %5342 = vmatprep.subr.mxu0 0.0
        %5343 = vmatpush1.msra.mxu0 0.0
        %5344 = vmatprep.subr.mxu0 0.0
        %5345 = vmatpush1.msra.mxu0 0.0
        %5346 = vmatprep.subr.mxu0 0.0
        %5347 = vmatpush1.msra.mxu0 0.0
        %5348 = vmatprep.subr.mxu0 0.0
        %5349 = vmatpush1.msra.mxu0 0.0
        %5350 = vmatprep.subr.mxu0 0.0
        %5351 = vmatpush1.msra.mxu0 0.0
        %5352 = vmatprep.subr.mxu0 0.0
        %5353 = vmatpush1.msra.mxu0 %v4737
        %5354 = vmatprep.subr.mxu0 0.0
        %5355 = vmatpush1.msra.mxu0 %v4736
        %5356 = vmatprep.subr.mxu0 0.0
        %5357 = vmatpush2.msra.mxu0 0.0
        %5358 = vmatprep.subr.mxu0 0.0
        %5359 = vmatpush2.msra.mxu0 0.0
        %5360 = vmatprep.subr.mxu0 0.0
        %5361 = vmatpush2.msra.mxu0 0.0
        %5362 = vmatprep.subr.mxu0 0.0
        %5363 = vmatpush2.msra.mxu0 0.0
        %5364 = vmatprep.subr.mxu0 0.0
        %5365 = vmatpush2.msra.mxu0 0.0
        %5366 = vmatprep.subr.mxu0 0.0
        %5367 = vmatpush2.msra.mxu0 0.0
        %5368 = vmatprep.subr.mxu0 0.0
        %5369 = vmatpush2.msra.mxu0 0.0
        %5370 = vmatprep.subr.mxu0 0.0
        %5371 = vmatpush2.msra.mxu0 0.0
        %5372 = vmatprep.subr.mxu0 0.0
        %5373 = vmatpush2.msra.mxu0 0.0
        %5374 = vmatprep.subr.mxu0 0.0
        %5375 = vmatpush2.msra.mxu0 0.0
        %5376 = vmatprep.subr.mxu0 0.0
        %5377 = vmatpush2.msra.mxu0 0.0
        %5378 = vmatprep.subr.mxu0 0.0
        %5379 = vmatpush2.msra.mxu0 0.0
        %5380 = vmatprep.subr.mxu0 0.0
        %5381 = vmatpush2.msra.mxu0 0.0
        %5382 = vmatprep.subr.mxu0 0.0
        %5383 = vmatpush2.msra.mxu0 0.0
        %5384 = vmatprep.subr.mxu0 0.0
        %5385 = vmatpush2.msra.mxu0 0.0
        %5386 = vmatprep.subr.mxu0 0.0
        %5387 = vmatpush2.msra.mxu0 0.0
        %5388 = vmatprep.mubr.f32.mxu0 0.0
        %5389 = vmatmul.mubr.f32.gmra.mxu0 %v5252
        %v5390 = vpop.f32.mrf.mxu0
        %v5391 = vadd.f32 0.0, %v5390
        %v5392 = vpop.f32.mrf.mxu0
        %5393 = vdwg.mxu0
        %v5394 = vmax.f32 %v5321, %v5391
        %5395 = vmatprep.subr.mxu0 0.0
        %5396 = vmatpush1.msra.mxu0 0.0
        %5397 = vmatprep.subr.mxu0 0.0
        %5398 = vmatpush1.msra.mxu0 0.0
        %5399 = vmatprep.subr.mxu0 0.0
        %5400 = vmatpush1.msra.mxu0 0.0
        %5401 = vmatprep.subr.mxu0 0.0
        %5402 = vmatpush1.msra.mxu0 0.0
        %5403 = vmatprep.subr.mxu0 0.0
        %5404 = vmatpush1.msra.mxu0 0.0
        %5405 = vmatprep.subr.mxu0 0.0
        %5406 = vmatpush1.msra.mxu0 0.0
        %5407 = vmatprep.subr.mxu0 0.0
        %5408 = vmatpush1.msra.mxu0 0.0
        %5409 = vmatprep.subr.mxu0 0.0
        %5410 = vmatpush1.msra.mxu0 0.0
        %5411 = vmatprep.subr.mxu0 0.0
        %5412 = vmatpush1.msra.mxu0 0.0
        %5413 = vmatprep.subr.mxu0 0.0
        %5414 = vmatpush1.msra.mxu0 0.0
        %5415 = vmatprep.subr.mxu0 0.0
        %5416 = vmatpush1.msra.mxu0 0.0
        %5417 = vmatprep.subr.mxu0 0.0
        %5418 = vmatpush1.msra.mxu0 0.0
        %5419 = vmatprep.subr.mxu0 0.0
        %5420 = vmatpush1.msra.mxu0 0.0
        %5421 = vmatprep.subr.mxu0 0.0
        %5422 = vmatpush1.msra.mxu0 0.0
        %5423 = vmatprep.subr.mxu0 0.0
        %5424 = vmatpush1.msra.mxu0 %v5248
        %5425 = vmatprep.subr.mxu0 0.0
        %5426 = vmatpush1.msra.mxu0 %v5247
        %5427 = vmatprep.subr.mxu0 0.0
        %5428 = vmatpush2.msra.mxu0 0.0
        %5429 = vmatprep.subr.mxu0 0.0
        %5430 = vmatpush2.msra.mxu0 0.0
        %5431 = vmatprep.subr.mxu0 0.0
        %5432 = vmatpush2.msra.mxu0 0.0
        %5433 = vmatprep.subr.mxu0 0.0
        %5434 = vmatpush2.msra.mxu0 0.0
        %5435 = vmatprep.subr.mxu0 0.0
        %5436 = vmatpush2.msra.mxu0 0.0
        %5437 = vmatprep.subr.mxu0 0.0
        %5438 = vmatpush2.msra.mxu0 0.0
        %5439 = vmatprep.subr.mxu0 0.0
        %5440 = vmatpush2.msra.mxu0 0.0
        %5441 = vmatprep.subr.mxu0 0.0
        %5442 = vmatpush2.msra.mxu0 0.0
        %5443 = vmatprep.subr.mxu0 0.0
        %5444 = vmatpush2.msra.mxu0 0.0
        %5445 = vmatprep.subr.mxu0 0.0
        %5446 = vmatpush2.msra.mxu0 0.0
        %5447 = vmatprep.subr.mxu0 0.0
        %5448 = vmatpush2.msra.mxu0 0.0
        %5449 = vmatprep.subr.mxu0 0.0
        %5450 = vmatpush2.msra.mxu0 0.0
        %5451 = vmatprep.subr.mxu0 0.0
        %5452 = vmatpush2.msra.mxu0 0.0
        %5453 = vmatprep.subr.mxu0 0.0
        %5454 = vmatpush2.msra.mxu0 0.0
        %5455 = vmatprep.subr.mxu0 0.0
        %5456 = vmatpush2.msra.mxu0 0.0
        %5457 = vmatprep.subr.mxu0 0.0
        %5458 = vmatpush2.msra.mxu0 0.0
        %5459 = vmatprep.mubr.f32.mxu0 0.0
        %5460 = vmatmul.mubr.f32.gmra.mxu0 %v5252
        %v5461 = vpop.f32.mrf.mxu0
        %v5462 = vadd.f32 0.0, %v5461
        %v5463 = vpop.f32.mrf.mxu0
        %5464 = vdwg.mxu0
        %v5465 = vmax.f32 %v5394, %v5462
        %s5466 = scalar_lea.vmem %s5, 8
        %v5467 = vld [vmem:[%s5466] sm:$0x1f]
        %v5469 = vsel %vm5250, %v5467, 0
        %5471 = vmatprep.subr.mxu0 0.0
        %5472 = vmatpush1.msra.mxu0 0.0
        %5473 = vmatprep.subr.mxu0 0.0
        %5474 = vmatpush1.msra.mxu0 0.0
        %5475 = vmatprep.subr.mxu0 0.0
        %5476 = vmatpush1.msra.mxu0 0.0
        %5477 = vmatprep.subr.mxu0 0.0
        %5478 = vmatpush1.msra.mxu0 0.0
        %5479 = vmatprep.subr.mxu0 0.0
        %5480 = vmatpush1.msra.mxu0 0.0
        %5481 = vmatprep.subr.mxu0 0.0
        %5482 = vmatpush1.msra.mxu0 0.0
        %5483 = vmatprep.subr.mxu0 0.0
        %5484 = vmatpush1.msra.mxu0 0.0
        %5485 = vmatprep.subr.mxu0 0.0
        %5486 = vmatpush1.msra.mxu0 0.0
        %5487 = vmatprep.subr.mxu0 0.0
        %5488 = vmatpush1.msra.mxu0 0.0
        %5489 = vmatprep.subr.mxu0 0.0
        %5490 = vmatpush1.msra.mxu0 0.0
        %5491 = vmatprep.subr.mxu0 0.0
        %5492 = vmatpush1.msra.mxu0 0.0
        %5493 = vmatprep.subr.mxu0 0.0
        %5494 = vmatpush1.msra.mxu0 0.0
        %5495 = vmatprep.subr.mxu0 0.0
        %5496 = vmatpush1.msra.mxu0 0.0
        %5497 = vmatprep.subr.mxu0 0.0
        %5498 = vmatpush1.msra.mxu0 0.0
        %5499 = vmatprep.subr.mxu0 0.0
        %5500 = vmatpush1.msra.mxu0 %v4226
        %5501 = vmatprep.subr.mxu0 0.0
        %5502 = vmatpush1.msra.mxu0 %v4225
        %5503 = vmatprep.subr.mxu0 0.0
        %5504 = vmatpush2.msra.mxu0 0.0
        %5505 = vmatprep.subr.mxu0 0.0
        %5506 = vmatpush2.msra.mxu0 0.0
        %5507 = vmatprep.subr.mxu0 0.0
        %5508 = vmatpush2.msra.mxu0 0.0
        %5509 = vmatprep.subr.mxu0 0.0
        %5510 = vmatpush2.msra.mxu0 0.0
        %5511 = vmatprep.subr.mxu0 0.0
        %5512 = vmatpush2.msra.mxu0 0.0
        %5513 = vmatprep.subr.mxu0 0.0
        %5514 = vmatpush2.msra.mxu0 0.0
        %5515 = vmatprep.subr.mxu0 0.0
        %5516 = vmatpush2.msra.mxu0 0.0
        %5517 = vmatprep.subr.mxu0 0.0
        %5518 = vmatpush2.msra.mxu0 0.0
        %5519 = vmatprep.subr.mxu0 0.0
        %5520 = vmatpush2.msra.mxu0 0.0
        %5521 = vmatprep.subr.mxu0 0.0
        %5522 = vmatpush2.msra.mxu0 0.0
        %5523 = vmatprep.subr.mxu0 0.0
        %5524 = vmatpush2.msra.mxu0 0.0
        %5525 = vmatprep.subr.mxu0 0.0
        %5526 = vmatpush2.msra.mxu0 0.0
        %5527 = vmatprep.subr.mxu0 0.0
        %5528 = vmatpush2.msra.mxu0 0.0
        %5529 = vmatprep.subr.mxu0 0.0
        %5530 = vmatpush2.msra.mxu0 0.0
        %5531 = vmatprep.subr.mxu0 0.0
        %5532 = vmatpush2.msra.mxu0 0.0
        %5533 = vmatprep.subr.mxu0 0.0
        %5534 = vmatpush2.msra.mxu0 0.0
        %5535 = vmatprep.mubr.f32.mxu0 0.0
        %5536 = vmatmul.mubr.f32.gmra.mxu0 %v5469
        %v5537 = vpop.f32.mrf.mxu0
        %v5538 = vadd.f32 0.0, %v5537
        %v5539 = vpop.f32.mrf.mxu0
        %5540 = vdwg.mxu0
        %v5541 = vmax.f32 %v5465, %v5538
        %5542 = vmatprep.subr.mxu0 0.0
        %5543 = vmatpush1.msra.mxu0 0.0
        %5544 = vmatprep.subr.mxu0 0.0
        %5545 = vmatpush1.msra.mxu0 0.0
        %5546 = vmatprep.subr.mxu0 0.0
        %5547 = vmatpush1.msra.mxu0 0.0
        %5548 = vmatprep.subr.mxu0 0.0
        %5549 = vmatpush1.msra.mxu0 0.0
        %5550 = vmatprep.subr.mxu0 0.0
        %5551 = vmatpush1.msra.mxu0 0.0
        %5552 = vmatprep.subr.mxu0 0.0
        %5553 = vmatpush1.msra.mxu0 0.0
        %5554 = vmatprep.subr.mxu0 0.0
        %5555 = vmatpush1.msra.mxu0 0.0
        %5556 = vmatprep.subr.mxu0 0.0
        %5557 = vmatpush1.msra.mxu0 0.0
        %5558 = vmatprep.subr.mxu0 0.0
        %5559 = vmatpush1.msra.mxu0 0.0
        %5560 = vmatprep.subr.mxu0 0.0
        %5561 = vmatpush1.msra.mxu0 0.0
        %5562 = vmatprep.subr.mxu0 0.0
        %5563 = vmatpush1.msra.mxu0 0.0
        %5564 = vmatprep.subr.mxu0 0.0
        %5565 = vmatpush1.msra.mxu0 0.0
        %5566 = vmatprep.subr.mxu0 0.0
        %5567 = vmatpush1.msra.mxu0 0.0
        %5568 = vmatprep.subr.mxu0 0.0
        %5569 = vmatpush1.msra.mxu0 0.0
        %5570 = vmatprep.subr.mxu0 0.0
        %5571 = vmatpush1.msra.mxu0 %v4737
        %5572 = vmatprep.subr.mxu0 0.0
        %5573 = vmatpush1.msra.mxu0 %v4736
        %5574 = vmatprep.subr.mxu0 0.0
        %5575 = vmatpush2.msra.mxu0 0.0
        %5576 = vmatprep.subr.mxu0 0.0
        %5577 = vmatpush2.msra.mxu0 0.0
        %5578 = vmatprep.subr.mxu0 0.0
        %5579 = vmatpush2.msra.mxu0 0.0
        %5580 = vmatprep.subr.mxu0 0.0
        %5581 = vmatpush2.msra.mxu0 0.0
        %5582 = vmatprep.subr.mxu0 0.0
        %5583 = vmatpush2.msra.mxu0 0.0
        %5584 = vmatprep.subr.mxu0 0.0
        %5585 = vmatpush2.msra.mxu0 0.0
        %5586 = vmatprep.subr.mxu0 0.0
        %5587 = vmatpush2.msra.mxu0 0.0
        %5588 = vmatprep.subr.mxu0 0.0
        %5589 = vmatpush2.msra.mxu0 0.0
        %5590 = vmatprep.subr.mxu0 0.0
        %5591 = vmatpush2.msra.mxu0 0.0
        %5592 = vmatprep.subr.mxu0 0.0
        %5593 = vmatpush2.msra.mxu0 0.0
        %5594 = vmatprep.subr.mxu0 0.0
        %5595 = vmatpush2.msra.mxu0 0.0
        %5596 = vmatprep.subr.mxu0 0.0
        %5597 = vmatpush2.msra.mxu0 0.0
        %5598 = vmatprep.subr.mxu0 0.0
        %5599 = vmatpush2.msra.mxu0 0.0
        %5600 = vmatprep.subr.mxu0 0.0
        %5601 = vmatpush2.msra.mxu0 0.0
        %5602 = vmatprep.subr.mxu0 0.0
        %5603 = vmatpush2.msra.mxu0 0.0
        %5604 = vmatprep.subr.mxu0 0.0
        %5605 = vmatpush2.msra.mxu0 0.0
        %5606 = vmatprep.mubr.f32.mxu0 0.0
        %5607 = vmatmul.mubr.f32.gmra.mxu0 %v5469
        %v5608 = vpop.f32.mrf.mxu0
        %v5609 = vadd.f32 0.0, %v5608
        %v5610 = vpop.f32.mrf.mxu0
        %5611 = vdwg.mxu0
        %v5612 = vmax.f32 %v5541, %v5609
        %5613 = vmatprep.subr.mxu0 0.0
        %5614 = vmatpush1.msra.mxu0 0.0
        %5615 = vmatprep.subr.mxu0 0.0
        %5616 = vmatpush1.msra.mxu0 0.0
        %5617 = vmatprep.subr.mxu0 0.0
        %5618 = vmatpush1.msra.mxu0 0.0
        %5619 = vmatprep.subr.mxu0 0.0
        %5620 = vmatpush1.msra.mxu0 0.0
        %5621 = vmatprep.subr.mxu0 0.0
        %5622 = vmatpush1.msra.mxu0 0.0
        %5623 = vmatprep.subr.mxu0 0.0
        %5624 = vmatpush1.msra.mxu0 0.0
        %5625 = vmatprep.subr.mxu0 0.0
        %5626 = vmatpush1.msra.mxu0 0.0
        %5627 = vmatprep.subr.mxu0 0.0
        %5628 = vmatpush1.msra.mxu0 0.0
        %5629 = vmatprep.subr.mxu0 0.0
        %5630 = vmatpush1.msra.mxu0 0.0
        %5631 = vmatprep.subr.mxu0 0.0
        %5632 = vmatpush1.msra.mxu0 0.0
        %5633 = vmatprep.subr.mxu0 0.0
        %5634 = vmatpush1.msra.mxu0 0.0
        %5635 = vmatprep.subr.mxu0 0.0
        %5636 = vmatpush1.msra.mxu0 0.0
        %5637 = vmatprep.subr.mxu0 0.0
        %5638 = vmatpush1.msra.mxu0 0.0
        %5639 = vmatprep.subr.mxu0 0.0
        %5640 = vmatpush1.msra.mxu0 0.0
        %5641 = vmatprep.subr.mxu0 0.0
        %5642 = vmatpush1.msra.mxu0 %v5248
        %5643 = vmatprep.subr.mxu0 0.0
        %5644 = vmatpush1.msra.mxu0 %v5247
        %5645 = vmatprep.subr.mxu0 0.0
        %5646 = vmatpush2.msra.mxu0 0.0
        %5647 = vmatprep.subr.mxu0 0.0
        %5648 = vmatpush2.msra.mxu0 0.0
        %5649 = vmatprep.subr.mxu0 0.0
        %5650 = vmatpush2.msra.mxu0 0.0
        %5651 = vmatprep.subr.mxu0 0.0
        %5652 = vmatpush2.msra.mxu0 0.0
        %5653 = vmatprep.subr.mxu0 0.0
        %5654 = vmatpush2.msra.mxu0 0.0
        %5655 = vmatprep.subr.mxu0 0.0
        %5656 = vmatpush2.msra.mxu0 0.0
        %5657 = vmatprep.subr.mxu0 0.0
        %5658 = vmatpush2.msra.mxu0 0.0
        %5659 = vmatprep.subr.mxu0 0.0
        %5660 = vmatpush2.msra.mxu0 0.0
        %5661 = vmatprep.subr.mxu0 0.0
        %5662 = vmatpush2.msra.mxu0 0.0
        %5663 = vmatprep.subr.mxu0 0.0
        %5664 = vmatpush2.msra.mxu0 0.0
        %5665 = vmatprep.subr.mxu0 0.0
        %5666 = vmatpush2.msra.mxu0 0.0
        %5667 = vmatprep.subr.mxu0 0.0
        %5668 = vmatpush2.msra.mxu0 0.0
        %5669 = vmatprep.subr.mxu0 0.0
        %5670 = vmatpush2.msra.mxu0 0.0
        %5671 = vmatprep.subr.mxu0 0.0
        %5672 = vmatpush2.msra.mxu0 0.0
        %5673 = vmatprep.subr.mxu0 0.0
        %5674 = vmatpush2.msra.mxu0 0.0
        %5675 = vmatprep.subr.mxu0 0.0
        %5676 = vmatpush2.msra.mxu0 0.0
        %5677 = vmatprep.mubr.f32.mxu0 0.0
        %5678 = vmatmul.mubr.f32.gmra.mxu0 %v5469
        %v5679 = vpop.f32.mrf.mxu0
        %v5680 = vadd.f32 0.0, %v5679
        %v5681 = vpop.f32.mrf.mxu0
        %5682 = vdwg.mxu0
        %v5683 = vmax.f32 %v5612, %v5680
        %s5684 = scalar_lea.vmem %s5, 16
        %v5685 = vld [vmem:[%s5684] sm:$0x1f]
        %v5687 = vsel %vm5250, %v5685, 0
        %5689 = vmatprep.subr.mxu0 0.0
        %5690 = vmatpush1.msra.mxu0 0.0
        %5691 = vmatprep.subr.mxu0 0.0
        %5692 = vmatpush1.msra.mxu0 0.0
        %5693 = vmatprep.subr.mxu0 0.0
        %5694 = vmatpush1.msra.mxu0 0.0
        %5695 = vmatprep.subr.mxu0 0.0
        %5696 = vmatpush1.msra.mxu0 0.0
        %5697 = vmatprep.subr.mxu0 0.0
        %5698 = vmatpush1.msra.mxu0 0.0
        %5699 = vmatprep.subr.mxu0 0.0
        %5700 = vmatpush1.msra.mxu0 0.0
        %5701 = vmatprep.subr.mxu0 0.0
        %5702 = vmatpush1.msra.mxu0 0.0
        %5703 = vmatprep.subr.mxu0 0.0
        %5704 = vmatpush1.msra.mxu0 0.0
        %5705 = vmatprep.subr.mxu0 0.0
        %5706 = vmatpush1.msra.mxu0 0.0
        %5707 = vmatprep.subr.mxu0 0.0
        %5708 = vmatpush1.msra.mxu0 0.0
        %5709 = vmatprep.subr.mxu0 0.0
        %5710 = vmatpush1.msra.mxu0 0.0
        %5711 = vmatprep.subr.mxu0 0.0
        %5712 = vmatpush1.msra.mxu0 0.0
        %5713 = vmatprep.subr.mxu0 0.0
        %5714 = vmatpush1.msra.mxu0 0.0
        %5715 = vmatprep.subr.mxu0 0.0
        %5716 = vmatpush1.msra.mxu0 0.0
        %5717 = vmatprep.subr.mxu0 0.0
        %5718 = vmatpush1.msra.mxu0 %v4226
        %5719 = vmatprep.subr.mxu0 0.0
        %5720 = vmatpush1.msra.mxu0 %v4225
        %5721 = vmatprep.subr.mxu0 0.0
        %5722 = vmatpush2.msra.mxu0 0.0
        %5723 = vmatprep.subr.mxu0 0.0
        %5724 = vmatpush2.msra.mxu0 0.0
        %5725 = vmatprep.subr.mxu0 0.0
        %5726 = vmatpush2.msra.mxu0 0.0
        %5727 = vmatprep.subr.mxu0 0.0
        %5728 = vmatpush2.msra.mxu0 0.0
        %5729 = vmatprep.subr.mxu0 0.0
        %5730 = vmatpush2.msra.mxu0 0.0
        %5731 = vmatprep.subr.mxu0 0.0
        %5732 = vmatpush2.msra.mxu0 0.0
        %5733 = vmatprep.subr.mxu0 0.0
        %5734 = vmatpush2.msra.mxu0 0.0
        %5735 = vmatprep.subr.mxu0 0.0
        %5736 = vmatpush2.msra.mxu0 0.0
        %5737 = vmatprep.subr.mxu0 0.0
        %5738 = vmatpush2.msra.mxu0 0.0
        %5739 = vmatprep.subr.mxu0 0.0
        %5740 = vmatpush2.msra.mxu0 0.0
        %5741 = vmatprep.subr.mxu0 0.0
        %5742 = vmatpush2.msra.mxu0 0.0
        %5743 = vmatprep.subr.mxu0 0.0
        %5744 = vmatpush2.msra.mxu0 0.0
        %5745 = vmatprep.subr.mxu0 0.0
        %5746 = vmatpush2.msra.mxu0 0.0
        %5747 = vmatprep.subr.mxu0 0.0
        %5748 = vmatpush2.msra.mxu0 0.0
        %5749 = vmatprep.subr.mxu0 0.0
        %5750 = vmatpush2.msra.mxu0 0.0
        %5751 = vmatprep.subr.mxu0 0.0
        %5752 = vmatpush2.msra.mxu0 0.0
        %5753 = vmatprep.mubr.f32.mxu0 0.0
        %5754 = vmatmul.mubr.f32.gmra.mxu0 %v5687
        %v5755 = vpop.f32.mrf.mxu0
        %v5756 = vadd.f32 0.0, %v5755
        %v5757 = vpop.f32.mrf.mxu0
        %5758 = vdwg.mxu0
        %v5759 = vmax.f32 %v5683, %v5756
        %5760 = vmatprep.subr.mxu0 0.0
        %5761 = vmatpush1.msra.mxu0 0.0
        %5762 = vmatprep.subr.mxu0 0.0
        %5763 = vmatpush1.msra.mxu0 0.0
        %5764 = vmatprep.subr.mxu0 0.0
        %5765 = vmatpush1.msra.mxu0 0.0
        %5766 = vmatprep.subr.mxu0 0.0
        %5767 = vmatpush1.msra.mxu0 0.0
        %5768 = vmatprep.subr.mxu0 0.0
        %5769 = vmatpush1.msra.mxu0 0.0
        %5770 = vmatprep.subr.mxu0 0.0
        %5771 = vmatpush1.msra.mxu0 0.0
        %5772 = vmatprep.subr.mxu0 0.0
        %5773 = vmatpush1.msra.mxu0 0.0
        %5774 = vmatprep.subr.mxu0 0.0
        %5775 = vmatpush1.msra.mxu0 0.0
        %5776 = vmatprep.subr.mxu0 0.0
        %5777 = vmatpush1.msra.mxu0 0.0
        %5778 = vmatprep.subr.mxu0 0.0
        %5779 = vmatpush1.msra.mxu0 0.0
        %5780 = vmatprep.subr.mxu0 0.0
        %5781 = vmatpush1.msra.mxu0 0.0
        %5782 = vmatprep.subr.mxu0 0.0
        %5783 = vmatpush1.msra.mxu0 0.0
        %5784 = vmatprep.subr.mxu0 0.0
        %5785 = vmatpush1.msra.mxu0 0.0
        %5786 = vmatprep.subr.mxu0 0.0
        %5787 = vmatpush1.msra.mxu0 0.0
        %5788 = vmatprep.subr.mxu0 0.0
        %5789 = vmatpush1.msra.mxu0 %v4737
        %5790 = vmatprep.subr.mxu0 0.0
        %5791 = vmatpush1.msra.mxu0 %v4736
        %5792 = vmatprep.subr.mxu0 0.0
        %5793 = vmatpush2.msra.mxu0 0.0
        %5794 = vmatprep.subr.mxu0 0.0
        %5795 = vmatpush2.msra.mxu0 0.0
        %5796 = vmatprep.subr.mxu0 0.0
        %5797 = vmatpush2.msra.mxu0 0.0
        %5798 = vmatprep.subr.mxu0 0.0
        %5799 = vmatpush2.msra.mxu0 0.0
        %5800 = vmatprep.subr.mxu0 0.0
        %5801 = vmatpush2.msra.mxu0 0.0
        %5802 = vmatprep.subr.mxu0 0.0
        %5803 = vmatpush2.msra.mxu0 0.0
        %5804 = vmatprep.subr.mxu0 0.0
        %5805 = vmatpush2.msra.mxu0 0.0
        %5806 = vmatprep.subr.mxu0 0.0
        %5807 = vmatpush2.msra.mxu0 0.0
        %5808 = vmatprep.subr.mxu0 0.0
        %5809 = vmatpush2.msra.mxu0 0.0
        %5810 = vmatprep.subr.mxu0 0.0
        %5811 = vmatpush2.msra.mxu0 0.0
        %5812 = vmatprep.subr.mxu0 0.0
        %5813 = vmatpush2.msra.mxu0 0.0
        %5814 = vmatprep.subr.mxu0 0.0
        %5815 = vmatpush2.msra.mxu0 0.0
        %5816 = vmatprep.subr.mxu0 0.0
        %5817 = vmatpush2.msra.mxu0 0.0
        %5818 = vmatprep.subr.mxu0 0.0
        %5819 = vmatpush2.msra.mxu0 0.0
        %5820 = vmatprep.subr.mxu0 0.0
        %5821 = vmatpush2.msra.mxu0 0.0
        %5822 = vmatprep.subr.mxu0 0.0
        %5823 = vmatpush2.msra.mxu0 0.0
        %5824 = vmatprep.mubr.f32.mxu0 0.0
        %5825 = vmatmul.mubr.f32.gmra.mxu0 %v5687
        %v5826 = vpop.f32.mrf.mxu0
        %v5827 = vadd.f32 0.0, %v5826
        %v5828 = vpop.f32.mrf.mxu0
        %5829 = vdwg.mxu0
        %v5830 = vmax.f32 %v5759, %v5827
        %5831 = vmatprep.subr.mxu0 0.0
        %5832 = vmatpush1.msra.mxu0 0.0
        %5833 = vmatprep.subr.mxu0 0.0
        %5834 = vmatpush1.msra.mxu0 0.0
        %5835 = vmatprep.subr.mxu0 0.0
        %5836 = vmatpush1.msra.mxu0 0.0
        %5837 = vmatprep.subr.mxu0 0.0
        %5838 = vmatpush1.msra.mxu0 0.0
        %5839 = vmatprep.subr.mxu0 0.0
        %5840 = vmatpush1.msra.mxu0 0.0
        %5841 = vmatprep.subr.mxu0 0.0
        %5842 = vmatpush1.msra.mxu0 0.0
        %5843 = vmatprep.subr.mxu0 0.0
        %5844 = vmatpush1.msra.mxu0 0.0
        %5845 = vmatprep.subr.mxu0 0.0
        %5846 = vmatpush1.msra.mxu0 0.0
        %5847 = vmatprep.subr.mxu0 0.0
        %5848 = vmatpush1.msra.mxu0 0.0
        %5849 = vmatprep.subr.mxu0 0.0
        %5850 = vmatpush1.msra.mxu0 0.0
        %5851 = vmatprep.subr.mxu0 0.0
        %5852 = vmatpush1.msra.mxu0 0.0
        %5853 = vmatprep.subr.mxu0 0.0
        %5854 = vmatpush1.msra.mxu0 0.0
        %5855 = vmatprep.subr.mxu0 0.0
        %5856 = vmatpush1.msra.mxu0 0.0
        %5857 = vmatprep.subr.mxu0 0.0
        %5858 = vmatpush1.msra.mxu0 0.0
        %5859 = vmatprep.subr.mxu0 0.0
        %5860 = vmatpush1.msra.mxu0 %v5248
        %5861 = vmatprep.subr.mxu0 0.0
        %5862 = vmatpush1.msra.mxu0 %v5247
        %5863 = vmatprep.subr.mxu0 0.0
        %5864 = vmatpush2.msra.mxu0 0.0
        %5865 = vmatprep.subr.mxu0 0.0
        %5866 = vmatpush2.msra.mxu0 0.0
        %5867 = vmatprep.subr.mxu0 0.0
        %5868 = vmatpush2.msra.mxu0 0.0
        %5869 = vmatprep.subr.mxu0 0.0
        %5870 = vmatpush2.msra.mxu0 0.0
        %5871 = vmatprep.subr.mxu0 0.0
        %5872 = vmatpush2.msra.mxu0 0.0
        %5873 = vmatprep.subr.mxu0 0.0
        %5874 = vmatpush2.msra.mxu0 0.0
        %5875 = vmatprep.subr.mxu0 0.0
        %5876 = vmatpush2.msra.mxu0 0.0
        %5877 = vmatprep.subr.mxu0 0.0
        %5878 = vmatpush2.msra.mxu0 0.0
        %5879 = vmatprep.subr.mxu0 0.0
        %5880 = vmatpush2.msra.mxu0 0.0
        %5881 = vmatprep.subr.mxu0 0.0
        %5882 = vmatpush2.msra.mxu0 0.0
        %5883 = vmatprep.subr.mxu0 0.0
        %5884 = vmatpush2.msra.mxu0 0.0
        %5885 = vmatprep.subr.mxu0 0.0
        %5886 = vmatpush2.msra.mxu0 0.0
        %5887 = vmatprep.subr.mxu0 0.0
        %5888 = vmatpush2.msra.mxu0 0.0
        %5889 = vmatprep.subr.mxu0 0.0
        %5890 = vmatpush2.msra.mxu0 0.0
        %5891 = vmatprep.subr.mxu0 0.0
        %5892 = vmatpush2.msra.mxu0 0.0
        %5893 = vmatprep.subr.mxu0 0.0
        %5894 = vmatpush2.msra.mxu0 0.0
        %5895 = vmatprep.mubr.f32.mxu0 0.0
        %5896 = vmatmul.mubr.f32.gmra.mxu0 %v5687
        %v5897 = vpop.f32.mrf.mxu0
        %v5898 = vadd.f32 0.0, %v5897
        %v5899 = vpop.f32.mrf.mxu0
        %5900 = vdwg.mxu0
        %v5901 = vmax.f32 %v5830, %v5898
        %v5902 = vld [vmem:[#allocation11] sm:$0x1]
        %v5904 = vlaneseq
        %v5905 = vshrl.u32 %v5904, 7
        %v5906 = vsub.s32 0, %v5905
        %v5907 = vrot.slane %v5902, %v5906
        %v5909 = vadd.f32 %v5901, %v5907
        %v5910 = vmax.f32 %v5909, 0.0
        %v5911 = vld [vmem:[#allocation13] sm:$0xff]
        %v5912 = vld [vmem:[#allocation13 + $0x8] sm:$0xff]
        %v5913 = vld [vmem:[#allocation13 + $0x10] sm:$0xff]
        %v5914 = vld [vmem:[#allocation13 + $0x18] sm:$0xff]
        %v5915 = vld [vmem:[#allocation13 + $0x20] sm:$0xff]
        %v5916 = vld [vmem:[#allocation13 + $0x28] sm:$0xff]
        %v5917 = vld [vmem:[#allocation13 + $0x30] sm:$0xff]
        %v5918 = vld [vmem:[#allocation13 + $0x38] sm:$0xff]
        %v5919 = vld [vmem:[#allocation13 + $0x40] sm:$0xff]
        %v5920 = vld [vmem:[#allocation13 + $0x48] sm:$0xff]
        %v5921 = vld [vmem:[#allocation13 + $0x50] sm:$0xff]
        %v5922 = vld [vmem:[#allocation13 + $0x58] sm:$0xff]
        %v5923 = vld [vmem:[#allocation13 + $0x60] sm:$0xf]
        %s5924 = scalar_lea.vmem [#allocation13], 104
        %v5925 = vld [vmem:[%s5924] sm:$0xff]
        %v5926 = vld [vmem:[%s5924 + $0x8] sm:$0xff]
        %v5927 = vld [vmem:[%s5924 + $0x10] sm:$0xff]
        %v5928 = vld [vmem:[%s5924 + $0x18] sm:$0xff]
        %v5929 = vld [vmem:[%s5924 + $0x20] sm:$0xff]
        %v5930 = vld [vmem:[%s5924 + $0x28] sm:$0xff]
        %v5931 = vld [vmem:[%s5924 + $0x30] sm:$0xff]
        %v5932 = vld [vmem:[%s5924 + $0x38] sm:$0xff]
        %v5933 = vld [vmem:[%s5924 + $0x40] sm:$0xff]
        %v5934 = vld [vmem:[%s5924 + $0x48] sm:$0xff]
        %v5935 = vld [vmem:[%s5924 + $0x50] sm:$0xff]
        %v5936 = vld [vmem:[%s5924 + $0x58] sm:$0xff]
        %v5937 = vld [vmem:[%s5924 + $0x60] sm:$0xf]
        %v5939 = vrot.slane %v5910, 1
        %vm5940 = vcmask 818176
        %v5941 = vsel %vm5940, %v5939, 0
        %v5944 = vsel %vm1209, %v5937, 0
        %5946 = vmatprep.subr.mxu0 0.0
        %5947 = vmatpush1.msra.mxu0 0.0
        %5948 = vmatprep.subr.mxu0 0.0
        %5949 = vmatpush1.msra.mxu0 0.0
        %5950 = vmatprep.subr.mxu0 0.0
        %5951 = vmatpush1.msra.mxu0 0.0
        %5952 = vmatprep.subr.mxu0 0.0
        %5953 = vmatpush1.msra.mxu0 %v5944
        %5954 = vmatprep.subr.mxu0 0.0
        %5955 = vmatpush1.msra.mxu0 %v5936
        %5956 = vmatprep.subr.mxu0 0.0
        %5957 = vmatpush1.msra.mxu0 %v5935
        %5958 = vmatprep.subr.mxu0 0.0
        %5959 = vmatpush1.msra.mxu0 %v5934
        %5960 = vmatprep.subr.mxu0 0.0
        %5961 = vmatpush1.msra.mxu0 %v5933
        %5962 = vmatprep.subr.mxu0 0.0
        %5963 = vmatpush1.msra.mxu0 %v5932
        %5964 = vmatprep.subr.mxu0 0.0
        %5965 = vmatpush1.msra.mxu0 %v5931
        %5966 = vmatprep.subr.mxu0 0.0
        %5967 = vmatpush1.msra.mxu0 %v5930
        %5968 = vmatprep.subr.mxu0 0.0
        %5969 = vmatpush1.msra.mxu0 %v5929
        %5970 = vmatprep.subr.mxu0 0.0
        %5971 = vmatpush1.msra.mxu0 %v5928
        %5972 = vmatprep.subr.mxu0 0.0
        %5973 = vmatpush1.msra.mxu0 %v5927
        %5974 = vmatprep.subr.mxu0 0.0
        %5975 = vmatpush1.msra.mxu0 %v5926
        %5976 = vmatprep.subr.mxu0 0.0
        %5977 = vmatpush1.msra.mxu0 %v5925
        %5978 = vmatprep.subr.mxu0 0.0
        %5979 = vmatpush2.msra.mxu0 0.0
        %5980 = vmatprep.subr.mxu0 0.0
        %5981 = vmatpush2.msra.mxu0 0.0
        %5982 = vmatprep.subr.mxu0 0.0
        %5983 = vmatpush2.msra.mxu0 0.0
        %5984 = vmatprep.subr.mxu0 0.0
        %5985 = vmatpush2.msra.mxu0 0.0
        %5986 = vmatprep.subr.mxu0 0.0
        %5987 = vmatpush2.msra.mxu0 0.0
        %5988 = vmatprep.subr.mxu0 0.0
        %5989 = vmatpush2.msra.mxu0 0.0
        %5990 = vmatprep.subr.mxu0 0.0
        %5991 = vmatpush2.msra.mxu0 0.0
        %5992 = vmatprep.subr.mxu0 0.0
        %5993 = vmatpush2.msra.mxu0 0.0
        %5994 = vmatprep.subr.mxu0 0.0
        %5995 = vmatpush2.msra.mxu0 0.0
        %5996 = vmatprep.subr.mxu0 0.0
        %5997 = vmatpush2.msra.mxu0 0.0
        %5998 = vmatprep.subr.mxu0 0.0
        %5999 = vmatpush2.msra.mxu0 0.0
        %6000 = vmatprep.subr.mxu0 0.0
        %6001 = vmatpush2.msra.mxu0 0.0
        %6002 = vmatprep.subr.mxu0 0.0
        %6003 = vmatpush2.msra.mxu0 0.0
        %6004 = vmatprep.subr.mxu0 0.0
        %6005 = vmatpush2.msra.mxu0 0.0
        %6006 = vmatprep.subr.mxu0 0.0
        %6007 = vmatpush2.msra.mxu0 0.0
        %6008 = vmatprep.subr.mxu0 0.0
        %6009 = vmatpush2.msra.mxu0 0.0
        %6010 = vmatprep.mubr.f32.mxu0 0.0
        %6011 = vmatmul.mubr.f32.gmra.mxu0 %v5941
        %v6012 = vpop.f32.mrf.mxu0
        %v6013 = vadd.f32 0.0, %v6012
        %v6014 = vpop.f32.mrf.mxu0
        %6015 = vdwg.mxu0
        %v6016 = vsel %vm5940, %v5910, 0
        %v6019 = vsel %vm1209, %v5923, 0
        %6021 = vmatprep.subr.mxu0 0.0
        %6022 = vmatpush1.msra.mxu0 0.0
        %6023 = vmatprep.subr.mxu0 0.0
        %6024 = vmatpush1.msra.mxu0 0.0
        %6025 = vmatprep.subr.mxu0 0.0
        %6026 = vmatpush1.msra.mxu0 0.0
        %6027 = vmatprep.subr.mxu0 0.0
        %6028 = vmatpush1.msra.mxu0 %v6019
        %6029 = vmatprep.subr.mxu0 0.0
        %6030 = vmatpush1.msra.mxu0 %v5922
        %6031 = vmatprep.subr.mxu0 0.0
        %6032 = vmatpush1.msra.mxu0 %v5921
        %6033 = vmatprep.subr.mxu0 0.0
        %6034 = vmatpush1.msra.mxu0 %v5920
        %6035 = vmatprep.subr.mxu0 0.0
        %6036 = vmatpush1.msra.mxu0 %v5919
        %6037 = vmatprep.subr.mxu0 0.0
        %6038 = vmatpush1.msra.mxu0 %v5918
        %6039 = vmatprep.subr.mxu0 0.0
        %6040 = vmatpush1.msra.mxu0 %v5917
        %6041 = vmatprep.subr.mxu0 0.0
        %6042 = vmatpush1.msra.mxu0 %v5916
        %6043 = vmatprep.subr.mxu0 0.0
        %6044 = vmatpush1.msra.mxu0 %v5915
        %6045 = vmatprep.subr.mxu0 0.0
        %6046 = vmatpush1.msra.mxu0 %v5914
        %6047 = vmatprep.subr.mxu0 0.0
        %6048 = vmatpush1.msra.mxu0 %v5913
        %6049 = vmatprep.subr.mxu0 0.0
        %6050 = vmatpush1.msra.mxu0 %v5912
        %6051 = vmatprep.subr.mxu0 0.0
        %6052 = vmatpush1.msra.mxu0 %v5911
        %6053 = vmatprep.subr.mxu0 0.0
        %6054 = vmatpush2.msra.mxu0 0.0
        %6055 = vmatprep.subr.mxu0 0.0
        %6056 = vmatpush2.msra.mxu0 0.0
        %6057 = vmatprep.subr.mxu0 0.0
        %6058 = vmatpush2.msra.mxu0 0.0
        %6059 = vmatprep.subr.mxu0 0.0
        %6060 = vmatpush2.msra.mxu0 0.0
        %6061 = vmatprep.subr.mxu0 0.0
        %6062 = vmatpush2.msra.mxu0 0.0
        %6063 = vmatprep.subr.mxu0 0.0
        %6064 = vmatpush2.msra.mxu0 0.0
        %6065 = vmatprep.subr.mxu0 0.0
        %6066 = vmatpush2.msra.mxu0 0.0
        %6067 = vmatprep.subr.mxu0 0.0
        %6068 = vmatpush2.msra.mxu0 0.0
        %6069 = vmatprep.subr.mxu0 0.0
        %6070 = vmatpush2.msra.mxu0 0.0
        %6071 = vmatprep.subr.mxu0 0.0
        %6072 = vmatpush2.msra.mxu0 0.0
        %6073 = vmatprep.subr.mxu0 0.0
        %6074 = vmatpush2.msra.mxu0 0.0
        %6075 = vmatprep.subr.mxu0 0.0
        %6076 = vmatpush2.msra.mxu0 0.0
        %6077 = vmatprep.subr.mxu0 0.0
        %6078 = vmatpush2.msra.mxu0 0.0
        %6079 = vmatprep.subr.mxu0 0.0
        %6080 = vmatpush2.msra.mxu0 0.0
        %6081 = vmatprep.subr.mxu0 0.0
        %6082 = vmatpush2.msra.mxu0 0.0
        %6083 = vmatprep.subr.mxu0 0.0
        %6084 = vmatpush2.msra.mxu0 0.0
        %6085 = vmatprep.mubr.f32.mxu0 0.0
        %6086 = vmatmul.mubr.f32.gmra.mxu0 %v6016
        %v6087 = vpop.f32.mrf.mxu0
        %v6088 = vadd.f32 %v6013, %v6087
        %v6089 = vpop.f32.mrf.mxu0
        %6090 = vdwg.mxu0
        %s6091 = scalar_lea.vmem [#allocation13], 208
        %v6092 = vld [vmem:[%s6091] sm:$0xff]
        %v6093 = vld [vmem:[%s6091 + $0x8] sm:$0xff]
        %v6094 = vld [vmem:[%s6091 + $0x10] sm:$0xff]
        %v6095 = vld [vmem:[%s6091 + $0x18] sm:$0xff]
        %v6096 = vld [vmem:[%s6091 + $0x20] sm:$0xff]
        %v6097 = vld [vmem:[%s6091 + $0x28] sm:$0xff]
        %v6098 = vld [vmem:[%s6091 + $0x30] sm:$0xff]
        %v6099 = vld [vmem:[%s6091 + $0x38] sm:$0xff]
        %v6100 = vld [vmem:[%s6091 + $0x40] sm:$0xff]
        %v6101 = vld [vmem:[%s6091 + $0x48] sm:$0xff]
        %v6102 = vld [vmem:[%s6091 + $0x50] sm:$0xff]
        %v6103 = vld [vmem:[%s6091 + $0x58] sm:$0xff]
        %v6104 = vld [vmem:[%s6091 + $0x60] sm:$0xf]
        %v6105 = vrot.slane %v5910, 2
        %v6106 = vsel %vm5940, %v6105, 0
        %v6109 = vsel %vm1209, %v6104, 0
        %6111 = vmatprep.subr.mxu0 0.0
        %6112 = vmatpush1.msra.mxu0 0.0
        %6113 = vmatprep.subr.mxu0 0.0
        %6114 = vmatpush1.msra.mxu0 0.0
        %6115 = vmatprep.subr.mxu0 0.0
        %6116 = vmatpush1.msra.mxu0 0.0
        %6117 = vmatprep.subr.mxu0 0.0
        %6118 = vmatpush1.msra.mxu0 %v6109
        %6119 = vmatprep.subr.mxu0 0.0
        %6120 = vmatpush1.msra.mxu0 %v6103
        %6121 = vmatprep.subr.mxu0 0.0
        %6122 = vmatpush1.msra.mxu0 %v6102
        %6123 = vmatprep.subr.mxu0 0.0
        %6124 = vmatpush1.msra.mxu0 %v6101
        %6125 = vmatprep.subr.mxu0 0.0
        %6126 = vmatpush1.msra.mxu0 %v6100
        %6127 = vmatprep.subr.mxu0 0.0
        %6128 = vmatpush1.msra.mxu0 %v6099
        %6129 = vmatprep.subr.mxu0 0.0
        %6130 = vmatpush1.msra.mxu0 %v6098
        %6131 = vmatprep.subr.mxu0 0.0
        %6132 = vmatpush1.msra.mxu0 %v6097
        %6133 = vmatprep.subr.mxu0 0.0
        %6134 = vmatpush1.msra.mxu0 %v6096
        %6135 = vmatprep.subr.mxu0 0.0
        %6136 = vmatpush1.msra.mxu0 %v6095
        %6137 = vmatprep.subr.mxu0 0.0
        %6138 = vmatpush1.msra.mxu0 %v6094
        %6139 = vmatprep.subr.mxu0 0.0
        %6140 = vmatpush1.msra.mxu0 %v6093
        %6141 = vmatprep.subr.mxu0 0.0
        %6142 = vmatpush1.msra.mxu0 %v6092
        %6143 = vmatprep.subr.mxu0 0.0
        %6144 = vmatpush2.msra.mxu0 0.0
        %6145 = vmatprep.subr.mxu0 0.0
        %6146 = vmatpush2.msra.mxu0 0.0
        %6147 = vmatprep.subr.mxu0 0.0
        %6148 = vmatpush2.msra.mxu0 0.0
        %6149 = vmatprep.subr.mxu0 0.0
        %6150 = vmatpush2.msra.mxu0 0.0
        %6151 = vmatprep.subr.mxu0 0.0
        %6152 = vmatpush2.msra.mxu0 0.0
        %6153 = vmatprep.subr.mxu0 0.0
        %6154 = vmatpush2.msra.mxu0 0.0
        %6155 = vmatprep.subr.mxu0 0.0
        %6156 = vmatpush2.msra.mxu0 0.0
        %6157 = vmatprep.subr.mxu0 0.0
        %6158 = vmatpush2.msra.mxu0 0.0
        %6159 = vmatprep.subr.mxu0 0.0
        %6160 = vmatpush2.msra.mxu0 0.0
        %6161 = vmatprep.subr.mxu0 0.0
        %6162 = vmatpush2.msra.mxu0 0.0
        %6163 = vmatprep.subr.mxu0 0.0
        %6164 = vmatpush2.msra.mxu0 0.0
        %6165 = vmatprep.subr.mxu0 0.0
        %6166 = vmatpush2.msra.mxu0 0.0
        %6167 = vmatprep.subr.mxu0 0.0
        %6168 = vmatpush2.msra.mxu0 0.0
        %6169 = vmatprep.subr.mxu0 0.0
        %6170 = vmatpush2.msra.mxu0 0.0
        %6171 = vmatprep.subr.mxu0 0.0
        %6172 = vmatpush2.msra.mxu0 0.0
        %6173 = vmatprep.subr.mxu0 0.0
        %6174 = vmatpush2.msra.mxu0 0.0
        %6175 = vmatprep.mubr.f32.mxu0 0.0
        %6176 = vmatmul.mubr.f32.gmra.mxu0 %v6106
        %v6177 = vpop.f32.mrf.mxu0
        %v6178 = vadd.f32 0.0, %v6177
        %v6179 = vpop.f32.mrf.mxu0
        %6180 = vdwg.mxu0
        %v6181 = vadd.f32 %v6088, %v6178
        %s6182 = scalar_lea.vmem [#allocation13], 312
        %v6183 = vld [vmem:[%s6182] sm:$0xff]
        %v6184 = vld [vmem:[%s6182 + $0x8] sm:$0xff]
        %v6185 = vld [vmem:[%s6182 + $0x10] sm:$0xff]
        %v6186 = vld [vmem:[%s6182 + $0x18] sm:$0xff]
        %v6187 = vld [vmem:[%s6182 + $0x20] sm:$0xff]
        %v6188 = vld [vmem:[%s6182 + $0x28] sm:$0xff]
        %v6189 = vld [vmem:[%s6182 + $0x30] sm:$0xff]
        %v6190 = vld [vmem:[%s6182 + $0x38] sm:$0xff]
        %v6191 = vld [vmem:[%s6182 + $0x40] sm:$0xff]
        %v6192 = vld [vmem:[%s6182 + $0x48] sm:$0xff]
        %v6193 = vld [vmem:[%s6182 + $0x50] sm:$0xff]
        %v6194 = vld [vmem:[%s6182 + $0x58] sm:$0xff]
        %v6195 = vld [vmem:[%s6182 + $0x60] sm:$0xf]
        %v6196 = vrot.slane %v5910, 3
        %v6197 = vsel %vm5940, %v6196, 0
        %v6200 = vsel %vm1209, %v6195, 0
        %6202 = vmatprep.subr.mxu0 0.0
        %6203 = vmatpush1.msra.mxu0 0.0
        %6204 = vmatprep.subr.mxu0 0.0
        %6205 = vmatpush1.msra.mxu0 0.0
        %6206 = vmatprep.subr.mxu0 0.0
        %6207 = vmatpush1.msra.mxu0 0.0
        %6208 = vmatprep.subr.mxu0 0.0
        %6209 = vmatpush1.msra.mxu0 %v6200
        %6210 = vmatprep.subr.mxu0 0.0
        %6211 = vmatpush1.msra.mxu0 %v6194
        %6212 = vmatprep.subr.mxu0 0.0
        %6213 = vmatpush1.msra.mxu0 %v6193
        %6214 = vmatprep.subr.mxu0 0.0
        %6215 = vmatpush1.msra.mxu0 %v6192
        %6216 = vmatprep.subr.mxu0 0.0
        %6217 = vmatpush1.msra.mxu0 %v6191
        %6218 = vmatprep.subr.mxu0 0.0
        %6219 = vmatpush1.msra.mxu0 %v6190
        %6220 = vmatprep.subr.mxu0 0.0
        %6221 = vmatpush1.msra.mxu0 %v6189
        %6222 = vmatprep.subr.mxu0 0.0
        %6223 = vmatpush1.msra.mxu0 %v6188
        %6224 = vmatprep.subr.mxu0 0.0
        %6225 = vmatpush1.msra.mxu0 %v6187
        %6226 = vmatprep.subr.mxu0 0.0
        %6227 = vmatpush1.msra.mxu0 %v6186
        %6228 = vmatprep.subr.mxu0 0.0
        %6229 = vmatpush1.msra.mxu0 %v6185
        %6230 = vmatprep.subr.mxu0 0.0
        %6231 = vmatpush1.msra.mxu0 %v6184
        %6232 = vmatprep.subr.mxu0 0.0
        %6233 = vmatpush1.msra.mxu0 %v6183
        %6234 = vmatprep.subr.mxu0 0.0
        %6235 = vmatpush2.msra.mxu0 0.0
        %6236 = vmatprep.subr.mxu0 0.0
        %6237 = vmatpush2.msra.mxu0 0.0
        %6238 = vmatprep.subr.mxu0 0.0
        %6239 = vmatpush2.msra.mxu0 0.0
        %6240 = vmatprep.subr.mxu0 0.0
        %6241 = vmatpush2.msra.mxu0 0.0
        %6242 = vmatprep.subr.mxu0 0.0
        %6243 = vmatpush2.msra.mxu0 0.0
        %6244 = vmatprep.subr.mxu0 0.0
        %6245 = vmatpush2.msra.mxu0 0.0
        %6246 = vmatprep.subr.mxu0 0.0
        %6247 = vmatpush2.msra.mxu0 0.0
        %6248 = vmatprep.subr.mxu0 0.0
        %6249 = vmatpush2.msra.mxu0 0.0
        %6250 = vmatprep.subr.mxu0 0.0
        %6251 = vmatpush2.msra.mxu0 0.0
        %6252 = vmatprep.subr.mxu0 0.0
        %6253 = vmatpush2.msra.mxu0 0.0
        %6254 = vmatprep.subr.mxu0 0.0
        %6255 = vmatpush2.msra.mxu0 0.0
        %6256 = vmatprep.subr.mxu0 0.0
        %6257 = vmatpush2.msra.mxu0 0.0
        %6258 = vmatprep.subr.mxu0 0.0
        %6259 = vmatpush2.msra.mxu0 0.0
        %6260 = vmatprep.subr.mxu0 0.0
        %6261 = vmatpush2.msra.mxu0 0.0
        %6262 = vmatprep.subr.mxu0 0.0
        %6263 = vmatpush2.msra.mxu0 0.0
        %6264 = vmatprep.subr.mxu0 0.0
        %6265 = vmatpush2.msra.mxu0 0.0
        %6266 = vmatprep.mubr.f32.mxu0 0.0
        %6267 = vmatmul.mubr.f32.gmra.mxu0 %v6197
        %v6268 = vpop.f32.mrf.mxu0
        %v6269 = vadd.f32 0.0, %v6268
        %v6270 = vpop.f32.mrf.mxu0
        %6271 = vdwg.mxu0
        %v6272 = vadd.f32 %v6181, %v6269
        %s6273 = scalar_lea.vmem [#allocation13], 416
        %v6274 = vld [vmem:[%s6273] sm:$0xff]
        %v6275 = vld [vmem:[%s6273 + $0x8] sm:$0xff]
        %v6276 = vld [vmem:[%s6273 + $0x10] sm:$0xff]
        %v6277 = vld [vmem:[%s6273 + $0x18] sm:$0xff]
        %v6278 = vld [vmem:[%s6273 + $0x20] sm:$0xff]
        %v6279 = vld [vmem:[%s6273 + $0x28] sm:$0xff]
        %v6280 = vld [vmem:[%s6273 + $0x30] sm:$0xff]
        %v6281 = vld [vmem:[%s6273 + $0x38] sm:$0xff]
        %v6282 = vld [vmem:[%s6273 + $0x40] sm:$0xff]
        %v6283 = vld [vmem:[%s6273 + $0x48] sm:$0xff]
        %v6284 = vld [vmem:[%s6273 + $0x50] sm:$0xff]
        %v6285 = vld [vmem:[%s6273 + $0x58] sm:$0xff]
        %v6286 = vld [vmem:[%s6273 + $0x60] sm:$0xf]
        %v6287 = vrot.slane %v5910, 4
        %v6288 = vsel %vm5940, %v6287, 0
        %v6291 = vsel %vm1209, %v6286, 0
        %6293 = vmatprep.subr.mxu0 0.0
        %6294 = vmatpush1.msra.mxu0 0.0
        %6295 = vmatprep.subr.mxu0 0.0
        %6296 = vmatpush1.msra.mxu0 0.0
        %6297 = vmatprep.subr.mxu0 0.0
        %6298 = vmatpush1.msra.mxu0 0.0
        %6299 = vmatprep.subr.mxu0 0.0
        %6300 = vmatpush1.msra.mxu0 %v6291
        %6301 = vmatprep.subr.mxu0 0.0
        %6302 = vmatpush1.msra.mxu0 %v6285
        %6303 = vmatprep.subr.mxu0 0.0
        %6304 = vmatpush1.msra.mxu0 %v6284
        %6305 = vmatprep.subr.mxu0 0.0
        %6306 = vmatpush1.msra.mxu0 %v6283
        %6307 = vmatprep.subr.mxu0 0.0
        %6308 = vmatpush1.msra.mxu0 %v6282
        %6309 = vmatprep.subr.mxu0 0.0
        %6310 = vmatpush1.msra.mxu0 %v6281
        %6311 = vmatprep.subr.mxu0 0.0
        %6312 = vmatpush1.msra.mxu0 %v6280
        %6313 = vmatprep.subr.mxu0 0.0
        %6314 = vmatpush1.msra.mxu0 %v6279
        %6315 = vmatprep.subr.mxu0 0.0
        %6316 = vmatpush1.msra.mxu0 %v6278
        %6317 = vmatprep.subr.mxu0 0.0
        %6318 = vmatpush1.msra.mxu0 %v6277
        %6319 = vmatprep.subr.mxu0 0.0
        %6320 = vmatpush1.msra.mxu0 %v6276
        %6321 = vmatprep.subr.mxu0 0.0
        %6322 = vmatpush1.msra.mxu0 %v6275
        %6323 = vmatprep.subr.mxu0 0.0
        %6324 = vmatpush1.msra.mxu0 %v6274
        %6325 = vmatprep.subr.mxu0 0.0
        %6326 = vmatpush2.msra.mxu0 0.0
        %6327 = vmatprep.subr.mxu0 0.0
        %6328 = vmatpush2.msra.mxu0 0.0
        %6329 = vmatprep.subr.mxu0 0.0
        %6330 = vmatpush2.msra.mxu0 0.0
        %6331 = vmatprep.subr.mxu0 0.0
        %6332 = vmatpush2.msra.mxu0 0.0
        %6333 = vmatprep.subr.mxu0 0.0
        %6334 = vmatpush2.msra.mxu0 0.0
        %6335 = vmatprep.subr.mxu0 0.0
        %6336 = vmatpush2.msra.mxu0 0.0
        %6337 = vmatprep.subr.mxu0 0.0
        %6338 = vmatpush2.msra.mxu0 0.0
        %6339 = vmatprep.subr.mxu0 0.0
        %6340 = vmatpush2.msra.mxu0 0.0
        %6341 = vmatprep.subr.mxu0 0.0
        %6342 = vmatpush2.msra.mxu0 0.0
        %6343 = vmatprep.subr.mxu0 0.0
        %6344 = vmatpush2.msra.mxu0 0.0
        %6345 = vmatprep.subr.mxu0 0.0
        %6346 = vmatpush2.msra.mxu0 0.0
        %6347 = vmatprep.subr.mxu0 0.0
        %6348 = vmatpush2.msra.mxu0 0.0
        %6349 = vmatprep.subr.mxu0 0.0
        %6350 = vmatpush2.msra.mxu0 0.0
        %6351 = vmatprep.subr.mxu0 0.0
        %6352 = vmatpush2.msra.mxu0 0.0
        %6353 = vmatprep.subr.mxu0 0.0
        %6354 = vmatpush2.msra.mxu0 0.0
        %6355 = vmatprep.subr.mxu0 0.0
        %6356 = vmatpush2.msra.mxu0 0.0
        %6357 = vmatprep.mubr.f32.mxu0 0.0
        %6358 = vmatmul.mubr.f32.gmra.mxu0 %v6288
        %v6359 = vpop.f32.mrf.mxu0
        %v6360 = vadd.f32 0.0, %v6359
        %v6361 = vpop.f32.mrf.mxu0
        %6362 = vdwg.mxu0
        %v6363 = vadd.f32 %v6272, %v6360
        %v6364 = vld [vmem:[#allocation14] sm:$0x1]
        %v6365 = vadd.f32 %v6363, %v6364
        %v6366 = vld [vmem:[%s9] sm:$0xff]
        %v6367 = vld [vmem:[%s9 + $0x8] sm:$0xff]
        %v6368 = vld [vmem:[%s9 + $0x10] sm:$0xff]
        %v6369 = vld [vmem:[%s9 + $0x18] sm:$0xff]
        %v6370 = vld [vmem:[%s9 + $0x20] sm:$0xff]
        %v6371 = vld [vmem:[%s9 + $0x28] sm:$0xff]
        %v6372 = vld [vmem:[%s9 + $0x30] sm:$0xff]
        %v6373 = vld [vmem:[%s9 + $0x38] sm:$0xff]
        %v6374 = vld [vmem:[%s9 + $0x40] sm:$0xff]
        %v6375 = vld [vmem:[%s9 + $0x48] sm:$0xff]
        %v6376 = vld [vmem:[%s9 + $0x50] sm:$0xff]
        %v6377 = vld [vmem:[%s9 + $0x58] sm:$0xff]
        %v6378 = vld [vmem:[%s9 + $0x60] sm:$0xf]
        %v6379 = vld [vmem:[#allocation16] sm:$0x1]
        %v6381 = vsel %vm5940, %v6365, 0
        %v6384 = vsel %vm1209, %v6378, 0
        %6386 = vmatprep.subr.mxu0 0.0
        %6387 = vmatpush1.msra.mxu0 0.0
        %6388 = vmatprep.subr.mxu0 0.0
        %6389 = vmatpush1.msra.mxu0 0.0
        %6390 = vmatprep.subr.mxu0 0.0
        %6391 = vmatpush1.msra.mxu0 0.0
        %6392 = vmatprep.subr.mxu0 0.0
        %6393 = vmatpush1.msra.mxu0 %v6384
        %6394 = vmatprep.subr.mxu0 0.0
        %6395 = vmatpush1.msra.mxu0 %v6377
        %6396 = vmatprep.subr.mxu0 0.0
        %6397 = vmatpush1.msra.mxu0 %v6376
        %6398 = vmatprep.subr.mxu0 0.0
        %6399 = vmatpush1.msra.mxu0 %v6375
        %6400 = vmatprep.subr.mxu0 0.0
        %6401 = vmatpush1.msra.mxu0 %v6374
        %6402 = vmatprep.subr.mxu0 0.0
        %6403 = vmatpush1.msra.mxu0 %v6373
        %6404 = vmatprep.subr.mxu0 0.0
        %6405 = vmatpush1.msra.mxu0 %v6372
        %6406 = vmatprep.subr.mxu0 0.0
        %6407 = vmatpush1.msra.mxu0 %v6371
        %6408 = vmatprep.subr.mxu0 0.0
        %6409 = vmatpush1.msra.mxu0 %v6370
        %6410 = vmatprep.subr.mxu0 0.0
        %6411 = vmatpush1.msra.mxu0 %v6369
        %6412 = vmatprep.subr.mxu0 0.0
        %6413 = vmatpush1.msra.mxu0 %v6368
        %6414 = vmatprep.subr.mxu0 0.0
        %6415 = vmatpush1.msra.mxu0 %v6367
        %6416 = vmatprep.subr.mxu0 0.0
        %6417 = vmatpush1.msra.mxu0 %v6366
        %6418 = vmatprep.subr.mxu0 0.0
        %6419 = vmatpush2.msra.mxu0 0.0
        %6420 = vmatprep.subr.mxu0 0.0
        %6421 = vmatpush2.msra.mxu0 0.0
        %6422 = vmatprep.subr.mxu0 0.0
        %6423 = vmatpush2.msra.mxu0 0.0
        %6424 = vmatprep.subr.mxu0 0.0
        %6425 = vmatpush2.msra.mxu0 0.0
        %6426 = vmatprep.subr.mxu0 0.0
        %6427 = vmatpush2.msra.mxu0 0.0
        %6428 = vmatprep.subr.mxu0 0.0
        %6429 = vmatpush2.msra.mxu0 0.0
        %6430 = vmatprep.subr.mxu0 0.0
        %6431 = vmatpush2.msra.mxu0 0.0
        %6432 = vmatprep.subr.mxu0 0.0
        %6433 = vmatpush2.msra.mxu0 0.0
        %6434 = vmatprep.subr.mxu0 0.0
        %6435 = vmatpush2.msra.mxu0 0.0
        %6436 = vmatprep.subr.mxu0 0.0
        %6437 = vmatpush2.msra.mxu0 0.0
        %6438 = vmatprep.subr.mxu0 0.0
        %6439 = vmatpush2.msra.mxu0 0.0
        %6440 = vmatprep.subr.mxu0 0.0
        %6441 = vmatpush2.msra.mxu0 0.0
        %6442 = vmatprep.subr.mxu0 0.0
        %6443 = vmatpush2.msra.mxu0 0.0
        %6444 = vmatprep.subr.mxu0 0.0
        %6445 = vmatpush2.msra.mxu0 0.0
        %6446 = vmatprep.subr.mxu0 0.0
        %6447 = vmatpush2.msra.mxu0 0.0
        %6448 = vmatprep.subr.mxu0 0.0
        %6449 = vmatpush2.msra.mxu0 0.0
        %6450 = vmatprep.mubr.f32.mxu0 0.0
        %6451 = vmatmul.mubr.f32.gmra.mxu0 %v6381
        %v6452 = vpop.f32.mrf.mxu0
        %v6453 = vadd.f32 %v6379, %v6452
        %v6454 = vpop.f32.mrf.mxu0
        %6455 = vdwg.mxu0
        %vm6456 = vcmask 114688
        %6457 = vst.msk [vmem:[%s511] sm:$0x1] %vm6456, %v6453
        %s6458 = sand.u32 %s276, 1
        %s6459 = scalar_lea.sflag [#allocation4], %s6458
        %s6460 = sand.u32 %s276, 1
        %s6461 = scalar_lea.vmem [#allocation17], %s6460
        // Predicated region
        $region101: #{simple_net_forward.1} parent=63 // pred_check
          %p6462 = pneg %p286
        $region102: #{simple_net_forward.1} parent=63 // pred_check_branch
          %6464 = sbr.rel (%p6462) target = $region104
        $region103: #{simple_net_forward.1} parent=63 // pred_region
          %s6466 = ssub.s32 16, 16
          %6467 = vsyncadd %s6459, %s6466
          %s6468 = smul.addr %s32, 16
          %s6469 = scalar_lea.hbm %s11, %s6468
          %s6471 = sshll.u32 %s6461, 4
          %s6472 = int_to_ptr.vmem [resolvable:$true] %s6471
          %6474 = dma.vmem_to_hbm [thread:$0]  %s6472, 16, %s6469, %s6459
        $region104: #{simple_net_forward.1} parent=63 // pred_fallthru
          _
      $region64: #{simple_net_forward.1} parent=5 // pred_fallthru
        _
      %p6475 = scmp.le.s32.totalorder 2, %s27
      // Predicated region
      $region105: #{simple_net_forward.1} parent=5 // pred_check
        %p6476 = pneg %p6475
      $region106: #{simple_net_forward.1} parent=5 // pred_check_branch
        %6478 = sbr.rel (%p6476) target = $region108
      $region107: #{simple_net_forward.1} parent=5 // pred_region
        %s6479 = ssub.s32 %s27, 2
        // Predicated region
        $region109: #{simple_net_forward.1} parent=107 // pred_check
          %p6480 = pneg %p292
        $region110: #{simple_net_forward.1} parent=107 // pred_check_branch
          %6482 = sbr.rel (%p6480) target = $region112
        $region111: #{simple_net_forward.1} parent=107 // pred_region
          %s6483 = sand.u32 %s277, 1
          %s6484 = scalar_lea.sflag [#allocation4], %s6483
          %s6485 = sand.u32 %s277, 1
          %s6486 = scalar_lea.vmem [#allocation17], %s6485
          %6487 = dma.done %s6484, 16
        $region112: #{simple_net_forward.1} parent=107 // pred_fallthru
          _
      $region108: #{simple_net_forward.1} parent=5 // pred_fallthru
        _
    $region6: #{simple_net_forward.1} parent=1 // loop_footer
      %s31 = sadd.s32 1, %s27
    $region7: #{simple_net_forward.1} parent=1 // loop_footer_branch
      %26 = sbr.rel target = $region3
    $region8: #{simple_net_forward.1} parent=1 // loop_exit
      _
    %6488 = vsyncpa [#allocation3], 1
    %s6489 = scalar_lea.sflag [#allocation3], 1
    %6490 = vsyncpa %s6489, 1
    %6491 = vsyncpa [#allocation6], 1
    %6492 = vsyncpa [#allocation9], 1
    %6493 = vsyncpa [#allocation12], 1
    %6494 = vsyncpa [#allocation15], 1
    %6495 = vsyncpa [#allocation4], 1
    %s6496 = scalar_lea.sflag [#allocation4], 1
    %6497 = vsyncpa %s6496, 1

</llo_original>
